<compile_context>
chip_gen: v6e
topology: v6e:2x2x1
jax: 0.10.0
libtpu: 0.0.40
codegen_flags: <defaults>
</compile_context>

<pallas_src>
import math

import jax
import jax.numpy as jnp
from jax.experimental import pallas as pl
from jax.experimental.pallas import tpu as pltpu

NEG_SLOPE = 0.01   # nn.LeakyReLU default
BN_EPS = 1e-5      # nn.BatchNorm2d default


def _leaky_relu(x):
    # vmul + vmax instead of compare + select
    return jnp.maximum(x, NEG_SLOPE * x)


def _vmem_limit(block_nbytes):
    # double-buffered blocks + margin, clamped so it never exceeds v7x physical VMEM
    est = 2 * int(sum(block_nbytes)) + (4 << 20)
    return int(min(max(est, 32 << 20), 64 << 20))


# ----------------------------------------------------------------------------
# Kernel 1: fused FFT-branch MLP  (1x1 conv -> BN -> LReLU -> 1x1 conv -> BN -> LReLU)
# ----------------------------------------------------------------------------
def _fft_mlp_kernel(x_ref, w1_ref, t1_ref, w2_ref, t2_ref, o_ref):
    h = jnp.dot(x_ref[...], w1_ref[...], preferred_element_type=jnp.float32)
    h = _leaky_relu(h + t1_ref[...])
    h = h.astype(w2_ref.dtype)                      # bf16 for the second MXU pass
    o = jnp.dot(h, w2_ref[...], preferred_element_type=jnp.float32)
    o_ref[...] = _leaky_relu(o + t2_ref[...])


def fused_fft_mlp(rows, w1, t1, w2, t2, tm=512):
    """LReLU(LReLU(rows @ w1 + t1) @ w2 + t2); both weights stay resident in VMEM."""
    M, K1 = rows.shape
    C1 = w1.shape[1]
    C2 = w2.shape[1]
    tm = M if M <= tm else tm                       # full dim OK even if M % 8 != 0
    x = rows.astype(jnp.bfloat16)
    blocks = [tm * K1 * 2, K1 * C1 * 2, C1 * 4, C1 * C2 * 2, C2 * 4, tm * C2 * 4]
    return pl.pallas_call(
        _fft_mlp_kernel,
        out_shape=jax.ShapeDtypeStruct((M, C2), jnp.float32),
        grid=(pl.cdiv(M, tm),),
        in_specs=[
            pl.BlockSpec((tm, K1), lambda i: (i, 0)),
            pl.BlockSpec((K1, C1), lambda i: (0, 0)),
            pl.BlockSpec((1, C1), lambda i: (0, 0)),
            pl.BlockSpec((C1, C2), lambda i: (0, 0)),
            pl.BlockSpec((1, C2), lambda i: (0, 0)),
        ],
        out_specs=pl.BlockSpec((tm, C2), lambda i: (i, 0)),
        compiler_params=pltpu.CompilerParams(
            dimension_semantics=("parallel",),
            vmem_limit_bytes=_vmem_limit(blocks)),
    )(x, w1, t1, w2, t2)


# ----------------------------------------------------------------------------
# Kernel 2: fused 3x3 conv (9 shifted GEMM taps) -> BN -> LReLU [-> + residual]
#
# Input layout per image: the zero-padded NHWC image (H+3, W+2, Cin) flattened to
# ((H+3)*(W+2), Cin) rows.  For kernel tap (dy,dx) the lhs is the contiguous row
# window starting at dy*(W+2)+dx of length H*(W+2); all 9 taps accumulate into the
# same (H*(W+2), Cout) accumulator whose row h*(W+2)+w is output pixel (h,w) for
# w < W (columns w >= W are garbage strips the wrapper discards).
# ----------------------------------------------------------------------------
def _make_conv3x3_kernel(H, Wp, Cout, has_residual):
    L = H * Wp

    def kernel(x_ref, w_ref, t_ref, *rest):
        if has_residual:
            r_ref, o_ref = rest
        else:
            (o_ref,) = rest
        acc = jnp.zeros((L, Cout), jnp.float32)
        for tap in range(9):                         # static unroll: 9 bf16 GEMMs
            dy, dx = divmod(tap, 3)
            base = dy * Wp + dx
            lhs = x_ref[0, pl.ds(base, L), :]        # (L, Cin) bf16, VMEM view
            acc = acc + jnp.dot(lhs, w_ref[tap],
                                preferred_element_type=jnp.float32)
        acc = _leaky_relu(acc + t_ref[...])
        if has_residual:
            acc = acc + r_ref[0]
        o_ref[0] = acc
    return kernel


def fused_conv3x3_bn_lrelu(x_pad_flat, w_taps, shift, H, W, residual=None):
    """x_pad_flat: (N, (H+3)*(W+2), Cin) bf16 flattened zero-padded NHWC rows.
    w_taps: (9, Cin, Cout) bf16 (BN scale folded).  shift: (1, Cout) f32.
    residual: optional (N, H*(W+2), Cout) f32, aliased onto the output.
    Returns (N, H*(W+2), Cout) f32 (columns w >= W of each row strip are garbage)."""
    N, R, Cin = x_pad_flat.shape
    Wp = W + 2
    L = H * Wp
    assert R == (H + 3) * Wp, (R, H, W)
    Cout = w_taps.shape[-1]

    kernel = _make_conv3x3_kernel(H, Wp, Cout, residual is not None)
    args = [x_pad_flat, w_taps, shift]
    in_specs = [
        pl.BlockSpec((1, R, Cin), lambda n: (n, 0, 0)),
        pl.BlockSpec((9, Cin, Cout), lambda n: (0, 0, 0)),
        pl.BlockSpec((1, Cout), lambda n: (0, 0)),
    ]
    blocks = [R * Cin * 2, 9 * Cin * Cout * 2, Cout * 4, L * Cout * 4]
    io_alias = {}
    if residual is not None:
        args.append(residual)
        in_specs.append(pl.BlockSpec((1, L, Cout), lambda n: (n, 0, 0)))
        io_alias = {3: 0}                            # residual buffer reused as output
        blocks.append(L * Cout * 4)

    return pl.pallas_call(
        kernel,
        out_shape=jax.ShapeDtypeStruct((N, L, Cout), jnp.float32),
        grid=(N,),
        in_specs=in_specs,
        out_specs=pl.BlockSpec((1, L, Cout), lambda n: (n, 0, 0)),
        input_output_aliases=io_alias,
        compiler_params=pltpu.CompilerParams(
            dimension_semantics=("parallel",),
            vmem_limit_bytes=_vmem_limit(blocks)),
    )(*args)


# ----------------------------------------------------------------------------
# BN folding + parameter init
# ----------------------------------------------------------------------------
def _fold_bn_gemm(conv_w, conv_b, gamma, beta, mean=0.0, var=1.0):
    """1x1 conv (Cout,Cin,1,1) -> (Cin,Cout) bf16 with BN scale folded; fused shift."""
    scale = gamma / jnp.sqrt(var + BN_EPS)
    w = conv_w[:, :, 0, 0].T * scale[None, :]
    shift = (conv_b - mean) * scale + beta
    return w.astype(jnp.bfloat16), shift.reshape(1, -1).astype(jnp.float32)


def _fold_bn_conv(conv_w, conv_b, gamma, beta, mean=0.0, var=1.0):
    """3x3 conv (Cout,Cin,3,3) -> (9,Cin,Cout) bf16 tap matrices with BN scale folded."""
    scale = gamma / jnp.sqrt(var + BN_EPS)
    cout, cin = conv_w.shape[:2]
    w = jnp.transpose(conv_w, (2, 3, 1, 0)).reshape(9, cin, cout) * scale[None, None, :]
    shift = (conv_b - mean) * scale + beta
    return w.astype(jnp.bfloat16), shift.reshape(1, -1).astype(jnp.float32)


def init_params(key, in_ch, out_ch, mid_ch=None):
    if mid_ch is None:
        mid_ch = out_ch
    ks = jax.random.split(key, 16)

    def conv_w(k, co, ci, kh, kw):
        bound = 1.0 / math.sqrt(ci * kh * kw)
        return jax.random.uniform(k, (co, ci, kh, kw), jnp.float32, -bound, bound)

    def conv_b(k, co, fan_in):
        bound = 1.0 / math.sqrt(fan_in)
        return jax.random.uniform(k, (co,), jnp.float32, -bound, bound)

    def bn(kg, kb, c):
        return (1.0 + 0.1 * jax.random.normal(kg, (c,), jnp.float32),
                0.1 * jax.random.normal(kb, (c,), jnp.float32))

    p = {}
    # spatial branch: Conv3x3 -> BN -> LReLU -> Conv3x3 -> BN -> LReLU
    p["conv1_w"] = conv_w(ks[0], mid_ch, in_ch, 3, 3)
    p["conv1_b"] = conv_b(ks[1], mid_ch, in_ch * 9)
    p["bn1_g"], p["bn1_b"] = bn(ks[2], ks[3], mid_ch)
    p["conv2_w"] = conv_w(ks[4], out_ch, mid_ch, 3, 3)
    p["conv2_b"] = conv_b(ks[5], out_ch, mid_ch * 9)
    p["bn2_g"], p["bn2_b"] = bn(ks[6], ks[7], out_ch)
    # FFT branch: Conv1x1 -> BN -> LReLU -> Conv1x1 -> BN -> LReLU (on 2x channels)
    p["fconv1_w"] = conv_w(ks[8], 2 * mid_ch, 2 * in_ch, 1, 1)
    p["fconv1_b"] = conv_b(ks[9], 2 * mid_ch, 2 * in_ch)
    p["fbn1_g"], p["fbn1_b"] = bn(ks[10], ks[11], 2 * mid_ch)
    p["fconv2_w"] = conv_w(ks[12], 2 * out_ch, 2 * mid_ch, 1, 1)
    p["fconv2_b"] = conv_b(ks[13], 2 * out_ch, 2 * mid_ch)
    p["fbn2_g"], p["fbn2_b"] = bn(ks[14], ks[15], 2 * out_ch)
    return p


# ----------------------------------------------------------------------------
# Forward pass (matches DoubleConv.forward)
# ----------------------------------------------------------------------------
def double_conv_forward(params, x_nchw):
    N, Cin, H, W = x_nchw.shape
    x = x_nchw.astype(jnp.float32)
    Wp = W + 2
    cmid = params["conv1_w"].shape[0]
    cout = params["conv2_w"].shape[0]

    # ---------------- FFT branch (main_fft) ----------------
    # TODO(synk): rfft2/irfft2 have no Pallas primitive; they stay as XLA FFT ops.
    y = jnp.fft.rfft2(x, axes=(-2, -1), norm="ortho")            # (N,Cin,H,Wr) complex
    Wr = y.shape[-1]
    y_f = jnp.concatenate([y.real, y.imag], axis=1)              # (N,2Cin,H,Wr)
    rows = jnp.transpose(y_f, (0, 2, 3, 1)).reshape(N * H * Wr, 2 * Cin)

    w1, t1 = _fold_bn_gemm(params["fconv1_w"], params["fconv1_b"],
                           params["fbn1_g"], params["fbn1_b"])
    w2, t2 = _fold_bn_gemm(params["fconv2_w"], params["fconv2_b"],
                           params["fbn2_g"], params["fbn2_b"])
    rows = fused_fft_mlp(rows, w1, t1, w2, t2)                   # (N*H*Wr, 2*cout) f32

    yf = jnp.transpose(rows.reshape(N, H, Wr, 2 * cout), (0, 3, 1, 2))
    y_sp = jnp.fft.irfft2(yf[:, :cout] + 1j * yf[:, cout:], s=(H, W),
                          axes=(-2, -1), norm="ortho")           # (N,cout,H,W) f32
    # residual in the padded-row layout used by the conv kernel (cols >= W are zeros)
    resid = jnp.pad(jnp.transpose(y_sp, (0, 2, 3, 1)),
                    ((0, 0), (0, 0), (0, 2), (0, 0)))
    resid = resid.reshape(N, H * Wp, cout).astype(jnp.float32)

    # ---------------- spatial branch (main) ----------------
    x_nhwc = jnp.transpose(x, (0, 2, 3, 1))                      # (N,H,W,Cin)

    wt1, s1 = _fold_bn_conv(params["conv1_w"], params["conv1_b"],
                            params["bn1_g"], params["bn1_b"])
    xp = jnp.pad(x_nhwc, ((0, 0), (1, 2), (1, 1), (0, 0)))       # conv zero-pad (+1 spare row)
    xflat = xp.reshape(N, (H + 3) * Wp, Cin).astype(jnp.bfloat16)
    h1 = fused_conv3x3_bn_lrelu(xflat, wt1, s1, H, W)            # (N, H*Wp, cmid) f32

    wt2, s2 = _fold_bn_conv(params["conv2_w"], params["conv2_b"],
                            params["bn2_g"], params["bn2_b"])
    h1_sp = h1.reshape(N, H, Wp, cmid)[:, :, :W, :]              # drop garbage strips
    hp = jnp.pad(h1_sp, ((0, 0), (1, 2), (1, 1), (0, 0)))
    hflat = hp.reshape(N, (H + 3) * Wp, cmid).astype(jnp.bfloat16)
    # second conv, with the FFT-branch residual add fused in and aliased to the output
    out = fused_conv3x3_bn_lrelu(hflat, wt2, s2, H, W, residual=resid)

    out = out.reshape(N, H, Wp, cout)[:, :, :W, :]               # (N,H,W,cout)
    return jnp.transpose(out, (0, 3, 1, 2))                      # NCHW


if __name__ == "__main__":
    key = jax.random.PRNGKey(0)
    pkey, xkey = jax.random.split(key)

    in_ch, out_ch = 4, 4
    params = init_params(pkey, in_ch, out_ch)
    x = jax.random.normal(xkey, (2, in_ch, 16, 16), jnp.float32)

    out = jax.block_until_ready(jax.jit(double_conv_forward)(params, x))
    assert out.shape == (2, out_ch, 16, 16), out.shape
    assert out.dtype == jnp.float32
    assert bool(jnp.all(jnp.isfinite(out)))
    print("KERNEL_OK")
</pallas_src>

<mosaic_0001>
module attributes {stable_mosaic.version = 11 : i64} {
  func.func @_fft_mlp_kernel(%arg0: i32, %arg1: memref<288x8xbf16, #tpu.memory_space<vmem>>, %arg2: memref<8x8xbf16, #tpu.memory_space<vmem>>, %arg3: memref<1x8xf32, #tpu.memory_space<vmem>>, %arg4: memref<8x8xbf16, #tpu.memory_space<vmem>>, %arg5: memref<1x8xf32, #tpu.memory_space<vmem>>, %arg6: memref<288x8xf32, #tpu.memory_space<vmem>>) attributes {dimension_semantics = [#tpu.dimension_semantics<parallel>], iteration_bounds = array<i64: 1>, scalar_prefetch = 0 : i64, scratch_operands = 0 : i64, tpu.core_type = #tpu.core_type<tc>, window_params = [{transform_indices = @transform_0, window_bounds = array<i64: 288, 8>}, {pipeline_mode = #tpu.pipeline_mode<synchronous>, transform_indices = @transform_1, window_bounds = array<i64: 8, 8>}, {pipeline_mode = #tpu.pipeline_mode<synchronous>, transform_indices = @transform_2, window_bounds = array<i64: 1, 8>}, {pipeline_mode = #tpu.pipeline_mode<synchronous>, transform_indices = @transform_3, window_bounds = array<i64: 8, 8>}, {pipeline_mode = #tpu.pipeline_mode<synchronous>, transform_indices = @transform_4, window_bounds = array<i64: 1, 8>}, {transform_indices = @transform_5, window_bounds = array<i64: 288, 8>}]} {
    %c0 = arith.constant 0 : index
    %c0_0 = arith.constant 0 : index
    %0 = vector.load %arg1[%c0, %c0_0] : memref<288x8xbf16, #tpu.memory_space<vmem>>, vector<288x8xbf16>
    %c0_1 = arith.constant 0 : index
    %c0_2 = arith.constant 0 : index
    %1 = vector.load %arg2[%c0_1, %c0_2] : memref<8x8xbf16, #tpu.memory_space<vmem>>, vector<8x8xbf16>
    %cst = arith.constant dense<0.000000e+00> : vector<288x8xf32>
    %2 = tpu.matmul %0, %1, %cst {dimension_numbers = #tpu.dot_dimension_numbers<[1], [0], [0], [1], [0, 0, 1, 1], [], []>} : vector<288x8xbf16>, vector<8x8xbf16>, vector<288x8xf32> -> vector<288x8xf32>
    %c0_3 = arith.constant 0 : index
    %c0_4 = arith.constant 0 : index
    %3 = vector.load %arg3[%c0_3, %c0_4] : memref<1x8xf32, #tpu.memory_space<vmem>>, vector<1x8xf32>
    %4 = vector.broadcast %3 : vector<1x8xf32> to vector<288x8xf32>
    %5 = arith.addf %2, %4 : vector<288x8xf32>
    %cst_5 = arith.constant 0.00999999977 : f32
    %6 = vector.broadcast %cst_5 : f32 to vector<288x8xf32>
    %7 = arith.mulf %6, %5 : vector<288x8xf32>
    %8 = arith.maximumf %5, %7 : vector<288x8xf32>
    %9 = arith.truncf %8 : vector<288x8xf32> to vector<288x8xbf16>
    %c0_6 = arith.constant 0 : index
    %c0_7 = arith.constant 0 : index
    %10 = vector.load %arg4[%c0_6, %c0_7] : memref<8x8xbf16, #tpu.memory_space<vmem>>, vector<8x8xbf16>
    %cst_8 = arith.constant dense<0.000000e+00> : vector<288x8xf32>
    %11 = tpu.matmul %9, %10, %cst_8 {dimension_numbers = #tpu.dot_dimension_numbers<[1], [0], [0], [1], [0, 0, 1, 1], [], []>} : vector<288x8xbf16>, vector<8x8xbf16>, vector<288x8xf32> -> vector<288x8xf32>
    %c0_9 = arith.constant 0 : index
    %c0_10 = arith.constant 0 : index
    %12 = vector.load %arg5[%c0_9, %c0_10] : memref<1x8xf32, #tpu.memory_space<vmem>>, vector<1x8xf32>
    %13 = vector.broadcast %12 : vector<1x8xf32> to vector<288x8xf32>
    %14 = arith.addf %11, %13 : vector<288x8xf32>
    %cst_11 = arith.constant 0.00999999977 : f32
    %15 = vector.broadcast %cst_11 : f32 to vector<288x8xf32>
    %16 = arith.mulf %15, %14 : vector<288x8xf32>
    %17 = arith.maximumf %14, %16 : vector<288x8xf32>
    %c0_12 = arith.constant 0 : index
    %c0_13 = arith.constant 0 : index
    %18 = vector.load %arg6[%c0_12, %c0_13] : memref<288x8xf32, #tpu.memory_space<vmem>>, vector<288x8xf32>
    tpu.vector_store %arg6[%c0_12, %c0_13], %17 {strides = array<i32>} : memref<288x8xf32, #tpu.memory_space<vmem>>, vector<288x8xf32>,
    return
  }
  func.func @transform_0(%arg0: i32) -> (i32, i32) {
    %c0_i32 = arith.constant 0 : i32
    %c0_i32_0 = arith.constant 0 : i32
    return %arg0, %c0_i32 : i32, i32
  }
  func.func @transform_1(%arg0: i32) -> (i32, i32) {
    %c0_i32 = arith.constant 0 : i32
    %c0_i32_0 = arith.constant 0 : i32
    %c0_i32_1 = arith.constant 0 : i32
    return %c0_i32, %c0_i32_0 : i32, i32
  }
  func.func @transform_2(%arg0: i32) -> (i32, i32) {
    %c0_i32 = arith.constant 0 : i32
    %c0_i32_0 = arith.constant 0 : i32
    %c0_i32_1 = arith.constant 0 : i32
    return %c0_i32, %c0_i32_0 : i32, i32
  }
  func.func @transform_3(%arg0: i32) -> (i32, i32) {
    %c0_i32 = arith.constant 0 : i32
    %c0_i32_0 = arith.constant 0 : i32
    %c0_i32_1 = arith.constant 0 : i32
    return %c0_i32, %c0_i32_0 : i32, i32
  }
  func.func @transform_4(%arg0: i32) -> (i32, i32) {
    %c0_i32 = arith.constant 0 : i32
    %c0_i32_0 = arith.constant 0 : i32
    %c0_i32_1 = arith.constant 0 : i32
    return %c0_i32, %c0_i32_0 : i32, i32
  }
  func.func @transform_5(%arg0: i32) -> (i32, i32) {
    %c0_i32 = arith.constant 0 : i32
    %c0_i32_0 = arith.constant 0 : i32
    return %arg0, %c0_i32 : i32, i32
  }
}

module attributes {stable_mosaic.version = 11 : i64} {
  func.func @kernel(%arg0: i32, %arg1: memref<1x342x4xbf16, #tpu.memory_space<vmem>>, %arg2: memref<9x4x4xbf16, #tpu.memory_space<vmem>>, %arg3: memref<1x4xf32, #tpu.memory_space<vmem>>, %arg4: memref<1x288x4xf32, #tpu.memory_space<vmem>>) attributes {dimension_semantics = [#tpu.dimension_semantics<parallel>], iteration_bounds = array<i64: 2>, scalar_prefetch = 0 : i64, scratch_operands = 0 : i64, tpu.core_type = #tpu.core_type<tc>, window_params = [{transform_indices = @transform_0, window_bounds = array<i64: 1, 342, 4>}, {pipeline_mode = #tpu.pipeline_mode<synchronous>, transform_indices = @transform_1, window_bounds = array<i64: 9, 4, 4>}, {pipeline_mode = #tpu.pipeline_mode<synchronous>, transform_indices = @transform_2, window_bounds = array<i64: 1, 4>}, {transform_indices = @transform_3, window_bounds = array<i64: 1, 288, 4>}]} {
    %cst = arith.constant 0.000000e+00 : f32
    %0 = vector.broadcast %cst : f32 to vector<288x4xf32>
    %c0 = arith.constant 0 : index
    %c0_0 = arith.constant 0 : index
    %c0_1 = arith.constant 0 : index
    %1 = vector.load %arg1[%c0, %c0_0, %c0_1] : memref<1x342x4xbf16, #tpu.memory_space<vmem>>, vector<1x288x4xbf16>
    %2 = vector.shape_cast %1 : vector<1x288x4xbf16> to vector<288x4xbf16>
    %c0_2 = arith.constant 0 : index
    %c0_3 = arith.constant 0 : index
    %c0_4 = arith.constant 0 : index
    %3 = vector.load %arg2[%c0_2, %c0_3, %c0_4] : memref<9x4x4xbf16, #tpu.memory_space<vmem>>, vector<1x4x4xbf16>
    %4 = vector.shape_cast %3 : vector<1x4x4xbf16> to vector<4x4xbf16>
    %cst_5 = arith.constant dense<0.000000e+00> : vector<288x4xf32>
    %5 = tpu.matmul %2, %4, %cst_5 {dimension_numbers = #tpu.dot_dimension_numbers<[1], [0], [0], [1], [0, 0, 1, 1], [], []>} : vector<288x4xbf16>, vector<4x4xbf16>, vector<288x4xf32> -> vector<288x4xf32>
    %6 = arith.addf %0, %5 : vector<288x4xf32>
    %c0_6 = arith.constant 0 : index
    %c1 = arith.constant 1 : index
    %c0_7 = arith.constant 0 : index
    %7 = vector.load %arg1[%c0_6, %c1, %c0_7] : memref<1x342x4xbf16, #tpu.memory_space<vmem>>, vector<1x288x4xbf16>
    %8 = vector.shape_cast %7 : vector<1x288x4xbf16> to vector<288x4xbf16>
    %c1_8 = arith.constant 1 : index
    %c0_9 = arith.constant 0 : index
    %c0_10 = arith.constant 0 : index
    %9 = vector.load %arg2[%c1_8, %c0_9, %c0_10] : memref<9x4x4xbf16, #tpu.memory_space<vmem>>, vector<1x4x4xbf16>
    %10 = vector.shape_cast %9 : vector<1x4x4xbf16> to vector<4x4xbf16>
    %cst_11 = arith.constant dense<0.000000e+00> : vector<288x4xf32>
    %11 = tpu.matmul %8, %10, %cst_11 {dimension_numbers = #tpu.dot_dimension_numbers<[1], [0], [0], [1], [0, 0, 1, 1], [], []>} : vector<288x4xbf16>, vector<4x4xbf16>, vector<288x4xf32> -> vector<288x4xf32>
    %12 = arith.addf %6, %11 : vector<288x4xf32>
    %c0_12 = arith.constant 0 : index
    %c2 = arith.constant 2 : index
    %c0_13 = arith.constant 0 : index
    %13 = vector.load %arg1[%c0_12, %c2, %c0_13] : memref<1x342x4xbf16, #tpu.memory_space<vmem>>, vector<1x288x4xbf16>
    %14 = vector.shape_cast %13 : vector<1x288x4xbf16> to vector<288x4xbf16>
    %c2_14 = arith.constant 2 : index
    %c0_15 = arith.constant 0 : index
    %c0_16 = arith.constant 0 : index
    %15 = vector.load %arg2[%c2_14, %c0_15, %c0_16] : memref<9x4x4xbf16, #tpu.memory_space<vmem>>, vector<1x4x4xbf16>
    %16 = vector.shape_cast %15 : vector<1x4x4xbf16> to vector<4x4xbf16>
    %cst_17 = arith.constant dense<0.000000e+00> : vector<288x4xf32>
    %17 = tpu.matmul %14, %16, %cst_17 {dimension_numbers = #tpu.dot_dimension_numbers<[1], [0], [0], [1], [0, 0, 1, 1], [], []>} : vector<288x4xbf16>, vector<4x4xbf16>, vector<288x4xf32> -> vector<288x4xf32>
    %18 = arith.addf %12, %17 : vector<288x4xf32>
    %c0_18 = arith.constant 0 : index
    %c18 = arith.constant 18 : index
    %c0_19 = arith.constant 0 : index
    %19 = vector.load %arg1[%c0_18, %c18, %c0_19] : memref<1x342x4xbf16, #tpu.memory_space<vmem>>, vector<1x288x4xbf16>
    %20 = vector.shape_cast %19 : vector<1x288x4xbf16> to vector<288x4xbf16>
    %c3 = arith.constant 3 : index
    %c0_20 = arith.constant 0 : index
    %c0_21 = arith.constant 0 : index
    %21 = vector.load %arg2[%c3, %c0_20, %c0_21] : memref<9x4x4xbf16, #tpu.memory_space<vmem>>, vector<1x4x4xbf16>
    %22 = vector.shape_cast %21 : vector<1x4x4xbf16> to vector<4x4xbf16>
    %cst_22 = arith.constant dense<0.000000e+00> : vector<288x4xf32>
    %23 = tpu.matmul %20, %22, %cst_22 {dimension_numbers = #tpu.dot_dimension_numbers<[1], [0], [0], [1], [0, 0, 1, 1], [], []>} : vector<288x4xbf16>, vector<4x4xbf16>, vector<288x4xf32> -> vector<288x4xf32>
    %24 = arith.addf %18, %23 : vector<288x4xf32>
    %c0_23 = arith.constant 0 : index
    %c19 = arith.constant 19 : index
    %c0_24 = arith.constant 0 : index
    %25 = vector.load %arg1[%c0_23, %c19, %c0_24] : memref<1x342x4xbf16, #tpu.memory_space<vmem>>, vector<1x288x4xbf16>
    %26 = vector.shape_cast %25 : vector<1x288x4xbf16> to vector<288x4xbf16>
    %c4 = arith.constant 4 : index
    %c0_25 = arith.constant 0 : index
    %c0_26 = arith.constant 0 : index
    %27 = vector.load %arg2[%c4, %c0_25, %c0_26] : memref<9x4x4xbf16, #tpu.memory_space<vmem>>, vector<1x4x4xbf16>
    %28 = vector.shape_cast %27 : vector<1x4x4xbf16> to vector<4x4xbf16>
    %cst_27 = arith.constant dense<0.000000e+00> : vector<288x4xf32>
    %29 = tpu.matmul %26, %28, %cst_27 {dimension_numbers = #tpu.dot_dimension_numbers<[1], [0], [0], [1], [0, 0, 1, 1], [], []>} : vector<288x4xbf16>, vector<4x4xbf16>, vector<288x4xf32> -> vector<288x4xf32>
    %30 = arith.addf %24, %29 : vector<288x4xf32>
    %c0_28 = arith.constant 0 : index
    %c20 = arith.constant 20 : index
    %c0_29 = arith.constant 0 : index
    %31 = vector.load %arg1[%c0_28, %c20, %c0_29] : memref<1x342x4xbf16, #tpu.memory_space<vmem>>, vector<1x288x4xbf16>
    %32 = vector.shape_cast %31 : vector<1x288x4xbf16> to vector<288x4xbf16>
    %c5 = arith.constant 5 : index
    %c0_30 = arith.constant 0 : index
    %c0_31 = arith.constant 0 : index
    %33 = vector.load %arg2[%c5, %c0_30, %c0_31] : memref<9x4x4xbf16, #tpu.memory_space<vmem>>, vector<1x4x4xbf16>
    %34 = vector.shape_cast %33 : vector<1x4x4xbf16> to vector<4x4xbf16>
    %cst_32 = arith.constant dense<0.000000e+00> : vector<288x4xf32>
    %35 = tpu.matmul %32, %34, %cst_32 {dimension_numbers = #tpu.dot_dimension_numbers<[1], [0], [0], [1], [0, 0, 1, 1], [], []>} : vector<288x4xbf16>, vector<4x4xbf16>, vector<288x4xf32> -> vector<288x4xf32>
    %36 = arith.addf %30, %35 : vector<288x4xf32>
    %c0_33 = arith.constant 0 : index
    %c36 = arith.constant 36 : index
    %c0_34 = arith.constant 0 : index
    %37 = vector.load %arg1[%c0_33, %c36, %c0_34] : memref<1x342x4xbf16, #tpu.memory_space<vmem>>, vector<1x288x4xbf16>
    %38 = vector.shape_cast %37 : vector<1x288x4xbf16> to vector<288x4xbf16>
    %c6 = arith.constant 6 : index
    %c0_35 = arith.constant 0 : index
    %c0_36 = arith.constant 0 : index
    %39 = vector.load %arg2[%c6, %c0_35, %c0_36] : memref<9x4x4xbf16, #tpu.memory_space<vmem>>, vector<1x4x4xbf16>
    %40 = vector.shape_cast %39 : vector<1x4x4xbf16> to vector<4x4xbf16>
    %cst_37 = arith.constant dense<0.000000e+00> : vector<288x4xf32>
    %41 = tpu.matmul %38, %40, %cst_37 {dimension_numbers = #tpu.dot_dimension_numbers<[1], [0], [0], [1], [0, 0, 1, 1], [], []>} : vector<288x4xbf16>, vector<4x4xbf16>, vector<288x4xf32> -> vector<288x4xf32>
    %42 = arith.addf %36, %41 : vector<288x4xf32>
    %c0_38 = arith.constant 0 : index
    %c37 = arith.constant 37 : index
    %c0_39 = arith.constant 0 : index
    %43 = vector.load %arg1[%c0_38, %c37, %c0_39] : memref<1x342x4xbf16, #tpu.memory_space<vmem>>, vector<1x288x4xbf16>
    %44 = vector.shape_cast %43 : vector<1x288x4xbf16> to vector<288x4xbf16>
    %c7 = arith.constant 7 : index
    %c0_40 = arith.constant 0 : index
    %c0_41 = arith.constant 0 : index
    %45 = vector.load %arg2[%c7, %c0_40, %c0_41] : memref<9x4x4xbf16, #tpu.memory_space<vmem>>, vector<1x4x4xbf16>
    %46 = vector.shape_cast %45 : vector<1x4x4xbf16> to vector<4x4xbf16>
    %cst_42 = arith.constant dense<0.000000e+00> : vector<288x4xf32>
    %47 = tpu.matmul %44, %46, %cst_42 {dimension_numbers = #tpu.dot_dimension_numbers<[1], [0], [0], [1], [0, 0, 1, 1], [], []>} : vector<288x4xbf16>, vector<4x4xbf16>, vector<288x4xf32> -> vector<288x4xf32>
    %48 = arith.addf %42, %47 : vector<288x4xf32>
    %c0_43 = arith.constant 0 : index
    %c38 = arith.constant 38 : index
    %c0_44 = arith.constant 0 : index
    %49 = vector.load %arg1[%c0_43, %c38, %c0_44] : memref<1x342x4xbf16, #tpu.memory_space<vmem>>, vector<1x288x4xbf16>
    %50 = vector.shape_cast %49 : vector<1x288x4xbf16> to vector<288x4xbf16>
    %c8 = arith.constant 8 : index
    %c0_45 = arith.constant 0 : index
    %c0_46 = arith.constant 0 : index
    %51 = vector.load %arg2[%c8, %c0_45, %c0_46] : memref<9x4x4xbf16, #tpu.memory_space<vmem>>, vector<1x4x4xbf16>
    %52 = vector.shape_cast %51 : vector<1x4x4xbf16> to vector<4x4xbf16>
    %cst_47 = arith.constant dense<0.000000e+00> : vector<288x4xf32>
    %53 = tpu.matmul %50, %52, %cst_47 {dimension_numbers = #tpu.dot_dimension_numbers<[1], [0], [0], [1], [0, 0, 1, 1], [], []>} : vector<288x4xbf16>, vector<4x4xbf16>, vector<288x4xf32> -> vector<288x4xf32>
    %54 = arith.addf %48, %53 : vector<288x4xf32>
    %c0_48 = arith.constant 0 : index
    %c0_49 = arith.constant 0 : index
    %55 = vector.load %arg3[%c0_48, %c0_49] : memref<1x4xf32, #tpu.memory_space<vmem>>, vector<1x4xf32>
    %56 = vector.broadcast %55 : vector<1x4xf32> to vector<288x4xf32>
    %57 = arith.addf %54, %56 : vector<288x4xf32>
    %cst_50 = arith.constant 0.00999999977 : f32
    %58 = vector.broadcast %cst_50 : f32 to vector<288x4xf32>
    %59 = arith.mulf %58, %57 : vector<288x4xf32>
    %60 = arith.maximumf %57, %59 : vector<288x4xf32>
    %c0_51 = arith.constant 0 : index
    %c0_52 = arith.constant 0 : index
    %c0_53 = arith.constant 0 : index
    %61 = vector.load %arg4[%c0_51, %c0_52, %c0_53] : memref<1x288x4xf32, #tpu.memory_space<vmem>>, vector<1x288x4xf32>
    %62 = vector.shape_cast %61 : vector<1x288x4xf32> to vector<288x4xf32>
    %63 = vector.shape_cast %60 : vector<288x4xf32> to vector<1x288x4xf32>
    tpu.vector_store %arg4[%c0_51, %c0_52, %c0_53], %63 {strides = array<i32>} : memref<1x288x4xf32, #tpu.memory_space<vmem>>, vector<1x288x4xf32>,
    return
  }
  func.func @transform_0(%arg0: i32) -> (i32, i32, i32) {
    %c0_i32 = arith.constant 0 : i32
    %c0_i32_0 = arith.constant 0 : i32
    %c0_i32_1 = arith.constant 0 : i32
    return %arg0, %c0_i32, %c0_i32_0 : i32, i32, i32
  }
  func.func @transform_1(%arg0: i32) -> (i32, i32, i32) {
    %c0_i32 = arith.constant 0 : i32
    %c0_i32_0 = arith.constant 0 : i32
    %c0_i32_1 = arith.constant 0 : i32
    %c0_i32_2 = arith.constant 0 : i32
    return %c0_i32, %c0_i32_0, %c0_i32_1 : i32, i32, i32
  }
  func.func @transform_2(%arg0: i32) -> (i32, i32) {
    %c0_i32 = arith.constant 0 : i32
    %c0_i32_0 = arith.constant 0 : i32
    %c0_i32_1 = arith.constant 0 : i32
    return %c0_i32, %c0_i32_0 : i32, i32
  }
  func.func @transform_3(%arg0: i32) -> (i32, i32, i32) {
    %c0_i32 = arith.constant 0 : i32
    %c0_i32_0 = arith.constant 0 : i32
    %c0_i32_1 = arith.constant 0 : i32
    return %arg0, %c0_i32, %c0_i32_0 : i32, i32, i32
  }
}

module attributes {stable_mosaic.version = 11 : i64} {
  func.func @kernel(%arg0: i32, %arg1: memref<1x342x4xbf16, #tpu.memory_space<vmem>>, %arg2: memref<9x4x4xbf16, #tpu.memory_space<vmem>>, %arg3: memref<1x4xf32, #tpu.memory_space<vmem>>, %arg4: memref<1x288x4xf32, #tpu.memory_space<vmem>>, %arg5: memref<1x288x4xf32, #tpu.memory_space<vmem>>) attributes {dimension_semantics = [#tpu.dimension_semantics<parallel>], iteration_bounds = array<i64: 2>, scalar_prefetch = 0 : i64, scratch_operands = 0 : i64, tpu.core_type = #tpu.core_type<tc>, window_params = [{transform_indices = @transform_0, window_bounds = array<i64: 1, 342, 4>}, {pipeline_mode = #tpu.pipeline_mode<synchronous>, transform_indices = @transform_1, window_bounds = array<i64: 9, 4, 4>}, {pipeline_mode = #tpu.pipeline_mode<synchronous>, transform_indices = @transform_2, window_bounds = array<i64: 1, 4>}, {transform_indices = @transform_3, window_bounds = array<i64: 1, 288, 4>}, {transform_indices = @transform_4, window_bounds = array<i64: 1, 288, 4>}]} {
    %cst = arith.constant 0.000000e+00 : f32
    %0 = vector.broadcast %cst : f32 to vector<288x4xf32>
    %c0 = arith.constant 0 : index
    %c0_0 = arith.constant 0 : index
    %c0_1 = arith.constant 0 : index
    %1 = vector.load %arg1[%c0, %c0_0, %c0_1] : memref<1x342x4xbf16, #tpu.memory_space<vmem>>, vector<1x288x4xbf16>
    %2 = vector.shape_cast %1 : vector<1x288x4xbf16> to vector<288x4xbf16>
    %c0_2 = arith.constant 0 : index
    %c0_3 = arith.constant 0 : index
    %c0_4 = arith.constant 0 : index
    %3 = vector.load %arg2[%c0_2, %c0_3, %c0_4] : memref<9x4x4xbf16, #tpu.memory_space<vmem>>, vector<1x4x4xbf16>
    %4 = vector.shape_cast %3 : vector<1x4x4xbf16> to vector<4x4xbf16>
    %cst_5 = arith.constant dense<0.000000e+00> : vector<288x4xf32>
    %5 = tpu.matmul %2, %4, %cst_5 {dimension_numbers = #tpu.dot_dimension_numbers<[1], [0], [0], [1], [0, 0, 1, 1], [], []>} : vector<288x4xbf16>, vector<4x4xbf16>, vector<288x4xf32> -> vector<288x4xf32>
    %6 = arith.addf %0, %5 : vector<288x4xf32>
    %c0_6 = arith.constant 0 : index
    %c1 = arith.constant 1 : index
    %c0_7 = arith.constant 0 : index
    %7 = vector.load %arg1[%c0_6, %c1, %c0_7] : memref<1x342x4xbf16, #tpu.memory_space<vmem>>, vector<1x288x4xbf16>
    %8 = vector.shape_cast %7 : vector<1x288x4xbf16> to vector<288x4xbf16>
    %c1_8 = arith.constant 1 : index
    %c0_9 = arith.constant 0 : index
    %c0_10 = arith.constant 0 : index
    %9 = vector.load %arg2[%c1_8, %c0_9, %c0_10] : memref<9x4x4xbf16, #tpu.memory_space<vmem>>, vector<1x4x4xbf16>
    %10 = vector.shape_cast %9 : vector<1x4x4xbf16> to vector<4x4xbf16>
    %cst_11 = arith.constant dense<0.000000e+00> : vector<288x4xf32>
    %11 = tpu.matmul %8, %10, %cst_11 {dimension_numbers = #tpu.dot_dimension_numbers<[1], [0], [0], [1], [0, 0, 1, 1], [], []>} : vector<288x4xbf16>, vector<4x4xbf16>, vector<288x4xf32> -> vector<288x4xf32>
    %12 = arith.addf %6, %11 : vector<288x4xf32>
    %c0_12 = arith.constant 0 : index
    %c2 = arith.constant 2 : index
    %c0_13 = arith.constant 0 : index
    %13 = vector.load %arg1[%c0_12, %c2, %c0_13] : memref<1x342x4xbf16, #tpu.memory_space<vmem>>, vector<1x288x4xbf16>
    %14 = vector.shape_cast %13 : vector<1x288x4xbf16> to vector<288x4xbf16>
    %c2_14 = arith.constant 2 : index
    %c0_15 = arith.constant 0 : index
    %c0_16 = arith.constant 0 : index
    %15 = vector.load %arg2[%c2_14, %c0_15, %c0_16] : memref<9x4x4xbf16, #tpu.memory_space<vmem>>, vector<1x4x4xbf16>
    %16 = vector.shape_cast %15 : vector<1x4x4xbf16> to vector<4x4xbf16>
    %cst_17 = arith.constant dense<0.000000e+00> : vector<288x4xf32>
    %17 = tpu.matmul %14, %16, %cst_17 {dimension_numbers = #tpu.dot_dimension_numbers<[1], [0], [0], [1], [0, 0, 1, 1], [], []>} : vector<288x4xbf16>, vector<4x4xbf16>, vector<288x4xf32> -> vector<288x4xf32>
    %18 = arith.addf %12, %17 : vector<288x4xf32>
    %c0_18 = arith.constant 0 : index
    %c18 = arith.constant 18 : index
    %c0_19 = arith.constant 0 : index
    %19 = vector.load %arg1[%c0_18, %c18, %c0_19] : memref<1x342x4xbf16, #tpu.memory_space<vmem>>, vector<1x288x4xbf16>
    %20 = vector.shape_cast %19 : vector<1x288x4xbf16> to vector<288x4xbf16>
    %c3 = arith.constant 3 : index
    %c0_20 = arith.constant 0 : index
    %c0_21 = arith.constant 0 : index
    %21 = vector.load %arg2[%c3, %c0_20, %c0_21] : memref<9x4x4xbf16, #tpu.memory_space<vmem>>, vector<1x4x4xbf16>
    %22 = vector.shape_cast %21 : vector<1x4x4xbf16> to vector<4x4xbf16>
    %cst_22 = arith.constant dense<0.000000e+00> : vector<288x4xf32>
    %23 = tpu.matmul %20, %22, %cst_22 {dimension_numbers = #tpu.dot_dimension_numbers<[1], [0], [0], [1], [0, 0, 1, 1], [], []>} : vector<288x4xbf16>, vector<4x4xbf16>, vector<288x4xf32> -> vector<288x4xf32>
    %24 = arith.addf %18, %23 : vector<288x4xf32>
    %c0_23 = arith.constant 0 : index
    %c19 = arith.constant 19 : index
    %c0_24 = arith.constant 0 : index
    %25 = vector.load %arg1[%c0_23, %c19, %c0_24] : memref<1x342x4xbf16, #tpu.memory_space<vmem>>, vector<1x288x4xbf16>
    %26 = vector.shape_cast %25 : vector<1x288x4xbf16> to vector<288x4xbf16>
    %c4 = arith.constant 4 : index
    %c0_25 = arith.constant 0 : index
    %c0_26 = arith.constant 0 : index
    %27 = vector.load %arg2[%c4, %c0_25, %c0_26] : memref<9x4x4xbf16, #tpu.memory_space<vmem>>, vector<1x4x4xbf16>
    %28 = vector.shape_cast %27 : vector<1x4x4xbf16> to vector<4x4xbf16>
    %cst_27 = arith.constant dense<0.000000e+00> : vector<288x4xf32>
    %29 = tpu.matmul %26, %28, %cst_27 {dimension_numbers = #tpu.dot_dimension_numbers<[1], [0], [0], [1], [0, 0, 1, 1], [], []>} : vector<288x4xbf16>, vector<4x4xbf16>, vector<288x4xf32> -> vector<288x4xf32>
    %30 = arith.addf %24, %29 : vector<288x4xf32>
    %c0_28 = arith.constant 0 : index
    %c20 = arith.constant 20 : index
    %c0_29 = arith.constant 0 : index
    %31 = vector.load %arg1[%c0_28, %c20, %c0_29] : memref<1x342x4xbf16, #tpu.memory_space<vmem>>, vector<1x288x4xbf16>
    %32 = vector.shape_cast %31 : vector<1x288x4xbf16> to vector<288x4xbf16>
    %c5 = arith.constant 5 : index
    %c0_30 = arith.constant 0 : index
    %c0_31 = arith.constant 0 : index
    %33 = vector.load %arg2[%c5, %c0_30, %c0_31] : memref<9x4x4xbf16, #tpu.memory_space<vmem>>, vector<1x4x4xbf16>
    %34 = vector.shape_cast %33 : vector<1x4x4xbf16> to vector<4x4xbf16>
    %cst_32 = arith.constant dense<0.000000e+00> : vector<288x4xf32>
    %35 = tpu.matmul %32, %34, %cst_32 {dimension_numbers = #tpu.dot_dimension_numbers<[1], [0], [0], [1], [0, 0, 1, 1], [], []>} : vector<288x4xbf16>, vector<4x4xbf16>, vector<288x4xf32> -> vector<288x4xf32>
    %36 = arith.addf %30, %35 : vector<288x4xf32>
    %c0_33 = arith.constant 0 : index
    %c36 = arith.constant 36 : index
    %c0_34 = arith.constant 0 : index
    %37 = vector.load %arg1[%c0_33, %c36, %c0_34] : memref<1x342x4xbf16, #tpu.memory_space<vmem>>, vector<1x288x4xbf16>
    %38 = vector.shape_cast %37 : vector<1x288x4xbf16> to vector<288x4xbf16>
    %c6 = arith.constant 6 : index
    %c0_35 = arith.constant 0 : index
    %c0_36 = arith.constant 0 : index
    %39 = vector.load %arg2[%c6, %c0_35, %c0_36] : memref<9x4x4xbf16, #tpu.memory_space<vmem>>, vector<1x4x4xbf16>
    %40 = vector.shape_cast %39 : vector<1x4x4xbf16> to vector<4x4xbf16>
    %cst_37 = arith.constant dense<0.000000e+00> : vector<288x4xf32>
    %41 = tpu.matmul %38, %40, %cst_37 {dimension_numbers = #tpu.dot_dimension_numbers<[1], [0], [0], [1], [0, 0, 1, 1], [], []>} : vector<288x4xbf16>, vector<4x4xbf16>, vector<288x4xf32> -> vector<288x4xf32>
    %42 = arith.addf %36, %41 : vector<288x4xf32>
    %c0_38 = arith.constant 0 : index
    %c37 = arith.constant 37 : index
    %c0_39 = arith.constant 0 : index
    %43 = vector.load %arg1[%c0_38, %c37, %c0_39] : memref<1x342x4xbf16, #tpu.memory_space<vmem>>, vector<1x288x4xbf16>
    %44 = vector.shape_cast %43 : vector<1x288x4xbf16> to vector<288x4xbf16>
    %c7 = arith.constant 7 : index
    %c0_40 = arith.constant 0 : index
    %c0_41 = arith.constant 0 : index
    %45 = vector.load %arg2[%c7, %c0_40, %c0_41] : memref<9x4x4xbf16, #tpu.memory_space<vmem>>, vector<1x4x4xbf16>
    %46 = vector.shape_cast %45 : vector<1x4x4xbf16> to vector<4x4xbf16>
    %cst_42 = arith.constant dense<0.000000e+00> : vector<288x4xf32>
    %47 = tpu.matmul %44, %46, %cst_42 {dimension_numbers = #tpu.dot_dimension_numbers<[1], [0], [0], [1], [0, 0, 1, 1], [], []>} : vector<288x4xbf16>, vector<4x4xbf16>, vector<288x4xf32> -> vector<288x4xf32>
    %48 = arith.addf %42, %47 : vector<288x4xf32>
    %c0_43 = arith.constant 0 : index
    %c38 = arith.constant 38 : index
    %c0_44 = arith.constant 0 : index
    %49 = vector.load %arg1[%c0_43, %c38, %c0_44] : memref<1x342x4xbf16, #tpu.memory_space<vmem>>, vector<1x288x4xbf16>
    %50 = vector.shape_cast %49 : vector<1x288x4xbf16> to vector<288x4xbf16>
    %c8 = arith.constant 8 : index
    %c0_45 = arith.constant 0 : index
    %c0_46 = arith.constant 0 : index
    %51 = vector.load %arg2[%c8, %c0_45, %c0_46] : memref<9x4x4xbf16, #tpu.memory_space<vmem>>, vector<1x4x4xbf16>
    %52 = vector.shape_cast %51 : vector<1x4x4xbf16> to vector<4x4xbf16>
    %cst_47 = arith.constant dense<0.000000e+00> : vector<288x4xf32>
    %53 = tpu.matmul %50, %52, %cst_47 {dimension_numbers = #tpu.dot_dimension_numbers<[1], [0], [0], [1], [0, 0, 1, 1], [], []>} : vector<288x4xbf16>, vector<4x4xbf16>, vector<288x4xf32> -> vector<288x4xf32>
    %54 = arith.addf %48, %53 : vector<288x4xf32>
    %c0_48 = arith.constant 0 : index
    %c0_49 = arith.constant 0 : index
    %55 = vector.load %arg3[%c0_48, %c0_49] : memref<1x4xf32, #tpu.memory_space<vmem>>, vector<1x4xf32>
    %56 = vector.broadcast %55 : vector<1x4xf32> to vector<288x4xf32>
    %57 = arith.addf %54, %56 : vector<288x4xf32>
    %cst_50 = arith.constant 0.00999999977 : f32
    %58 = vector.broadcast %cst_50 : f32 to vector<288x4xf32>
    %59 = arith.mulf %58, %57 : vector<288x4xf32>
    %60 = arith.maximumf %57, %59 : vector<288x4xf32>
    %c0_51 = arith.constant 0 : index
    %c0_52 = arith.constant 0 : index
    %c0_53 = arith.constant 0 : index
    %61 = vector.load %arg4[%c0_51, %c0_52, %c0_53] : memref<1x288x4xf32, #tpu.memory_space<vmem>>, vector<1x288x4xf32>
    %62 = vector.shape_cast %61 : vector<1x288x4xf32> to vector<288x4xf32>
    %63 = arith.addf %60, %62 : vector<288x4xf32>
    %c0_54 = arith.constant 0 : index
    %c0_55 = arith.constant 0 : index
    %c0_56 = arith.constant 0 : index
    %64 = vector.load %arg5[%c0_54, %c0_55, %c0_56] : memref<1x288x4xf32, #tpu.memory_space<vmem>>, vector<1x288x4xf32>
    %65 = vector.shape_cast %64 : vector<1x288x4xf32> to vector<288x4xf32>
    %66 = vector.shape_cast %63 : vector<288x4xf32> to vector<1x288x4xf32>
    tpu.vector_store %arg5[%c0_54, %c0_55, %c0_56], %66 {strides = array<i32>} : memref<1x288x4xf32, #tpu.memory_space<vmem>>, vector<1x288x4xf32>,
    return
  }
  func.func @transform_0(%arg0: i32) -> (i32, i32, i32) {
    %c0_i32 = arith.constant 0 : i32
    %c0_i32_0 = arith.constant 0 : i32
    %c0_i32_1 = arith.constant 0 : i32
    return %arg0, %c0_i32, %c0_i32_0 : i32, i32, i32
  }
  func.func @transform_1(%arg0: i32) -> (i32, i32, i32) {
    %c0_i32 = arith.constant 0 : i32
    %c0_i32_0 = arith.constant 0 : i32
    %c0_i32_1 = arith.constant 0 : i32
    %c0_i32_2 = arith.constant 0 : i32
    return %c0_i32, %c0_i32_0, %c0_i32_1 : i32, i32, i32
  }
  func.func @transform_2(%arg0: i32) -> (i32, i32) {
    %c0_i32 = arith.constant 0 : i32
    %c0_i32_0 = arith.constant 0 : i32
    %c0_i32_1 = arith.constant 0 : i32
    return %c0_i32, %c0_i32_0 : i32, i32
  }
  func.func @transform_3(%arg0: i32) -> (i32, i32, i32) {
    %c0_i32 = arith.constant 0 : i32
    %c0_i32_0 = arith.constant 0 : i32
    %c0_i32_1 = arith.constant 0 : i32
    return %arg0, %c0_i32, %c0_i32_0 : i32, i32, i32
  }
  func.func @transform_4(%arg0: i32) -> (i32, i32, i32) {
    %c0_i32 = arith.constant 0 : i32
    %c0_i32_0 = arith.constant 0 : i32
    %c0_i32_1 = arith.constant 0 : i32
    return %arg0, %c0_i32, %c0_i32_0 : i32, i32, i32
  }
}

</mosaic_0001>

<llo_original>
// kernel: reverse.1
$region0: #{reverse.1}
  %s0 = inlined_call_operand.vmem [shape: f32[2,4,16,7], index: 0, kind: input, shape index: {}]
  %s1 = inlined_call_operand.vmem [shape: f32[2,4,16,7], index: 1, kind: output, shape index: {}]
  $region1: #{reverse.1} parent=0
    #allocation0 [shape = 'u8[65536]{0}', space=vmem, size = 0x10000, scoped, tag = 'operand span for operand 0']
    #allocation1 [shape = 'u8[32768]{0}', space=vmem, size = 0x8000, scoped, tag = 'operand span for operand 1']
    %s2 = scalar_lea.vmem [#allocation0], 8
    // Predicated region
    $region2: #{reverse.1} parent=1 // pred_check
      _
    $region3: #{reverse.1} parent=1 // pred_check_branch
      %4 = sbr.rel (0) target = $region5
    $region4: #{reverse.1} parent=1 // pred_region
      // Predicated region
      $region6: #{reverse.1} parent=4 // pred_check
        _
      $region7: #{reverse.1} parent=4 // pred_check_branch
        %6 = sbr.rel (0) target = $region9
      $region8: #{reverse.1} parent=4 // pred_region
        // Predicated region
        $region21: #{reverse.1} parent=8 // pred_check
          _
        $region22: #{reverse.1} parent=8 // pred_check_branch
          %36 = sbr.rel (0) target = $region24
        $region23: #{reverse.1} parent=8 // pred_region
          loop: start=0, step=1, limit=1
          $region25: #{reverse.1} parent=23 // loop_pre_header
            _
          $region26: #{reverse.1} parent=23 // loop_header
            %s38 = sphi 0, %s42
            %p39 = scmp.ge.s32.totalorder %s38, 1
            %s43 = sphi %s0, %s0
            %s44 = sphi %s2, %s2
          $region27: #{reverse.1} parent=23 // loop_header_branch
            %41 = sbr.rel (%p39) target = $region31
          $region28: #{reverse.1} parent=23 // loop_body
            %v45 = vld [vmem:[%s43] sm:$0xff]
            %46 = vst [vmem:[%s44] sm:$0xff] %v45
            %v47 = vld [vmem:[%s43 + $0x8] sm:$0xff]
            %48 = vst [vmem:[%s44 + $0x10] sm:$0xff] %v47
            %v49 = vld [vmem:[%s43 + $0x10] sm:$0xff]
            %50 = vst [vmem:[%s44 + $0x20] sm:$0xff] %v49
            %v51 = vld [vmem:[%s43 + $0x18] sm:$0xff]
            %52 = vst [vmem:[%s44 + $0x30] sm:$0xff] %v51
            %v53 = vld [vmem:[%s43 + $0x20] sm:$0xff]
            %54 = vst [vmem:[%s44 + $0x40] sm:$0xff] %v53
            %v55 = vld [vmem:[%s43 + $0x28] sm:$0xff]
            %56 = vst [vmem:[%s44 + $0x50] sm:$0xff] %v55
            %v57 = vld [vmem:[%s43 + $0x30] sm:$0xff]
            %58 = vst [vmem:[%s44 + $0x60] sm:$0xff] %v57
            %v59 = vld [vmem:[%s43 + $0x38] sm:$0xff]
            %60 = vst [vmem:[%s44 + $0x70] sm:$0xff] %v59
          $region29: #{reverse.1} parent=23 // loop_footer
            %s42 = sadd.s32 1, %s38
          $region30: #{reverse.1} parent=23 // loop_footer_branch
            %37 = sbr.rel target = $region26
          $region31: #{reverse.1} parent=23 // loop_exit
            _
        $region24: #{reverse.1} parent=8 // pred_fallthru
          _
        // Predicated region
        $region32: #{reverse.1} parent=8 // pred_check
          _
        $region33: #{reverse.1} parent=8 // pred_check_branch
          %62 = sbr.rel target = $region35
        $region34: #{reverse.1} parent=8 // pred_region
          _
        $region35: #{reverse.1} parent=8 // pred_fallthru
          _
      $region9: #{reverse.1} parent=4 // pred_fallthru
        _
      // Predicated region
      $region10: #{reverse.1} parent=4 // pred_check
        _
      $region11: #{reverse.1} parent=4 // pred_check_branch
        %8 = sbr.rel target = $region13
      $region12: #{reverse.1} parent=4 // pred_region
        %s10 = ssub.s32 256, 1
        loop: start=0, step=1, limit=1
        $region14: #{reverse.1} parent=12 // loop_pre_header
          _
        $region15: #{reverse.1} parent=12 // loop_header
          %s12 = sphi 0, %s16
          %p13 = scmp.ge.s32.totalorder %s12, 1
          %s17 = sphi %s0, %s0
          %s18 = sphi %s2, %s2
        $region16: #{reverse.1} parent=12 // loop_header_branch
          %15 = sbr.rel (%p13) target = $region20
        $region17: #{reverse.1} parent=12 // loop_body
          %v19 = vld [vmem:[%s17] sm:%s10]
          %20 = vst [vmem:[%s18] sm:%s10] %v19
          %v21 = vld [vmem:[%s17 + $0x8] sm:%s10]
          %22 = vst [vmem:[%s18 + $0x10] sm:%s10] %v21
          %v23 = vld [vmem:[%s17 + $0x10] sm:%s10]
          %24 = vst [vmem:[%s18 + $0x20] sm:%s10] %v23
          %v25 = vld [vmem:[%s17 + $0x18] sm:%s10]
          %26 = vst [vmem:[%s18 + $0x30] sm:%s10] %v25
          %v27 = vld [vmem:[%s17 + $0x20] sm:%s10]
          %28 = vst [vmem:[%s18 + $0x40] sm:%s10] %v27
          %v29 = vld [vmem:[%s17 + $0x28] sm:%s10]
          %30 = vst [vmem:[%s18 + $0x50] sm:%s10] %v29
          %v31 = vld [vmem:[%s17 + $0x30] sm:%s10]
          %32 = vst [vmem:[%s18 + $0x60] sm:%s10] %v31
          %v33 = vld [vmem:[%s17 + $0x38] sm:%s10]
          %34 = vst [vmem:[%s18 + $0x70] sm:%s10] %v33
        $region18: #{reverse.1} parent=12 // loop_footer
          %s16 = sadd.s32 1, %s12
        $region19: #{reverse.1} parent=12 // loop_footer_branch
          %11 = sbr.rel target = $region15
        $region20: #{reverse.1} parent=12 // loop_exit
          _
      $region13: #{reverse.1} parent=4 // pred_fallthru
        _
    $region5: #{reverse.1} parent=1 // pred_fallthru
      _
    %63 = vnop
    %s64 = scalar_lea.vmem [#allocation0], 7
    %v65 = vld [vmem:[%s64] ss:$-1 sm:$0xff]
    %v66 = vrot.slane %v65, 1
    %67 = vst [vmem:[#allocation1] sm:$0xff] %v66
    %s68 = scalar_lea.vmem [#allocation0], 8
    %s69 = scalar_lea.vmem %s68, 7 [#allocation0]
    %v70 = vld [vmem:[%s69] ss:$-1 sm:$0xff]
    %v71 = vrot.slane %v70, 1
    %v72 = vlaneseq
    %v73 = vshrl.u32 %v72, 7
    %vm74 = vcmp.lt.s32.totalorder %v73, 7
    %75 = vst.msk [vmem:[#allocation1] sm:$0xff] %vm74, %v71
    %s76 = scalar_lea.vmem [#allocation1], 8
    %s77 = scalar_lea.vmem [#allocation0], 16
    %s78 = scalar_lea.vmem %s77, 7 [#allocation0]
    %v79 = vld [vmem:[%s78] ss:$-1 sm:$0xff]
    %v80 = vrot.slane %v79, 1
    %81 = vst [vmem:[%s76] sm:$0xff] %v80
    %s82 = scalar_lea.vmem %s77, 8 [#allocation0]
    %s83 = scalar_lea.vmem %s82, 7 [#allocation0]
    %v84 = vld [vmem:[%s83] ss:$-1 sm:$0xff]
    %v85 = vrot.slane %v84, 1
    %v86 = vlaneseq
    %v87 = vshrl.u32 %v86, 7
    %vm88 = vcmp.lt.s32.totalorder %v87, 7
    %89 = vst.msk [vmem:[%s76] sm:$0xff] %vm88, %v85
    %s90 = scalar_lea.vmem [#allocation1], 16
    %s91 = scalar_lea.vmem [#allocation0], 32
    %s92 = scalar_lea.vmem %s91, 7 [#allocation0]
    %v93 = vld [vmem:[%s92] ss:$-1 sm:$0xff]
    %v94 = vrot.slane %v93, 1
    %95 = vst [vmem:[%s90] sm:$0xff] %v94
    %s96 = scalar_lea.vmem %s91, 8 [#allocation0]
    %s97 = scalar_lea.vmem %s96, 7 [#allocation0]
    %v98 = vld [vmem:[%s97] ss:$-1 sm:$0xff]
    %v99 = vrot.slane %v98, 1
    %v100 = vlaneseq
    %v101 = vshrl.u32 %v100, 7
    %vm102 = vcmp.lt.s32.totalorder %v101, 7
    %103 = vst.msk [vmem:[%s90] sm:$0xff] %vm102, %v99
    %s104 = scalar_lea.vmem [#allocation1], 24
    %s105 = scalar_lea.vmem [#allocation0], 48
    %s106 = scalar_lea.vmem %s105, 7 [#allocation0]
    %v107 = vld [vmem:[%s106] ss:$-1 sm:$0xff]
    %v108 = vrot.slane %v107, 1
    %109 = vst [vmem:[%s104] sm:$0xff] %v108
    %s110 = scalar_lea.vmem %s105, 8 [#allocation0]
    %s111 = scalar_lea.vmem %s110, 7 [#allocation0]
    %v112 = vld [vmem:[%s111] ss:$-1 sm:$0xff]
    %v113 = vrot.slane %v112, 1
    %v114 = vlaneseq
    %v115 = vshrl.u32 %v114, 7
    %vm116 = vcmp.lt.s32.totalorder %v115, 7
    %117 = vst.msk [vmem:[%s104] sm:$0xff] %vm116, %v113
    %s118 = scalar_lea.vmem [#allocation1], 32
    %s119 = scalar_lea.vmem [#allocation0], 64
    %s120 = scalar_lea.vmem %s119, 7 [#allocation0]
    %v121 = vld [vmem:[%s120] ss:$-1 sm:$0xff]
    %v122 = vrot.slane %v121, 1
    %123 = vst [vmem:[%s118] sm:$0xff] %v122
    %s124 = scalar_lea.vmem %s119, 8 [#allocation0]
    %s125 = scalar_lea.vmem %s124, 7 [#allocation0]
    %v126 = vld [vmem:[%s125] ss:$-1 sm:$0xff]
    %v127 = vrot.slane %v126, 1
    %v128 = vlaneseq
    %v129 = vshrl.u32 %v128, 7
    %vm130 = vcmp.lt.s32.totalorder %v129, 7
    %131 = vst.msk [vmem:[%s118] sm:$0xff] %vm130, %v127
    %s132 = scalar_lea.vmem [#allocation1], 40
    %s133 = scalar_lea.vmem [#allocation0], 80
    %s134 = scalar_lea.vmem %s133, 7 [#allocation0]
    %v135 = vld [vmem:[%s134] ss:$-1 sm:$0xff]
    %v136 = vrot.slane %v135, 1
    %137 = vst [vmem:[%s132] sm:$0xff] %v136
    %s138 = scalar_lea.vmem %s133, 8 [#allocation0]
    %s139 = scalar_lea.vmem %s138, 7 [#allocation0]
    %v140 = vld [vmem:[%s139] ss:$-1 sm:$0xff]
    %v141 = vrot.slane %v140, 1
    %v142 = vlaneseq
    %v143 = vshrl.u32 %v142, 7
    %vm144 = vcmp.lt.s32.totalorder %v143, 7
    %145 = vst.msk [vmem:[%s132] sm:$0xff] %vm144, %v141
    %s146 = scalar_lea.vmem [#allocation1], 48
    %s147 = scalar_lea.vmem [#allocation0], 96
    %s148 = scalar_lea.vmem %s147, 7 [#allocation0]
    %v149 = vld [vmem:[%s148] ss:$-1 sm:$0xff]
    %v150 = vrot.slane %v149, 1
    %151 = vst [vmem:[%s146] sm:$0xff] %v150
    %s152 = scalar_lea.vmem %s147, 8 [#allocation0]
    %s153 = scalar_lea.vmem %s152, 7 [#allocation0]
    %v154 = vld [vmem:[%s153] ss:$-1 sm:$0xff]
    %v155 = vrot.slane %v154, 1
    %v156 = vlaneseq
    %v157 = vshrl.u32 %v156, 7
    %vm158 = vcmp.lt.s32.totalorder %v157, 7
    %159 = vst.msk [vmem:[%s146] sm:$0xff] %vm158, %v155
    %s160 = scalar_lea.vmem [#allocation1], 56
    %s161 = scalar_lea.vmem [#allocation0], 112
    %s162 = scalar_lea.vmem %s161, 7 [#allocation0]
    %v163 = vld [vmem:[%s162] ss:$-1 sm:$0xff]
    %v164 = vrot.slane %v163, 1
    %165 = vst [vmem:[%s160] sm:$0xff] %v164
    %s166 = scalar_lea.vmem %s161, 8 [#allocation0]
    %s167 = scalar_lea.vmem %s166, 7 [#allocation0]
    %v168 = vld [vmem:[%s167] ss:$-1 sm:$0xff]
    %v169 = vrot.slane %v168, 1
    %v170 = vlaneseq
    %v171 = vshrl.u32 %v170, 7
    %vm172 = vcmp.lt.s32.totalorder %v171, 7
    %173 = vst.msk [vmem:[%s160] sm:$0xff] %vm172, %v169
    // Predicated region
    $region36: #{reverse.1} parent=1 // pred_check
      _
    $region37: #{reverse.1} parent=1 // pred_check_branch
      %175 = sbr.rel (0) target = $region39
    $region38: #{reverse.1} parent=1 // pred_region
      // Predicated region
      $region40: #{reverse.1} parent=38 // pred_check
        _
      $region41: #{reverse.1} parent=38 // pred_check_branch
        %177 = sbr.rel (0) target = $region43
      $region42: #{reverse.1} parent=38 // pred_region
        // Predicated region
        $region55: #{reverse.1} parent=42 // pred_check
          _
        $region56: #{reverse.1} parent=42 // pred_check_branch
          %207 = sbr.rel (0) target = $region58
        $region57: #{reverse.1} parent=42 // pred_region
          loop: start=0, step=1, limit=1
          $region59: #{reverse.1} parent=57 // loop_pre_header
            _
          $region60: #{reverse.1} parent=57 // loop_header
            %s209 = sphi 0, %s213
            %p210 = scmp.ge.s32.totalorder %s209, 1
            %s214 = sphi [#allocation1], [#allocation1]
            %s215 = sphi %s1, %s1
          $region61: #{reverse.1} parent=57 // loop_header_branch
            %212 = sbr.rel (%p210) target = $region65
          $region62: #{reverse.1} parent=57 // loop_body
            %v216 = vld [vmem:[%s214] sm:$0xff]
            %217 = vst [vmem:[%s215] sm:$0xff] %v216
            %v218 = vld [vmem:[%s214 + $0x8] sm:$0xff]
            %219 = vst [vmem:[%s215 + $0x8] sm:$0xff] %v218
            %v220 = vld [vmem:[%s214 + $0x10] sm:$0xff]
            %221 = vst [vmem:[%s215 + $0x10] sm:$0xff] %v220
            %v222 = vld [vmem:[%s214 + $0x18] sm:$0xff]
            %223 = vst [vmem:[%s215 + $0x18] sm:$0xff] %v222
            %v224 = vld [vmem:[%s214 + $0x20] sm:$0xff]
            %225 = vst [vmem:[%s215 + $0x20] sm:$0xff] %v224
            %v226 = vld [vmem:[%s214 + $0x28] sm:$0xff]
            %227 = vst [vmem:[%s215 + $0x28] sm:$0xff] %v226
            %v228 = vld [vmem:[%s214 + $0x30] sm:$0xff]
            %229 = vst [vmem:[%s215 + $0x30] sm:$0xff] %v228
            %v230 = vld [vmem:[%s214 + $0x38] sm:$0xff]
            %231 = vst [vmem:[%s215 + $0x38] sm:$0xff] %v230
          $region63: #{reverse.1} parent=57 // loop_footer
            %s213 = sadd.s32 1, %s209
          $region64: #{reverse.1} parent=57 // loop_footer_branch
            %208 = sbr.rel target = $region60
          $region65: #{reverse.1} parent=57 // loop_exit
            _
        $region58: #{reverse.1} parent=42 // pred_fallthru
          _
        // Predicated region
        $region66: #{reverse.1} parent=42 // pred_check
          _
        $region67: #{reverse.1} parent=42 // pred_check_branch
          %233 = sbr.rel target = $region69
        $region68: #{reverse.1} parent=42 // pred_region
          _
        $region69: #{reverse.1} parent=42 // pred_fallthru
          _
      $region43: #{reverse.1} parent=38 // pred_fallthru
        _
      // Predicated region
      $region44: #{reverse.1} parent=38 // pred_check
        _
      $region45: #{reverse.1} parent=38 // pred_check_branch
        %179 = sbr.rel target = $region47
      $region46: #{reverse.1} parent=38 // pred_region
        %s181 = ssub.s32 256, 1
        loop: start=0, step=1, limit=1
        $region48: #{reverse.1} parent=46 // loop_pre_header
          _
        $region49: #{reverse.1} parent=46 // loop_header
          %s183 = sphi 0, %s187
          %p184 = scmp.ge.s32.totalorder %s183, 1
          %s188 = sphi [#allocation1], [#allocation1]
          %s189 = sphi %s1, %s1
        $region50: #{reverse.1} parent=46 // loop_header_branch
          %186 = sbr.rel (%p184) target = $region54
        $region51: #{reverse.1} parent=46 // loop_body
          %v190 = vld [vmem:[%s188] sm:%s181]
          %191 = vst [vmem:[%s189] sm:%s181] %v190
          %v192 = vld [vmem:[%s188 + $0x8] sm:%s181]
          %193 = vst [vmem:[%s189 + $0x8] sm:%s181] %v192
          %v194 = vld [vmem:[%s188 + $0x10] sm:%s181]
          %195 = vst [vmem:[%s189 + $0x10] sm:%s181] %v194
          %v196 = vld [vmem:[%s188 + $0x18] sm:%s181]
          %197 = vst [vmem:[%s189 + $0x18] sm:%s181] %v196
          %v198 = vld [vmem:[%s188 + $0x20] sm:%s181]
          %199 = vst [vmem:[%s189 + $0x20] sm:%s181] %v198
          %v200 = vld [vmem:[%s188 + $0x28] sm:%s181]
          %201 = vst [vmem:[%s189 + $0x28] sm:%s181] %v200
          %v202 = vld [vmem:[%s188 + $0x30] sm:%s181]
          %203 = vst [vmem:[%s189 + $0x30] sm:%s181] %v202
          %v204 = vld [vmem:[%s188 + $0x38] sm:%s181]
          %205 = vst [vmem:[%s189 + $0x38] sm:%s181] %v204
        $region52: #{reverse.1} parent=46 // loop_footer
          %s187 = sadd.s32 1, %s183
        $region53: #{reverse.1} parent=46 // loop_footer_branch
          %182 = sbr.rel target = $region49
        $region54: #{reverse.1} parent=46 // loop_exit
          _
      $region47: #{reverse.1} parent=38 // pred_fallthru
        _
    $region39: #{reverse.1} parent=1 // pred_fallthru
      _
    %234 = vnop

// kernel: double_conv_forward.4
$region0: #{double_conv_forward.4}
  #allocation0 [shape = 'u32[]', space=smem, size = 0x4, offset = 0x4, fixed_abs, tag = 'smem constant byte address 0x4 - core index']
  #allocation1 [shape = 'u32[144,128]{1,0:T(1,128)}', space=vmem, size = 0x12000, scoped, tag = 'internal scratch']
  %s0 = inlined_call_operand.vmem [shape: bf16[288,8], index: 0, kind: input, shape index: {}]
  %s1 = inlined_call_operand.vmem [shape: bf16[8,8], index: 1, kind: input, shape index: {}]
  %s2 = inlined_call_operand.vmem [shape: f32[1,8], index: 2, kind: input, shape index: {}]
  %s3 = inlined_call_operand.vmem [shape: bf16[8,8], index: 3, kind: input, shape index: {}]
  %s4 = inlined_call_operand.vmem [shape: f32[1,8], index: 4, kind: input, shape index: {}]
  %s5 = inlined_call_operand.vmem [shape: f32[288,8], index: 5, kind: output, shape index: {}]
  %s6 = sld [smem:[#allocation0]]
  $region30: #{double_conv_forward.4} parent=0
    _
  %s8 = ssub.s32 1, %s6
  %s9 = scalar_select 0, %s8, %s6
  // Predicated region
  $region2: #{double_conv_forward.4} parent=0 // pred_check
    _
  $region3: #{double_conv_forward.4} parent=0 // pred_check_branch
    %11 = sbr.rel (0) target = $region5
  $region4: #{double_conv_forward.4} parent=0 // pred_region
    _
  $region5: #{double_conv_forward.4} parent=0 // pred_fallthru
    _
  // Predicated region
  $region6: #{double_conv_forward.4} parent=0 // pred_check
    _
  $region7: #{double_conv_forward.4} parent=0 // pred_check_branch
    %13 = sbr.rel (0) target = $region9
  $region8: #{double_conv_forward.4} parent=0 // pred_region
    _
  $region9: #{double_conv_forward.4} parent=0 // pred_fallthru
    _
  // Predicated region
  $region10: #{double_conv_forward.4} parent=0 // pred_check
    _
  $region11: #{double_conv_forward.4} parent=0 // pred_check_branch
    %15 = sbr.rel (0) target = $region13
  $region12: #{double_conv_forward.4} parent=0 // pred_region
    _
  $region13: #{double_conv_forward.4} parent=0 // pred_fallthru
    _
  // Predicated region
  $region14: #{double_conv_forward.4} parent=0 // pred_check
    _
  $region15: #{double_conv_forward.4} parent=0 // pred_check_branch
    %17 = sbr.rel (0) target = $region17
  $region16: #{double_conv_forward.4} parent=0 // pred_region
    _
  $region17: #{double_conv_forward.4} parent=0 // pred_fallthru
    _
  // Predicated region
  $region18: #{double_conv_forward.4} parent=0 // pred_check
    _
  $region19: #{double_conv_forward.4} parent=0 // pred_check_branch
    %19 = sbr.rel (0) target = $region21
  $region20: #{double_conv_forward.4} parent=0 // pred_region
    _
  $region21: #{double_conv_forward.4} parent=0 // pred_fallthru
    _
  %v21 = vld [vmem:[%s0] sm:$0xf]
  %v22 = vld [vmem:[%s0 + $0x4] sm:$0xf]
  %v23 = vld [vmem:[%s0 + $0x8] sm:$0xf]
  %v24 = vld [vmem:[%s0 + $0xc] sm:$0xf]
  %v25 = vld [vmem:[%s0 + $0x10] sm:$0xf]
  %v26 = vld [vmem:[%s0 + $0x14] sm:$0xf]
  %v27 = vld [vmem:[%s0 + $0x18] sm:$0xf]
  %v28 = vld [vmem:[%s0 + $0x1c] sm:$0xf]
  %v29 = vld [vmem:[%s0 + $0x20] sm:$0xf]
  %v30 = vld [vmem:[%s0 + $0x24] sm:$0xf]
  %v31 = vld [vmem:[%s0 + $0x28] sm:$0xf]
  %v32 = vld [vmem:[%s0 + $0x2c] sm:$0xf]
  %v33 = vld [vmem:[%s0 + $0x30] sm:$0xf]
  %v34 = vld [vmem:[%s0 + $0x34] sm:$0xf]
  %v35 = vld [vmem:[%s0 + $0x38] sm:$0xf]
  %v36 = vld [vmem:[%s0 + $0x3c] sm:$0xf]
  %v37 = vld [vmem:[%s0 + $0x40] sm:$0xf]
  %v38 = vld [vmem:[%s0 + $0x44] sm:$0xf]
  %v39 = vld [vmem:[%s0 + $0x48] sm:$0xf]
  %v40 = vld [vmem:[%s0 + $0x4c] sm:$0xf]
  %v41 = vld [vmem:[%s0 + $0x50] sm:$0xf]
  %v42 = vld [vmem:[%s0 + $0x54] sm:$0xf]
  %v43 = vld [vmem:[%s0 + $0x58] sm:$0xf]
  %v44 = vld [vmem:[%s0 + $0x5c] sm:$0xf]
  %v45 = vld [vmem:[%s0 + $0x60] sm:$0xf]
  %v46 = vld [vmem:[%s0 + $0x64] sm:$0xf]
  %v47 = vld [vmem:[%s0 + $0x68] sm:$0xf]
  %v48 = vld [vmem:[%s0 + $0x6c] sm:$0xf]
  %v49 = vld [vmem:[%s0 + $0x70] sm:$0xf]
  %v50 = vld [vmem:[%s0 + $0x74] sm:$0xf]
  %v51 = vld [vmem:[%s0 + $0x78] sm:$0xf]
  %v52 = vld [vmem:[%s0 + $0x7c] sm:$0xf]
  %v53 = vld [vmem:[%s0 + $0x80] sm:$0xf]
  %v54 = vld [vmem:[%s0 + $0x84] sm:$0xf]
  %v55 = vld [vmem:[%s0 + $0x88] sm:$0xf]
  %v56 = vld [vmem:[%s0 + $0x8c] sm:$0xf]
  %v57 = vld [vmem:[%s1] sm:$0xf]
  %v58 = vld [vmem:[%s2] sm:$0x1]
  %v60 = vlaneseq
  %v61 = vshrl.u32 %v60, 7
  %v62 = vsub.s32 0, %v61
  %v63 = vrot.slane %v58, %v62
  %v101 = vunpack.c.l.b16 %v21
  %v102 = vunpack.c.l.b16 %v22
  %v103 = vunpack.c.l.b16 %v23
  %v104 = vunpack.c.l.b16 %v24
  %v105 = vunpack.c.l.b16 %v25
  %v106 = vunpack.c.l.b16 %v26
  %v107 = vunpack.c.l.b16 %v27
  %v108 = vunpack.c.l.b16 %v28
  %v109 = vunpack.c.l.b16 %v29
  %v110 = vunpack.c.l.b16 %v30
  %v111 = vunpack.c.l.b16 %v31
  %v112 = vunpack.c.l.b16 %v32
  %v113 = vunpack.c.l.b16 %v33
  %v114 = vunpack.c.l.b16 %v34
  %v115 = vunpack.c.l.b16 %v35
  %v116 = vunpack.c.l.b16 %v36
  %v117 = vunpack.c.l.b16 %v37
  %v118 = vunpack.c.l.b16 %v38
  %v119 = vunpack.c.l.b16 %v39
  %v120 = vunpack.c.l.b16 %v40
  %v121 = vunpack.c.l.b16 %v41
  %v122 = vunpack.c.l.b16 %v42
  %v123 = vunpack.c.l.b16 %v43
  %v124 = vunpack.c.l.b16 %v44
  %v125 = vunpack.c.l.b16 %v45
  %v126 = vunpack.c.l.b16 %v46
  %v127 = vunpack.c.l.b16 %v47
  %v128 = vunpack.c.l.b16 %v48
  %v129 = vunpack.c.l.b16 %v49
  %v130 = vunpack.c.l.b16 %v50
  %v131 = vunpack.c.l.b16 %v51
  %v132 = vunpack.c.l.b16 %v52
  %v133 = vunpack.c.l.b16 %v53
  %v134 = vunpack.c.l.b16 %v54
  %v135 = vunpack.c.l.b16 %v55
  %v136 = vunpack.c.l.b16 %v56
  %v137 = vpack.c.b16 %v102, %v101
  %v138 = vpack.c.b16 %v104, %v103
  %v139 = vpack.c.b16 %v106, %v105
  %v140 = vpack.c.b16 %v108, %v107
  %v141 = vpack.c.b16 %v110, %v109
  %v142 = vpack.c.b16 %v112, %v111
  %v143 = vpack.c.b16 %v114, %v113
  %v144 = vpack.c.b16 %v116, %v115
  %v145 = vpack.c.b16 %v118, %v117
  %v146 = vpack.c.b16 %v120, %v119
  %v147 = vpack.c.b16 %v122, %v121
  %v148 = vpack.c.b16 %v124, %v123
  %v149 = vpack.c.b16 %v126, %v125
  %v150 = vpack.c.b16 %v128, %v127
  %v151 = vpack.c.b16 %v130, %v129
  %v152 = vpack.c.b16 %v132, %v131
  %v153 = vpack.c.b16 %v134, %v133
  %v154 = vpack.c.b16 %v136, %v135
  %vm155 = vcmask 64512
  %v157 = vsel %vm155, %v137, 0
  %v160 = vsel %vm155, %v138, 0
  %v163 = vsel %vm155, %v139, 0
  %v166 = vsel %vm155, %v140, 0
  %v169 = vsel %vm155, %v141, 0
  %v172 = vsel %vm155, %v142, 0
  %v175 = vsel %vm155, %v143, 0
  %v178 = vsel %vm155, %v144, 0
  %v181 = vsel %vm155, %v145, 0
  %v184 = vsel %vm155, %v146, 0
  %v187 = vsel %vm155, %v147, 0
  %v190 = vsel %vm155, %v148, 0
  %v193 = vsel %vm155, %v149, 0
  %v196 = vsel %vm155, %v150, 0
  %v199 = vsel %vm155, %v151, 0
  %v202 = vsel %vm155, %v152, 0
  %v205 = vsel %vm155, %v153, 0
  %v208 = vsel %vm155, %v154, 0
  %vm210 = vcmask 1043456
  %v212 = vsel %vm210, %v57, 0
  %214 = vmatprep.subr.bf16.mxu0 0
  %215 = vmatpush1.bf16.msra.mxu0 0
  %216 = vmatprep.subr.bf16.mxu0 0
  %217 = vmatpush1.bf16.msra.mxu0 0
  %218 = vmatprep.subr.bf16.mxu0 0
  %219 = vmatpush1.bf16.msra.mxu0 0
  %220 = vmatprep.subr.bf16.mxu0 0
  %221 = vmatpush1.bf16.msra.mxu0 0
  %222 = vmatprep.subr.bf16.mxu0 0
  %223 = vmatpush1.bf16.msra.mxu0 0
  %224 = vmatprep.subr.bf16.mxu0 0
  %225 = vmatpush1.bf16.msra.mxu0 0
  %226 = vmatprep.subr.bf16.mxu0 0
  %227 = vmatpush1.bf16.msra.mxu0 0
  %228 = vmatprep.subr.bf16.mxu0 0
  %229 = vmatpush1.bf16.msra.mxu0 %v212
  %230 = vmatprep.subr.bf16.mxu0 0
  %231 = vmatpush2.bf16.msra.mxu0 0
  %232 = vmatprep.subr.bf16.mxu0 0
  %233 = vmatpush2.bf16.msra.mxu0 0
  %234 = vmatprep.subr.bf16.mxu0 0
  %235 = vmatpush2.bf16.msra.mxu0 0
  %236 = vmatprep.subr.bf16.mxu0 0
  %237 = vmatpush2.bf16.msra.mxu0 0
  %238 = vmatprep.subr.bf16.mxu0 0
  %239 = vmatpush2.bf16.msra.mxu0 0
  %240 = vmatprep.subr.bf16.mxu0 0
  %241 = vmatpush2.bf16.msra.mxu0 0
  %242 = vmatprep.subr.bf16.mxu0 0
  %243 = vmatpush2.bf16.msra.mxu0 0
  %244 = vmatprep.subr.bf16.mxu0 0
  %245 = vmatpush2.bf16.msra.mxu0 0
  %246 = vmatprep.mubr.bf16.mxu0 0
  %247 = vmatmul.mubr.bf16.gmra.mxu0 %v157
  %v248 = vpop.f32.mrf.mxu0
  %v249 = vadd.f32 %v63, %v248
  %v250 = vpop.f32.mrf.mxu0
  %v251 = vpop.f32.mrf.mxu0
  %v252 = vadd.f32 %v63, %v251
  %v253 = vpop.f32.mrf.mxu0
  %254 = vmatprep.mubr.bf16.mxu0 0
  %255 = vmatmul.mubr.bf16.gmra.mxu0 %v160
  %v256 = vpop.f32.mrf.mxu0
  %v257 = vadd.f32 %v63, %v256
  %v258 = vpop.f32.mrf.mxu0
  %v259 = vpop.f32.mrf.mxu0
  %v260 = vadd.f32 %v63, %v259
  %v261 = vpop.f32.mrf.mxu0
  %262 = vmatprep.mubr.bf16.mxu0 0
  %263 = vmatmul.mubr.bf16.gmra.mxu0 %v163
  %v264 = vpop.f32.mrf.mxu0
  %v265 = vadd.f32 %v63, %v264
  %v266 = vpop.f32.mrf.mxu0
  %v267 = vpop.f32.mrf.mxu0
  %v268 = vadd.f32 %v63, %v267
  %v269 = vpop.f32.mrf.mxu0
  %270 = vmatprep.mubr.bf16.mxu0 0
  %271 = vmatmul.mubr.bf16.gmra.mxu0 %v166
  %v272 = vpop.f32.mrf.mxu0
  %v273 = vadd.f32 %v63, %v272
  %v274 = vpop.f32.mrf.mxu0
  %v275 = vpop.f32.mrf.mxu0
  %v276 = vadd.f32 %v63, %v275
  %v277 = vpop.f32.mrf.mxu0
  %278 = vmatprep.mubr.bf16.mxu0 0
  %279 = vmatmul.mubr.bf16.gmra.mxu0 %v169
  %v280 = vpop.f32.mrf.mxu0
  %v281 = vadd.f32 %v63, %v280
  %v282 = vpop.f32.mrf.mxu0
  %v283 = vpop.f32.mrf.mxu0
  %v284 = vadd.f32 %v63, %v283
  %v285 = vpop.f32.mrf.mxu0
  %286 = vmatprep.mubr.bf16.mxu0 0
  %287 = vmatmul.mubr.bf16.gmra.mxu0 %v172
  %v288 = vpop.f32.mrf.mxu0
  %v289 = vadd.f32 %v63, %v288
  %v290 = vpop.f32.mrf.mxu0
  %v291 = vpop.f32.mrf.mxu0
  %v292 = vadd.f32 %v63, %v291
  %v293 = vpop.f32.mrf.mxu0
  %294 = vmatprep.mubr.bf16.mxu0 0
  %295 = vmatmul.mubr.bf16.gmra.mxu0 %v175
  %v296 = vpop.f32.mrf.mxu0
  %v297 = vadd.f32 %v63, %v296
  %v298 = vpop.f32.mrf.mxu0
  %v299 = vpop.f32.mrf.mxu0
  %v300 = vadd.f32 %v63, %v299
  %v301 = vpop.f32.mrf.mxu0
  %302 = vmatprep.mubr.bf16.mxu0 0
  %303 = vmatmul.mubr.bf16.gmra.mxu0 %v178
  %v304 = vpop.f32.mrf.mxu0
  %v305 = vadd.f32 %v63, %v304
  %v306 = vpop.f32.mrf.mxu0
  %v307 = vpop.f32.mrf.mxu0
  %v308 = vadd.f32 %v63, %v307
  %v309 = vpop.f32.mrf.mxu0
  %310 = vmatprep.mubr.bf16.mxu0 0
  %311 = vmatmul.mubr.bf16.gmra.mxu0 %v181
  %v312 = vpop.f32.mrf.mxu0
  %v313 = vadd.f32 %v63, %v312
  %v314 = vpop.f32.mrf.mxu0
  %v315 = vpop.f32.mrf.mxu0
  %v316 = vadd.f32 %v63, %v315
  %v317 = vpop.f32.mrf.mxu0
  %318 = vmatprep.mubr.bf16.mxu0 0
  %319 = vmatmul.mubr.bf16.gmra.mxu0 %v184
  %v320 = vpop.f32.mrf.mxu0
  %v321 = vadd.f32 %v63, %v320
  %v322 = vpop.f32.mrf.mxu0
  %v323 = vpop.f32.mrf.mxu0
  %v324 = vadd.f32 %v63, %v323
  %v325 = vpop.f32.mrf.mxu0
  %326 = vmatprep.mubr.bf16.mxu0 0
  %327 = vmatmul.mubr.bf16.gmra.mxu0 %v187
  %v328 = vpop.f32.mrf.mxu0
  %v329 = vadd.f32 %v63, %v328
  %v330 = vpop.f32.mrf.mxu0
  %v331 = vpop.f32.mrf.mxu0
  %v332 = vadd.f32 %v63, %v331
  %v333 = vpop.f32.mrf.mxu0
  %334 = vmatprep.mubr.bf16.mxu0 0
  %335 = vmatmul.mubr.bf16.gmra.mxu0 %v190
  %v336 = vpop.f32.mrf.mxu0
  %v337 = vadd.f32 %v63, %v336
  %v338 = vpop.f32.mrf.mxu0
  %v339 = vpop.f32.mrf.mxu0
  %v340 = vadd.f32 %v63, %v339
  %v341 = vpop.f32.mrf.mxu0
  %342 = vmatprep.mubr.bf16.mxu0 0
  %343 = vmatmul.mubr.bf16.gmra.mxu0 %v193
  %v344 = vpop.f32.mrf.mxu0
  %v345 = vadd.f32 %v63, %v344
  %v346 = vpop.f32.mrf.mxu0
  %v347 = vpop.f32.mrf.mxu0
  %v348 = vadd.f32 %v63, %v347
  %v349 = vpop.f32.mrf.mxu0
  %350 = vmatprep.mubr.bf16.mxu0 0
  %351 = vmatmul.mubr.bf16.gmra.mxu0 %v196
  %v352 = vpop.f32.mrf.mxu0
  %v353 = vadd.f32 %v63, %v352
  %v354 = vpop.f32.mrf.mxu0
  %v355 = vpop.f32.mrf.mxu0
  %v356 = vadd.f32 %v63, %v355
  %v357 = vpop.f32.mrf.mxu0
  %358 = vmatprep.mubr.bf16.mxu0 0
  %359 = vmatmul.mubr.bf16.gmra.mxu0 %v199
  %v360 = vpop.f32.mrf.mxu0
  %v361 = vadd.f32 %v63, %v360
  %v362 = vpop.f32.mrf.mxu0
  %v363 = vpop.f32.mrf.mxu0
  %v364 = vadd.f32 %v63, %v363
  %v365 = vpop.f32.mrf.mxu0
  %366 = vmatprep.mubr.bf16.mxu0 0
  %367 = vmatmul.mubr.bf16.gmra.mxu0 %v202
  %v368 = vpop.f32.mrf.mxu0
  %v369 = vadd.f32 %v63, %v368
  %v370 = vpop.f32.mrf.mxu0
  %v371 = vpop.f32.mrf.mxu0
  %v372 = vadd.f32 %v63, %v371
  %v373 = vpop.f32.mrf.mxu0
  %374 = vmatprep.mubr.bf16.mxu0 0
  %375 = vmatmul.mubr.bf16.gmra.mxu0 %v205
  %v376 = vpop.f32.mrf.mxu0
  %v377 = vadd.f32 %v63, %v376
  %v378 = vpop.f32.mrf.mxu0
  %v379 = vpop.f32.mrf.mxu0
  %v380 = vadd.f32 %v63, %v379
  %v381 = vpop.f32.mrf.mxu0
  %382 = vmatprep.mubr.bf16.mxu0 0
  %383 = vmatmul.mubr.bf16.gmra.mxu0 %v208
  %v384 = vpop.f32.mrf.mxu0
  %v385 = vadd.f32 %v63, %v384
  %v386 = vpop.f32.mrf.mxu0
  %v387 = vpop.f32.mrf.mxu0
  %v388 = vadd.f32 %v63, %v387
  %v389 = vpop.f32.mrf.mxu0
  %390 = vdwg.mxu0
  %v391 = vmul.f32 %v249, 0.01
  %v392 = vmul.f32 %v252, 0.01
  %v393 = vmul.f32 %v257, 0.01
  %v394 = vmul.f32 %v260, 0.01
  %v395 = vmul.f32 %v265, 0.01
  %v396 = vmul.f32 %v268, 0.01
  %v397 = vmul.f32 %v273, 0.01
  %v398 = vmul.f32 %v276, 0.01
  %v399 = vmul.f32 %v281, 0.01
  %v400 = vmul.f32 %v284, 0.01
  %v401 = vmul.f32 %v289, 0.01
  %v402 = vmul.f32 %v292, 0.01
  %v403 = vmul.f32 %v297, 0.01
  %v404 = vmul.f32 %v300, 0.01
  %v405 = vmul.f32 %v305, 0.01
  %v406 = vmul.f32 %v308, 0.01
  %v407 = vmul.f32 %v313, 0.01
  %v408 = vmul.f32 %v316, 0.01
  %v409 = vmul.f32 %v321, 0.01
  %v410 = vmul.f32 %v324, 0.01
  %v411 = vmul.f32 %v329, 0.01
  %v412 = vmul.f32 %v332, 0.01
  %v413 = vmul.f32 %v337, 0.01
  %v414 = vmul.f32 %v340, 0.01
  %v415 = vmul.f32 %v345, 0.01
  %v416 = vmul.f32 %v348, 0.01
  %v417 = vmul.f32 %v353, 0.01
  %v418 = vmul.f32 %v356, 0.01
  %v419 = vmul.f32 %v361, 0.01
  %v420 = vmul.f32 %v364, 0.01
  %v421 = vmul.f32 %v369, 0.01
  %v422 = vmul.f32 %v372, 0.01
  %v423 = vmul.f32 %v377, 0.01
  %v424 = vmul.f32 %v380, 0.01
  %v425 = vmul.f32 %v385, 0.01
  %v426 = vmul.f32 %v388, 0.01
  %v427 = vmax.f32 %v249, %v391
  %v428 = vmax.f32 %v252, %v392
  %v429 = vmax.f32 %v257, %v393
  %v430 = vmax.f32 %v260, %v394
  %v431 = vmax.f32 %v265, %v395
  %v432 = vmax.f32 %v268, %v396
  %v433 = vmax.f32 %v273, %v397
  %v434 = vmax.f32 %v276, %v398
  %v435 = vmax.f32 %v281, %v399
  %v436 = vmax.f32 %v284, %v400
  %v437 = vmax.f32 %v289, %v401
  %v438 = vmax.f32 %v292, %v402
  %v439 = vmax.f32 %v297, %v403
  %v440 = vmax.f32 %v300, %v404
  %v441 = vmax.f32 %v305, %v405
  %v442 = vmax.f32 %v308, %v406
  %v443 = vmax.f32 %v313, %v407
  %v444 = vmax.f32 %v316, %v408
  %v445 = vmax.f32 %v321, %v409
  %v446 = vmax.f32 %v324, %v410
  %v447 = vmax.f32 %v329, %v411
  %v448 = vmax.f32 %v332, %v412
  %v449 = vmax.f32 %v337, %v413
  %v450 = vmax.f32 %v340, %v414
  %v451 = vmax.f32 %v345, %v415
  %v452 = vmax.f32 %v348, %v416
  %v453 = vmax.f32 %v353, %v417
  %v454 = vmax.f32 %v356, %v418
  %v455 = vmax.f32 %v361, %v419
  %v456 = vmax.f32 %v364, %v420
  %v457 = vmax.f32 %v369, %v421
  %v458 = vmax.f32 %v372, %v422
  %v459 = vmax.f32 %v377, %v423
  %v460 = vmax.f32 %v380, %v424
  %v461 = vmax.f32 %v385, %v425
  %v462 = vmax.f32 %v388, %v426
  %v463 = vpack.c.bf16 %v428, %v427
  %v464 = vpack.c.bf16 %v430, %v429
  %v465 = vpack.c.bf16 %v432, %v431
  %v466 = vpack.c.bf16 %v434, %v433
  %v467 = vpack.c.bf16 %v436, %v435
  %v468 = vpack.c.bf16 %v438, %v437
  %v469 = vpack.c.bf16 %v440, %v439
  %v470 = vpack.c.bf16 %v442, %v441
  %v471 = vpack.c.bf16 %v444, %v443
  %v472 = vpack.c.bf16 %v446, %v445
  %v473 = vpack.c.bf16 %v448, %v447
  %v474 = vpack.c.bf16 %v450, %v449
  %v475 = vpack.c.bf16 %v452, %v451
  %v476 = vpack.c.bf16 %v454, %v453
  %v477 = vpack.c.bf16 %v456, %v455
  %v478 = vpack.c.bf16 %v458, %v457
  %v479 = vpack.c.bf16 %v460, %v459
  %v480 = vpack.c.bf16 %v462, %v461
  %v481 = vld [vmem:[%s3] sm:$0xf]
  %v482 = vld [vmem:[%s4] sm:$0x1]
  %v484 = vlaneseq
  %v485 = vshrl.u32 %v484, 7
  %v486 = vsub.s32 0, %v485
  %v487 = vrot.slane %v482, %v486
  %v490 = vsel %vm155, %v463, 0
  %v493 = vsel %vm155, %v464, 0
  %v496 = vsel %vm155, %v465, 0
  %v499 = vsel %vm155, %v466, 0
  %v502 = vsel %vm155, %v467, 0
  %v505 = vsel %vm155, %v468, 0
  %v508 = vsel %vm155, %v469, 0
  %v511 = vsel %vm155, %v470, 0
  %v514 = vsel %vm155, %v471, 0
  %v517 = vsel %vm155, %v472, 0
  %v520 = vsel %vm155, %v473, 0
  %v523 = vsel %vm155, %v474, 0
  %v526 = vsel %vm155, %v475, 0
  %v529 = vsel %vm155, %v476, 0
  %v532 = vsel %vm155, %v477, 0
  %v535 = vsel %vm155, %v478, 0
  %v538 = vsel %vm155, %v479, 0
  %v541 = vsel %vm155, %v480, 0
  %v544 = vsel %vm210, %v481, 0
  %546 = vmatprep.subr.bf16.mxu0 0
  %547 = vmatpush1.bf16.msra.mxu0 0
  %548 = vmatprep.subr.bf16.mxu0 0
  %549 = vmatpush1.bf16.msra.mxu0 0
  %550 = vmatprep.subr.bf16.mxu0 0
  %551 = vmatpush1.bf16.msra.mxu0 0
  %552 = vmatprep.subr.bf16.mxu0 0
  %553 = vmatpush1.bf16.msra.mxu0 0
  %554 = vmatprep.subr.bf16.mxu0 0
  %555 = vmatpush1.bf16.msra.mxu0 0
  %556 = vmatprep.subr.bf16.mxu0 0
  %557 = vmatpush1.bf16.msra.mxu0 0
  %558 = vmatprep.subr.bf16.mxu0 0
  %559 = vmatpush1.bf16.msra.mxu0 0
  %560 = vmatprep.subr.bf16.mxu0 0
  %561 = vmatpush1.bf16.msra.mxu0 %v544
  %562 = vmatprep.subr.bf16.mxu0 0
  %563 = vmatpush2.bf16.msra.mxu0 0
  %564 = vmatprep.subr.bf16.mxu0 0
  %565 = vmatpush2.bf16.msra.mxu0 0
  %566 = vmatprep.subr.bf16.mxu0 0
  %567 = vmatpush2.bf16.msra.mxu0 0
  %568 = vmatprep.subr.bf16.mxu0 0
  %569 = vmatpush2.bf16.msra.mxu0 0
  %570 = vmatprep.subr.bf16.mxu0 0
  %571 = vmatpush2.bf16.msra.mxu0 0
  %572 = vmatprep.subr.bf16.mxu0 0
  %573 = vmatpush2.bf16.msra.mxu0 0
  %574 = vmatprep.subr.bf16.mxu0 0
  %575 = vmatpush2.bf16.msra.mxu0 0
  %576 = vmatprep.subr.bf16.mxu0 0
  %577 = vmatpush2.bf16.msra.mxu0 0
  %578 = vmatprep.mubr.bf16.mxu0 0
  %579 = vmatmul.mubr.bf16.gmra.mxu0 %v490
  %v580 = vpop.f32.mrf.mxu0
  %v581 = vadd.f32 %v487, %v580
  %v582 = vpop.f32.mrf.mxu0
  %v583 = vpop.f32.mrf.mxu0
  %v584 = vadd.f32 %v487, %v583
  %v585 = vpop.f32.mrf.mxu0
  %586 = vmatprep.mubr.bf16.mxu0 0
  %587 = vmatmul.mubr.bf16.gmra.mxu0 %v493
  %v588 = vpop.f32.mrf.mxu0
  %v589 = vadd.f32 %v487, %v588
  %v590 = vpop.f32.mrf.mxu0
  %v591 = vpop.f32.mrf.mxu0
  %v592 = vadd.f32 %v487, %v591
  %v593 = vpop.f32.mrf.mxu0
  %594 = vmatprep.mubr.bf16.mxu0 0
  %595 = vmatmul.mubr.bf16.gmra.mxu0 %v496
  %v596 = vpop.f32.mrf.mxu0
  %v597 = vadd.f32 %v487, %v596
  %v598 = vpop.f32.mrf.mxu0
  %v599 = vpop.f32.mrf.mxu0
  %v600 = vadd.f32 %v487, %v599
  %v601 = vpop.f32.mrf.mxu0
  %602 = vmatprep.mubr.bf16.mxu0 0
  %603 = vmatmul.mubr.bf16.gmra.mxu0 %v499
  %v604 = vpop.f32.mrf.mxu0
  %v605 = vadd.f32 %v487, %v604
  %v606 = vpop.f32.mrf.mxu0
  %v607 = vpop.f32.mrf.mxu0
  %v608 = vadd.f32 %v487, %v607
  %v609 = vpop.f32.mrf.mxu0
  %610 = vmatprep.mubr.bf16.mxu0 0
  %611 = vmatmul.mubr.bf16.gmra.mxu0 %v502
  %v612 = vpop.f32.mrf.mxu0
  %v613 = vadd.f32 %v487, %v612
  %v614 = vpop.f32.mrf.mxu0
  %v615 = vpop.f32.mrf.mxu0
  %v616 = vadd.f32 %v487, %v615
  %v617 = vpop.f32.mrf.mxu0
  %618 = vmatprep.mubr.bf16.mxu0 0
  %619 = vmatmul.mubr.bf16.gmra.mxu0 %v505
  %v620 = vpop.f32.mrf.mxu0
  %v621 = vadd.f32 %v487, %v620
  %v622 = vpop.f32.mrf.mxu0
  %v623 = vpop.f32.mrf.mxu0
  %v624 = vadd.f32 %v487, %v623
  %v625 = vpop.f32.mrf.mxu0
  %626 = vmatprep.mubr.bf16.mxu0 0
  %627 = vmatmul.mubr.bf16.gmra.mxu0 %v508
  %v628 = vpop.f32.mrf.mxu0
  %v629 = vadd.f32 %v487, %v628
  %v630 = vpop.f32.mrf.mxu0
  %v631 = vpop.f32.mrf.mxu0
  %v632 = vadd.f32 %v487, %v631
  %v633 = vpop.f32.mrf.mxu0
  %634 = vmatprep.mubr.bf16.mxu0 0
  %635 = vmatmul.mubr.bf16.gmra.mxu0 %v511
  %v636 = vpop.f32.mrf.mxu0
  %v637 = vadd.f32 %v487, %v636
  %v638 = vpop.f32.mrf.mxu0
  %v639 = vpop.f32.mrf.mxu0
  %v640 = vadd.f32 %v487, %v639
  %v641 = vpop.f32.mrf.mxu0
  %642 = vmatprep.mubr.bf16.mxu0 0
  %643 = vmatmul.mubr.bf16.gmra.mxu0 %v514
  %v644 = vpop.f32.mrf.mxu0
  %v645 = vadd.f32 %v487, %v644
  %v646 = vpop.f32.mrf.mxu0
  %v647 = vpop.f32.mrf.mxu0
  %v648 = vadd.f32 %v487, %v647
  %v649 = vpop.f32.mrf.mxu0
  %650 = vmatprep.mubr.bf16.mxu0 0
  %651 = vmatmul.mubr.bf16.gmra.mxu0 %v517
  %v652 = vpop.f32.mrf.mxu0
  %v653 = vadd.f32 %v487, %v652
  %v654 = vpop.f32.mrf.mxu0
  %v655 = vpop.f32.mrf.mxu0
  %v656 = vadd.f32 %v487, %v655
  %v657 = vpop.f32.mrf.mxu0
  %658 = vmatprep.mubr.bf16.mxu0 0
  %659 = vmatmul.mubr.bf16.gmra.mxu0 %v520
  %v660 = vpop.f32.mrf.mxu0
  %v661 = vadd.f32 %v487, %v660
  %v662 = vpop.f32.mrf.mxu0
  %v663 = vpop.f32.mrf.mxu0
  %v664 = vadd.f32 %v487, %v663
  %v665 = vpop.f32.mrf.mxu0
  %666 = vmatprep.mubr.bf16.mxu0 0
  %667 = vmatmul.mubr.bf16.gmra.mxu0 %v523
  %v668 = vpop.f32.mrf.mxu0
  %v669 = vadd.f32 %v487, %v668
  %v670 = vpop.f32.mrf.mxu0
  %v671 = vpop.f32.mrf.mxu0
  %v672 = vadd.f32 %v487, %v671
  %v673 = vpop.f32.mrf.mxu0
  %674 = vmatprep.mubr.bf16.mxu0 0
  %675 = vmatmul.mubr.bf16.gmra.mxu0 %v526
  %v676 = vpop.f32.mrf.mxu0
  %v677 = vadd.f32 %v487, %v676
  %v678 = vpop.f32.mrf.mxu0
  %v679 = vpop.f32.mrf.mxu0
  %v680 = vadd.f32 %v487, %v679
  %v681 = vpop.f32.mrf.mxu0
  %682 = vmatprep.mubr.bf16.mxu0 0
  %683 = vmatmul.mubr.bf16.gmra.mxu0 %v529
  %v684 = vpop.f32.mrf.mxu0
  %v685 = vadd.f32 %v487, %v684
  %v686 = vpop.f32.mrf.mxu0
  %v687 = vpop.f32.mrf.mxu0
  %v688 = vadd.f32 %v487, %v687
  %v689 = vpop.f32.mrf.mxu0
  %690 = vmatprep.mubr.bf16.mxu0 0
  %691 = vmatmul.mubr.bf16.gmra.mxu0 %v532
  %v692 = vpop.f32.mrf.mxu0
  %v693 = vadd.f32 %v487, %v692
  %v694 = vpop.f32.mrf.mxu0
  %v695 = vpop.f32.mrf.mxu0
  %v696 = vadd.f32 %v487, %v695
  %v697 = vpop.f32.mrf.mxu0
  %698 = vmatprep.mubr.bf16.mxu0 0
  %699 = vmatmul.mubr.bf16.gmra.mxu0 %v535
  %v700 = vpop.f32.mrf.mxu0
  %v701 = vadd.f32 %v487, %v700
  %v702 = vpop.f32.mrf.mxu0
  %v703 = vpop.f32.mrf.mxu0
  %v704 = vadd.f32 %v487, %v703
  %v705 = vpop.f32.mrf.mxu0
  %706 = vmatprep.mubr.bf16.mxu0 0
  %707 = vmatmul.mubr.bf16.gmra.mxu0 %v538
  %v708 = vpop.f32.mrf.mxu0
  %v709 = vadd.f32 %v487, %v708
  %v710 = vpop.f32.mrf.mxu0
  %v711 = vpop.f32.mrf.mxu0
  %v712 = vadd.f32 %v487, %v711
  %v713 = vpop.f32.mrf.mxu0
  %714 = vmatprep.mubr.bf16.mxu0 0
  %715 = vmatmul.mubr.bf16.gmra.mxu0 %v541
  %v716 = vpop.f32.mrf.mxu0
  %v717 = vadd.f32 %v487, %v716
  %v718 = vpop.f32.mrf.mxu0
  %v719 = vpop.f32.mrf.mxu0
  %v720 = vadd.f32 %v487, %v719
  %v721 = vpop.f32.mrf.mxu0
  %722 = vdwg.mxu0
  %v723 = vmul.f32 %v581, 0.01
  %v724 = vmul.f32 %v584, 0.01
  %v725 = vmul.f32 %v589, 0.01
  %v726 = vmul.f32 %v592, 0.01
  %v727 = vmul.f32 %v597, 0.01
  %v728 = vmul.f32 %v600, 0.01
  %v729 = vmul.f32 %v605, 0.01
  %v730 = vmul.f32 %v608, 0.01
  %v731 = vmul.f32 %v613, 0.01
  %v732 = vmul.f32 %v616, 0.01
  %v733 = vmul.f32 %v621, 0.01
  %v734 = vmul.f32 %v624, 0.01
  %v735 = vmul.f32 %v629, 0.01
  %v736 = vmul.f32 %v632, 0.01
  %v737 = vmul.f32 %v637, 0.01
  %v738 = vmul.f32 %v640, 0.01
  %v739 = vmul.f32 %v645, 0.01
  %v740 = vmul.f32 %v648, 0.01
  %v741 = vmul.f32 %v653, 0.01
  %v742 = vmul.f32 %v656, 0.01
  %v743 = vmul.f32 %v661, 0.01
  %v744 = vmul.f32 %v664, 0.01
  %v745 = vmul.f32 %v669, 0.01
  %v746 = vmul.f32 %v672, 0.01
  %v747 = vmul.f32 %v677, 0.01
  %v748 = vmul.f32 %v680, 0.01
  %v749 = vmul.f32 %v685, 0.01
  %v750 = vmul.f32 %v688, 0.01
  %v751 = vmul.f32 %v693, 0.01
  %v752 = vmul.f32 %v696, 0.01
  %v753 = vmul.f32 %v701, 0.01
  %v754 = vmul.f32 %v704, 0.01
  %v755 = vmul.f32 %v709, 0.01
  %v756 = vmul.f32 %v712, 0.01
  %v757 = vmul.f32 %v717, 0.01
  %v758 = vmul.f32 %v720, 0.01
  %v759 = vmax.f32 %v581, %v723
  %v760 = vmax.f32 %v584, %v724
  %v761 = vmax.f32 %v589, %v725
  %v762 = vmax.f32 %v592, %v726
  %v763 = vmax.f32 %v597, %v727
  %v764 = vmax.f32 %v600, %v728
  %v765 = vmax.f32 %v605, %v729
  %v766 = vmax.f32 %v608, %v730
  %v767 = vmax.f32 %v613, %v731
  %v768 = vmax.f32 %v616, %v732
  %v769 = vmax.f32 %v621, %v733
  %v770 = vmax.f32 %v624, %v734
  %v771 = vmax.f32 %v629, %v735
  %v772 = vmax.f32 %v632, %v736
  %v773 = vmax.f32 %v637, %v737
  %v774 = vmax.f32 %v640, %v738
  %v775 = vmax.f32 %v645, %v739
  %v776 = vmax.f32 %v648, %v740
  %v777 = vmax.f32 %v653, %v741
  %v778 = vmax.f32 %v656, %v742
  %v779 = vmax.f32 %v661, %v743
  %v780 = vmax.f32 %v664, %v744
  %v781 = vmax.f32 %v669, %v745
  %v782 = vmax.f32 %v672, %v746
  %v783 = vmax.f32 %v677, %v747
  %v784 = vmax.f32 %v680, %v748
  %v785 = vmax.f32 %v685, %v749
  %v786 = vmax.f32 %v688, %v750
  %v787 = vmax.f32 %v693, %v751
  %v788 = vmax.f32 %v696, %v752
  %v789 = vmax.f32 %v701, %v753
  %v790 = vmax.f32 %v704, %v754
  %v791 = vmax.f32 %v709, %v755
  %v792 = vmax.f32 %v712, %v756
  %v793 = vmax.f32 %v717, %v757
  %v794 = vmax.f32 %v720, %v758
  %795 = vst.msk [vmem:[%s5] sm:$0xff] %vm155, %v759
  %796 = vst.msk [vmem:[%s5 + $0x8] sm:$0xff] %vm155, %v760
  %797 = vst.msk [vmem:[%s5 + $0x10] sm:$0xff] %vm155, %v761
  %798 = vst.msk [vmem:[%s5 + $0x18] sm:$0xff] %vm155, %v762
  %799 = vst.msk [vmem:[%s5 + $0x20] sm:$0xff] %vm155, %v763
  %800 = vst.msk [vmem:[%s5 + $0x28] sm:$0xff] %vm155, %v764
  %801 = vst.msk [vmem:[%s5 + $0x30] sm:$0xff] %vm155, %v765
  %802 = vst.msk [vmem:[%s5 + $0x38] sm:$0xff] %vm155, %v766
  %803 = vst.msk [vmem:[%s5 + $0x40] sm:$0xff] %vm155, %v767
  %804 = vst.msk [vmem:[%s5 + $0x48] sm:$0xff] %vm155, %v768
  %805 = vst.msk [vmem:[%s5 + $0x50] sm:$0xff] %vm155, %v769
  %806 = vst.msk [vmem:[%s5 + $0x58] sm:$0xff] %vm155, %v770
  %807 = vst.msk [vmem:[%s5 + $0x60] sm:$0xff] %vm155, %v771
  %808 = vst.msk [vmem:[%s5 + $0x68] sm:$0xff] %vm155, %v772
  %809 = vst.msk [vmem:[%s5 + $0x70] sm:$0xff] %vm155, %v773
  %810 = vst.msk [vmem:[%s5 + $0x78] sm:$0xff] %vm155, %v774
  %811 = vst.msk [vmem:[%s5 + $0x80] sm:$0xff] %vm155, %v775
  %812 = vst.msk [vmem:[%s5 + $0x88] sm:$0xff] %vm155, %v776
  %813 = vst.msk [vmem:[%s5 + $0x90] sm:$0xff] %vm155, %v777
  %814 = vst.msk [vmem:[%s5 + $0x98] sm:$0xff] %vm155, %v778
  %815 = vst.msk [vmem:[%s5 + $0xa0] sm:$0xff] %vm155, %v779
  %816 = vst.msk [vmem:[%s5 + $0xa8] sm:$0xff] %vm155, %v780
  %817 = vst.msk [vmem:[%s5 + $0xb0] sm:$0xff] %vm155, %v781
  %818 = vst.msk [vmem:[%s5 + $0xb8] sm:$0xff] %vm155, %v782
  %819 = vst.msk [vmem:[%s5 + $0xc0] sm:$0xff] %vm155, %v783
  %820 = vst.msk [vmem:[%s5 + $0xc8] sm:$0xff] %vm155, %v784
  %821 = vst.msk [vmem:[%s5 + $0xd0] sm:$0xff] %vm155, %v785
  %822 = vst.msk [vmem:[%s5 + $0xd8] sm:$0xff] %vm155, %v786
  %823 = vst.msk [vmem:[%s5 + $0xe0] sm:$0xff] %vm155, %v787
  %824 = vst.msk [vmem:[%s5 + $0xe8] sm:$0xff] %vm155, %v788
  %825 = vst.msk [vmem:[%s5 + $0xf0] sm:$0xff] %vm155, %v789
  %826 = vst.msk [vmem:[%s5 + $0xf8] sm:$0xff] %vm155, %v790
  %827 = vst.msk [vmem:[%s5 + $0x100] sm:$0xff] %vm155, %v791
  %828 = vst.msk [vmem:[%s5 + $0x108] sm:$0xff] %vm155, %v792
  %829 = vst.msk [vmem:[%s5 + $0x110] sm:$0xff] %vm155, %v793
  %830 = vst.msk [vmem:[%s5 + $0x118] sm:$0xff] %vm155, %v794
  // Predicated region
  $region22: #{double_conv_forward.4} parent=0 // pred_check
    _
  $region23: #{double_conv_forward.4} parent=0 // pred_check_branch
    %832 = sbr.rel (0) target = $region25
  $region24: #{double_conv_forward.4} parent=0 // pred_region
    _
  $region25: #{double_conv_forward.4} parent=0 // pred_fallthru
    _
  // Predicated region
  $region26: #{double_conv_forward.4} parent=0 // pred_check
    _
  $region27: #{double_conv_forward.4} parent=0 // pred_check_branch
    %834 = sbr.rel (0) target = $region29
  $region28: #{double_conv_forward.4} parent=0 // pred_region
    _
  $region29: #{double_conv_forward.4} parent=0 // pred_fallthru
    _

// kernel: double_conv_forward.3
$region0: #{double_conv_forward.3}
  #allocation0 [shape = 'u32[]', space=smem, size = 0x4, offset = 0x4, fixed_abs, tag = 'smem constant byte address 0x4 - core index']
  #allocation1 [shape = 'u32[144,128]{1,0:T(1,128)}', space=vmem, size = 0x12000, scoped, tag = 'internal scratch']
  %s0 = inlined_call_operand.vmem [shape: bf16[2,342,4], index: 0, kind: input, shape index: {}]
  %s1 = inlined_call_operand.vmem [shape: bf16[9,4,4], index: 1, kind: input, shape index: {}]
  %s2 = inlined_call_operand.vmem [shape: f32[1,4], index: 2, kind: input, shape index: {}]
  %s3 = inlined_call_operand.vmem [shape: f32[2,288,4], index: 3, kind: output, shape index: {}]
  %s4 = sld [smem:[#allocation0]]
  $region45: #{double_conv_forward.3} parent=0
    _
  %s6 = ssub.s32 1, %s4
  %s7 = scalar_select 0, %s6, %s4
  loop: start=0, step=1, limit=4
  $region2: #{double_conv_forward.3} parent=0 // loop_pre_header
    _
  $region3: #{double_conv_forward.3} parent=0 // loop_header
    %s9 = sphi 0, %s13
    %p10 = scmp.ge.s32.totalorder %s9, 4
    %s19 = sphi 0, %s21
    %s22 = sphi 0, %s19
    %s23 = sphi 0, %s22
    %s39 = sphi 0, %s23
    %s43 = sphi 0, %s43
    %s45 = sphi 0, %s43
    %s46 = sphi 0, %s45
    %s60 = sphi 0, %s46
    %s64 = sphi 0, %s64
    %s66 = sphi 0, %s64
    %s67 = sphi 0, %s66
    %s81 = sphi 0, %s67
    %s87 = sphi 0, %s89
    %s90 = sphi 0, %s87
    %s91 = sphi 0, %s90
    %s107 = sphi 0, %s91
  $region4: #{double_conv_forward.3} parent=0 // loop_header_branch
    %12 = sbr.rel (%p10) target = $region8
  $region5: #{double_conv_forward.3} parent=0 // loop_body
    %s14 = ssub.s32 %s9, 1
    %s15 = ssub.s32 %s9, 2
    %s16 = sadd.s32 %s9, 1
    %s17 = ssub.s32 %s9, %s16
    %p18 = scmp.eq.s32.totalorder %s17, 0
    %s20 = sadd.s32 %s19, 1
    %s21 = scalar_select %p18, %s19, %s20
    %p24 = pneg %p18
    %p25 = scmp.eq.s32.totalorder %s9, 1
    %p26 = por %p24, %p25
    %p27 = scmp.ne.s32.totalorder %s19, %s22
    %p28 = scmp.eq.s32.totalorder %s9, 0
    %p29 = por %p27, %p28
    %p30 = scmp.ne.s32.totalorder %s19, %s22
    %p31 = scmp.eq.s32.totalorder %s14, 1
    %p32 = por %p30, %p31
    %p33 = scmp.ne.s32.totalorder %s22, %s23
    %p34 = scmp.eq.s32.totalorder %s14, 0
    %p35 = por %p33, %p34
    %p36 = scmp.ne.s32.totalorder %s22, %s23
    %p37 = scmp.eq.s32.totalorder %s15, 1
    %p38 = por %p36, %p37
    %p40 = scmp.ne.s32.totalorder %s23, %s39
    %p41 = scmp.eq.s32.totalorder %s15, 0
    %p42 = por %p40, %p41
    %s44 = sadd.s32 %s43, 1
    %p47 = scmp.eq.s32.totalorder %s9, 1
    %p48 = scmp.ne.s32.totalorder %s43, %s45
    %p49 = scmp.eq.s32.totalorder %s9, 0
    %p50 = por %p48, %p49
    %p51 = scmp.ne.s32.totalorder %s43, %s45
    %p52 = scmp.eq.s32.totalorder %s14, 1
    %p53 = por %p51, %p52
    %p54 = scmp.ne.s32.totalorder %s45, %s46
    %p55 = scmp.eq.s32.totalorder %s14, 0
    %p56 = por %p54, %p55
    %p57 = scmp.ne.s32.totalorder %s45, %s46
    %p58 = scmp.eq.s32.totalorder %s15, 1
    %p59 = por %p57, %p58
    %p61 = scmp.ne.s32.totalorder %s46, %s60
    %p62 = scmp.eq.s32.totalorder %s15, 0
    %p63 = por %p61, %p62
    %s65 = sadd.s32 %s64, 1
    %p68 = scmp.eq.s32.totalorder %s9, 1
    %p69 = scmp.ne.s32.totalorder %s64, %s66
    %p70 = scmp.eq.s32.totalorder %s9, 0
    %p71 = por %p69, %p70
    %p72 = scmp.ne.s32.totalorder %s64, %s66
    %p73 = scmp.eq.s32.totalorder %s14, 1
    %p74 = por %p72, %p73
    %p75 = scmp.ne.s32.totalorder %s66, %s67
    %p76 = scmp.eq.s32.totalorder %s14, 0
    %p77 = por %p75, %p76
    %p78 = scmp.ne.s32.totalorder %s66, %s67
    %p79 = scmp.eq.s32.totalorder %s15, 1
    %p80 = por %p78, %p79
    %p82 = scmp.ne.s32.totalorder %s67, %s81
    %p83 = scmp.eq.s32.totalorder %s15, 0
    %p84 = por %p82, %p83
    %s85 = ssub.s32 %s9, %s16
    %p86 = scmp.eq.s32.totalorder %s85, 0
    %s88 = sadd.s32 %s87, 1
    %s89 = scalar_select %p86, %s87, %s88
    %p92 = pneg %p86
    %p93 = scmp.eq.s32.totalorder %s9, 1
    %p94 = por %p92, %p93
    %p95 = scmp.ne.s32.totalorder %s87, %s90
    %p96 = scmp.eq.s32.totalorder %s9, 0
    %p97 = por %p95, %p96
    %p98 = scmp.ne.s32.totalorder %s87, %s90
    %p99 = scmp.eq.s32.totalorder %s14, 1
    %p100 = por %p98, %p99
    %p101 = scmp.ne.s32.totalorder %s90, %s91
    %p102 = scmp.eq.s32.totalorder %s14, 0
    %p103 = por %p101, %p102
    %p104 = scmp.ne.s32.totalorder %s90, %s91
    %p105 = scmp.eq.s32.totalorder %s15, 1
    %p106 = por %p104, %p105
    %p108 = scmp.ne.s32.totalorder %s91, %s107
    %p109 = scmp.eq.s32.totalorder %s15, 0
    %p110 = por %p108, %p109
    %p111 = scmp.le.s32.totalorder 1, %s9
    %p112 = scmp.lt.s32.totalorder %s9, 3
    %p113 = pnand %p111, %p112
    %p114 = pneg %p113
    // Predicated region
    $region9: #{double_conv_forward.3} parent=5 // pred_check
      _
    $region10: #{double_conv_forward.3} parent=5 // pred_check_branch
      %116 = sbr.rel (%p113) target = $region12
    $region11: #{double_conv_forward.3} parent=5 // pred_region
      %s117 = ssub.s32 %s9, 1
      // Predicated region
      $region13: #{double_conv_forward.3} parent=11 // pred_check
        %p118 = pneg %p56
      $region14: #{double_conv_forward.3} parent=11 // pred_check_branch
        %120 = sbr.rel (%p118) target = $region16
      $region15: #{double_conv_forward.3} parent=11 // pred_region
        _
      $region16: #{double_conv_forward.3} parent=11 // pred_fallthru
        _
      // Predicated region
      $region17: #{double_conv_forward.3} parent=11 // pred_check
        %p121 = pneg %p77
      $region18: #{double_conv_forward.3} parent=11 // pred_check_branch
        %123 = sbr.rel (%p121) target = $region20
      $region19: #{double_conv_forward.3} parent=11 // pred_region
        _
      $region20: #{double_conv_forward.3} parent=11 // pred_fallthru
        _
    $region12: #{double_conv_forward.3} parent=5 // pred_fallthru
      _
    %p124 = scmp.lt.s32.totalorder %s9, 2
    // Predicated region
    $region21: #{double_conv_forward.3} parent=5 // pred_check
      %p125 = pneg %p124
    $region22: #{double_conv_forward.3} parent=5 // pred_check_branch
      %127 = sbr.rel (%p125) target = $region24
    $region23: #{double_conv_forward.3} parent=5 // pred_region
      // Predicated region
      $region25: #{double_conv_forward.3} parent=23 // pred_check
        %p128 = pneg %p29
      $region26: #{double_conv_forward.3} parent=23 // pred_check_branch
        %130 = sbr.rel (%p128) target = $region28
      $region27: #{double_conv_forward.3} parent=23 // pred_region
        %p131 = scmp.lt.s32.totalorder %s9, 1
        %s132 = scalar_select %p131, %s9, 1
        %s133 = smul.addr %s132, 43
        %s134 = smul.addr %s133, 4
        %s135 = scalar_lea.vmem %s0, %s134
      $region28: #{double_conv_forward.3} parent=23 // pred_fallthru
        _
    $region24: #{double_conv_forward.3} parent=5 // pred_fallthru
      _
    %p136 = scmp.le.s32.totalorder 1, %s9
    %p137 = scmp.lt.s32.totalorder %s9, 3
    %p138 = pnand %p136, %p137
    %p139 = pneg %p138
    // Predicated region
    $region29: #{double_conv_forward.3} parent=5 // pred_check
      _
    $region30: #{double_conv_forward.3} parent=5 // pred_check_branch
      %141 = sbr.rel (%p138) target = $region32
    $region31: #{double_conv_forward.3} parent=5 // pred_region
      %s142 = ssub.s32 %s9, 1
      %p143 = scmp.lt.s32.totalorder %s14, 1
      %s144 = scalar_select %p143, %s14, 1
      %s145 = smul.addr %s144, 43
      %s146 = smul.addr %s145, 4
      %s147 = scalar_lea.vmem %s0, %s146
      %p148 = pneg %p35
      %p149 = pneg %p32
      %p150 = pneg %p56
      %p151 = pneg %p53
      %p152 = pneg %p77
      %p153 = pneg %p74
      %p154 = pneg %p103
      %p155 = pneg %p100
      %p156 = scmp.lt.s32.totalorder %s14, 1
      %s157 = scalar_select %p156, %s14, 1
      %s158 = smul.addr %s157, 36
      %s159 = smul.addr %s158, 8
      %s160 = scalar_lea.vmem %s3, %s159
      %p161 = scmp.lt.s32.totalorder %s14, 1
      %s162 = scalar_select %p161, %s14, 1
      %s163 = smul.addr %s162, 43
      %s164 = smul.addr %s163, 4
      %s165 = scalar_lea.vmem %s0, %s164
      %p166 = scmp.lt.s32.totalorder %s14, 1
      %s167 = scalar_select %p166, %s14, 1
      %s168 = smul.addr %s167, 36
      %s169 = smul.addr %s168, 8
      %s170 = scalar_lea.vmem %s3, %s169
      %v172 = vld [vmem:[%s165] sm:$0xf]
      %v173 = vld [vmem:[%s165 + $0x4] sm:$0xf]
      %v174 = vld [vmem:[%s165 + $0x8] sm:$0xf]
      %v175 = vld [vmem:[%s165 + $0xc] sm:$0xf]
      %v176 = vld [vmem:[%s165 + $0x10] sm:$0xf]
      %v177 = vld [vmem:[%s165 + $0x14] sm:$0xf]
      %v178 = vld [vmem:[%s165 + $0x18] sm:$0xf]
      %v179 = vld [vmem:[%s165 + $0x1c] sm:$0xf]
      %v180 = vld [vmem:[%s165 + $0x20] sm:$0xf]
      %v181 = vld [vmem:[%s165 + $0x24] sm:$0xf]
      %v182 = vld [vmem:[%s165 + $0x28] sm:$0xf]
      %v183 = vld [vmem:[%s165 + $0x2c] sm:$0xf]
      %v184 = vld [vmem:[%s165 + $0x30] sm:$0xf]
      %v185 = vld [vmem:[%s165 + $0x34] sm:$0xf]
      %v186 = vld [vmem:[%s165 + $0x38] sm:$0xf]
      %v187 = vld [vmem:[%s165 + $0x3c] sm:$0xf]
      %v188 = vld [vmem:[%s165 + $0x40] sm:$0xf]
      %v189 = vld [vmem:[%s165 + $0x44] sm:$0xf]
      %v190 = vld [vmem:[%s165 + $0x48] sm:$0xf]
      %v191 = vld [vmem:[%s165 + $0x4c] sm:$0xf]
      %v192 = vld [vmem:[%s165 + $0x50] sm:$0xf]
      %v193 = vld [vmem:[%s165 + $0x54] sm:$0xf]
      %v194 = vld [vmem:[%s165 + $0x58] sm:$0xf]
      %v195 = vld [vmem:[%s165 + $0x5c] sm:$0xf]
      %v196 = vld [vmem:[%s165 + $0x60] sm:$0xf]
      %v197 = vld [vmem:[%s165 + $0x64] sm:$0xf]
      %v198 = vld [vmem:[%s165 + $0x68] sm:$0xf]
      %v199 = vld [vmem:[%s165 + $0x6c] sm:$0xf]
      %v200 = vld [vmem:[%s165 + $0x70] sm:$0xf]
      %v201 = vld [vmem:[%s165 + $0x74] sm:$0xf]
      %v202 = vld [vmem:[%s165 + $0x78] sm:$0xf]
      %v203 = vld [vmem:[%s165 + $0x7c] sm:$0xf]
      %v204 = vld [vmem:[%s165 + $0x80] sm:$0xf]
      %v205 = vld [vmem:[%s165 + $0x84] sm:$0xf]
      %v206 = vld [vmem:[%s165 + $0x88] sm:$0xf]
      %v207 = vld [vmem:[%s165 + $0x8c] sm:$0xf]
      %v208 = vld [vmem:[%s1] sm:$0x3]
      %v209 = vld [vmem:[%s165 + $0x90] sm:$0x1]
      %s210 = scalar_lea.vmem %s1, 2
      %v211 = vld [vmem:[%s210] sm:$0x3]
      %v249 = vunpack.c.l.b16 %v172
      %v250 = vunpack.c.l.b16 %v173
      %v251 = vunpack.c.l.b16 %v174
      %v252 = vunpack.c.l.b16 %v175
      %v253 = vunpack.c.l.b16 %v176
      %v254 = vunpack.c.l.b16 %v177
      %v255 = vunpack.c.l.b16 %v178
      %v256 = vunpack.c.l.b16 %v179
      %v257 = vunpack.c.l.b16 %v180
      %v258 = vunpack.c.l.b16 %v181
      %v259 = vunpack.c.l.b16 %v182
      %v260 = vunpack.c.l.b16 %v183
      %v261 = vunpack.c.l.b16 %v184
      %v262 = vunpack.c.l.b16 %v185
      %v263 = vunpack.c.l.b16 %v186
      %v264 = vunpack.c.l.b16 %v187
      %v265 = vunpack.c.l.b16 %v188
      %v266 = vunpack.c.l.b16 %v189
      %v267 = vunpack.c.l.b16 %v190
      %v268 = vunpack.c.l.b16 %v191
      %v269 = vunpack.c.l.b16 %v192
      %v270 = vunpack.c.l.b16 %v193
      %v271 = vunpack.c.l.b16 %v194
      %v272 = vunpack.c.l.b16 %v195
      %v273 = vunpack.c.l.b16 %v196
      %v274 = vunpack.c.l.b16 %v197
      %v275 = vunpack.c.l.b16 %v198
      %v276 = vunpack.c.l.b16 %v199
      %v277 = vunpack.c.l.b16 %v200
      %v278 = vunpack.c.l.b16 %v201
      %v279 = vunpack.c.l.b16 %v202
      %v280 = vunpack.c.l.b16 %v203
      %v281 = vunpack.c.l.b16 %v204
      %v282 = vunpack.c.l.b16 %v205
      %v283 = vunpack.c.l.b16 %v206
      %v284 = vunpack.c.l.b16 %v207
      %v285 = vunpack.c.l.b16 %v209
      %v286 = vpack.c.b16 %v250, %v249
      %v287 = vpack.c.b16 %v252, %v251
      %v288 = vpack.c.b16 %v254, %v253
      %v289 = vpack.c.b16 %v256, %v255
      %v290 = vpack.c.b16 %v258, %v257
      %v291 = vpack.c.b16 %v260, %v259
      %v292 = vpack.c.b16 %v262, %v261
      %v293 = vpack.c.b16 %v264, %v263
      %v294 = vpack.c.b16 %v266, %v265
      %v295 = vpack.c.b16 %v268, %v267
      %v296 = vpack.c.b16 %v270, %v269
      %v297 = vpack.c.b16 %v272, %v271
      %v298 = vpack.c.b16 %v274, %v273
      %v299 = vpack.c.b16 %v276, %v275
      %v300 = vpack.c.b16 %v278, %v277
      %v301 = vpack.c.b16 %v280, %v279
      %v302 = vpack.c.b16 %v282, %v281
      %v303 = vpack.c.b16 %v284, %v283
      %v304 = vpack.c.b16 %v285, %v285
      %vm305 = vsmask.f32 7424
      %v307 = vshrl.u32 %v286, 16
      %v309 = vshll.u32 %v286, 16
      %v311 = vrot.slane %v309, 1
      %v312 = vor.u32 %v307, %v311
      %v314 = vshll.u32 %v287, 16
      %v316 = vrot.slane %v314, 1
      %v317 = vsel %vm305, %v312, %v316
      %v318 = vshrl.u32 %v287, 16
      %v320 = vor.u32 %v318, %v316
      %v322 = vshll.u32 %v288, 16
      %v324 = vrot.slane %v322, 1
      %v325 = vsel %vm305, %v320, %v324
      %v326 = vshrl.u32 %v288, 16
      %v328 = vor.u32 %v326, %v324
      %v330 = vshll.u32 %v289, 16
      %v332 = vrot.slane %v330, 1
      %v333 = vsel %vm305, %v328, %v332
      %v334 = vshrl.u32 %v289, 16
      %v336 = vor.u32 %v334, %v332
      %v338 = vshll.u32 %v290, 16
      %v340 = vrot.slane %v338, 1
      %v341 = vsel %vm305, %v336, %v340
      %v342 = vshrl.u32 %v290, 16
      %v344 = vor.u32 %v342, %v340
      %v346 = vshll.u32 %v291, 16
      %v348 = vrot.slane %v346, 1
      %v349 = vsel %vm305, %v344, %v348
      %v350 = vshrl.u32 %v291, 16
      %v352 = vor.u32 %v350, %v348
      %v354 = vshll.u32 %v292, 16
      %v356 = vrot.slane %v354, 1
      %v357 = vsel %vm305, %v352, %v356
      %v358 = vshrl.u32 %v292, 16
      %v360 = vor.u32 %v358, %v356
      %v362 = vshll.u32 %v293, 16
      %v364 = vrot.slane %v362, 1
      %v365 = vsel %vm305, %v360, %v364
      %v366 = vshrl.u32 %v293, 16
      %v368 = vor.u32 %v366, %v364
      %v370 = vshll.u32 %v294, 16
      %v372 = vrot.slane %v370, 1
      %v373 = vsel %vm305, %v368, %v372
      %v374 = vshrl.u32 %v294, 16
      %v376 = vor.u32 %v374, %v372
      %v378 = vshll.u32 %v295, 16
      %v380 = vrot.slane %v378, 1
      %v381 = vsel %vm305, %v376, %v380
      %v382 = vshrl.u32 %v295, 16
      %v384 = vor.u32 %v382, %v380
      %v386 = vshll.u32 %v296, 16
      %v388 = vrot.slane %v386, 1
      %v389 = vsel %vm305, %v384, %v388
      %v390 = vshrl.u32 %v296, 16
      %v392 = vor.u32 %v390, %v388
      %v394 = vshll.u32 %v297, 16
      %v396 = vrot.slane %v394, 1
      %v397 = vsel %vm305, %v392, %v396
      %v398 = vshrl.u32 %v297, 16
      %v400 = vor.u32 %v398, %v396
      %v402 = vshll.u32 %v298, 16
      %v404 = vrot.slane %v402, 1
      %v405 = vsel %vm305, %v400, %v404
      %v406 = vshrl.u32 %v298, 16
      %v408 = vor.u32 %v406, %v404
      %v410 = vshll.u32 %v299, 16
      %v412 = vrot.slane %v410, 1
      %v413 = vsel %vm305, %v408, %v412
      %v414 = vshrl.u32 %v299, 16
      %v416 = vor.u32 %v414, %v412
      %v418 = vshll.u32 %v300, 16
      %v420 = vrot.slane %v418, 1
      %v421 = vsel %vm305, %v416, %v420
      %v422 = vshrl.u32 %v300, 16
      %v424 = vor.u32 %v422, %v420
      %v426 = vshll.u32 %v301, 16
      %v428 = vrot.slane %v426, 1
      %v429 = vsel %vm305, %v424, %v428
      %v430 = vshrl.u32 %v301, 16
      %v432 = vor.u32 %v430, %v428
      %v434 = vshll.u32 %v302, 16
      %v436 = vrot.slane %v434, 1
      %v437 = vsel %vm305, %v432, %v436
      %v438 = vshrl.u32 %v302, 16
      %v440 = vor.u32 %v438, %v436
      %v442 = vshll.u32 %v303, 16
      %v444 = vrot.slane %v442, 1
      %v445 = vsel %vm305, %v440, %v444
      %v446 = vshrl.u32 %v303, 16
      %v448 = vor.u32 %v446, %v444
      %v450 = vshll.u32 %v304, 16
      %v452 = vrot.slane %v450, 1
      %v453 = vsel %vm305, %v448, %v452
      %vm454 = vcmask 31744
      %v456 = vsel %vm454, %v317, 0
      %v459 = vsel %vm454, %v325, 0
      %v462 = vsel %vm454, %v333, 0
      %v465 = vsel %vm454, %v341, 0
      %v468 = vsel %vm454, %v349, 0
      %v471 = vsel %vm454, %v357, 0
      %v474 = vsel %vm454, %v365, 0
      %v477 = vsel %vm454, %v373, 0
      %v480 = vsel %vm454, %v381, 0
      %v483 = vsel %vm454, %v389, 0
      %v486 = vsel %vm454, %v397, 0
      %v489 = vsel %vm454, %v405, 0
      %v492 = vsel %vm454, %v413, 0
      %v495 = vsel %vm454, %v421, 0
      %v498 = vsel %vm454, %v429, 0
      %v501 = vsel %vm454, %v437, 0
      %v504 = vsel %vm454, %v445, 0
      %v507 = vsel %vm454, %v453, 0
      %vm509 = vcmask 1041408
      %v511 = vsel %vm509, %v211, 0
      %513 = vmatprep.subr.bf16.mxu0 0
      %514 = vmatpush1.bf16.msra.mxu0 0
      %515 = vmatprep.subr.bf16.mxu0 0
      %516 = vmatpush1.bf16.msra.mxu0 0
      %517 = vmatprep.subr.bf16.mxu0 0
      %518 = vmatpush1.bf16.msra.mxu0 0
      %519 = vmatprep.subr.bf16.mxu0 0
      %520 = vmatpush1.bf16.msra.mxu0 0
      %521 = vmatprep.subr.bf16.mxu0 0
      %522 = vmatpush1.bf16.msra.mxu0 0
      %523 = vmatprep.subr.bf16.mxu0 0
      %524 = vmatpush1.bf16.msra.mxu0 0
      %525 = vmatprep.subr.bf16.mxu0 0
      %526 = vmatpush1.bf16.msra.mxu0 0
      %527 = vmatprep.subr.bf16.mxu0 0
      %528 = vmatpush1.bf16.msra.mxu0 %v511
      %529 = vmatprep.subr.bf16.mxu0 0
      %530 = vmatpush2.bf16.msra.mxu0 0
      %531 = vmatprep.subr.bf16.mxu0 0
      %532 = vmatpush2.bf16.msra.mxu0 0
      %533 = vmatprep.subr.bf16.mxu0 0
      %534 = vmatpush2.bf16.msra.mxu0 0
      %535 = vmatprep.subr.bf16.mxu0 0
      %536 = vmatpush2.bf16.msra.mxu0 0
      %537 = vmatprep.subr.bf16.mxu0 0
      %538 = vmatpush2.bf16.msra.mxu0 0
      %539 = vmatprep.subr.bf16.mxu0 0
      %540 = vmatpush2.bf16.msra.mxu0 0
      %541 = vmatprep.subr.bf16.mxu0 0
      %542 = vmatpush2.bf16.msra.mxu0 0
      %543 = vmatprep.subr.bf16.mxu0 0
      %544 = vmatpush2.bf16.msra.mxu0 0
      %545 = vmatprep.mubr.bf16.mxu0 0
      %546 = vmatmul.mubr.bf16.gmra.mxu0 %v456
      %v547 = vpop.f32.mrf.mxu0
      %v548 = vadd.f32 0.0, %v547
      %v549 = vpop.f32.mrf.mxu0
      %v550 = vpop.f32.mrf.mxu0
      %v551 = vadd.f32 0.0, %v550
      %v552 = vpop.f32.mrf.mxu0
      %553 = vmatprep.mubr.bf16.mxu0 0
      %554 = vmatmul.mubr.bf16.gmra.mxu0 %v459
      %v555 = vpop.f32.mrf.mxu0
      %v556 = vadd.f32 0.0, %v555
      %v557 = vpop.f32.mrf.mxu0
      %v558 = vpop.f32.mrf.mxu0
      %v559 = vadd.f32 0.0, %v558
      %v560 = vpop.f32.mrf.mxu0
      %561 = vmatprep.mubr.bf16.mxu0 0
      %562 = vmatmul.mubr.bf16.gmra.mxu0 %v462
      %v563 = vpop.f32.mrf.mxu0
      %v564 = vadd.f32 0.0, %v563
      %v565 = vpop.f32.mrf.mxu0
      %v566 = vpop.f32.mrf.mxu0
      %v567 = vadd.f32 0.0, %v566
      %v568 = vpop.f32.mrf.mxu0
      %569 = vmatprep.mubr.bf16.mxu0 0
      %570 = vmatmul.mubr.bf16.gmra.mxu0 %v465
      %v571 = vpop.f32.mrf.mxu0
      %v572 = vadd.f32 0.0, %v571
      %v573 = vpop.f32.mrf.mxu0
      %v574 = vpop.f32.mrf.mxu0
      %v575 = vadd.f32 0.0, %v574
      %v576 = vpop.f32.mrf.mxu0
      %577 = vmatprep.mubr.bf16.mxu0 0
      %578 = vmatmul.mubr.bf16.gmra.mxu0 %v468
      %v579 = vpop.f32.mrf.mxu0
      %v580 = vadd.f32 0.0, %v579
      %v581 = vpop.f32.mrf.mxu0
      %v582 = vpop.f32.mrf.mxu0
      %v583 = vadd.f32 0.0, %v582
      %v584 = vpop.f32.mrf.mxu0
      %585 = vmatprep.mubr.bf16.mxu0 0
      %586 = vmatmul.mubr.bf16.gmra.mxu0 %v471
      %v587 = vpop.f32.mrf.mxu0
      %v588 = vadd.f32 0.0, %v587
      %v589 = vpop.f32.mrf.mxu0
      %v590 = vpop.f32.mrf.mxu0
      %v591 = vadd.f32 0.0, %v590
      %v592 = vpop.f32.mrf.mxu0
      %593 = vmatprep.mubr.bf16.mxu0 0
      %594 = vmatmul.mubr.bf16.gmra.mxu0 %v474
      %v595 = vpop.f32.mrf.mxu0
      %v596 = vadd.f32 0.0, %v595
      %v597 = vpop.f32.mrf.mxu0
      %v598 = vpop.f32.mrf.mxu0
      %v599 = vadd.f32 0.0, %v598
      %v600 = vpop.f32.mrf.mxu0
      %601 = vmatprep.mubr.bf16.mxu0 0
      %602 = vmatmul.mubr.bf16.gmra.mxu0 %v477
      %v603 = vpop.f32.mrf.mxu0
      %v604 = vadd.f32 0.0, %v603
      %v605 = vpop.f32.mrf.mxu0
      %v606 = vpop.f32.mrf.mxu0
      %v607 = vadd.f32 0.0, %v606
      %v608 = vpop.f32.mrf.mxu0
      %609 = vmatprep.mubr.bf16.mxu0 0
      %610 = vmatmul.mubr.bf16.gmra.mxu0 %v480
      %v611 = vpop.f32.mrf.mxu0
      %v612 = vadd.f32 0.0, %v611
      %v613 = vpop.f32.mrf.mxu0
      %v614 = vpop.f32.mrf.mxu0
      %v615 = vadd.f32 0.0, %v614
      %v616 = vpop.f32.mrf.mxu0
      %617 = vmatprep.mubr.bf16.mxu0 0
      %618 = vmatmul.mubr.bf16.gmra.mxu0 %v483
      %v619 = vpop.f32.mrf.mxu0
      %v620 = vadd.f32 0.0, %v619
      %v621 = vpop.f32.mrf.mxu0
      %v622 = vpop.f32.mrf.mxu0
      %v623 = vadd.f32 0.0, %v622
      %v624 = vpop.f32.mrf.mxu0
      %625 = vmatprep.mubr.bf16.mxu0 0
      %626 = vmatmul.mubr.bf16.gmra.mxu0 %v486
      %v627 = vpop.f32.mrf.mxu0
      %v628 = vadd.f32 0.0, %v627
      %v629 = vpop.f32.mrf.mxu0
      %v630 = vpop.f32.mrf.mxu0
      %v631 = vadd.f32 0.0, %v630
      %v632 = vpop.f32.mrf.mxu0
      %633 = vmatprep.mubr.bf16.mxu0 0
      %634 = vmatmul.mubr.bf16.gmra.mxu0 %v489
      %v635 = vpop.f32.mrf.mxu0
      %v636 = vadd.f32 0.0, %v635
      %v637 = vpop.f32.mrf.mxu0
      %v638 = vpop.f32.mrf.mxu0
      %v639 = vadd.f32 0.0, %v638
      %v640 = vpop.f32.mrf.mxu0
      %641 = vmatprep.mubr.bf16.mxu0 0
      %642 = vmatmul.mubr.bf16.gmra.mxu0 %v492
      %v643 = vpop.f32.mrf.mxu0
      %v644 = vadd.f32 0.0, %v643
      %v645 = vpop.f32.mrf.mxu0
      %v646 = vpop.f32.mrf.mxu0
      %v647 = vadd.f32 0.0, %v646
      %v648 = vpop.f32.mrf.mxu0
      %649 = vmatprep.mubr.bf16.mxu0 0
      %650 = vmatmul.mubr.bf16.gmra.mxu0 %v495
      %v651 = vpop.f32.mrf.mxu0
      %v652 = vadd.f32 0.0, %v651
      %v653 = vpop.f32.mrf.mxu0
      %v654 = vpop.f32.mrf.mxu0
      %v655 = vadd.f32 0.0, %v654
      %v656 = vpop.f32.mrf.mxu0
      %657 = vmatprep.mubr.bf16.mxu0 0
      %658 = vmatmul.mubr.bf16.gmra.mxu0 %v498
      %v659 = vpop.f32.mrf.mxu0
      %v660 = vadd.f32 0.0, %v659
      %v661 = vpop.f32.mrf.mxu0
      %v662 = vpop.f32.mrf.mxu0
      %v663 = vadd.f32 0.0, %v662
      %v664 = vpop.f32.mrf.mxu0
      %665 = vmatprep.mubr.bf16.mxu0 0
      %666 = vmatmul.mubr.bf16.gmra.mxu0 %v501
      %v667 = vpop.f32.mrf.mxu0
      %v668 = vadd.f32 0.0, %v667
      %v669 = vpop.f32.mrf.mxu0
      %v670 = vpop.f32.mrf.mxu0
      %v671 = vadd.f32 0.0, %v670
      %v672 = vpop.f32.mrf.mxu0
      %673 = vmatprep.mubr.bf16.mxu0 0
      %674 = vmatmul.mubr.bf16.gmra.mxu0 %v504
      %v675 = vpop.f32.mrf.mxu0
      %v676 = vadd.f32 0.0, %v675
      %v677 = vpop.f32.mrf.mxu0
      %v678 = vpop.f32.mrf.mxu0
      %v679 = vadd.f32 0.0, %v678
      %v680 = vpop.f32.mrf.mxu0
      %681 = vmatprep.mubr.bf16.mxu0 0
      %682 = vmatmul.mubr.bf16.gmra.mxu0 %v507
      %v683 = vpop.f32.mrf.mxu0
      %v684 = vadd.f32 0.0, %v683
      %v685 = vpop.f32.mrf.mxu0
      %v686 = vpop.f32.mrf.mxu0
      %v687 = vadd.f32 0.0, %v686
      %v688 = vpop.f32.mrf.mxu0
      %689 = vdwg.mxu0
      %v690 = vsel %vm454, %v286, 0
      %v692 = vsel %vm454, %v287, 0
      %v694 = vsel %vm454, %v288, 0
      %v696 = vsel %vm454, %v289, 0
      %v698 = vsel %vm454, %v290, 0
      %v700 = vsel %vm454, %v291, 0
      %v702 = vsel %vm454, %v292, 0
      %v704 = vsel %vm454, %v293, 0
      %v706 = vsel %vm454, %v294, 0
      %v708 = vsel %vm454, %v295, 0
      %v710 = vsel %vm454, %v296, 0
      %v712 = vsel %vm454, %v297, 0
      %v714 = vsel %vm454, %v298, 0
      %v716 = vsel %vm454, %v299, 0
      %v718 = vsel %vm454, %v300, 0
      %v720 = vsel %vm454, %v301, 0
      %v722 = vsel %vm454, %v302, 0
      %v724 = vsel %vm454, %v303, 0
      %v727 = vsel %vm509, %v208, 0
      %729 = vmatprep.subr.bf16.mxu0 0
      %730 = vmatpush1.bf16.msra.mxu0 0
      %731 = vmatprep.subr.bf16.mxu0 0
      %732 = vmatpush1.bf16.msra.mxu0 0
      %733 = vmatprep.subr.bf16.mxu0 0
      %734 = vmatpush1.bf16.msra.mxu0 0
      %735 = vmatprep.subr.bf16.mxu0 0
      %736 = vmatpush1.bf16.msra.mxu0 0
      %737 = vmatprep.subr.bf16.mxu0 0
      %738 = vmatpush1.bf16.msra.mxu0 0
      %739 = vmatprep.subr.bf16.mxu0 0
      %740 = vmatpush1.bf16.msra.mxu0 0
      %741 = vmatprep.subr.bf16.mxu0 0
      %742 = vmatpush1.bf16.msra.mxu0 0
      %743 = vmatprep.subr.bf16.mxu0 0
      %744 = vmatpush1.bf16.msra.mxu0 %v727
      %745 = vmatprep.subr.bf16.mxu0 0
      %746 = vmatpush2.bf16.msra.mxu0 0
      %747 = vmatprep.subr.bf16.mxu0 0
      %748 = vmatpush2.bf16.msra.mxu0 0
      %749 = vmatprep.subr.bf16.mxu0 0
      %750 = vmatpush2.bf16.msra.mxu0 0
      %751 = vmatprep.subr.bf16.mxu0 0
      %752 = vmatpush2.bf16.msra.mxu0 0
      %753 = vmatprep.subr.bf16.mxu0 0
      %754 = vmatpush2.bf16.msra.mxu0 0
      %755 = vmatprep.subr.bf16.mxu0 0
      %756 = vmatpush2.bf16.msra.mxu0 0
      %757 = vmatprep.subr.bf16.mxu0 0
      %758 = vmatpush2.bf16.msra.mxu0 0
      %759 = vmatprep.subr.bf16.mxu0 0
      %760 = vmatpush2.bf16.msra.mxu0 0
      %761 = vmatprep.mubr.bf16.mxu0 0
      %762 = vmatmul.mubr.bf16.gmra.mxu0 %v690
      %v763 = vpop.f32.mrf.mxu0
      %v764 = vadd.f32 %v548, %v763
      %v765 = vpop.f32.mrf.mxu0
      %v766 = vpop.f32.mrf.mxu0
      %v767 = vadd.f32 %v551, %v766
      %v768 = vpop.f32.mrf.mxu0
      %769 = vmatprep.mubr.bf16.mxu0 0
      %770 = vmatmul.mubr.bf16.gmra.mxu0 %v692
      %v771 = vpop.f32.mrf.mxu0
      %v772 = vadd.f32 %v556, %v771
      %v773 = vpop.f32.mrf.mxu0
      %v774 = vpop.f32.mrf.mxu0
      %v775 = vadd.f32 %v559, %v774
      %v776 = vpop.f32.mrf.mxu0
      %777 = vmatprep.mubr.bf16.mxu0 0
      %778 = vmatmul.mubr.bf16.gmra.mxu0 %v694
      %v779 = vpop.f32.mrf.mxu0
      %v780 = vadd.f32 %v564, %v779
      %v781 = vpop.f32.mrf.mxu0
      %v782 = vpop.f32.mrf.mxu0
      %v783 = vadd.f32 %v567, %v782
      %v784 = vpop.f32.mrf.mxu0
      %785 = vmatprep.mubr.bf16.mxu0 0
      %786 = vmatmul.mubr.bf16.gmra.mxu0 %v696
      %v787 = vpop.f32.mrf.mxu0
      %v788 = vadd.f32 %v572, %v787
      %v789 = vpop.f32.mrf.mxu0
      %v790 = vpop.f32.mrf.mxu0
      %v791 = vadd.f32 %v575, %v790
      %v792 = vpop.f32.mrf.mxu0
      %793 = vmatprep.mubr.bf16.mxu0 0
      %794 = vmatmul.mubr.bf16.gmra.mxu0 %v698
      %v795 = vpop.f32.mrf.mxu0
      %v796 = vadd.f32 %v580, %v795
      %v797 = vpop.f32.mrf.mxu0
      %v798 = vpop.f32.mrf.mxu0
      %v799 = vadd.f32 %v583, %v798
      %v800 = vpop.f32.mrf.mxu0
      %801 = vmatprep.mubr.bf16.mxu0 0
      %802 = vmatmul.mubr.bf16.gmra.mxu0 %v700
      %v803 = vpop.f32.mrf.mxu0
      %v804 = vadd.f32 %v588, %v803
      %v805 = vpop.f32.mrf.mxu0
      %v806 = vpop.f32.mrf.mxu0
      %v807 = vadd.f32 %v591, %v806
      %v808 = vpop.f32.mrf.mxu0
      %809 = vmatprep.mubr.bf16.mxu0 0
      %810 = vmatmul.mubr.bf16.gmra.mxu0 %v702
      %v811 = vpop.f32.mrf.mxu0
      %v812 = vadd.f32 %v596, %v811
      %v813 = vpop.f32.mrf.mxu0
      %v814 = vpop.f32.mrf.mxu0
      %v815 = vadd.f32 %v599, %v814
      %v816 = vpop.f32.mrf.mxu0
      %817 = vmatprep.mubr.bf16.mxu0 0
      %818 = vmatmul.mubr.bf16.gmra.mxu0 %v704
      %v819 = vpop.f32.mrf.mxu0
      %v820 = vadd.f32 %v604, %v819
      %v821 = vpop.f32.mrf.mxu0
      %v822 = vpop.f32.mrf.mxu0
      %v823 = vadd.f32 %v607, %v822
      %v824 = vpop.f32.mrf.mxu0
      %825 = vmatprep.mubr.bf16.mxu0 0
      %826 = vmatmul.mubr.bf16.gmra.mxu0 %v706
      %v827 = vpop.f32.mrf.mxu0
      %v828 = vadd.f32 %v612, %v827
      %v829 = vpop.f32.mrf.mxu0
      %v830 = vpop.f32.mrf.mxu0
      %v831 = vadd.f32 %v615, %v830
      %v832 = vpop.f32.mrf.mxu0
      %833 = vmatprep.mubr.bf16.mxu0 0
      %834 = vmatmul.mubr.bf16.gmra.mxu0 %v708
      %v835 = vpop.f32.mrf.mxu0
      %v836 = vadd.f32 %v620, %v835
      %v837 = vpop.f32.mrf.mxu0
      %v838 = vpop.f32.mrf.mxu0
      %v839 = vadd.f32 %v623, %v838
      %v840 = vpop.f32.mrf.mxu0
      %841 = vmatprep.mubr.bf16.mxu0 0
      %842 = vmatmul.mubr.bf16.gmra.mxu0 %v710
      %v843 = vpop.f32.mrf.mxu0
      %v844 = vadd.f32 %v628, %v843
      %v845 = vpop.f32.mrf.mxu0
      %v846 = vpop.f32.mrf.mxu0
      %v847 = vadd.f32 %v631, %v846
      %v848 = vpop.f32.mrf.mxu0
      %849 = vmatprep.mubr.bf16.mxu0 0
      %850 = vmatmul.mubr.bf16.gmra.mxu0 %v712
      %v851 = vpop.f32.mrf.mxu0
      %v852 = vadd.f32 %v636, %v851
      %v853 = vpop.f32.mrf.mxu0
      %v854 = vpop.f32.mrf.mxu0
      %v855 = vadd.f32 %v639, %v854
      %v856 = vpop.f32.mrf.mxu0
      %857 = vmatprep.mubr.bf16.mxu0 0
      %858 = vmatmul.mubr.bf16.gmra.mxu0 %v714
      %v859 = vpop.f32.mrf.mxu0
      %v860 = vadd.f32 %v644, %v859
      %v861 = vpop.f32.mrf.mxu0
      %v862 = vpop.f32.mrf.mxu0
      %v863 = vadd.f32 %v647, %v862
      %v864 = vpop.f32.mrf.mxu0
      %865 = vmatprep.mubr.bf16.mxu0 0
      %866 = vmatmul.mubr.bf16.gmra.mxu0 %v716
      %v867 = vpop.f32.mrf.mxu0
      %v868 = vadd.f32 %v652, %v867
      %v869 = vpop.f32.mrf.mxu0
      %v870 = vpop.f32.mrf.mxu0
      %v871 = vadd.f32 %v655, %v870
      %v872 = vpop.f32.mrf.mxu0
      %873 = vmatprep.mubr.bf16.mxu0 0
      %874 = vmatmul.mubr.bf16.gmra.mxu0 %v718
      %v875 = vpop.f32.mrf.mxu0
      %v876 = vadd.f32 %v660, %v875
      %v877 = vpop.f32.mrf.mxu0
      %v878 = vpop.f32.mrf.mxu0
      %v879 = vadd.f32 %v663, %v878
      %v880 = vpop.f32.mrf.mxu0
      %881 = vmatprep.mubr.bf16.mxu0 0
      %882 = vmatmul.mubr.bf16.gmra.mxu0 %v720
      %v883 = vpop.f32.mrf.mxu0
      %v884 = vadd.f32 %v668, %v883
      %v885 = vpop.f32.mrf.mxu0
      %v886 = vpop.f32.mrf.mxu0
      %v887 = vadd.f32 %v671, %v886
      %v888 = vpop.f32.mrf.mxu0
      %889 = vmatprep.mubr.bf16.mxu0 0
      %890 = vmatmul.mubr.bf16.gmra.mxu0 %v722
      %v891 = vpop.f32.mrf.mxu0
      %v892 = vadd.f32 %v676, %v891
      %v893 = vpop.f32.mrf.mxu0
      %v894 = vpop.f32.mrf.mxu0
      %v895 = vadd.f32 %v679, %v894
      %v896 = vpop.f32.mrf.mxu0
      %897 = vmatprep.mubr.bf16.mxu0 0
      %898 = vmatmul.mubr.bf16.gmra.mxu0 %v724
      %v899 = vpop.f32.mrf.mxu0
      %v900 = vadd.f32 %v684, %v899
      %v901 = vpop.f32.mrf.mxu0
      %v902 = vpop.f32.mrf.mxu0
      %v903 = vadd.f32 %v687, %v902
      %v904 = vpop.f32.mrf.mxu0
      %905 = vdwg.mxu0
      %v906 = vld [vmem:[%s165] sm:$0xe]
      %s907 = scalar_lea.vmem %s1, 4
      %v908 = vld [vmem:[%s907] sm:$0x3]
      %v910 = vunpack.c.l.b16 %v906
      %v911 = vpack.c.b16 %v250, %v910
      %vm912 = vcmask 1046528
      %v913 = vrot.slane %v911, 1
      %v914 = vrot.slane %v287, 1
      %v915 = vsel %vm912, %v913, %v914
      %v916 = vrot.slane %v288, 1
      %v917 = vsel %vm912, %v914, %v916
      %v918 = vrot.slane %v289, 1
      %v919 = vsel %vm912, %v916, %v918
      %v920 = vrot.slane %v290, 1
      %v921 = vsel %vm912, %v918, %v920
      %v922 = vrot.slane %v291, 1
      %v923 = vsel %vm912, %v920, %v922
      %v924 = vrot.slane %v292, 1
      %v925 = vsel %vm912, %v922, %v924
      %v926 = vrot.slane %v293, 1
      %v927 = vsel %vm912, %v924, %v926
      %v928 = vrot.slane %v294, 1
      %v929 = vsel %vm912, %v926, %v928
      %v930 = vrot.slane %v295, 1
      %v931 = vsel %vm912, %v928, %v930
      %v932 = vrot.slane %v296, 1
      %v933 = vsel %vm912, %v930, %v932
      %v934 = vrot.slane %v297, 1
      %v935 = vsel %vm912, %v932, %v934
      %v936 = vrot.slane %v298, 1
      %v937 = vsel %vm912, %v934, %v936
      %v938 = vrot.slane %v299, 1
      %v939 = vsel %vm912, %v936, %v938
      %v940 = vrot.slane %v300, 1
      %v941 = vsel %vm912, %v938, %v940
      %v942 = vrot.slane %v301, 1
      %v943 = vsel %vm912, %v940, %v942
      %v944 = vrot.slane %v302, 1
      %v945 = vsel %vm912, %v942, %v944
      %v946 = vrot.slane %v303, 1
      %v947 = vsel %vm912, %v944, %v946
      %v948 = vrot.slane %v304, 1
      %v949 = vsel %vm912, %v946, %v948
      %v951 = vsel %vm454, %v915, 0
      %v954 = vsel %vm454, %v917, 0
      %v957 = vsel %vm454, %v919, 0
      %v960 = vsel %vm454, %v921, 0
      %v963 = vsel %vm454, %v923, 0
      %v966 = vsel %vm454, %v925, 0
      %v969 = vsel %vm454, %v927, 0
      %v972 = vsel %vm454, %v929, 0
      %v975 = vsel %vm454, %v931, 0
      %v978 = vsel %vm454, %v933, 0
      %v981 = vsel %vm454, %v935, 0
      %v984 = vsel %vm454, %v937, 0
      %v987 = vsel %vm454, %v939, 0
      %v990 = vsel %vm454, %v941, 0
      %v993 = vsel %vm454, %v943, 0
      %v996 = vsel %vm454, %v945, 0
      %v999 = vsel %vm454, %v947, 0
      %v1002 = vsel %vm454, %v949, 0
      %v1005 = vsel %vm509, %v908, 0
      %1007 = vmatprep.subr.bf16.mxu0 0
      %1008 = vmatpush1.bf16.msra.mxu0 0
      %1009 = vmatprep.subr.bf16.mxu0 0
      %1010 = vmatpush1.bf16.msra.mxu0 0
      %1011 = vmatprep.subr.bf16.mxu0 0
      %1012 = vmatpush1.bf16.msra.mxu0 0
      %1013 = vmatprep.subr.bf16.mxu0 0
      %1014 = vmatpush1.bf16.msra.mxu0 0
      %1015 = vmatprep.subr.bf16.mxu0 0
      %1016 = vmatpush1.bf16.msra.mxu0 0
      %1017 = vmatprep.subr.bf16.mxu0 0
      %1018 = vmatpush1.bf16.msra.mxu0 0
      %1019 = vmatprep.subr.bf16.mxu0 0
      %1020 = vmatpush1.bf16.msra.mxu0 0
      %1021 = vmatprep.subr.bf16.mxu0 0
      %1022 = vmatpush1.bf16.msra.mxu0 %v1005
      %1023 = vmatprep.subr.bf16.mxu0 0
      %1024 = vmatpush2.bf16.msra.mxu0 0
      %1025 = vmatprep.subr.bf16.mxu0 0
      %1026 = vmatpush2.bf16.msra.mxu0 0
      %1027 = vmatprep.subr.bf16.mxu0 0
      %1028 = vmatpush2.bf16.msra.mxu0 0
      %1029 = vmatprep.subr.bf16.mxu0 0
      %1030 = vmatpush2.bf16.msra.mxu0 0
      %1031 = vmatprep.subr.bf16.mxu0 0
      %1032 = vmatpush2.bf16.msra.mxu0 0
      %1033 = vmatprep.subr.bf16.mxu0 0
      %1034 = vmatpush2.bf16.msra.mxu0 0
      %1035 = vmatprep.subr.bf16.mxu0 0
      %1036 = vmatpush2.bf16.msra.mxu0 0
      %1037 = vmatprep.subr.bf16.mxu0 0
      %1038 = vmatpush2.bf16.msra.mxu0 0
      %1039 = vmatprep.mubr.bf16.mxu0 0
      %1040 = vmatmul.mubr.bf16.gmra.mxu0 %v951
      %v1041 = vpop.f32.mrf.mxu0
      %v1042 = vadd.f32 0.0, %v1041
      %v1043 = vpop.f32.mrf.mxu0
      %v1044 = vpop.f32.mrf.mxu0
      %v1045 = vadd.f32 0.0, %v1044
      %v1046 = vpop.f32.mrf.mxu0
      %1047 = vmatprep.mubr.bf16.mxu0 0
      %1048 = vmatmul.mubr.bf16.gmra.mxu0 %v954
      %v1049 = vpop.f32.mrf.mxu0
      %v1050 = vadd.f32 0.0, %v1049
      %v1051 = vpop.f32.mrf.mxu0
      %v1052 = vpop.f32.mrf.mxu0
      %v1053 = vadd.f32 0.0, %v1052
      %v1054 = vpop.f32.mrf.mxu0
      %1055 = vmatprep.mubr.bf16.mxu0 0
      %1056 = vmatmul.mubr.bf16.gmra.mxu0 %v957
      %v1057 = vpop.f32.mrf.mxu0
      %v1058 = vadd.f32 0.0, %v1057
      %v1059 = vpop.f32.mrf.mxu0
      %v1060 = vpop.f32.mrf.mxu0
      %v1061 = vadd.f32 0.0, %v1060
      %v1062 = vpop.f32.mrf.mxu0
      %1063 = vmatprep.mubr.bf16.mxu0 0
      %1064 = vmatmul.mubr.bf16.gmra.mxu0 %v960
      %v1065 = vpop.f32.mrf.mxu0
      %v1066 = vadd.f32 0.0, %v1065
      %v1067 = vpop.f32.mrf.mxu0
      %v1068 = vpop.f32.mrf.mxu0
      %v1069 = vadd.f32 0.0, %v1068
      %v1070 = vpop.f32.mrf.mxu0
      %1071 = vmatprep.mubr.bf16.mxu0 0
      %1072 = vmatmul.mubr.bf16.gmra.mxu0 %v963
      %v1073 = vpop.f32.mrf.mxu0
      %v1074 = vadd.f32 0.0, %v1073
      %v1075 = vpop.f32.mrf.mxu0
      %v1076 = vpop.f32.mrf.mxu0
      %v1077 = vadd.f32 0.0, %v1076
      %v1078 = vpop.f32.mrf.mxu0
      %1079 = vmatprep.mubr.bf16.mxu0 0
      %1080 = vmatmul.mubr.bf16.gmra.mxu0 %v966
      %v1081 = vpop.f32.mrf.mxu0
      %v1082 = vadd.f32 0.0, %v1081
      %v1083 = vpop.f32.mrf.mxu0
      %v1084 = vpop.f32.mrf.mxu0
      %v1085 = vadd.f32 0.0, %v1084
      %v1086 = vpop.f32.mrf.mxu0
      %1087 = vmatprep.mubr.bf16.mxu0 0
      %1088 = vmatmul.mubr.bf16.gmra.mxu0 %v969
      %v1089 = vpop.f32.mrf.mxu0
      %v1090 = vadd.f32 0.0, %v1089
      %v1091 = vpop.f32.mrf.mxu0
      %v1092 = vpop.f32.mrf.mxu0
      %v1093 = vadd.f32 0.0, %v1092
      %v1094 = vpop.f32.mrf.mxu0
      %1095 = vmatprep.mubr.bf16.mxu0 0
      %1096 = vmatmul.mubr.bf16.gmra.mxu0 %v972
      %v1097 = vpop.f32.mrf.mxu0
      %v1098 = vadd.f32 0.0, %v1097
      %v1099 = vpop.f32.mrf.mxu0
      %v1100 = vpop.f32.mrf.mxu0
      %v1101 = vadd.f32 0.0, %v1100
      %v1102 = vpop.f32.mrf.mxu0
      %1103 = vmatprep.mubr.bf16.mxu0 0
      %1104 = vmatmul.mubr.bf16.gmra.mxu0 %v975
      %v1105 = vpop.f32.mrf.mxu0
      %v1106 = vadd.f32 0.0, %v1105
      %v1107 = vpop.f32.mrf.mxu0
      %v1108 = vpop.f32.mrf.mxu0
      %v1109 = vadd.f32 0.0, %v1108
      %v1110 = vpop.f32.mrf.mxu0
      %1111 = vmatprep.mubr.bf16.mxu0 0
      %1112 = vmatmul.mubr.bf16.gmra.mxu0 %v978
      %v1113 = vpop.f32.mrf.mxu0
      %v1114 = vadd.f32 0.0, %v1113
      %v1115 = vpop.f32.mrf.mxu0
      %v1116 = vpop.f32.mrf.mxu0
      %v1117 = vadd.f32 0.0, %v1116
      %v1118 = vpop.f32.mrf.mxu0
      %1119 = vmatprep.mubr.bf16.mxu0 0
      %1120 = vmatmul.mubr.bf16.gmra.mxu0 %v981
      %v1121 = vpop.f32.mrf.mxu0
      %v1122 = vadd.f32 0.0, %v1121
      %v1123 = vpop.f32.mrf.mxu0
      %v1124 = vpop.f32.mrf.mxu0
      %v1125 = vadd.f32 0.0, %v1124
      %v1126 = vpop.f32.mrf.mxu0
      %1127 = vmatprep.mubr.bf16.mxu0 0
      %1128 = vmatmul.mubr.bf16.gmra.mxu0 %v984
      %v1129 = vpop.f32.mrf.mxu0
      %v1130 = vadd.f32 0.0, %v1129
      %v1131 = vpop.f32.mrf.mxu0
      %v1132 = vpop.f32.mrf.mxu0
      %v1133 = vadd.f32 0.0, %v1132
      %v1134 = vpop.f32.mrf.mxu0
      %1135 = vmatprep.mubr.bf16.mxu0 0
      %1136 = vmatmul.mubr.bf16.gmra.mxu0 %v987
      %v1137 = vpop.f32.mrf.mxu0
      %v1138 = vadd.f32 0.0, %v1137
      %v1139 = vpop.f32.mrf.mxu0
      %v1140 = vpop.f32.mrf.mxu0
      %v1141 = vadd.f32 0.0, %v1140
      %v1142 = vpop.f32.mrf.mxu0
      %1143 = vmatprep.mubr.bf16.mxu0 0
      %1144 = vmatmul.mubr.bf16.gmra.mxu0 %v990
      %v1145 = vpop.f32.mrf.mxu0
      %v1146 = vadd.f32 0.0, %v1145
      %v1147 = vpop.f32.mrf.mxu0
      %v1148 = vpop.f32.mrf.mxu0
      %v1149 = vadd.f32 0.0, %v1148
      %v1150 = vpop.f32.mrf.mxu0
      %1151 = vmatprep.mubr.bf16.mxu0 0
      %1152 = vmatmul.mubr.bf16.gmra.mxu0 %v993
      %v1153 = vpop.f32.mrf.mxu0
      %v1154 = vadd.f32 0.0, %v1153
      %v1155 = vpop.f32.mrf.mxu0
      %v1156 = vpop.f32.mrf.mxu0
      %v1157 = vadd.f32 0.0, %v1156
      %v1158 = vpop.f32.mrf.mxu0
      %1159 = vmatprep.mubr.bf16.mxu0 0
      %1160 = vmatmul.mubr.bf16.gmra.mxu0 %v996
      %v1161 = vpop.f32.mrf.mxu0
      %v1162 = vadd.f32 0.0, %v1161
      %v1163 = vpop.f32.mrf.mxu0
      %v1164 = vpop.f32.mrf.mxu0
      %v1165 = vadd.f32 0.0, %v1164
      %v1166 = vpop.f32.mrf.mxu0
      %1167 = vmatprep.mubr.bf16.mxu0 0
      %1168 = vmatmul.mubr.bf16.gmra.mxu0 %v999
      %v1169 = vpop.f32.mrf.mxu0
      %v1170 = vadd.f32 0.0, %v1169
      %v1171 = vpop.f32.mrf.mxu0
      %v1172 = vpop.f32.mrf.mxu0
      %v1173 = vadd.f32 0.0, %v1172
      %v1174 = vpop.f32.mrf.mxu0
      %1175 = vmatprep.mubr.bf16.mxu0 0
      %1176 = vmatmul.mubr.bf16.gmra.mxu0 %v1002
      %v1177 = vpop.f32.mrf.mxu0
      %v1178 = vadd.f32 0.0, %v1177
      %v1179 = vpop.f32.mrf.mxu0
      %v1180 = vpop.f32.mrf.mxu0
      %v1181 = vadd.f32 0.0, %v1180
      %v1182 = vpop.f32.mrf.mxu0
      %1183 = vdwg.mxu0
      %v1184 = vadd.f32 %v764, %v1042
      %v1185 = vadd.f32 %v767, %v1045
      %v1186 = vadd.f32 %v772, %v1050
      %v1187 = vadd.f32 %v775, %v1053
      %v1188 = vadd.f32 %v780, %v1058
      %v1189 = vadd.f32 %v783, %v1061
      %v1190 = vadd.f32 %v788, %v1066
      %v1191 = vadd.f32 %v791, %v1069
      %v1192 = vadd.f32 %v796, %v1074
      %v1193 = vadd.f32 %v799, %v1077
      %v1194 = vadd.f32 %v804, %v1082
      %v1195 = vadd.f32 %v807, %v1085
      %v1196 = vadd.f32 %v812, %v1090
      %v1197 = vadd.f32 %v815, %v1093
      %v1198 = vadd.f32 %v820, %v1098
      %v1199 = vadd.f32 %v823, %v1101
      %v1200 = vadd.f32 %v828, %v1106
      %v1201 = vadd.f32 %v831, %v1109
      %v1202 = vadd.f32 %v836, %v1114
      %v1203 = vadd.f32 %v839, %v1117
      %v1204 = vadd.f32 %v844, %v1122
      %v1205 = vadd.f32 %v847, %v1125
      %v1206 = vadd.f32 %v852, %v1130
      %v1207 = vadd.f32 %v855, %v1133
      %v1208 = vadd.f32 %v860, %v1138
      %v1209 = vadd.f32 %v863, %v1141
      %v1210 = vadd.f32 %v868, %v1146
      %v1211 = vadd.f32 %v871, %v1149
      %v1212 = vadd.f32 %v876, %v1154
      %v1213 = vadd.f32 %v879, %v1157
      %v1214 = vadd.f32 %v884, %v1162
      %v1215 = vadd.f32 %v887, %v1165
      %v1216 = vadd.f32 %v892, %v1170
      %v1217 = vadd.f32 %v895, %v1173
      %v1218 = vadd.f32 %v900, %v1178
      %v1219 = vadd.f32 %v903, %v1181
      %v1220 = vld [vmem:[%s165 + $0x8] sm:$0xe]
      %v1221 = vld [vmem:[%s165 + $0xc] sm:$0xf]
      %v1222 = vld [vmem:[%s165 + $0x10] sm:$0xf]
      %v1223 = vld [vmem:[%s165 + $0x14] sm:$0xf]
      %v1224 = vld [vmem:[%s165 + $0x18] sm:$0xf]
      %v1225 = vld [vmem:[%s165 + $0x1c] sm:$0xf]
      %v1226 = vld [vmem:[%s165 + $0x20] sm:$0xf]
      %v1227 = vld [vmem:[%s165 + $0x24] sm:$0xf]
      %v1228 = vld [vmem:[%s165 + $0x28] sm:$0xf]
      %v1229 = vld [vmem:[%s165 + $0x2c] sm:$0xf]
      %v1230 = vld [vmem:[%s165 + $0x30] sm:$0xf]
      %v1231 = vld [vmem:[%s165 + $0x34] sm:$0xf]
      %v1232 = vld [vmem:[%s165 + $0x38] sm:$0xf]
      %v1233 = vld [vmem:[%s165 + $0x3c] sm:$0xf]
      %v1234 = vld [vmem:[%s165 + $0x40] sm:$0xf]
      %v1235 = vld [vmem:[%s165 + $0x44] sm:$0xf]
      %v1236 = vld [vmem:[%s165 + $0x48] sm:$0xf]
      %v1237 = vld [vmem:[%s165 + $0x4c] sm:$0xf]
      %v1238 = vld [vmem:[%s165 + $0x50] sm:$0xf]
      %v1239 = vld [vmem:[%s165 + $0x54] sm:$0xf]
      %v1240 = vld [vmem:[%s165 + $0x58] sm:$0xf]
      %v1241 = vld [vmem:[%s165 + $0x5c] sm:$0xf]
      %v1242 = vld [vmem:[%s165 + $0x60] sm:$0xf]
      %v1243 = vld [vmem:[%s165 + $0x64] sm:$0xf]
      %v1244 = vld [vmem:[%s165 + $0x68] sm:$0xf]
      %v1245 = vld [vmem:[%s165 + $0x6c] sm:$0xf]
      %v1246 = vld [vmem:[%s165 + $0x70] sm:$0xf]
      %v1247 = vld [vmem:[%s165 + $0x74] sm:$0xf]
      %v1248 = vld [vmem:[%s165 + $0x78] sm:$0xf]
      %v1249 = vld [vmem:[%s165 + $0x7c] sm:$0xf]
      %v1250 = vld [vmem:[%s165 + $0x80] sm:$0xf]
      %v1251 = vld [vmem:[%s165 + $0x84] sm:$0xf]
      %v1252 = vld [vmem:[%s165 + $0x88] sm:$0xf]
      %v1253 = vld [vmem:[%s165 + $0x8c] sm:$0xf]
      %v1254 = vld [vmem:[%s165 + $0x90] sm:$0xf]
      %v1255 = vld [vmem:[%s165 + $0x94] sm:$0xf]
      %v1256 = vld [vmem:[%s165 + $0x98] sm:$0x1]
      %s1257 = scalar_lea.vmem %s1, 6
      %v1258 = vld [vmem:[%s1257] sm:$0x3]
      %v1296 = vunpack.c.l.b16 %v1220
      %v1297 = vunpack.c.l.b16 %v1221
      %v1298 = vunpack.c.l.b16 %v1222
      %v1299 = vunpack.c.l.b16 %v1223
      %v1300 = vunpack.c.l.b16 %v1224
      %v1301 = vunpack.c.l.b16 %v1225
      %v1302 = vunpack.c.l.b16 %v1226
      %v1303 = vunpack.c.l.b16 %v1227
      %v1304 = vunpack.c.l.b16 %v1228
      %v1305 = vunpack.c.l.b16 %v1229
      %v1306 = vunpack.c.l.b16 %v1230
      %v1307 = vunpack.c.l.b16 %v1231
      %v1308 = vunpack.c.l.b16 %v1232
      %v1309 = vunpack.c.l.b16 %v1233
      %v1310 = vunpack.c.l.b16 %v1234
      %v1311 = vunpack.c.l.b16 %v1235
      %v1312 = vunpack.c.l.b16 %v1236
      %v1313 = vunpack.c.l.b16 %v1237
      %v1314 = vunpack.c.l.b16 %v1238
      %v1315 = vunpack.c.l.b16 %v1239
      %v1316 = vunpack.c.l.b16 %v1240
      %v1317 = vunpack.c.l.b16 %v1241
      %v1318 = vunpack.c.l.b16 %v1242
      %v1319 = vunpack.c.l.b16 %v1243
      %v1320 = vunpack.c.l.b16 %v1244
      %v1321 = vunpack.c.l.b16 %v1245
      %v1322 = vunpack.c.l.b16 %v1246
      %v1323 = vunpack.c.l.b16 %v1247
      %v1324 = vunpack.c.l.b16 %v1248
      %v1325 = vunpack.c.l.b16 %v1249
      %v1326 = vunpack.c.l.b16 %v1250
      %v1327 = vunpack.c.l.b16 %v1251
      %v1328 = vunpack.c.l.b16 %v1252
      %v1329 = vunpack.c.l.b16 %v1253
      %v1330 = vunpack.c.l.b16 %v1254
      %v1331 = vunpack.c.l.b16 %v1255
      %v1332 = vunpack.c.l.b16 %v1256
      %v1333 = vpack.c.b16 %v1297, %v1296
      %v1334 = vpack.c.b16 %v1299, %v1298
      %v1335 = vpack.c.b16 %v1301, %v1300
      %v1336 = vpack.c.b16 %v1303, %v1302
      %v1337 = vpack.c.b16 %v1305, %v1304
      %v1338 = vpack.c.b16 %v1307, %v1306
      %v1339 = vpack.c.b16 %v1309, %v1308
      %v1340 = vpack.c.b16 %v1311, %v1310
      %v1341 = vpack.c.b16 %v1313, %v1312
      %v1342 = vpack.c.b16 %v1315, %v1314
      %v1343 = vpack.c.b16 %v1317, %v1316
      %v1344 = vpack.c.b16 %v1319, %v1318
      %v1345 = vpack.c.b16 %v1321, %v1320
      %v1346 = vpack.c.b16 %v1323, %v1322
      %v1347 = vpack.c.b16 %v1325, %v1324
      %v1348 = vpack.c.b16 %v1327, %v1326
      %v1349 = vpack.c.b16 %v1329, %v1328
      %v1350 = vpack.c.b16 %v1331, %v1330
      %v1351 = vpack.c.b16 %v1332, %v1332
      %v1352 = vrot.slane %v1333, 1
      %v1353 = vrot.slane %v1334, 1
      %v1354 = vsel %vm912, %v1352, %v1353
      %v1355 = vrot.slane %v1335, 1
      %v1356 = vsel %vm912, %v1353, %v1355
      %v1357 = vrot.slane %v1336, 1
      %v1358 = vsel %vm912, %v1355, %v1357
      %v1359 = vrot.slane %v1337, 1
      %v1360 = vsel %vm912, %v1357, %v1359
      %v1361 = vrot.slane %v1338, 1
      %v1362 = vsel %vm912, %v1359, %v1361
      %v1363 = vrot.slane %v1339, 1
      %v1364 = vsel %vm912, %v1361, %v1363
      %v1365 = vrot.slane %v1340, 1
      %v1366 = vsel %vm912, %v1363, %v1365
      %v1367 = vrot.slane %v1341, 1
      %v1368 = vsel %vm912, %v1365, %v1367
      %v1369 = vrot.slane %v1342, 1
      %v1370 = vsel %vm912, %v1367, %v1369
      %v1371 = vrot.slane %v1343, 1
      %v1372 = vsel %vm912, %v1369, %v1371
      %v1373 = vrot.slane %v1344, 1
      %v1374 = vsel %vm912, %v1371, %v1373
      %v1375 = vrot.slane %v1345, 1
      %v1376 = vsel %vm912, %v1373, %v1375
      %v1377 = vrot.slane %v1346, 1
      %v1378 = vsel %vm912, %v1375, %v1377
      %v1379 = vrot.slane %v1347, 1
      %v1380 = vsel %vm912, %v1377, %v1379
      %v1381 = vrot.slane %v1348, 1
      %v1382 = vsel %vm912, %v1379, %v1381
      %v1383 = vrot.slane %v1349, 1
      %v1384 = vsel %vm912, %v1381, %v1383
      %v1385 = vrot.slane %v1350, 1
      %v1386 = vsel %vm912, %v1383, %v1385
      %v1387 = vrot.slane %v1351, 1
      %v1388 = vsel %vm912, %v1385, %v1387
      %v1390 = vsel %vm454, %v1354, 0
      %v1393 = vsel %vm454, %v1356, 0
      %v1396 = vsel %vm454, %v1358, 0
      %v1399 = vsel %vm454, %v1360, 0
      %v1402 = vsel %vm454, %v1362, 0
      %v1405 = vsel %vm454, %v1364, 0
      %v1408 = vsel %vm454, %v1366, 0
      %v1411 = vsel %vm454, %v1368, 0
      %v1414 = vsel %vm454, %v1370, 0
      %v1417 = vsel %vm454, %v1372, 0
      %v1420 = vsel %vm454, %v1374, 0
      %v1423 = vsel %vm454, %v1376, 0
      %v1426 = vsel %vm454, %v1378, 0
      %v1429 = vsel %vm454, %v1380, 0
      %v1432 = vsel %vm454, %v1382, 0
      %v1435 = vsel %vm454, %v1384, 0
      %v1438 = vsel %vm454, %v1386, 0
      %v1441 = vsel %vm454, %v1388, 0
      %v1444 = vsel %vm509, %v1258, 0
      %1446 = vmatprep.subr.bf16.mxu0 0
      %1447 = vmatpush1.bf16.msra.mxu0 0
      %1448 = vmatprep.subr.bf16.mxu0 0
      %1449 = vmatpush1.bf16.msra.mxu0 0
      %1450 = vmatprep.subr.bf16.mxu0 0
      %1451 = vmatpush1.bf16.msra.mxu0 0
      %1452 = vmatprep.subr.bf16.mxu0 0
      %1453 = vmatpush1.bf16.msra.mxu0 0
      %1454 = vmatprep.subr.bf16.mxu0 0
      %1455 = vmatpush1.bf16.msra.mxu0 0
      %1456 = vmatprep.subr.bf16.mxu0 0
      %1457 = vmatpush1.bf16.msra.mxu0 0
      %1458 = vmatprep.subr.bf16.mxu0 0
      %1459 = vmatpush1.bf16.msra.mxu0 0
      %1460 = vmatprep.subr.bf16.mxu0 0
      %1461 = vmatpush1.bf16.msra.mxu0 %v1444
      %1462 = vmatprep.subr.bf16.mxu0 0
      %1463 = vmatpush2.bf16.msra.mxu0 0
      %1464 = vmatprep.subr.bf16.mxu0 0
      %1465 = vmatpush2.bf16.msra.mxu0 0
      %1466 = vmatprep.subr.bf16.mxu0 0
      %1467 = vmatpush2.bf16.msra.mxu0 0
      %1468 = vmatprep.subr.bf16.mxu0 0
      %1469 = vmatpush2.bf16.msra.mxu0 0
      %1470 = vmatprep.subr.bf16.mxu0 0
      %1471 = vmatpush2.bf16.msra.mxu0 0
      %1472 = vmatprep.subr.bf16.mxu0 0
      %1473 = vmatpush2.bf16.msra.mxu0 0
      %1474 = vmatprep.subr.bf16.mxu0 0
      %1475 = vmatpush2.bf16.msra.mxu0 0
      %1476 = vmatprep.subr.bf16.mxu0 0
      %1477 = vmatpush2.bf16.msra.mxu0 0
      %1478 = vmatprep.mubr.bf16.mxu0 0
      %1479 = vmatmul.mubr.bf16.gmra.mxu0 %v1390
      %v1480 = vpop.f32.mrf.mxu0
      %v1481 = vadd.f32 0.0, %v1480
      %v1482 = vpop.f32.mrf.mxu0
      %v1483 = vpop.f32.mrf.mxu0
      %v1484 = vadd.f32 0.0, %v1483
      %v1485 = vpop.f32.mrf.mxu0
      %1486 = vmatprep.mubr.bf16.mxu0 0
      %1487 = vmatmul.mubr.bf16.gmra.mxu0 %v1393
      %v1488 = vpop.f32.mrf.mxu0
      %v1489 = vadd.f32 0.0, %v1488
      %v1490 = vpop.f32.mrf.mxu0
      %v1491 = vpop.f32.mrf.mxu0
      %v1492 = vadd.f32 0.0, %v1491
      %v1493 = vpop.f32.mrf.mxu0
      %1494 = vmatprep.mubr.bf16.mxu0 0
      %1495 = vmatmul.mubr.bf16.gmra.mxu0 %v1396
      %v1496 = vpop.f32.mrf.mxu0
      %v1497 = vadd.f32 0.0, %v1496
      %v1498 = vpop.f32.mrf.mxu0
      %v1499 = vpop.f32.mrf.mxu0
      %v1500 = vadd.f32 0.0, %v1499
      %v1501 = vpop.f32.mrf.mxu0
      %1502 = vmatprep.mubr.bf16.mxu0 0
      %1503 = vmatmul.mubr.bf16.gmra.mxu0 %v1399
      %v1504 = vpop.f32.mrf.mxu0
      %v1505 = vadd.f32 0.0, %v1504
      %v1506 = vpop.f32.mrf.mxu0
      %v1507 = vpop.f32.mrf.mxu0
      %v1508 = vadd.f32 0.0, %v1507
      %v1509 = vpop.f32.mrf.mxu0
      %1510 = vmatprep.mubr.bf16.mxu0 0
      %1511 = vmatmul.mubr.bf16.gmra.mxu0 %v1402
      %v1512 = vpop.f32.mrf.mxu0
      %v1513 = vadd.f32 0.0, %v1512
      %v1514 = vpop.f32.mrf.mxu0
      %v1515 = vpop.f32.mrf.mxu0
      %v1516 = vadd.f32 0.0, %v1515
      %v1517 = vpop.f32.mrf.mxu0
      %1518 = vmatprep.mubr.bf16.mxu0 0
      %1519 = vmatmul.mubr.bf16.gmra.mxu0 %v1405
      %v1520 = vpop.f32.mrf.mxu0
      %v1521 = vadd.f32 0.0, %v1520
      %v1522 = vpop.f32.mrf.mxu0
      %v1523 = vpop.f32.mrf.mxu0
      %v1524 = vadd.f32 0.0, %v1523
      %v1525 = vpop.f32.mrf.mxu0
      %1526 = vmatprep.mubr.bf16.mxu0 0
      %1527 = vmatmul.mubr.bf16.gmra.mxu0 %v1408
      %v1528 = vpop.f32.mrf.mxu0
      %v1529 = vadd.f32 0.0, %v1528
      %v1530 = vpop.f32.mrf.mxu0
      %v1531 = vpop.f32.mrf.mxu0
      %v1532 = vadd.f32 0.0, %v1531
      %v1533 = vpop.f32.mrf.mxu0
      %1534 = vmatprep.mubr.bf16.mxu0 0
      %1535 = vmatmul.mubr.bf16.gmra.mxu0 %v1411
      %v1536 = vpop.f32.mrf.mxu0
      %v1537 = vadd.f32 0.0, %v1536
      %v1538 = vpop.f32.mrf.mxu0
      %v1539 = vpop.f32.mrf.mxu0
      %v1540 = vadd.f32 0.0, %v1539
      %v1541 = vpop.f32.mrf.mxu0
      %1542 = vmatprep.mubr.bf16.mxu0 0
      %1543 = vmatmul.mubr.bf16.gmra.mxu0 %v1414
      %v1544 = vpop.f32.mrf.mxu0
      %v1545 = vadd.f32 0.0, %v1544
      %v1546 = vpop.f32.mrf.mxu0
      %v1547 = vpop.f32.mrf.mxu0
      %v1548 = vadd.f32 0.0, %v1547
      %v1549 = vpop.f32.mrf.mxu0
      %1550 = vmatprep.mubr.bf16.mxu0 0
      %1551 = vmatmul.mubr.bf16.gmra.mxu0 %v1417
      %v1552 = vpop.f32.mrf.mxu0
      %v1553 = vadd.f32 0.0, %v1552
      %v1554 = vpop.f32.mrf.mxu0
      %v1555 = vpop.f32.mrf.mxu0
      %v1556 = vadd.f32 0.0, %v1555
      %v1557 = vpop.f32.mrf.mxu0
      %1558 = vmatprep.mubr.bf16.mxu0 0
      %1559 = vmatmul.mubr.bf16.gmra.mxu0 %v1420
      %v1560 = vpop.f32.mrf.mxu0
      %v1561 = vadd.f32 0.0, %v1560
      %v1562 = vpop.f32.mrf.mxu0
      %v1563 = vpop.f32.mrf.mxu0
      %v1564 = vadd.f32 0.0, %v1563
      %v1565 = vpop.f32.mrf.mxu0
      %1566 = vmatprep.mubr.bf16.mxu0 0
      %1567 = vmatmul.mubr.bf16.gmra.mxu0 %v1423
      %v1568 = vpop.f32.mrf.mxu0
      %v1569 = vadd.f32 0.0, %v1568
      %v1570 = vpop.f32.mrf.mxu0
      %v1571 = vpop.f32.mrf.mxu0
      %v1572 = vadd.f32 0.0, %v1571
      %v1573 = vpop.f32.mrf.mxu0
      %1574 = vmatprep.mubr.bf16.mxu0 0
      %1575 = vmatmul.mubr.bf16.gmra.mxu0 %v1426
      %v1576 = vpop.f32.mrf.mxu0
      %v1577 = vadd.f32 0.0, %v1576
      %v1578 = vpop.f32.mrf.mxu0
      %v1579 = vpop.f32.mrf.mxu0
      %v1580 = vadd.f32 0.0, %v1579
      %v1581 = vpop.f32.mrf.mxu0
      %1582 = vmatprep.mubr.bf16.mxu0 0
      %1583 = vmatmul.mubr.bf16.gmra.mxu0 %v1429
      %v1584 = vpop.f32.mrf.mxu0
      %v1585 = vadd.f32 0.0, %v1584
      %v1586 = vpop.f32.mrf.mxu0
      %v1587 = vpop.f32.mrf.mxu0
      %v1588 = vadd.f32 0.0, %v1587
      %v1589 = vpop.f32.mrf.mxu0
      %1590 = vmatprep.mubr.bf16.mxu0 0
      %1591 = vmatmul.mubr.bf16.gmra.mxu0 %v1432
      %v1592 = vpop.f32.mrf.mxu0
      %v1593 = vadd.f32 0.0, %v1592
      %v1594 = vpop.f32.mrf.mxu0
      %v1595 = vpop.f32.mrf.mxu0
      %v1596 = vadd.f32 0.0, %v1595
      %v1597 = vpop.f32.mrf.mxu0
      %1598 = vmatprep.mubr.bf16.mxu0 0
      %1599 = vmatmul.mubr.bf16.gmra.mxu0 %v1435
      %v1600 = vpop.f32.mrf.mxu0
      %v1601 = vadd.f32 0.0, %v1600
      %v1602 = vpop.f32.mrf.mxu0
      %v1603 = vpop.f32.mrf.mxu0
      %v1604 = vadd.f32 0.0, %v1603
      %v1605 = vpop.f32.mrf.mxu0
      %1606 = vmatprep.mubr.bf16.mxu0 0
      %1607 = vmatmul.mubr.bf16.gmra.mxu0 %v1438
      %v1608 = vpop.f32.mrf.mxu0
      %v1609 = vadd.f32 0.0, %v1608
      %v1610 = vpop.f32.mrf.mxu0
      %v1611 = vpop.f32.mrf.mxu0
      %v1612 = vadd.f32 0.0, %v1611
      %v1613 = vpop.f32.mrf.mxu0
      %1614 = vmatprep.mubr.bf16.mxu0 0
      %1615 = vmatmul.mubr.bf16.gmra.mxu0 %v1441
      %v1616 = vpop.f32.mrf.mxu0
      %v1617 = vadd.f32 0.0, %v1616
      %v1618 = vpop.f32.mrf.mxu0
      %v1619 = vpop.f32.mrf.mxu0
      %v1620 = vadd.f32 0.0, %v1619
      %v1621 = vpop.f32.mrf.mxu0
      %1622 = vdwg.mxu0
      %v1623 = vadd.f32 %v1184, %v1481
      %v1624 = vadd.f32 %v1185, %v1484
      %v1625 = vadd.f32 %v1186, %v1489
      %v1626 = vadd.f32 %v1187, %v1492
      %v1627 = vadd.f32 %v1188, %v1497
      %v1628 = vadd.f32 %v1189, %v1500
      %v1629 = vadd.f32 %v1190, %v1505
      %v1630 = vadd.f32 %v1191, %v1508
      %v1631 = vadd.f32 %v1192, %v1513
      %v1632 = vadd.f32 %v1193, %v1516
      %v1633 = vadd.f32 %v1194, %v1521
      %v1634 = vadd.f32 %v1195, %v1524
      %v1635 = vadd.f32 %v1196, %v1529
      %v1636 = vadd.f32 %v1197, %v1532
      %v1637 = vadd.f32 %v1198, %v1537
      %v1638 = vadd.f32 %v1199, %v1540
      %v1639 = vadd.f32 %v1200, %v1545
      %v1640 = vadd.f32 %v1201, %v1548
      %v1641 = vadd.f32 %v1202, %v1553
      %v1642 = vadd.f32 %v1203, %v1556
      %v1643 = vadd.f32 %v1204, %v1561
      %v1644 = vadd.f32 %v1205, %v1564
      %v1645 = vadd.f32 %v1206, %v1569
      %v1646 = vadd.f32 %v1207, %v1572
      %v1647 = vadd.f32 %v1208, %v1577
      %v1648 = vadd.f32 %v1209, %v1580
      %v1649 = vadd.f32 %v1210, %v1585
      %v1650 = vadd.f32 %v1211, %v1588
      %v1651 = vadd.f32 %v1212, %v1593
      %v1652 = vadd.f32 %v1213, %v1596
      %v1653 = vadd.f32 %v1214, %v1601
      %v1654 = vadd.f32 %v1215, %v1604
      %v1655 = vadd.f32 %v1216, %v1609
      %v1656 = vadd.f32 %v1217, %v1612
      %v1657 = vadd.f32 %v1218, %v1617
      %v1658 = vadd.f32 %v1219, %v1620
      %v1659 = vld [vmem:[%s165 + $0x98] sm:$0x3]
      %s1660 = scalar_lea.vmem %s1, 8
      %v1661 = vld [vmem:[%s1660] sm:$0x3]
      %v1663 = vunpack.c.l.b16 %v1659
      %v1664 = vpack.c.b16 %v1663, %v1663
      %vm1665 = vsmask.f32 6400
      %v1667 = vshrl.u32 %v1333, 16
      %v1669 = vrot.slane %v1667, 1
      %v1670 = vshll.u32 %v1333, 16
      %v1672 = vrot.slane %v1670, 2
      %v1673 = vor.u32 %v1669, %v1672
      %v1675 = vshrl.u32 %v1334, 16
      %v1677 = vrot.slane %v1675, 1
      %v1678 = vshll.u32 %v1334, 16
      %v1680 = vrot.slane %v1678, 2
      %v1681 = vor.u32 %v1677, %v1680
      %v1682 = vsel %vm1665, %v1673, %v1681
      %v1684 = vshrl.u32 %v1335, 16
      %v1686 = vrot.slane %v1684, 1
      %v1687 = vshll.u32 %v1335, 16
      %v1689 = vrot.slane %v1687, 2
      %v1690 = vor.u32 %v1686, %v1689
      %v1691 = vsel %vm1665, %v1681, %v1690
      %v1693 = vshrl.u32 %v1336, 16
      %v1695 = vrot.slane %v1693, 1
      %v1696 = vshll.u32 %v1336, 16
      %v1698 = vrot.slane %v1696, 2
      %v1699 = vor.u32 %v1695, %v1698
      %v1700 = vsel %vm1665, %v1690, %v1699
      %v1702 = vshrl.u32 %v1337, 16
      %v1704 = vrot.slane %v1702, 1
      %v1705 = vshll.u32 %v1337, 16
      %v1707 = vrot.slane %v1705, 2
      %v1708 = vor.u32 %v1704, %v1707
      %v1709 = vsel %vm1665, %v1699, %v1708
      %v1711 = vshrl.u32 %v1338, 16
      %v1713 = vrot.slane %v1711, 1
      %v1714 = vshll.u32 %v1338, 16
      %v1716 = vrot.slane %v1714, 2
      %v1717 = vor.u32 %v1713, %v1716
      %v1718 = vsel %vm1665, %v1708, %v1717
      %v1720 = vshrl.u32 %v1339, 16
      %v1722 = vrot.slane %v1720, 1
      %v1723 = vshll.u32 %v1339, 16
      %v1725 = vrot.slane %v1723, 2
      %v1726 = vor.u32 %v1722, %v1725
      %v1727 = vsel %vm1665, %v1717, %v1726
      %v1729 = vshrl.u32 %v1340, 16
      %v1731 = vrot.slane %v1729, 1
      %v1732 = vshll.u32 %v1340, 16
      %v1734 = vrot.slane %v1732, 2
      %v1735 = vor.u32 %v1731, %v1734
      %v1736 = vsel %vm1665, %v1726, %v1735
      %v1738 = vshrl.u32 %v1341, 16
      %v1740 = vrot.slane %v1738, 1
      %v1741 = vshll.u32 %v1341, 16
      %v1743 = vrot.slane %v1741, 2
      %v1744 = vor.u32 %v1740, %v1743
      %v1745 = vsel %vm1665, %v1735, %v1744
      %v1747 = vshrl.u32 %v1342, 16
      %v1749 = vrot.slane %v1747, 1
      %v1750 = vshll.u32 %v1342, 16
      %v1752 = vrot.slane %v1750, 2
      %v1753 = vor.u32 %v1749, %v1752
      %v1754 = vsel %vm1665, %v1744, %v1753
      %v1756 = vshrl.u32 %v1343, 16
      %v1758 = vrot.slane %v1756, 1
      %v1759 = vshll.u32 %v1343, 16
      %v1761 = vrot.slane %v1759, 2
      %v1762 = vor.u32 %v1758, %v1761
      %v1763 = vsel %vm1665, %v1753, %v1762
      %v1765 = vshrl.u32 %v1344, 16
      %v1767 = vrot.slane %v1765, 1
      %v1768 = vshll.u32 %v1344, 16
      %v1770 = vrot.slane %v1768, 2
      %v1771 = vor.u32 %v1767, %v1770
      %v1772 = vsel %vm1665, %v1762, %v1771
      %v1774 = vshrl.u32 %v1345, 16
      %v1776 = vrot.slane %v1774, 1
      %v1777 = vshll.u32 %v1345, 16
      %v1779 = vrot.slane %v1777, 2
      %v1780 = vor.u32 %v1776, %v1779
      %v1781 = vsel %vm1665, %v1771, %v1780
      %v1783 = vshrl.u32 %v1346, 16
      %v1785 = vrot.slane %v1783, 1
      %v1786 = vshll.u32 %v1346, 16
      %v1788 = vrot.slane %v1786, 2
      %v1789 = vor.u32 %v1785, %v1788
      %v1790 = vsel %vm1665, %v1780, %v1789
      %v1792 = vshrl.u32 %v1347, 16
      %v1794 = vrot.slane %v1792, 1
      %v1795 = vshll.u32 %v1347, 16
      %v1797 = vrot.slane %v1795, 2
      %v1798 = vor.u32 %v1794, %v1797
      %v1799 = vsel %vm1665, %v1789, %v1798
      %v1801 = vshrl.u32 %v1348, 16
      %v1803 = vrot.slane %v1801, 1
      %v1804 = vshll.u32 %v1348, 16
      %v1806 = vrot.slane %v1804, 2
      %v1807 = vor.u32 %v1803, %v1806
      %v1808 = vsel %vm1665, %v1798, %v1807
      %v1810 = vshrl.u32 %v1349, 16
      %v1812 = vrot.slane %v1810, 1
      %v1813 = vshll.u32 %v1349, 16
      %v1815 = vrot.slane %v1813, 2
      %v1816 = vor.u32 %v1812, %v1815
      %v1817 = vsel %vm1665, %v1807, %v1816
      %v1819 = vshrl.u32 %v1350, 16
      %v1821 = vrot.slane %v1819, 1
      %v1822 = vshll.u32 %v1350, 16
      %v1824 = vrot.slane %v1822, 2
      %v1825 = vor.u32 %v1821, %v1824
      %v1826 = vsel %vm1665, %v1816, %v1825
      %v1828 = vshrl.u32 %v1664, 16
      %v1830 = vrot.slane %v1828, 1
      %v1831 = vshll.u32 %v1664, 16
      %v1833 = vrot.slane %v1831, 2
      %v1834 = vor.u32 %v1830, %v1833
      %v1835 = vsel %vm1665, %v1825, %v1834
      %v1837 = vsel %vm454, %v1682, 0
      %v1840 = vsel %vm454, %v1691, 0
      %v1843 = vsel %vm454, %v1700, 0
      %v1846 = vsel %vm454, %v1709, 0
      %v1849 = vsel %vm454, %v1718, 0
      %v1852 = vsel %vm454, %v1727, 0
      %v1855 = vsel %vm454, %v1736, 0
      %v1858 = vsel %vm454, %v1745, 0
      %v1861 = vsel %vm454, %v1754, 0
      %v1864 = vsel %vm454, %v1763, 0
      %v1867 = vsel %vm454, %v1772, 0
      %v1870 = vsel %vm454, %v1781, 0
      %v1873 = vsel %vm454, %v1790, 0
      %v1876 = vsel %vm454, %v1799, 0
      %v1879 = vsel %vm454, %v1808, 0
      %v1882 = vsel %vm454, %v1817, 0
      %v1885 = vsel %vm454, %v1826, 0
      %v1888 = vsel %vm454, %v1835, 0
      %v1891 = vsel %vm509, %v1661, 0
      %1893 = vmatprep.subr.bf16.mxu0 0
      %1894 = vmatpush1.bf16.msra.mxu0 0
      %1895 = vmatprep.subr.bf16.mxu0 0
      %1896 = vmatpush1.bf16.msra.mxu0 0
      %1897 = vmatprep.subr.bf16.mxu0 0
      %1898 = vmatpush1.bf16.msra.mxu0 0
      %1899 = vmatprep.subr.bf16.mxu0 0
      %1900 = vmatpush1.bf16.msra.mxu0 0
      %1901 = vmatprep.subr.bf16.mxu0 0
      %1902 = vmatpush1.bf16.msra.mxu0 0
      %1903 = vmatprep.subr.bf16.mxu0 0
      %1904 = vmatpush1.bf16.msra.mxu0 0
      %1905 = vmatprep.subr.bf16.mxu0 0
      %1906 = vmatpush1.bf16.msra.mxu0 0
      %1907 = vmatprep.subr.bf16.mxu0 0
      %1908 = vmatpush1.bf16.msra.mxu0 %v1891
      %1909 = vmatprep.subr.bf16.mxu0 0
      %1910 = vmatpush2.bf16.msra.mxu0 0
      %1911 = vmatprep.subr.bf16.mxu0 0
      %1912 = vmatpush2.bf16.msra.mxu0 0
      %1913 = vmatprep.subr.bf16.mxu0 0
      %1914 = vmatpush2.bf16.msra.mxu0 0
      %1915 = vmatprep.subr.bf16.mxu0 0
      %1916 = vmatpush2.bf16.msra.mxu0 0
      %1917 = vmatprep.subr.bf16.mxu0 0
      %1918 = vmatpush2.bf16.msra.mxu0 0
      %1919 = vmatprep.subr.bf16.mxu0 0
      %1920 = vmatpush2.bf16.msra.mxu0 0
      %1921 = vmatprep.subr.bf16.mxu0 0
      %1922 = vmatpush2.bf16.msra.mxu0 0
      %1923 = vmatprep.subr.bf16.mxu0 0
      %1924 = vmatpush2.bf16.msra.mxu0 0
      %1925 = vmatprep.mubr.bf16.mxu0 0
      %1926 = vmatmul.mubr.bf16.gmra.mxu0 %v1837
      %v1927 = vpop.f32.mrf.mxu0
      %v1928 = vadd.f32 0.0, %v1927
      %v1929 = vpop.f32.mrf.mxu0
      %v1930 = vpop.f32.mrf.mxu0
      %v1931 = vadd.f32 0.0, %v1930
      %v1932 = vpop.f32.mrf.mxu0
      %1933 = vmatprep.mubr.bf16.mxu0 0
      %1934 = vmatmul.mubr.bf16.gmra.mxu0 %v1840
      %v1935 = vpop.f32.mrf.mxu0
      %v1936 = vadd.f32 0.0, %v1935
      %v1937 = vpop.f32.mrf.mxu0
      %v1938 = vpop.f32.mrf.mxu0
      %v1939 = vadd.f32 0.0, %v1938
      %v1940 = vpop.f32.mrf.mxu0
      %1941 = vmatprep.mubr.bf16.mxu0 0
      %1942 = vmatmul.mubr.bf16.gmra.mxu0 %v1843
      %v1943 = vpop.f32.mrf.mxu0
      %v1944 = vadd.f32 0.0, %v1943
      %v1945 = vpop.f32.mrf.mxu0
      %v1946 = vpop.f32.mrf.mxu0
      %v1947 = vadd.f32 0.0, %v1946
      %v1948 = vpop.f32.mrf.mxu0
      %1949 = vmatprep.mubr.bf16.mxu0 0
      %1950 = vmatmul.mubr.bf16.gmra.mxu0 %v1846
      %v1951 = vpop.f32.mrf.mxu0
      %v1952 = vadd.f32 0.0, %v1951
      %v1953 = vpop.f32.mrf.mxu0
      %v1954 = vpop.f32.mrf.mxu0
      %v1955 = vadd.f32 0.0, %v1954
      %v1956 = vpop.f32.mrf.mxu0
      %1957 = vmatprep.mubr.bf16.mxu0 0
      %1958 = vmatmul.mubr.bf16.gmra.mxu0 %v1849
      %v1959 = vpop.f32.mrf.mxu0
      %v1960 = vadd.f32 0.0, %v1959
      %v1961 = vpop.f32.mrf.mxu0
      %v1962 = vpop.f32.mrf.mxu0
      %v1963 = vadd.f32 0.0, %v1962
      %v1964 = vpop.f32.mrf.mxu0
      %1965 = vmatprep.mubr.bf16.mxu0 0
      %1966 = vmatmul.mubr.bf16.gmra.mxu0 %v1852
      %v1967 = vpop.f32.mrf.mxu0
      %v1968 = vadd.f32 0.0, %v1967
      %v1969 = vpop.f32.mrf.mxu0
      %v1970 = vpop.f32.mrf.mxu0
      %v1971 = vadd.f32 0.0, %v1970
      %v1972 = vpop.f32.mrf.mxu0
      %1973 = vmatprep.mubr.bf16.mxu0 0
      %1974 = vmatmul.mubr.bf16.gmra.mxu0 %v1855
      %v1975 = vpop.f32.mrf.mxu0
      %v1976 = vadd.f32 0.0, %v1975
      %v1977 = vpop.f32.mrf.mxu0
      %v1978 = vpop.f32.mrf.mxu0
      %v1979 = vadd.f32 0.0, %v1978
      %v1980 = vpop.f32.mrf.mxu0
      %1981 = vmatprep.mubr.bf16.mxu0 0
      %1982 = vmatmul.mubr.bf16.gmra.mxu0 %v1858
      %v1983 = vpop.f32.mrf.mxu0
      %v1984 = vadd.f32 0.0, %v1983
      %v1985 = vpop.f32.mrf.mxu0
      %v1986 = vpop.f32.mrf.mxu0
      %v1987 = vadd.f32 0.0, %v1986
      %v1988 = vpop.f32.mrf.mxu0
      %1989 = vmatprep.mubr.bf16.mxu0 0
      %1990 = vmatmul.mubr.bf16.gmra.mxu0 %v1861
      %v1991 = vpop.f32.mrf.mxu0
      %v1992 = vadd.f32 0.0, %v1991
      %v1993 = vpop.f32.mrf.mxu0
      %v1994 = vpop.f32.mrf.mxu0
      %v1995 = vadd.f32 0.0, %v1994
      %v1996 = vpop.f32.mrf.mxu0
      %1997 = vmatprep.mubr.bf16.mxu0 0
      %1998 = vmatmul.mubr.bf16.gmra.mxu0 %v1864
      %v1999 = vpop.f32.mrf.mxu0
      %v2000 = vadd.f32 0.0, %v1999
      %v2001 = vpop.f32.mrf.mxu0
      %v2002 = vpop.f32.mrf.mxu0
      %v2003 = vadd.f32 0.0, %v2002
      %v2004 = vpop.f32.mrf.mxu0
      %2005 = vmatprep.mubr.bf16.mxu0 0
      %2006 = vmatmul.mubr.bf16.gmra.mxu0 %v1867
      %v2007 = vpop.f32.mrf.mxu0
      %v2008 = vadd.f32 0.0, %v2007
      %v2009 = vpop.f32.mrf.mxu0
      %v2010 = vpop.f32.mrf.mxu0
      %v2011 = vadd.f32 0.0, %v2010
      %v2012 = vpop.f32.mrf.mxu0
      %2013 = vmatprep.mubr.bf16.mxu0 0
      %2014 = vmatmul.mubr.bf16.gmra.mxu0 %v1870
      %v2015 = vpop.f32.mrf.mxu0
      %v2016 = vadd.f32 0.0, %v2015
      %v2017 = vpop.f32.mrf.mxu0
      %v2018 = vpop.f32.mrf.mxu0
      %v2019 = vadd.f32 0.0, %v2018
      %v2020 = vpop.f32.mrf.mxu0
      %2021 = vmatprep.mubr.bf16.mxu0 0
      %2022 = vmatmul.mubr.bf16.gmra.mxu0 %v1873
      %v2023 = vpop.f32.mrf.mxu0
      %v2024 = vadd.f32 0.0, %v2023
      %v2025 = vpop.f32.mrf.mxu0
      %v2026 = vpop.f32.mrf.mxu0
      %v2027 = vadd.f32 0.0, %v2026
      %v2028 = vpop.f32.mrf.mxu0
      %2029 = vmatprep.mubr.bf16.mxu0 0
      %2030 = vmatmul.mubr.bf16.gmra.mxu0 %v1876
      %v2031 = vpop.f32.mrf.mxu0
      %v2032 = vadd.f32 0.0, %v2031
      %v2033 = vpop.f32.mrf.mxu0
      %v2034 = vpop.f32.mrf.mxu0
      %v2035 = vadd.f32 0.0, %v2034
      %v2036 = vpop.f32.mrf.mxu0
      %2037 = vmatprep.mubr.bf16.mxu0 0
      %2038 = vmatmul.mubr.bf16.gmra.mxu0 %v1879
      %v2039 = vpop.f32.mrf.mxu0
      %v2040 = vadd.f32 0.0, %v2039
      %v2041 = vpop.f32.mrf.mxu0
      %v2042 = vpop.f32.mrf.mxu0
      %v2043 = vadd.f32 0.0, %v2042
      %v2044 = vpop.f32.mrf.mxu0
      %2045 = vmatprep.mubr.bf16.mxu0 0
      %2046 = vmatmul.mubr.bf16.gmra.mxu0 %v1882
      %v2047 = vpop.f32.mrf.mxu0
      %v2048 = vadd.f32 0.0, %v2047
      %v2049 = vpop.f32.mrf.mxu0
      %v2050 = vpop.f32.mrf.mxu0
      %v2051 = vadd.f32 0.0, %v2050
      %v2052 = vpop.f32.mrf.mxu0
      %2053 = vmatprep.mubr.bf16.mxu0 0
      %2054 = vmatmul.mubr.bf16.gmra.mxu0 %v1885
      %v2055 = vpop.f32.mrf.mxu0
      %v2056 = vadd.f32 0.0, %v2055
      %v2057 = vpop.f32.mrf.mxu0
      %v2058 = vpop.f32.mrf.mxu0
      %v2059 = vadd.f32 0.0, %v2058
      %v2060 = vpop.f32.mrf.mxu0
      %2061 = vmatprep.mubr.bf16.mxu0 0
      %2062 = vmatmul.mubr.bf16.gmra.mxu0 %v1888
      %v2063 = vpop.f32.mrf.mxu0
      %v2064 = vadd.f32 0.0, %v2063
      %v2065 = vpop.f32.mrf.mxu0
      %v2066 = vpop.f32.mrf.mxu0
      %v2067 = vadd.f32 0.0, %v2066
      %v2068 = vpop.f32.mrf.mxu0
      %2069 = vdwg.mxu0
      %v2070 = vadd.f32 %v1623, %v1928
      %v2071 = vadd.f32 %v1624, %v1931
      %v2072 = vadd.f32 %v1625, %v1936
      %v2073 = vadd.f32 %v1626, %v1939
      %v2074 = vadd.f32 %v1627, %v1944
      %v2075 = vadd.f32 %v1628, %v1947
      %v2076 = vadd.f32 %v1629, %v1952
      %v2077 = vadd.f32 %v1630, %v1955
      %v2078 = vadd.f32 %v1631, %v1960
      %v2079 = vadd.f32 %v1632, %v1963
      %v2080 = vadd.f32 %v1633, %v1968
      %v2081 = vadd.f32 %v1634, %v1971
      %v2082 = vadd.f32 %v1635, %v1976
      %v2083 = vadd.f32 %v1636, %v1979
      %v2084 = vadd.f32 %v1637, %v1984
      %v2085 = vadd.f32 %v1638, %v1987
      %v2086 = vadd.f32 %v1639, %v1992
      %v2087 = vadd.f32 %v1640, %v1995
      %v2088 = vadd.f32 %v1641, %v2000
      %v2089 = vadd.f32 %v1642, %v2003
      %v2090 = vadd.f32 %v1643, %v2008
      %v2091 = vadd.f32 %v1644, %v2011
      %v2092 = vadd.f32 %v1645, %v2016
      %v2093 = vadd.f32 %v1646, %v2019
      %v2094 = vadd.f32 %v1647, %v2024
      %v2095 = vadd.f32 %v1648, %v2027
      %v2096 = vadd.f32 %v1649, %v2032
      %v2097 = vadd.f32 %v1650, %v2035
      %v2098 = vadd.f32 %v1651, %v2040
      %v2099 = vadd.f32 %v1652, %v2043
      %v2100 = vadd.f32 %v1653, %v2048
      %v2101 = vadd.f32 %v1654, %v2051
      %v2102 = vadd.f32 %v1655, %v2056
      %v2103 = vadd.f32 %v1656, %v2059
      %v2104 = vadd.f32 %v1657, %v2064
      %v2105 = vadd.f32 %v1658, %v2067
      %v2106 = vld [vmem:[%s165 + $0x8] sm:$0xc]
      %s2107 = scalar_lea.vmem %s1, 10
      %v2108 = vld [vmem:[%s2107] sm:$0x3]
      %v2110 = vunpack.c.l.b16 %v2106
      %v2111 = vpack.c.b16 %v1297, %v2110
      %vm2112 = vcmask 1045504
      %v2113 = vrot.slane %v2111, 2
      %v2114 = vrot.slane %v1334, 2
      %v2115 = vsel %vm2112, %v2113, %v2114
      %v2116 = vrot.slane %v1335, 2
      %v2117 = vsel %vm2112, %v2114, %v2116
      %v2118 = vrot.slane %v1336, 2
      %v2119 = vsel %vm2112, %v2116, %v2118
      %v2120 = vrot.slane %v1337, 2
      %v2121 = vsel %vm2112, %v2118, %v2120
      %v2122 = vrot.slane %v1338, 2
      %v2123 = vsel %vm2112, %v2120, %v2122
      %v2124 = vrot.slane %v1339, 2
      %v2125 = vsel %vm2112, %v2122, %v2124
      %v2126 = vrot.slane %v1340, 2
      %v2127 = vsel %vm2112, %v2124, %v2126
      %v2128 = vrot.slane %v1341, 2
      %v2129 = vsel %vm2112, %v2126, %v2128
      %v2130 = vrot.slane %v1342, 2
      %v2131 = vsel %vm2112, %v2128, %v2130
      %v2132 = vrot.slane %v1343, 2
      %v2133 = vsel %vm2112, %v2130, %v2132
      %v2134 = vrot.slane %v1344, 2
      %v2135 = vsel %vm2112, %v2132, %v2134
      %v2136 = vrot.slane %v1345, 2
      %v2137 = vsel %vm2112, %v2134, %v2136
      %v2138 = vrot.slane %v1346, 2
      %v2139 = vsel %vm2112, %v2136, %v2138
      %v2140 = vrot.slane %v1347, 2
      %v2141 = vsel %vm2112, %v2138, %v2140
      %v2142 = vrot.slane %v1348, 2
      %v2143 = vsel %vm2112, %v2140, %v2142
      %v2144 = vrot.slane %v1349, 2
      %v2145 = vsel %vm2112, %v2142, %v2144
      %v2146 = vrot.slane %v1350, 2
      %v2147 = vsel %vm2112, %v2144, %v2146
      %v2148 = vrot.slane %v1664, 2
      %v2149 = vsel %vm2112, %v2146, %v2148
      %v2151 = vsel %vm454, %v2115, 0
      %v2154 = vsel %vm454, %v2117, 0
      %v2157 = vsel %vm454, %v2119, 0
      %v2160 = vsel %vm454, %v2121, 0
      %v2163 = vsel %vm454, %v2123, 0
      %v2166 = vsel %vm454, %v2125, 0
      %v2169 = vsel %vm454, %v2127, 0
      %v2172 = vsel %vm454, %v2129, 0
      %v2175 = vsel %vm454, %v2131, 0
      %v2178 = vsel %vm454, %v2133, 0
      %v2181 = vsel %vm454, %v2135, 0
      %v2184 = vsel %vm454, %v2137, 0
      %v2187 = vsel %vm454, %v2139, 0
      %v2190 = vsel %vm454, %v2141, 0
      %v2193 = vsel %vm454, %v2143, 0
      %v2196 = vsel %vm454, %v2145, 0
      %v2199 = vsel %vm454, %v2147, 0
      %v2202 = vsel %vm454, %v2149, 0
      %v2205 = vsel %vm509, %v2108, 0
      %2207 = vmatprep.subr.bf16.mxu0 0
      %2208 = vmatpush1.bf16.msra.mxu0 0
      %2209 = vmatprep.subr.bf16.mxu0 0
      %2210 = vmatpush1.bf16.msra.mxu0 0
      %2211 = vmatprep.subr.bf16.mxu0 0
      %2212 = vmatpush1.bf16.msra.mxu0 0
      %2213 = vmatprep.subr.bf16.mxu0 0
      %2214 = vmatpush1.bf16.msra.mxu0 0
      %2215 = vmatprep.subr.bf16.mxu0 0
      %2216 = vmatpush1.bf16.msra.mxu0 0
      %2217 = vmatprep.subr.bf16.mxu0 0
      %2218 = vmatpush1.bf16.msra.mxu0 0
      %2219 = vmatprep.subr.bf16.mxu0 0
      %2220 = vmatpush1.bf16.msra.mxu0 0
      %2221 = vmatprep.subr.bf16.mxu0 0
      %2222 = vmatpush1.bf16.msra.mxu0 %v2205
      %2223 = vmatprep.subr.bf16.mxu0 0
      %2224 = vmatpush2.bf16.msra.mxu0 0
      %2225 = vmatprep.subr.bf16.mxu0 0
      %2226 = vmatpush2.bf16.msra.mxu0 0
      %2227 = vmatprep.subr.bf16.mxu0 0
      %2228 = vmatpush2.bf16.msra.mxu0 0
      %2229 = vmatprep.subr.bf16.mxu0 0
      %2230 = vmatpush2.bf16.msra.mxu0 0
      %2231 = vmatprep.subr.bf16.mxu0 0
      %2232 = vmatpush2.bf16.msra.mxu0 0
      %2233 = vmatprep.subr.bf16.mxu0 0
      %2234 = vmatpush2.bf16.msra.mxu0 0
      %2235 = vmatprep.subr.bf16.mxu0 0
      %2236 = vmatpush2.bf16.msra.mxu0 0
      %2237 = vmatprep.subr.bf16.mxu0 0
      %2238 = vmatpush2.bf16.msra.mxu0 0
      %2239 = vmatprep.mubr.bf16.mxu0 0
      %2240 = vmatmul.mubr.bf16.gmra.mxu0 %v2151
      %v2241 = vpop.f32.mrf.mxu0
      %v2242 = vadd.f32 0.0, %v2241
      %v2243 = vpop.f32.mrf.mxu0
      %v2244 = vpop.f32.mrf.mxu0
      %v2245 = vadd.f32 0.0, %v2244
      %v2246 = vpop.f32.mrf.mxu0
      %2247 = vmatprep.mubr.bf16.mxu0 0
      %2248 = vmatmul.mubr.bf16.gmra.mxu0 %v2154
      %v2249 = vpop.f32.mrf.mxu0
      %v2250 = vadd.f32 0.0, %v2249
      %v2251 = vpop.f32.mrf.mxu0
      %v2252 = vpop.f32.mrf.mxu0
      %v2253 = vadd.f32 0.0, %v2252
      %v2254 = vpop.f32.mrf.mxu0
      %2255 = vmatprep.mubr.bf16.mxu0 0
      %2256 = vmatmul.mubr.bf16.gmra.mxu0 %v2157
      %v2257 = vpop.f32.mrf.mxu0
      %v2258 = vadd.f32 0.0, %v2257
      %v2259 = vpop.f32.mrf.mxu0
      %v2260 = vpop.f32.mrf.mxu0
      %v2261 = vadd.f32 0.0, %v2260
      %v2262 = vpop.f32.mrf.mxu0
      %2263 = vmatprep.mubr.bf16.mxu0 0
      %2264 = vmatmul.mubr.bf16.gmra.mxu0 %v2160
      %v2265 = vpop.f32.mrf.mxu0
      %v2266 = vadd.f32 0.0, %v2265
      %v2267 = vpop.f32.mrf.mxu0
      %v2268 = vpop.f32.mrf.mxu0
      %v2269 = vadd.f32 0.0, %v2268
      %v2270 = vpop.f32.mrf.mxu0
      %2271 = vmatprep.mubr.bf16.mxu0 0
      %2272 = vmatmul.mubr.bf16.gmra.mxu0 %v2163
      %v2273 = vpop.f32.mrf.mxu0
      %v2274 = vadd.f32 0.0, %v2273
      %v2275 = vpop.f32.mrf.mxu0
      %v2276 = vpop.f32.mrf.mxu0
      %v2277 = vadd.f32 0.0, %v2276
      %v2278 = vpop.f32.mrf.mxu0
      %2279 = vmatprep.mubr.bf16.mxu0 0
      %2280 = vmatmul.mubr.bf16.gmra.mxu0 %v2166
      %v2281 = vpop.f32.mrf.mxu0
      %v2282 = vadd.f32 0.0, %v2281
      %v2283 = vpop.f32.mrf.mxu0
      %v2284 = vpop.f32.mrf.mxu0
      %v2285 = vadd.f32 0.0, %v2284
      %v2286 = vpop.f32.mrf.mxu0
      %2287 = vmatprep.mubr.bf16.mxu0 0
      %2288 = vmatmul.mubr.bf16.gmra.mxu0 %v2169
      %v2289 = vpop.f32.mrf.mxu0
      %v2290 = vadd.f32 0.0, %v2289
      %v2291 = vpop.f32.mrf.mxu0
      %v2292 = vpop.f32.mrf.mxu0
      %v2293 = vadd.f32 0.0, %v2292
      %v2294 = vpop.f32.mrf.mxu0
      %2295 = vmatprep.mubr.bf16.mxu0 0
      %2296 = vmatmul.mubr.bf16.gmra.mxu0 %v2172
      %v2297 = vpop.f32.mrf.mxu0
      %v2298 = vadd.f32 0.0, %v2297
      %v2299 = vpop.f32.mrf.mxu0
      %v2300 = vpop.f32.mrf.mxu0
      %v2301 = vadd.f32 0.0, %v2300
      %v2302 = vpop.f32.mrf.mxu0
      %2303 = vmatprep.mubr.bf16.mxu0 0
      %2304 = vmatmul.mubr.bf16.gmra.mxu0 %v2175
      %v2305 = vpop.f32.mrf.mxu0
      %v2306 = vadd.f32 0.0, %v2305
      %v2307 = vpop.f32.mrf.mxu0
      %v2308 = vpop.f32.mrf.mxu0
      %v2309 = vadd.f32 0.0, %v2308
      %v2310 = vpop.f32.mrf.mxu0
      %2311 = vmatprep.mubr.bf16.mxu0 0
      %2312 = vmatmul.mubr.bf16.gmra.mxu0 %v2178
      %v2313 = vpop.f32.mrf.mxu0
      %v2314 = vadd.f32 0.0, %v2313
      %v2315 = vpop.f32.mrf.mxu0
      %v2316 = vpop.f32.mrf.mxu0
      %v2317 = vadd.f32 0.0, %v2316
      %v2318 = vpop.f32.mrf.mxu0
      %2319 = vmatprep.mubr.bf16.mxu0 0
      %2320 = vmatmul.mubr.bf16.gmra.mxu0 %v2181
      %v2321 = vpop.f32.mrf.mxu0
      %v2322 = vadd.f32 0.0, %v2321
      %v2323 = vpop.f32.mrf.mxu0
      %v2324 = vpop.f32.mrf.mxu0
      %v2325 = vadd.f32 0.0, %v2324
      %v2326 = vpop.f32.mrf.mxu0
      %2327 = vmatprep.mubr.bf16.mxu0 0
      %2328 = vmatmul.mubr.bf16.gmra.mxu0 %v2184
      %v2329 = vpop.f32.mrf.mxu0
      %v2330 = vadd.f32 0.0, %v2329
      %v2331 = vpop.f32.mrf.mxu0
      %v2332 = vpop.f32.mrf.mxu0
      %v2333 = vadd.f32 0.0, %v2332
      %v2334 = vpop.f32.mrf.mxu0
      %2335 = vmatprep.mubr.bf16.mxu0 0
      %2336 = vmatmul.mubr.bf16.gmra.mxu0 %v2187
      %v2337 = vpop.f32.mrf.mxu0
      %v2338 = vadd.f32 0.0, %v2337
      %v2339 = vpop.f32.mrf.mxu0
      %v2340 = vpop.f32.mrf.mxu0
      %v2341 = vadd.f32 0.0, %v2340
      %v2342 = vpop.f32.mrf.mxu0
      %2343 = vmatprep.mubr.bf16.mxu0 0
      %2344 = vmatmul.mubr.bf16.gmra.mxu0 %v2190
      %v2345 = vpop.f32.mrf.mxu0
      %v2346 = vadd.f32 0.0, %v2345
      %v2347 = vpop.f32.mrf.mxu0
      %v2348 = vpop.f32.mrf.mxu0
      %v2349 = vadd.f32 0.0, %v2348
      %v2350 = vpop.f32.mrf.mxu0
      %2351 = vmatprep.mubr.bf16.mxu0 0
      %2352 = vmatmul.mubr.bf16.gmra.mxu0 %v2193
      %v2353 = vpop.f32.mrf.mxu0
      %v2354 = vadd.f32 0.0, %v2353
      %v2355 = vpop.f32.mrf.mxu0
      %v2356 = vpop.f32.mrf.mxu0
      %v2357 = vadd.f32 0.0, %v2356
      %v2358 = vpop.f32.mrf.mxu0
      %2359 = vmatprep.mubr.bf16.mxu0 0
      %2360 = vmatmul.mubr.bf16.gmra.mxu0 %v2196
      %v2361 = vpop.f32.mrf.mxu0
      %v2362 = vadd.f32 0.0, %v2361
      %v2363 = vpop.f32.mrf.mxu0
      %v2364 = vpop.f32.mrf.mxu0
      %v2365 = vadd.f32 0.0, %v2364
      %v2366 = vpop.f32.mrf.mxu0
      %2367 = vmatprep.mubr.bf16.mxu0 0
      %2368 = vmatmul.mubr.bf16.gmra.mxu0 %v2199
      %v2369 = vpop.f32.mrf.mxu0
      %v2370 = vadd.f32 0.0, %v2369
      %v2371 = vpop.f32.mrf.mxu0
      %v2372 = vpop.f32.mrf.mxu0
      %v2373 = vadd.f32 0.0, %v2372
      %v2374 = vpop.f32.mrf.mxu0
      %2375 = vmatprep.mubr.bf16.mxu0 0
      %2376 = vmatmul.mubr.bf16.gmra.mxu0 %v2202
      %v2377 = vpop.f32.mrf.mxu0
      %v2378 = vadd.f32 0.0, %v2377
      %v2379 = vpop.f32.mrf.mxu0
      %v2380 = vpop.f32.mrf.mxu0
      %v2381 = vadd.f32 0.0, %v2380
      %v2382 = vpop.f32.mrf.mxu0
      %2383 = vdwg.mxu0
      %v2384 = vadd.f32 %v2070, %v2242
      %v2385 = vadd.f32 %v2071, %v2245
      %v2386 = vadd.f32 %v2072, %v2250
      %v2387 = vadd.f32 %v2073, %v2253
      %v2388 = vadd.f32 %v2074, %v2258
      %v2389 = vadd.f32 %v2075, %v2261
      %v2390 = vadd.f32 %v2076, %v2266
      %v2391 = vadd.f32 %v2077, %v2269
      %v2392 = vadd.f32 %v2078, %v2274
      %v2393 = vadd.f32 %v2079, %v2277
      %v2394 = vadd.f32 %v2080, %v2282
      %v2395 = vadd.f32 %v2081, %v2285
      %v2396 = vadd.f32 %v2082, %v2290
      %v2397 = vadd.f32 %v2083, %v2293
      %v2398 = vadd.f32 %v2084, %v2298
      %v2399 = vadd.f32 %v2085, %v2301
      %v2400 = vadd.f32 %v2086, %v2306
      %v2401 = vadd.f32 %v2087, %v2309
      %v2402 = vadd.f32 %v2088, %v2314
      %v2403 = vadd.f32 %v2089, %v2317
      %v2404 = vadd.f32 %v2090, %v2322
      %v2405 = vadd.f32 %v2091, %v2325
      %v2406 = vadd.f32 %v2092, %v2330
      %v2407 = vadd.f32 %v2093, %v2333
      %v2408 = vadd.f32 %v2094, %v2338
      %v2409 = vadd.f32 %v2095, %v2341
      %v2410 = vadd.f32 %v2096, %v2346
      %v2411 = vadd.f32 %v2097, %v2349
      %v2412 = vadd.f32 %v2098, %v2354
      %v2413 = vadd.f32 %v2099, %v2357
      %v2414 = vadd.f32 %v2100, %v2362
      %v2415 = vadd.f32 %v2101, %v2365
      %v2416 = vadd.f32 %v2102, %v2370
      %v2417 = vadd.f32 %v2103, %v2373
      %v2418 = vadd.f32 %v2104, %v2378
      %v2419 = vadd.f32 %v2105, %v2381
      %v2420 = vld [vmem:[%s165 + $0x10] sm:$0xc]
      %v2421 = vld [vmem:[%s165 + $0x14] sm:$0xf]
      %v2422 = vld [vmem:[%s165 + $0x18] sm:$0xf]
      %v2423 = vld [vmem:[%s165 + $0x1c] sm:$0xf]
      %v2424 = vld [vmem:[%s165 + $0x20] sm:$0xf]
      %v2425 = vld [vmem:[%s165 + $0x24] sm:$0xf]
      %v2426 = vld [vmem:[%s165 + $0x28] sm:$0xf]
      %v2427 = vld [vmem:[%s165 + $0x2c] sm:$0xf]
      %v2428 = vld [vmem:[%s165 + $0x30] sm:$0xf]
      %v2429 = vld [vmem:[%s165 + $0x34] sm:$0xf]
      %v2430 = vld [vmem:[%s165 + $0x38] sm:$0xf]
      %v2431 = vld [vmem:[%s165 + $0x3c] sm:$0xf]
      %v2432 = vld [vmem:[%s165 + $0x40] sm:$0xf]
      %v2433 = vld [vmem:[%s165 + $0x44] sm:$0xf]
      %v2434 = vld [vmem:[%s165 + $0x48] sm:$0xf]
      %v2435 = vld [vmem:[%s165 + $0x4c] sm:$0xf]
      %v2436 = vld [vmem:[%s165 + $0x50] sm:$0xf]
      %v2437 = vld [vmem:[%s165 + $0x54] sm:$0xf]
      %v2438 = vld [vmem:[%s165 + $0x58] sm:$0xf]
      %v2439 = vld [vmem:[%s165 + $0x5c] sm:$0xf]
      %v2440 = vld [vmem:[%s165 + $0x60] sm:$0xf]
      %v2441 = vld [vmem:[%s165 + $0x64] sm:$0xf]
      %v2442 = vld [vmem:[%s165 + $0x68] sm:$0xf]
      %v2443 = vld [vmem:[%s165 + $0x6c] sm:$0xf]
      %v2444 = vld [vmem:[%s165 + $0x70] sm:$0xf]
      %v2445 = vld [vmem:[%s165 + $0x74] sm:$0xf]
      %v2446 = vld [vmem:[%s165 + $0x78] sm:$0xf]
      %v2447 = vld [vmem:[%s165 + $0x7c] sm:$0xf]
      %v2448 = vld [vmem:[%s165 + $0x80] sm:$0xf]
      %v2449 = vld [vmem:[%s165 + $0x84] sm:$0xf]
      %v2450 = vld [vmem:[%s165 + $0x88] sm:$0xf]
      %v2451 = vld [vmem:[%s165 + $0x8c] sm:$0xf]
      %v2452 = vld [vmem:[%s165 + $0x90] sm:$0xf]
      %v2453 = vld [vmem:[%s165 + $0x94] sm:$0xf]
      %v2454 = vld [vmem:[%s165 + $0x98] sm:$0xf]
      %v2455 = vld [vmem:[%s165 + $0x9c] sm:$0xf]
      %v2456 = vld [vmem:[%s165 + $0xa0] sm:$0x3]
      %s2457 = scalar_lea.vmem %s1, 12
      %v2458 = vld [vmem:[%s2457] sm:$0x3]
      %v2496 = vunpack.c.l.b16 %v2420
      %v2497 = vunpack.c.l.b16 %v2421
      %v2498 = vunpack.c.l.b16 %v2422
      %v2499 = vunpack.c.l.b16 %v2423
      %v2500 = vunpack.c.l.b16 %v2424
      %v2501 = vunpack.c.l.b16 %v2425
      %v2502 = vunpack.c.l.b16 %v2426
      %v2503 = vunpack.c.l.b16 %v2427
      %v2504 = vunpack.c.l.b16 %v2428
      %v2505 = vunpack.c.l.b16 %v2429
      %v2506 = vunpack.c.l.b16 %v2430
      %v2507 = vunpack.c.l.b16 %v2431
      %v2508 = vunpack.c.l.b16 %v2432
      %v2509 = vunpack.c.l.b16 %v2433
      %v2510 = vunpack.c.l.b16 %v2434
      %v2511 = vunpack.c.l.b16 %v2435
      %v2512 = vunpack.c.l.b16 %v2436
      %v2513 = vunpack.c.l.b16 %v2437
      %v2514 = vunpack.c.l.b16 %v2438
      %v2515 = vunpack.c.l.b16 %v2439
      %v2516 = vunpack.c.l.b16 %v2440
      %v2517 = vunpack.c.l.b16 %v2441
      %v2518 = vunpack.c.l.b16 %v2442
      %v2519 = vunpack.c.l.b16 %v2443
      %v2520 = vunpack.c.l.b16 %v2444
      %v2521 = vunpack.c.l.b16 %v2445
      %v2522 = vunpack.c.l.b16 %v2446
      %v2523 = vunpack.c.l.b16 %v2447
      %v2524 = vunpack.c.l.b16 %v2448
      %v2525 = vunpack.c.l.b16 %v2449
      %v2526 = vunpack.c.l.b16 %v2450
      %v2527 = vunpack.c.l.b16 %v2451
      %v2528 = vunpack.c.l.b16 %v2452
      %v2529 = vunpack.c.l.b16 %v2453
      %v2530 = vunpack.c.l.b16 %v2454
      %v2531 = vunpack.c.l.b16 %v2455
      %v2532 = vunpack.c.l.b16 %v2456
      %v2533 = vpack.c.b16 %v2497, %v2496
      %v2534 = vpack.c.b16 %v2499, %v2498
      %v2535 = vpack.c.b16 %v2501, %v2500
      %v2536 = vpack.c.b16 %v2503, %v2502
      %v2537 = vpack.c.b16 %v2505, %v2504
      %v2538 = vpack.c.b16 %v2507, %v2506
      %v2539 = vpack.c.b16 %v2509, %v2508
      %v2540 = vpack.c.b16 %v2511, %v2510
      %v2541 = vpack.c.b16 %v2513, %v2512
      %v2542 = vpack.c.b16 %v2515, %v2514
      %v2543 = vpack.c.b16 %v2517, %v2516
      %v2544 = vpack.c.b16 %v2519, %v2518
      %v2545 = vpack.c.b16 %v2521, %v2520
      %v2546 = vpack.c.b16 %v2523, %v2522
      %v2547 = vpack.c.b16 %v2525, %v2524
      %v2548 = vpack.c.b16 %v2527, %v2526
      %v2549 = vpack.c.b16 %v2529, %v2528
      %v2550 = vpack.c.b16 %v2531, %v2530
      %v2551 = vpack.c.b16 %v2532, %v2532
      %v2552 = vrot.slane %v2533, 2
      %v2553 = vrot.slane %v2534, 2
      %v2554 = vsel %vm2112, %v2552, %v2553
      %v2555 = vrot.slane %v2535, 2
      %v2556 = vsel %vm2112, %v2553, %v2555
      %v2557 = vrot.slane %v2536, 2
      %v2558 = vsel %vm2112, %v2555, %v2557
      %v2559 = vrot.slane %v2537, 2
      %v2560 = vsel %vm2112, %v2557, %v2559
      %v2561 = vrot.slane %v2538, 2
      %v2562 = vsel %vm2112, %v2559, %v2561
      %v2563 = vrot.slane %v2539, 2
      %v2564 = vsel %vm2112, %v2561, %v2563
      %v2565 = vrot.slane %v2540, 2
      %v2566 = vsel %vm2112, %v2563, %v2565
      %v2567 = vrot.slane %v2541, 2
      %v2568 = vsel %vm2112, %v2565, %v2567
      %v2569 = vrot.slane %v2542, 2
      %v2570 = vsel %vm2112, %v2567, %v2569
      %v2571 = vrot.slane %v2543, 2
      %v2572 = vsel %vm2112, %v2569, %v2571
      %v2573 = vrot.slane %v2544, 2
      %v2574 = vsel %vm2112, %v2571, %v2573
      %v2575 = vrot.slane %v2545, 2
      %v2576 = vsel %vm2112, %v2573, %v2575
      %v2577 = vrot.slane %v2546, 2
      %v2578 = vsel %vm2112, %v2575, %v2577
      %v2579 = vrot.slane %v2547, 2
      %v2580 = vsel %vm2112, %v2577, %v2579
      %v2581 = vrot.slane %v2548, 2
      %v2582 = vsel %vm2112, %v2579, %v2581
      %v2583 = vrot.slane %v2549, 2
      %v2584 = vsel %vm2112, %v2581, %v2583
      %v2585 = vrot.slane %v2550, 2
      %v2586 = vsel %vm2112, %v2583, %v2585
      %v2587 = vrot.slane %v2551, 2
      %v2588 = vsel %vm2112, %v2585, %v2587
      %v2590 = vsel %vm454, %v2554, 0
      %v2593 = vsel %vm454, %v2556, 0
      %v2596 = vsel %vm454, %v2558, 0
      %v2599 = vsel %vm454, %v2560, 0
      %v2602 = vsel %vm454, %v2562, 0
      %v2605 = vsel %vm454, %v2564, 0
      %v2608 = vsel %vm454, %v2566, 0
      %v2611 = vsel %vm454, %v2568, 0
      %v2614 = vsel %vm454, %v2570, 0
      %v2617 = vsel %vm454, %v2572, 0
      %v2620 = vsel %vm454, %v2574, 0
      %v2623 = vsel %vm454, %v2576, 0
      %v2626 = vsel %vm454, %v2578, 0
      %v2629 = vsel %vm454, %v2580, 0
      %v2632 = vsel %vm454, %v2582, 0
      %v2635 = vsel %vm454, %v2584, 0
      %v2638 = vsel %vm454, %v2586, 0
      %v2641 = vsel %vm454, %v2588, 0
      %v2644 = vsel %vm509, %v2458, 0
      %2646 = vmatprep.subr.bf16.mxu0 0
      %2647 = vmatpush1.bf16.msra.mxu0 0
      %2648 = vmatprep.subr.bf16.mxu0 0
      %2649 = vmatpush1.bf16.msra.mxu0 0
      %2650 = vmatprep.subr.bf16.mxu0 0
      %2651 = vmatpush1.bf16.msra.mxu0 0
      %2652 = vmatprep.subr.bf16.mxu0 0
      %2653 = vmatpush1.bf16.msra.mxu0 0
      %2654 = vmatprep.subr.bf16.mxu0 0
      %2655 = vmatpush1.bf16.msra.mxu0 0
      %2656 = vmatprep.subr.bf16.mxu0 0
      %2657 = vmatpush1.bf16.msra.mxu0 0
      %2658 = vmatprep.subr.bf16.mxu0 0
      %2659 = vmatpush1.bf16.msra.mxu0 0
      %2660 = vmatprep.subr.bf16.mxu0 0
      %2661 = vmatpush1.bf16.msra.mxu0 %v2644
      %2662 = vmatprep.subr.bf16.mxu0 0
      %2663 = vmatpush2.bf16.msra.mxu0 0
      %2664 = vmatprep.subr.bf16.mxu0 0
      %2665 = vmatpush2.bf16.msra.mxu0 0
      %2666 = vmatprep.subr.bf16.mxu0 0
      %2667 = vmatpush2.bf16.msra.mxu0 0
      %2668 = vmatprep.subr.bf16.mxu0 0
      %2669 = vmatpush2.bf16.msra.mxu0 0
      %2670 = vmatprep.subr.bf16.mxu0 0
      %2671 = vmatpush2.bf16.msra.mxu0 0
      %2672 = vmatprep.subr.bf16.mxu0 0
      %2673 = vmatpush2.bf16.msra.mxu0 0
      %2674 = vmatprep.subr.bf16.mxu0 0
      %2675 = vmatpush2.bf16.msra.mxu0 0
      %2676 = vmatprep.subr.bf16.mxu0 0
      %2677 = vmatpush2.bf16.msra.mxu0 0
      %2678 = vmatprep.mubr.bf16.mxu0 0
      %2679 = vmatmul.mubr.bf16.gmra.mxu0 %v2590
      %v2680 = vpop.f32.mrf.mxu0
      %v2681 = vadd.f32 0.0, %v2680
      %v2682 = vpop.f32.mrf.mxu0
      %v2683 = vpop.f32.mrf.mxu0
      %v2684 = vadd.f32 0.0, %v2683
      %v2685 = vpop.f32.mrf.mxu0
      %2686 = vmatprep.mubr.bf16.mxu0 0
      %2687 = vmatmul.mubr.bf16.gmra.mxu0 %v2593
      %v2688 = vpop.f32.mrf.mxu0
      %v2689 = vadd.f32 0.0, %v2688
      %v2690 = vpop.f32.mrf.mxu0
      %v2691 = vpop.f32.mrf.mxu0
      %v2692 = vadd.f32 0.0, %v2691
      %v2693 = vpop.f32.mrf.mxu0
      %2694 = vmatprep.mubr.bf16.mxu0 0
      %2695 = vmatmul.mubr.bf16.gmra.mxu0 %v2596
      %v2696 = vpop.f32.mrf.mxu0
      %v2697 = vadd.f32 0.0, %v2696
      %v2698 = vpop.f32.mrf.mxu0
      %v2699 = vpop.f32.mrf.mxu0
      %v2700 = vadd.f32 0.0, %v2699
      %v2701 = vpop.f32.mrf.mxu0
      %2702 = vmatprep.mubr.bf16.mxu0 0
      %2703 = vmatmul.mubr.bf16.gmra.mxu0 %v2599
      %v2704 = vpop.f32.mrf.mxu0
      %v2705 = vadd.f32 0.0, %v2704
      %v2706 = vpop.f32.mrf.mxu0
      %v2707 = vpop.f32.mrf.mxu0
      %v2708 = vadd.f32 0.0, %v2707
      %v2709 = vpop.f32.mrf.mxu0
      %2710 = vmatprep.mubr.bf16.mxu0 0
      %2711 = vmatmul.mubr.bf16.gmra.mxu0 %v2602
      %v2712 = vpop.f32.mrf.mxu0
      %v2713 = vadd.f32 0.0, %v2712
      %v2714 = vpop.f32.mrf.mxu0
      %v2715 = vpop.f32.mrf.mxu0
      %v2716 = vadd.f32 0.0, %v2715
      %v2717 = vpop.f32.mrf.mxu0
      %2718 = vmatprep.mubr.bf16.mxu0 0
      %2719 = vmatmul.mubr.bf16.gmra.mxu0 %v2605
      %v2720 = vpop.f32.mrf.mxu0
      %v2721 = vadd.f32 0.0, %v2720
      %v2722 = vpop.f32.mrf.mxu0
      %v2723 = vpop.f32.mrf.mxu0
      %v2724 = vadd.f32 0.0, %v2723
      %v2725 = vpop.f32.mrf.mxu0
      %2726 = vmatprep.mubr.bf16.mxu0 0
      %2727 = vmatmul.mubr.bf16.gmra.mxu0 %v2608
      %v2728 = vpop.f32.mrf.mxu0
      %v2729 = vadd.f32 0.0, %v2728
      %v2730 = vpop.f32.mrf.mxu0
      %v2731 = vpop.f32.mrf.mxu0
      %v2732 = vadd.f32 0.0, %v2731
      %v2733 = vpop.f32.mrf.mxu0
      %2734 = vmatprep.mubr.bf16.mxu0 0
      %2735 = vmatmul.mubr.bf16.gmra.mxu0 %v2611
      %v2736 = vpop.f32.mrf.mxu0
      %v2737 = vadd.f32 0.0, %v2736
      %v2738 = vpop.f32.mrf.mxu0
      %v2739 = vpop.f32.mrf.mxu0
      %v2740 = vadd.f32 0.0, %v2739
      %v2741 = vpop.f32.mrf.mxu0
      %2742 = vmatprep.mubr.bf16.mxu0 0
      %2743 = vmatmul.mubr.bf16.gmra.mxu0 %v2614
      %v2744 = vpop.f32.mrf.mxu0
      %v2745 = vadd.f32 0.0, %v2744
      %v2746 = vpop.f32.mrf.mxu0
      %v2747 = vpop.f32.mrf.mxu0
      %v2748 = vadd.f32 0.0, %v2747
      %v2749 = vpop.f32.mrf.mxu0
      %2750 = vmatprep.mubr.bf16.mxu0 0
      %2751 = vmatmul.mubr.bf16.gmra.mxu0 %v2617
      %v2752 = vpop.f32.mrf.mxu0
      %v2753 = vadd.f32 0.0, %v2752
      %v2754 = vpop.f32.mrf.mxu0
      %v2755 = vpop.f32.mrf.mxu0
      %v2756 = vadd.f32 0.0, %v2755
      %v2757 = vpop.f32.mrf.mxu0
      %2758 = vmatprep.mubr.bf16.mxu0 0
      %2759 = vmatmul.mubr.bf16.gmra.mxu0 %v2620
      %v2760 = vpop.f32.mrf.mxu0
      %v2761 = vadd.f32 0.0, %v2760
      %v2762 = vpop.f32.mrf.mxu0
      %v2763 = vpop.f32.mrf.mxu0
      %v2764 = vadd.f32 0.0, %v2763
      %v2765 = vpop.f32.mrf.mxu0
      %2766 = vmatprep.mubr.bf16.mxu0 0
      %2767 = vmatmul.mubr.bf16.gmra.mxu0 %v2623
      %v2768 = vpop.f32.mrf.mxu0
      %v2769 = vadd.f32 0.0, %v2768
      %v2770 = vpop.f32.mrf.mxu0
      %v2771 = vpop.f32.mrf.mxu0
      %v2772 = vadd.f32 0.0, %v2771
      %v2773 = vpop.f32.mrf.mxu0
      %2774 = vmatprep.mubr.bf16.mxu0 0
      %2775 = vmatmul.mubr.bf16.gmra.mxu0 %v2626
      %v2776 = vpop.f32.mrf.mxu0
      %v2777 = vadd.f32 0.0, %v2776
      %v2778 = vpop.f32.mrf.mxu0
      %v2779 = vpop.f32.mrf.mxu0
      %v2780 = vadd.f32 0.0, %v2779
      %v2781 = vpop.f32.mrf.mxu0
      %2782 = vmatprep.mubr.bf16.mxu0 0
      %2783 = vmatmul.mubr.bf16.gmra.mxu0 %v2629
      %v2784 = vpop.f32.mrf.mxu0
      %v2785 = vadd.f32 0.0, %v2784
      %v2786 = vpop.f32.mrf.mxu0
      %v2787 = vpop.f32.mrf.mxu0
      %v2788 = vadd.f32 0.0, %v2787
      %v2789 = vpop.f32.mrf.mxu0
      %2790 = vmatprep.mubr.bf16.mxu0 0
      %2791 = vmatmul.mubr.bf16.gmra.mxu0 %v2632
      %v2792 = vpop.f32.mrf.mxu0
      %v2793 = vadd.f32 0.0, %v2792
      %v2794 = vpop.f32.mrf.mxu0
      %v2795 = vpop.f32.mrf.mxu0
      %v2796 = vadd.f32 0.0, %v2795
      %v2797 = vpop.f32.mrf.mxu0
      %2798 = vmatprep.mubr.bf16.mxu0 0
      %2799 = vmatmul.mubr.bf16.gmra.mxu0 %v2635
      %v2800 = vpop.f32.mrf.mxu0
      %v2801 = vadd.f32 0.0, %v2800
      %v2802 = vpop.f32.mrf.mxu0
      %v2803 = vpop.f32.mrf.mxu0
      %v2804 = vadd.f32 0.0, %v2803
      %v2805 = vpop.f32.mrf.mxu0
      %2806 = vmatprep.mubr.bf16.mxu0 0
      %2807 = vmatmul.mubr.bf16.gmra.mxu0 %v2638
      %v2808 = vpop.f32.mrf.mxu0
      %v2809 = vadd.f32 0.0, %v2808
      %v2810 = vpop.f32.mrf.mxu0
      %v2811 = vpop.f32.mrf.mxu0
      %v2812 = vadd.f32 0.0, %v2811
      %v2813 = vpop.f32.mrf.mxu0
      %2814 = vmatprep.mubr.bf16.mxu0 0
      %2815 = vmatmul.mubr.bf16.gmra.mxu0 %v2641
      %v2816 = vpop.f32.mrf.mxu0
      %v2817 = vadd.f32 0.0, %v2816
      %v2818 = vpop.f32.mrf.mxu0
      %v2819 = vpop.f32.mrf.mxu0
      %v2820 = vadd.f32 0.0, %v2819
      %v2821 = vpop.f32.mrf.mxu0
      %2822 = vdwg.mxu0
      %v2823 = vadd.f32 %v2384, %v2681
      %v2824 = vadd.f32 %v2385, %v2684
      %v2825 = vadd.f32 %v2386, %v2689
      %v2826 = vadd.f32 %v2387, %v2692
      %v2827 = vadd.f32 %v2388, %v2697
      %v2828 = vadd.f32 %v2389, %v2700
      %v2829 = vadd.f32 %v2390, %v2705
      %v2830 = vadd.f32 %v2391, %v2708
      %v2831 = vadd.f32 %v2392, %v2713
      %v2832 = vadd.f32 %v2393, %v2716
      %v2833 = vadd.f32 %v2394, %v2721
      %v2834 = vadd.f32 %v2395, %v2724
      %v2835 = vadd.f32 %v2396, %v2729
      %v2836 = vadd.f32 %v2397, %v2732
      %v2837 = vadd.f32 %v2398, %v2737
      %v2838 = vadd.f32 %v2399, %v2740
      %v2839 = vadd.f32 %v2400, %v2745
      %v2840 = vadd.f32 %v2401, %v2748
      %v2841 = vadd.f32 %v2402, %v2753
      %v2842 = vadd.f32 %v2403, %v2756
      %v2843 = vadd.f32 %v2404, %v2761
      %v2844 = vadd.f32 %v2405, %v2764
      %v2845 = vadd.f32 %v2406, %v2769
      %v2846 = vadd.f32 %v2407, %v2772
      %v2847 = vadd.f32 %v2408, %v2777
      %v2848 = vadd.f32 %v2409, %v2780
      %v2849 = vadd.f32 %v2410, %v2785
      %v2850 = vadd.f32 %v2411, %v2788
      %v2851 = vadd.f32 %v2412, %v2793
      %v2852 = vadd.f32 %v2413, %v2796
      %v2853 = vadd.f32 %v2414, %v2801
      %v2854 = vadd.f32 %v2415, %v2804
      %v2855 = vadd.f32 %v2416, %v2809
      %v2856 = vadd.f32 %v2417, %v2812
      %v2857 = vadd.f32 %v2418, %v2817
      %v2858 = vadd.f32 %v2419, %v2820
      %v2859 = vld [vmem:[%s165 + $0xa0] sm:$0x7]
      %s2860 = scalar_lea.vmem %s1, 14
      %v2861 = vld [vmem:[%s2860] sm:$0x3]
      %v2863 = vunpack.c.l.b16 %v2859
      %v2864 = vpack.c.b16 %v2863, %v2863
      %vm2865 = vsmask.f32 5376
      %v2867 = vshrl.u32 %v2533, 16
      %v2869 = vrot.slane %v2867, 2
      %v2870 = vshll.u32 %v2533, 16
      %v2872 = vrot.slane %v2870, 3
      %v2873 = vor.u32 %v2869, %v2872
      %v2875 = vshrl.u32 %v2534, 16
      %v2877 = vrot.slane %v2875, 2
      %v2878 = vshll.u32 %v2534, 16
      %v2880 = vrot.slane %v2878, 3
      %v2881 = vor.u32 %v2877, %v2880
      %v2882 = vsel %vm2865, %v2873, %v2881
      %v2884 = vshrl.u32 %v2535, 16
      %v2886 = vrot.slane %v2884, 2
      %v2887 = vshll.u32 %v2535, 16
      %v2889 = vrot.slane %v2887, 3
      %v2890 = vor.u32 %v2886, %v2889
      %v2891 = vsel %vm2865, %v2881, %v2890
      %v2893 = vshrl.u32 %v2536, 16
      %v2895 = vrot.slane %v2893, 2
      %v2896 = vshll.u32 %v2536, 16
      %v2898 = vrot.slane %v2896, 3
      %v2899 = vor.u32 %v2895, %v2898
      %v2900 = vsel %vm2865, %v2890, %v2899
      %v2902 = vshrl.u32 %v2537, 16
      %v2904 = vrot.slane %v2902, 2
      %v2905 = vshll.u32 %v2537, 16
      %v2907 = vrot.slane %v2905, 3
      %v2908 = vor.u32 %v2904, %v2907
      %v2909 = vsel %vm2865, %v2899, %v2908
      %v2911 = vshrl.u32 %v2538, 16
      %v2913 = vrot.slane %v2911, 2
      %v2914 = vshll.u32 %v2538, 16
      %v2916 = vrot.slane %v2914, 3
      %v2917 = vor.u32 %v2913, %v2916
      %v2918 = vsel %vm2865, %v2908, %v2917
      %v2920 = vshrl.u32 %v2539, 16
      %v2922 = vrot.slane %v2920, 2
      %v2923 = vshll.u32 %v2539, 16
      %v2925 = vrot.slane %v2923, 3
      %v2926 = vor.u32 %v2922, %v2925
      %v2927 = vsel %vm2865, %v2917, %v2926
      %v2929 = vshrl.u32 %v2540, 16
      %v2931 = vrot.slane %v2929, 2
      %v2932 = vshll.u32 %v2540, 16
      %v2934 = vrot.slane %v2932, 3
      %v2935 = vor.u32 %v2931, %v2934
      %v2936 = vsel %vm2865, %v2926, %v2935
      %v2938 = vshrl.u32 %v2541, 16
      %v2940 = vrot.slane %v2938, 2
      %v2941 = vshll.u32 %v2541, 16
      %v2943 = vrot.slane %v2941, 3
      %v2944 = vor.u32 %v2940, %v2943
      %v2945 = vsel %vm2865, %v2935, %v2944
      %v2947 = vshrl.u32 %v2542, 16
      %v2949 = vrot.slane %v2947, 2
      %v2950 = vshll.u32 %v2542, 16
      %v2952 = vrot.slane %v2950, 3
      %v2953 = vor.u32 %v2949, %v2952
      %v2954 = vsel %vm2865, %v2944, %v2953
      %v2956 = vshrl.u32 %v2543, 16
      %v2958 = vrot.slane %v2956, 2
      %v2959 = vshll.u32 %v2543, 16
      %v2961 = vrot.slane %v2959, 3
      %v2962 = vor.u32 %v2958, %v2961
      %v2963 = vsel %vm2865, %v2953, %v2962
      %v2965 = vshrl.u32 %v2544, 16
      %v2967 = vrot.slane %v2965, 2
      %v2968 = vshll.u32 %v2544, 16
      %v2970 = vrot.slane %v2968, 3
      %v2971 = vor.u32 %v2967, %v2970
      %v2972 = vsel %vm2865, %v2962, %v2971
      %v2974 = vshrl.u32 %v2545, 16
      %v2976 = vrot.slane %v2974, 2
      %v2977 = vshll.u32 %v2545, 16
      %v2979 = vrot.slane %v2977, 3
      %v2980 = vor.u32 %v2976, %v2979
      %v2981 = vsel %vm2865, %v2971, %v2980
      %v2983 = vshrl.u32 %v2546, 16
      %v2985 = vrot.slane %v2983, 2
      %v2986 = vshll.u32 %v2546, 16
      %v2988 = vrot.slane %v2986, 3
      %v2989 = vor.u32 %v2985, %v2988
      %v2990 = vsel %vm2865, %v2980, %v2989
      %v2992 = vshrl.u32 %v2547, 16
      %v2994 = vrot.slane %v2992, 2
      %v2995 = vshll.u32 %v2547, 16
      %v2997 = vrot.slane %v2995, 3
      %v2998 = vor.u32 %v2994, %v2997
      %v2999 = vsel %vm2865, %v2989, %v2998
      %v3001 = vshrl.u32 %v2548, 16
      %v3003 = vrot.slane %v3001, 2
      %v3004 = vshll.u32 %v2548, 16
      %v3006 = vrot.slane %v3004, 3
      %v3007 = vor.u32 %v3003, %v3006
      %v3008 = vsel %vm2865, %v2998, %v3007
      %v3010 = vshrl.u32 %v2549, 16
      %v3012 = vrot.slane %v3010, 2
      %v3013 = vshll.u32 %v2549, 16
      %v3015 = vrot.slane %v3013, 3
      %v3016 = vor.u32 %v3012, %v3015
      %v3017 = vsel %vm2865, %v3007, %v3016
      %v3019 = vshrl.u32 %v2550, 16
      %v3021 = vrot.slane %v3019, 2
      %v3022 = vshll.u32 %v2550, 16
      %v3024 = vrot.slane %v3022, 3
      %v3025 = vor.u32 %v3021, %v3024
      %v3026 = vsel %vm2865, %v3016, %v3025
      %v3028 = vshrl.u32 %v2864, 16
      %v3030 = vrot.slane %v3028, 2
      %v3031 = vshll.u32 %v2864, 16
      %v3033 = vrot.slane %v3031, 3
      %v3034 = vor.u32 %v3030, %v3033
      %v3035 = vsel %vm2865, %v3025, %v3034
      %v3037 = vsel %vm454, %v2882, 0
      %v3040 = vsel %vm454, %v2891, 0
      %v3043 = vsel %vm454, %v2900, 0
      %v3046 = vsel %vm454, %v2909, 0
      %v3049 = vsel %vm454, %v2918, 0
      %v3052 = vsel %vm454, %v2927, 0
      %v3055 = vsel %vm454, %v2936, 0
      %v3058 = vsel %vm454, %v2945, 0
      %v3061 = vsel %vm454, %v2954, 0
      %v3064 = vsel %vm454, %v2963, 0
      %v3067 = vsel %vm454, %v2972, 0
      %v3070 = vsel %vm454, %v2981, 0
      %v3073 = vsel %vm454, %v2990, 0
      %v3076 = vsel %vm454, %v2999, 0
      %v3079 = vsel %vm454, %v3008, 0
      %v3082 = vsel %vm454, %v3017, 0
      %v3085 = vsel %vm454, %v3026, 0
      %v3088 = vsel %vm454, %v3035, 0
      %v3091 = vsel %vm509, %v2861, 0
      %3093 = vmatprep.subr.bf16.mxu0 0
      %3094 = vmatpush1.bf16.msra.mxu0 0
      %3095 = vmatprep.subr.bf16.mxu0 0
      %3096 = vmatpush1.bf16.msra.mxu0 0
      %3097 = vmatprep.subr.bf16.mxu0 0
      %3098 = vmatpush1.bf16.msra.mxu0 0
      %3099 = vmatprep.subr.bf16.mxu0 0
      %3100 = vmatpush1.bf16.msra.mxu0 0
      %3101 = vmatprep.subr.bf16.mxu0 0
      %3102 = vmatpush1.bf16.msra.mxu0 0
      %3103 = vmatprep.subr.bf16.mxu0 0
      %3104 = vmatpush1.bf16.msra.mxu0 0
      %3105 = vmatprep.subr.bf16.mxu0 0
      %3106 = vmatpush1.bf16.msra.mxu0 0
      %3107 = vmatprep.subr.bf16.mxu0 0
      %3108 = vmatpush1.bf16.msra.mxu0 %v3091
      %3109 = vmatprep.subr.bf16.mxu0 0
      %3110 = vmatpush2.bf16.msra.mxu0 0
      %3111 = vmatprep.subr.bf16.mxu0 0
      %3112 = vmatpush2.bf16.msra.mxu0 0
      %3113 = vmatprep.subr.bf16.mxu0 0
      %3114 = vmatpush2.bf16.msra.mxu0 0
      %3115 = vmatprep.subr.bf16.mxu0 0
      %3116 = vmatpush2.bf16.msra.mxu0 0
      %3117 = vmatprep.subr.bf16.mxu0 0
      %3118 = vmatpush2.bf16.msra.mxu0 0
      %3119 = vmatprep.subr.bf16.mxu0 0
      %3120 = vmatpush2.bf16.msra.mxu0 0
      %3121 = vmatprep.subr.bf16.mxu0 0
      %3122 = vmatpush2.bf16.msra.mxu0 0
      %3123 = vmatprep.subr.bf16.mxu0 0
      %3124 = vmatpush2.bf16.msra.mxu0 0
      %3125 = vmatprep.mubr.bf16.mxu0 0
      %3126 = vmatmul.mubr.bf16.gmra.mxu0 %v3037
      %v3127 = vpop.f32.mrf.mxu0
      %v3128 = vadd.f32 0.0, %v3127
      %v3129 = vpop.f32.mrf.mxu0
      %v3130 = vpop.f32.mrf.mxu0
      %v3131 = vadd.f32 0.0, %v3130
      %v3132 = vpop.f32.mrf.mxu0
      %3133 = vmatprep.mubr.bf16.mxu0 0
      %3134 = vmatmul.mubr.bf16.gmra.mxu0 %v3040
      %v3135 = vpop.f32.mrf.mxu0
      %v3136 = vadd.f32 0.0, %v3135
      %v3137 = vpop.f32.mrf.mxu0
      %v3138 = vpop.f32.mrf.mxu0
      %v3139 = vadd.f32 0.0, %v3138
      %v3140 = vpop.f32.mrf.mxu0
      %3141 = vmatprep.mubr.bf16.mxu0 0
      %3142 = vmatmul.mubr.bf16.gmra.mxu0 %v3043
      %v3143 = vpop.f32.mrf.mxu0
      %v3144 = vadd.f32 0.0, %v3143
      %v3145 = vpop.f32.mrf.mxu0
      %v3146 = vpop.f32.mrf.mxu0
      %v3147 = vadd.f32 0.0, %v3146
      %v3148 = vpop.f32.mrf.mxu0
      %3149 = vmatprep.mubr.bf16.mxu0 0
      %3150 = vmatmul.mubr.bf16.gmra.mxu0 %v3046
      %v3151 = vpop.f32.mrf.mxu0
      %v3152 = vadd.f32 0.0, %v3151
      %v3153 = vpop.f32.mrf.mxu0
      %v3154 = vpop.f32.mrf.mxu0
      %v3155 = vadd.f32 0.0, %v3154
      %v3156 = vpop.f32.mrf.mxu0
      %3157 = vmatprep.mubr.bf16.mxu0 0
      %3158 = vmatmul.mubr.bf16.gmra.mxu0 %v3049
      %v3159 = vpop.f32.mrf.mxu0
      %v3160 = vadd.f32 0.0, %v3159
      %v3161 = vpop.f32.mrf.mxu0
      %v3162 = vpop.f32.mrf.mxu0
      %v3163 = vadd.f32 0.0, %v3162
      %v3164 = vpop.f32.mrf.mxu0
      %3165 = vmatprep.mubr.bf16.mxu0 0
      %3166 = vmatmul.mubr.bf16.gmra.mxu0 %v3052
      %v3167 = vpop.f32.mrf.mxu0
      %v3168 = vadd.f32 0.0, %v3167
      %v3169 = vpop.f32.mrf.mxu0
      %v3170 = vpop.f32.mrf.mxu0
      %v3171 = vadd.f32 0.0, %v3170
      %v3172 = vpop.f32.mrf.mxu0
      %3173 = vmatprep.mubr.bf16.mxu0 0
      %3174 = vmatmul.mubr.bf16.gmra.mxu0 %v3055
      %v3175 = vpop.f32.mrf.mxu0
      %v3176 = vadd.f32 0.0, %v3175
      %v3177 = vpop.f32.mrf.mxu0
      %v3178 = vpop.f32.mrf.mxu0
      %v3179 = vadd.f32 0.0, %v3178
      %v3180 = vpop.f32.mrf.mxu0
      %3181 = vmatprep.mubr.bf16.mxu0 0
      %3182 = vmatmul.mubr.bf16.gmra.mxu0 %v3058
      %v3183 = vpop.f32.mrf.mxu0
      %v3184 = vadd.f32 0.0, %v3183
      %v3185 = vpop.f32.mrf.mxu0
      %v3186 = vpop.f32.mrf.mxu0
      %v3187 = vadd.f32 0.0, %v3186
      %v3188 = vpop.f32.mrf.mxu0
      %3189 = vmatprep.mubr.bf16.mxu0 0
      %3190 = vmatmul.mubr.bf16.gmra.mxu0 %v3061
      %v3191 = vpop.f32.mrf.mxu0
      %v3192 = vadd.f32 0.0, %v3191
      %v3193 = vpop.f32.mrf.mxu0
      %v3194 = vpop.f32.mrf.mxu0
      %v3195 = vadd.f32 0.0, %v3194
      %v3196 = vpop.f32.mrf.mxu0
      %3197 = vmatprep.mubr.bf16.mxu0 0
      %3198 = vmatmul.mubr.bf16.gmra.mxu0 %v3064
      %v3199 = vpop.f32.mrf.mxu0
      %v3200 = vadd.f32 0.0, %v3199
      %v3201 = vpop.f32.mrf.mxu0
      %v3202 = vpop.f32.mrf.mxu0
      %v3203 = vadd.f32 0.0, %v3202
      %v3204 = vpop.f32.mrf.mxu0
      %3205 = vmatprep.mubr.bf16.mxu0 0
      %3206 = vmatmul.mubr.bf16.gmra.mxu0 %v3067
      %v3207 = vpop.f32.mrf.mxu0
      %v3208 = vadd.f32 0.0, %v3207
      %v3209 = vpop.f32.mrf.mxu0
      %v3210 = vpop.f32.mrf.mxu0
      %v3211 = vadd.f32 0.0, %v3210
      %v3212 = vpop.f32.mrf.mxu0
      %3213 = vmatprep.mubr.bf16.mxu0 0
      %3214 = vmatmul.mubr.bf16.gmra.mxu0 %v3070
      %v3215 = vpop.f32.mrf.mxu0
      %v3216 = vadd.f32 0.0, %v3215
      %v3217 = vpop.f32.mrf.mxu0
      %v3218 = vpop.f32.mrf.mxu0
      %v3219 = vadd.f32 0.0, %v3218
      %v3220 = vpop.f32.mrf.mxu0
      %3221 = vmatprep.mubr.bf16.mxu0 0
      %3222 = vmatmul.mubr.bf16.gmra.mxu0 %v3073
      %v3223 = vpop.f32.mrf.mxu0
      %v3224 = vadd.f32 0.0, %v3223
      %v3225 = vpop.f32.mrf.mxu0
      %v3226 = vpop.f32.mrf.mxu0
      %v3227 = vadd.f32 0.0, %v3226
      %v3228 = vpop.f32.mrf.mxu0
      %3229 = vmatprep.mubr.bf16.mxu0 0
      %3230 = vmatmul.mubr.bf16.gmra.mxu0 %v3076
      %v3231 = vpop.f32.mrf.mxu0
      %v3232 = vadd.f32 0.0, %v3231
      %v3233 = vpop.f32.mrf.mxu0
      %v3234 = vpop.f32.mrf.mxu0
      %v3235 = vadd.f32 0.0, %v3234
      %v3236 = vpop.f32.mrf.mxu0
      %3237 = vmatprep.mubr.bf16.mxu0 0
      %3238 = vmatmul.mubr.bf16.gmra.mxu0 %v3079
      %v3239 = vpop.f32.mrf.mxu0
      %v3240 = vadd.f32 0.0, %v3239
      %v3241 = vpop.f32.mrf.mxu0
      %v3242 = vpop.f32.mrf.mxu0
      %v3243 = vadd.f32 0.0, %v3242
      %v3244 = vpop.f32.mrf.mxu0
      %3245 = vmatprep.mubr.bf16.mxu0 0
      %3246 = vmatmul.mubr.bf16.gmra.mxu0 %v3082
      %v3247 = vpop.f32.mrf.mxu0
      %v3248 = vadd.f32 0.0, %v3247
      %v3249 = vpop.f32.mrf.mxu0
      %v3250 = vpop.f32.mrf.mxu0
      %v3251 = vadd.f32 0.0, %v3250
      %v3252 = vpop.f32.mrf.mxu0
      %3253 = vmatprep.mubr.bf16.mxu0 0
      %3254 = vmatmul.mubr.bf16.gmra.mxu0 %v3085
      %v3255 = vpop.f32.mrf.mxu0
      %v3256 = vadd.f32 0.0, %v3255
      %v3257 = vpop.f32.mrf.mxu0
      %v3258 = vpop.f32.mrf.mxu0
      %v3259 = vadd.f32 0.0, %v3258
      %v3260 = vpop.f32.mrf.mxu0
      %3261 = vmatprep.mubr.bf16.mxu0 0
      %3262 = vmatmul.mubr.bf16.gmra.mxu0 %v3088
      %v3263 = vpop.f32.mrf.mxu0
      %v3264 = vadd.f32 0.0, %v3263
      %v3265 = vpop.f32.mrf.mxu0
      %v3266 = vpop.f32.mrf.mxu0
      %v3267 = vadd.f32 0.0, %v3266
      %v3268 = vpop.f32.mrf.mxu0
      %3269 = vdwg.mxu0
      %v3270 = vadd.f32 %v2823, %v3128
      %v3271 = vadd.f32 %v2824, %v3131
      %v3272 = vadd.f32 %v2825, %v3136
      %v3273 = vadd.f32 %v2826, %v3139
      %v3274 = vadd.f32 %v2827, %v3144
      %v3275 = vadd.f32 %v2828, %v3147
      %v3276 = vadd.f32 %v2829, %v3152
      %v3277 = vadd.f32 %v2830, %v3155
      %v3278 = vadd.f32 %v2831, %v3160
      %v3279 = vadd.f32 %v2832, %v3163
      %v3280 = vadd.f32 %v2833, %v3168
      %v3281 = vadd.f32 %v2834, %v3171
      %v3282 = vadd.f32 %v2835, %v3176
      %v3283 = vadd.f32 %v2836, %v3179
      %v3284 = vadd.f32 %v2837, %v3184
      %v3285 = vadd.f32 %v2838, %v3187
      %v3286 = vadd.f32 %v2839, %v3192
      %v3287 = vadd.f32 %v2840, %v3195
      %v3288 = vadd.f32 %v2841, %v3200
      %v3289 = vadd.f32 %v2842, %v3203
      %v3290 = vadd.f32 %v2843, %v3208
      %v3291 = vadd.f32 %v2844, %v3211
      %v3292 = vadd.f32 %v2845, %v3216
      %v3293 = vadd.f32 %v2846, %v3219
      %v3294 = vadd.f32 %v2847, %v3224
      %v3295 = vadd.f32 %v2848, %v3227
      %v3296 = vadd.f32 %v2849, %v3232
      %v3297 = vadd.f32 %v2850, %v3235
      %v3298 = vadd.f32 %v2851, %v3240
      %v3299 = vadd.f32 %v2852, %v3243
      %v3300 = vadd.f32 %v2853, %v3248
      %v3301 = vadd.f32 %v2854, %v3251
      %v3302 = vadd.f32 %v2855, %v3256
      %v3303 = vadd.f32 %v2856, %v3259
      %v3304 = vadd.f32 %v2857, %v3264
      %v3305 = vadd.f32 %v2858, %v3267
      %v3306 = vld [vmem:[%s165 + $0x10] sm:$0x8]
      %s3307 = scalar_lea.vmem %s1, 16
      %v3308 = vld [vmem:[%s3307] sm:$0x3]
      %v3310 = vunpack.c.l.b16 %v3306
      %v3311 = vpack.c.b16 %v2497, %v3310
      %vm3312 = vcmask 1044480
      %v3313 = vrot.slane %v3311, 3
      %v3314 = vrot.slane %v2534, 3
      %v3315 = vsel %vm3312, %v3313, %v3314
      %v3316 = vrot.slane %v2535, 3
      %v3317 = vsel %vm3312, %v3314, %v3316
      %v3318 = vrot.slane %v2536, 3
      %v3319 = vsel %vm3312, %v3316, %v3318
      %v3320 = vrot.slane %v2537, 3
      %v3321 = vsel %vm3312, %v3318, %v3320
      %v3322 = vrot.slane %v2538, 3
      %v3323 = vsel %vm3312, %v3320, %v3322
      %v3324 = vrot.slane %v2539, 3
      %v3325 = vsel %vm3312, %v3322, %v3324
      %v3326 = vrot.slane %v2540, 3
      %v3327 = vsel %vm3312, %v3324, %v3326
      %v3328 = vrot.slane %v2541, 3
      %v3329 = vsel %vm3312, %v3326, %v3328
      %v3330 = vrot.slane %v2542, 3
      %v3331 = vsel %vm3312, %v3328, %v3330
      %v3332 = vrot.slane %v2543, 3
      %v3333 = vsel %vm3312, %v3330, %v3332
      %v3334 = vrot.slane %v2544, 3
      %v3335 = vsel %vm3312, %v3332, %v3334
      %v3336 = vrot.slane %v2545, 3
      %v3337 = vsel %vm3312, %v3334, %v3336
      %v3338 = vrot.slane %v2546, 3
      %v3339 = vsel %vm3312, %v3336, %v3338
      %v3340 = vrot.slane %v2547, 3
      %v3341 = vsel %vm3312, %v3338, %v3340
      %v3342 = vrot.slane %v2548, 3
      %v3343 = vsel %vm3312, %v3340, %v3342
      %v3344 = vrot.slane %v2549, 3
      %v3345 = vsel %vm3312, %v3342, %v3344
      %v3346 = vrot.slane %v2550, 3
      %v3347 = vsel %vm3312, %v3344, %v3346
      %v3348 = vrot.slane %v2864, 3
      %v3349 = vsel %vm3312, %v3346, %v3348
      %v3351 = vsel %vm454, %v3315, 0
      %v3354 = vsel %vm454, %v3317, 0
      %v3357 = vsel %vm454, %v3319, 0
      %v3360 = vsel %vm454, %v3321, 0
      %v3363 = vsel %vm454, %v3323, 0
      %v3366 = vsel %vm454, %v3325, 0
      %v3369 = vsel %vm454, %v3327, 0
      %v3372 = vsel %vm454, %v3329, 0
      %v3375 = vsel %vm454, %v3331, 0
      %v3378 = vsel %vm454, %v3333, 0
      %v3381 = vsel %vm454, %v3335, 0
      %v3384 = vsel %vm454, %v3337, 0
      %v3387 = vsel %vm454, %v3339, 0
      %v3390 = vsel %vm454, %v3341, 0
      %v3393 = vsel %vm454, %v3343, 0
      %v3396 = vsel %vm454, %v3345, 0
      %v3399 = vsel %vm454, %v3347, 0
      %v3402 = vsel %vm454, %v3349, 0
      %v3405 = vsel %vm509, %v3308, 0
      %3407 = vmatprep.subr.bf16.mxu0 0
      %3408 = vmatpush1.bf16.msra.mxu0 0
      %3409 = vmatprep.subr.bf16.mxu0 0
      %3410 = vmatpush1.bf16.msra.mxu0 0
      %3411 = vmatprep.subr.bf16.mxu0 0
      %3412 = vmatpush1.bf16.msra.mxu0 0
      %3413 = vmatprep.subr.bf16.mxu0 0
      %3414 = vmatpush1.bf16.msra.mxu0 0
      %3415 = vmatprep.subr.bf16.mxu0 0
      %3416 = vmatpush1.bf16.msra.mxu0 0
      %3417 = vmatprep.subr.bf16.mxu0 0
      %3418 = vmatpush1.bf16.msra.mxu0 0
      %3419 = vmatprep.subr.bf16.mxu0 0
      %3420 = vmatpush1.bf16.msra.mxu0 0
      %3421 = vmatprep.subr.bf16.mxu0 0
      %3422 = vmatpush1.bf16.msra.mxu0 %v3405
      %3423 = vmatprep.subr.bf16.mxu0 0
      %3424 = vmatpush2.bf16.msra.mxu0 0
      %3425 = vmatprep.subr.bf16.mxu0 0
      %3426 = vmatpush2.bf16.msra.mxu0 0
      %3427 = vmatprep.subr.bf16.mxu0 0
      %3428 = vmatpush2.bf16.msra.mxu0 0
      %3429 = vmatprep.subr.bf16.mxu0 0
      %3430 = vmatpush2.bf16.msra.mxu0 0
      %3431 = vmatprep.subr.bf16.mxu0 0
      %3432 = vmatpush2.bf16.msra.mxu0 0
      %3433 = vmatprep.subr.bf16.mxu0 0
      %3434 = vmatpush2.bf16.msra.mxu0 0
      %3435 = vmatprep.subr.bf16.mxu0 0
      %3436 = vmatpush2.bf16.msra.mxu0 0
      %3437 = vmatprep.subr.bf16.mxu0 0
      %3438 = vmatpush2.bf16.msra.mxu0 0
      %3439 = vmatprep.mubr.bf16.mxu0 0
      %3440 = vmatmul.mubr.bf16.gmra.mxu0 %v3351
      %v3441 = vpop.f32.mrf.mxu0
      %v3442 = vadd.f32 0.0, %v3441
      %v3443 = vpop.f32.mrf.mxu0
      %v3444 = vpop.f32.mrf.mxu0
      %v3445 = vadd.f32 0.0, %v3444
      %v3446 = vpop.f32.mrf.mxu0
      %3447 = vmatprep.mubr.bf16.mxu0 0
      %3448 = vmatmul.mubr.bf16.gmra.mxu0 %v3354
      %v3449 = vpop.f32.mrf.mxu0
      %v3450 = vadd.f32 0.0, %v3449
      %v3451 = vpop.f32.mrf.mxu0
      %v3452 = vpop.f32.mrf.mxu0
      %v3453 = vadd.f32 0.0, %v3452
      %v3454 = vpop.f32.mrf.mxu0
      %3455 = vmatprep.mubr.bf16.mxu0 0
      %3456 = vmatmul.mubr.bf16.gmra.mxu0 %v3357
      %v3457 = vpop.f32.mrf.mxu0
      %v3458 = vadd.f32 0.0, %v3457
      %v3459 = vpop.f32.mrf.mxu0
      %v3460 = vpop.f32.mrf.mxu0
      %v3461 = vadd.f32 0.0, %v3460
      %v3462 = vpop.f32.mrf.mxu0
      %3463 = vmatprep.mubr.bf16.mxu0 0
      %3464 = vmatmul.mubr.bf16.gmra.mxu0 %v3360
      %v3465 = vpop.f32.mrf.mxu0
      %v3466 = vadd.f32 0.0, %v3465
      %v3467 = vpop.f32.mrf.mxu0
      %v3468 = vpop.f32.mrf.mxu0
      %v3469 = vadd.f32 0.0, %v3468
      %v3470 = vpop.f32.mrf.mxu0
      %3471 = vmatprep.mubr.bf16.mxu0 0
      %3472 = vmatmul.mubr.bf16.gmra.mxu0 %v3363
      %v3473 = vpop.f32.mrf.mxu0
      %v3474 = vadd.f32 0.0, %v3473
      %v3475 = vpop.f32.mrf.mxu0
      %v3476 = vpop.f32.mrf.mxu0
      %v3477 = vadd.f32 0.0, %v3476
      %v3478 = vpop.f32.mrf.mxu0
      %3479 = vmatprep.mubr.bf16.mxu0 0
      %3480 = vmatmul.mubr.bf16.gmra.mxu0 %v3366
      %v3481 = vpop.f32.mrf.mxu0
      %v3482 = vadd.f32 0.0, %v3481
      %v3483 = vpop.f32.mrf.mxu0
      %v3484 = vpop.f32.mrf.mxu0
      %v3485 = vadd.f32 0.0, %v3484
      %v3486 = vpop.f32.mrf.mxu0
      %3487 = vmatprep.mubr.bf16.mxu0 0
      %3488 = vmatmul.mubr.bf16.gmra.mxu0 %v3369
      %v3489 = vpop.f32.mrf.mxu0
      %v3490 = vadd.f32 0.0, %v3489
      %v3491 = vpop.f32.mrf.mxu0
      %v3492 = vpop.f32.mrf.mxu0
      %v3493 = vadd.f32 0.0, %v3492
      %v3494 = vpop.f32.mrf.mxu0
      %3495 = vmatprep.mubr.bf16.mxu0 0
      %3496 = vmatmul.mubr.bf16.gmra.mxu0 %v3372
      %v3497 = vpop.f32.mrf.mxu0
      %v3498 = vadd.f32 0.0, %v3497
      %v3499 = vpop.f32.mrf.mxu0
      %v3500 = vpop.f32.mrf.mxu0
      %v3501 = vadd.f32 0.0, %v3500
      %v3502 = vpop.f32.mrf.mxu0
      %3503 = vmatprep.mubr.bf16.mxu0 0
      %3504 = vmatmul.mubr.bf16.gmra.mxu0 %v3375
      %v3505 = vpop.f32.mrf.mxu0
      %v3506 = vadd.f32 0.0, %v3505
      %v3507 = vpop.f32.mrf.mxu0
      %v3508 = vpop.f32.mrf.mxu0
      %v3509 = vadd.f32 0.0, %v3508
      %v3510 = vpop.f32.mrf.mxu0
      %3511 = vmatprep.mubr.bf16.mxu0 0
      %3512 = vmatmul.mubr.bf16.gmra.mxu0 %v3378
      %v3513 = vpop.f32.mrf.mxu0
      %v3514 = vadd.f32 0.0, %v3513
      %v3515 = vpop.f32.mrf.mxu0
      %v3516 = vpop.f32.mrf.mxu0
      %v3517 = vadd.f32 0.0, %v3516
      %v3518 = vpop.f32.mrf.mxu0
      %3519 = vmatprep.mubr.bf16.mxu0 0
      %3520 = vmatmul.mubr.bf16.gmra.mxu0 %v3381
      %v3521 = vpop.f32.mrf.mxu0
      %v3522 = vadd.f32 0.0, %v3521
      %v3523 = vpop.f32.mrf.mxu0
      %v3524 = vpop.f32.mrf.mxu0
      %v3525 = vadd.f32 0.0, %v3524
      %v3526 = vpop.f32.mrf.mxu0
      %3527 = vmatprep.mubr.bf16.mxu0 0
      %3528 = vmatmul.mubr.bf16.gmra.mxu0 %v3384
      %v3529 = vpop.f32.mrf.mxu0
      %v3530 = vadd.f32 0.0, %v3529
      %v3531 = vpop.f32.mrf.mxu0
      %v3532 = vpop.f32.mrf.mxu0
      %v3533 = vadd.f32 0.0, %v3532
      %v3534 = vpop.f32.mrf.mxu0
      %3535 = vmatprep.mubr.bf16.mxu0 0
      %3536 = vmatmul.mubr.bf16.gmra.mxu0 %v3387
      %v3537 = vpop.f32.mrf.mxu0
      %v3538 = vadd.f32 0.0, %v3537
      %v3539 = vpop.f32.mrf.mxu0
      %v3540 = vpop.f32.mrf.mxu0
      %v3541 = vadd.f32 0.0, %v3540
      %v3542 = vpop.f32.mrf.mxu0
      %3543 = vmatprep.mubr.bf16.mxu0 0
      %3544 = vmatmul.mubr.bf16.gmra.mxu0 %v3390
      %v3545 = vpop.f32.mrf.mxu0
      %v3546 = vadd.f32 0.0, %v3545
      %v3547 = vpop.f32.mrf.mxu0
      %v3548 = vpop.f32.mrf.mxu0
      %v3549 = vadd.f32 0.0, %v3548
      %v3550 = vpop.f32.mrf.mxu0
      %3551 = vmatprep.mubr.bf16.mxu0 0
      %3552 = vmatmul.mubr.bf16.gmra.mxu0 %v3393
      %v3553 = vpop.f32.mrf.mxu0
      %v3554 = vadd.f32 0.0, %v3553
      %v3555 = vpop.f32.mrf.mxu0
      %v3556 = vpop.f32.mrf.mxu0
      %v3557 = vadd.f32 0.0, %v3556
      %v3558 = vpop.f32.mrf.mxu0
      %3559 = vmatprep.mubr.bf16.mxu0 0
      %3560 = vmatmul.mubr.bf16.gmra.mxu0 %v3396
      %v3561 = vpop.f32.mrf.mxu0
      %v3562 = vadd.f32 0.0, %v3561
      %v3563 = vpop.f32.mrf.mxu0
      %v3564 = vpop.f32.mrf.mxu0
      %v3565 = vadd.f32 0.0, %v3564
      %v3566 = vpop.f32.mrf.mxu0
      %3567 = vmatprep.mubr.bf16.mxu0 0
      %3568 = vmatmul.mubr.bf16.gmra.mxu0 %v3399
      %v3569 = vpop.f32.mrf.mxu0
      %v3570 = vadd.f32 0.0, %v3569
      %v3571 = vpop.f32.mrf.mxu0
      %v3572 = vpop.f32.mrf.mxu0
      %v3573 = vadd.f32 0.0, %v3572
      %v3574 = vpop.f32.mrf.mxu0
      %3575 = vmatprep.mubr.bf16.mxu0 0
      %3576 = vmatmul.mubr.bf16.gmra.mxu0 %v3402
      %v3577 = vpop.f32.mrf.mxu0
      %v3578 = vadd.f32 0.0, %v3577
      %v3579 = vpop.f32.mrf.mxu0
      %v3580 = vpop.f32.mrf.mxu0
      %v3581 = vadd.f32 0.0, %v3580
      %v3582 = vpop.f32.mrf.mxu0
      %3583 = vdwg.mxu0
      %v3584 = vadd.f32 %v3270, %v3442
      %v3585 = vadd.f32 %v3271, %v3445
      %v3586 = vadd.f32 %v3272, %v3450
      %v3587 = vadd.f32 %v3273, %v3453
      %v3588 = vadd.f32 %v3274, %v3458
      %v3589 = vadd.f32 %v3275, %v3461
      %v3590 = vadd.f32 %v3276, %v3466
      %v3591 = vadd.f32 %v3277, %v3469
      %v3592 = vadd.f32 %v3278, %v3474
      %v3593 = vadd.f32 %v3279, %v3477
      %v3594 = vadd.f32 %v3280, %v3482
      %v3595 = vadd.f32 %v3281, %v3485
      %v3596 = vadd.f32 %v3282, %v3490
      %v3597 = vadd.f32 %v3283, %v3493
      %v3598 = vadd.f32 %v3284, %v3498
      %v3599 = vadd.f32 %v3285, %v3501
      %v3600 = vadd.f32 %v3286, %v3506
      %v3601 = vadd.f32 %v3287, %v3509
      %v3602 = vadd.f32 %v3288, %v3514
      %v3603 = vadd.f32 %v3289, %v3517
      %v3604 = vadd.f32 %v3290, %v3522
      %v3605 = vadd.f32 %v3291, %v3525
      %v3606 = vadd.f32 %v3292, %v3530
      %v3607 = vadd.f32 %v3293, %v3533
      %v3608 = vadd.f32 %v3294, %v3538
      %v3609 = vadd.f32 %v3295, %v3541
      %v3610 = vadd.f32 %v3296, %v3546
      %v3611 = vadd.f32 %v3297, %v3549
      %v3612 = vadd.f32 %v3298, %v3554
      %v3613 = vadd.f32 %v3299, %v3557
      %v3614 = vadd.f32 %v3300, %v3562
      %v3615 = vadd.f32 %v3301, %v3565
      %v3616 = vadd.f32 %v3302, %v3570
      %v3617 = vadd.f32 %v3303, %v3573
      %v3618 = vadd.f32 %v3304, %v3578
      %v3619 = vadd.f32 %v3305, %v3581
      %v3620 = vld [vmem:[%s2] sm:$0x1]
      %v3622 = vlaneseq
      %v3623 = vshrl.u32 %v3622, 7
      %v3624 = vsub.s32 0, %v3623
      %v3625 = vrot.slane %v3620, %v3624
      %v3627 = vadd.f32 %v3584, %v3625
      %v3628 = vadd.f32 %v3585, %v3625
      %v3629 = vadd.f32 %v3586, %v3625
      %v3630 = vadd.f32 %v3587, %v3625
      %v3631 = vadd.f32 %v3588, %v3625
      %v3632 = vadd.f32 %v3589, %v3625
      %v3633 = vadd.f32 %v3590, %v3625
      %v3634 = vadd.f32 %v3591, %v3625
      %v3635 = vadd.f32 %v3592, %v3625
      %v3636 = vadd.f32 %v3593, %v3625
      %v3637 = vadd.f32 %v3594, %v3625
      %v3638 = vadd.f32 %v3595, %v3625
      %v3639 = vadd.f32 %v3596, %v3625
      %v3640 = vadd.f32 %v3597, %v3625
      %v3641 = vadd.f32 %v3598, %v3625
      %v3642 = vadd.f32 %v3599, %v3625
      %v3643 = vadd.f32 %v3600, %v3625
      %v3644 = vadd.f32 %v3601, %v3625
      %v3645 = vadd.f32 %v3602, %v3625
      %v3646 = vadd.f32 %v3603, %v3625
      %v3647 = vadd.f32 %v3604, %v3625
      %v3648 = vadd.f32 %v3605, %v3625
      %v3649 = vadd.f32 %v3606, %v3625
      %v3650 = vadd.f32 %v3607, %v3625
      %v3651 = vadd.f32 %v3608, %v3625
      %v3652 = vadd.f32 %v3609, %v3625
      %v3653 = vadd.f32 %v3610, %v3625
      %v3654 = vadd.f32 %v3611, %v3625
      %v3655 = vadd.f32 %v3612, %v3625
      %v3656 = vadd.f32 %v3613, %v3625
      %v3657 = vadd.f32 %v3614, %v3625
      %v3658 = vadd.f32 %v3615, %v3625
      %v3659 = vadd.f32 %v3616, %v3625
      %v3660 = vadd.f32 %v3617, %v3625
      %v3661 = vadd.f32 %v3618, %v3625
      %v3662 = vadd.f32 %v3619, %v3625
      %v3663 = vmul.f32 %v3627, 0.01
      %v3664 = vmul.f32 %v3628, 0.01
      %v3665 = vmul.f32 %v3629, 0.01
      %v3666 = vmul.f32 %v3630, 0.01
      %v3667 = vmul.f32 %v3631, 0.01
      %v3668 = vmul.f32 %v3632, 0.01
      %v3669 = vmul.f32 %v3633, 0.01
      %v3670 = vmul.f32 %v3634, 0.01
      %v3671 = vmul.f32 %v3635, 0.01
      %v3672 = vmul.f32 %v3636, 0.01
      %v3673 = vmul.f32 %v3637, 0.01
      %v3674 = vmul.f32 %v3638, 0.01
      %v3675 = vmul.f32 %v3639, 0.01
      %v3676 = vmul.f32 %v3640, 0.01
      %v3677 = vmul.f32 %v3641, 0.01
      %v3678 = vmul.f32 %v3642, 0.01
      %v3679 = vmul.f32 %v3643, 0.01
      %v3680 = vmul.f32 %v3644, 0.01
      %v3681 = vmul.f32 %v3645, 0.01
      %v3682 = vmul.f32 %v3646, 0.01
      %v3683 = vmul.f32 %v3647, 0.01
      %v3684 = vmul.f32 %v3648, 0.01
      %v3685 = vmul.f32 %v3649, 0.01
      %v3686 = vmul.f32 %v3650, 0.01
      %v3687 = vmul.f32 %v3651, 0.01
      %v3688 = vmul.f32 %v3652, 0.01
      %v3689 = vmul.f32 %v3653, 0.01
      %v3690 = vmul.f32 %v3654, 0.01
      %v3691 = vmul.f32 %v3655, 0.01
      %v3692 = vmul.f32 %v3656, 0.01
      %v3693 = vmul.f32 %v3657, 0.01
      %v3694 = vmul.f32 %v3658, 0.01
      %v3695 = vmul.f32 %v3659, 0.01
      %v3696 = vmul.f32 %v3660, 0.01
      %v3697 = vmul.f32 %v3661, 0.01
      %v3698 = vmul.f32 %v3662, 0.01
      %v3699 = vmax.f32 %v3627, %v3663
      %v3700 = vmax.f32 %v3628, %v3664
      %v3701 = vmax.f32 %v3629, %v3665
      %v3702 = vmax.f32 %v3630, %v3666
      %v3703 = vmax.f32 %v3631, %v3667
      %v3704 = vmax.f32 %v3632, %v3668
      %v3705 = vmax.f32 %v3633, %v3669
      %v3706 = vmax.f32 %v3634, %v3670
      %v3707 = vmax.f32 %v3635, %v3671
      %v3708 = vmax.f32 %v3636, %v3672
      %v3709 = vmax.f32 %v3637, %v3673
      %v3710 = vmax.f32 %v3638, %v3674
      %v3711 = vmax.f32 %v3639, %v3675
      %v3712 = vmax.f32 %v3640, %v3676
      %v3713 = vmax.f32 %v3641, %v3677
      %v3714 = vmax.f32 %v3642, %v3678
      %v3715 = vmax.f32 %v3643, %v3679
      %v3716 = vmax.f32 %v3644, %v3680
      %v3717 = vmax.f32 %v3645, %v3681
      %v3718 = vmax.f32 %v3646, %v3682
      %v3719 = vmax.f32 %v3647, %v3683
      %v3720 = vmax.f32 %v3648, %v3684
      %v3721 = vmax.f32 %v3649, %v3685
      %v3722 = vmax.f32 %v3650, %v3686
      %v3723 = vmax.f32 %v3651, %v3687
      %v3724 = vmax.f32 %v3652, %v3688
      %v3725 = vmax.f32 %v3653, %v3689
      %v3726 = vmax.f32 %v3654, %v3690
      %v3727 = vmax.f32 %v3655, %v3691
      %v3728 = vmax.f32 %v3656, %v3692
      %v3729 = vmax.f32 %v3657, %v3693
      %v3730 = vmax.f32 %v3658, %v3694
      %v3731 = vmax.f32 %v3659, %v3695
      %v3732 = vmax.f32 %v3660, %v3696
      %v3733 = vmax.f32 %v3661, %v3697
      %v3734 = vmax.f32 %v3662, %v3698
      %3735 = vst.msk [vmem:[%s170] sm:$0xff] %vm454, %v3699
      %3736 = vst.msk [vmem:[%s170 + $0x8] sm:$0xff] %vm454, %v3700
      %3737 = vst.msk [vmem:[%s170 + $0x10] sm:$0xff] %vm454, %v3701
      %3738 = vst.msk [vmem:[%s170 + $0x18] sm:$0xff] %vm454, %v3702
      %3739 = vst.msk [vmem:[%s170 + $0x20] sm:$0xff] %vm454, %v3703
      %3740 = vst.msk [vmem:[%s170 + $0x28] sm:$0xff] %vm454, %v3704
      %3741 = vst.msk [vmem:[%s170 + $0x30] sm:$0xff] %vm454, %v3705
      %3742 = vst.msk [vmem:[%s170 + $0x38] sm:$0xff] %vm454, %v3706
      %3743 = vst.msk [vmem:[%s170 + $0x40] sm:$0xff] %vm454, %v3707
      %3744 = vst.msk [vmem:[%s170 + $0x48] sm:$0xff] %vm454, %v3708
      %3745 = vst.msk [vmem:[%s170 + $0x50] sm:$0xff] %vm454, %v3709
      %3746 = vst.msk [vmem:[%s170 + $0x58] sm:$0xff] %vm454, %v3710
      %3747 = vst.msk [vmem:[%s170 + $0x60] sm:$0xff] %vm454, %v3711
      %3748 = vst.msk [vmem:[%s170 + $0x68] sm:$0xff] %vm454, %v3712
      %3749 = vst.msk [vmem:[%s170 + $0x70] sm:$0xff] %vm454, %v3713
      %3750 = vst.msk [vmem:[%s170 + $0x78] sm:$0xff] %vm454, %v3714
      %3751 = vst.msk [vmem:[%s170 + $0x80] sm:$0xff] %vm454, %v3715
      %3752 = vst.msk [vmem:[%s170 + $0x88] sm:$0xff] %vm454, %v3716
      %3753 = vst.msk [vmem:[%s170 + $0x90] sm:$0xff] %vm454, %v3717
      %3754 = vst.msk [vmem:[%s170 + $0x98] sm:$0xff] %vm454, %v3718
      %3755 = vst.msk [vmem:[%s170 + $0xa0] sm:$0xff] %vm454, %v3719
      %3756 = vst.msk [vmem:[%s170 + $0xa8] sm:$0xff] %vm454, %v3720
      %3757 = vst.msk [vmem:[%s170 + $0xb0] sm:$0xff] %vm454, %v3721
      %3758 = vst.msk [vmem:[%s170 + $0xb8] sm:$0xff] %vm454, %v3722
      %3759 = vst.msk [vmem:[%s170 + $0xc0] sm:$0xff] %vm454, %v3723
      %3760 = vst.msk [vmem:[%s170 + $0xc8] sm:$0xff] %vm454, %v3724
      %3761 = vst.msk [vmem:[%s170 + $0xd0] sm:$0xff] %vm454, %v3725
      %3762 = vst.msk [vmem:[%s170 + $0xd8] sm:$0xff] %vm454, %v3726
      %3763 = vst.msk [vmem:[%s170 + $0xe0] sm:$0xff] %vm454, %v3727
      %3764 = vst.msk [vmem:[%s170 + $0xe8] sm:$0xff] %vm454, %v3728
      %3765 = vst.msk [vmem:[%s170 + $0xf0] sm:$0xff] %vm454, %v3729
      %3766 = vst.msk [vmem:[%s170 + $0xf8] sm:$0xff] %vm454, %v3730
      %3767 = vst.msk [vmem:[%s170 + $0x100] sm:$0xff] %vm454, %v3731
      %3768 = vst.msk [vmem:[%s170 + $0x108] sm:$0xff] %vm454, %v3732
      %3769 = vst.msk [vmem:[%s170 + $0x110] sm:$0xff] %vm454, %v3733
      %3770 = vst.msk [vmem:[%s170 + $0x118] sm:$0xff] %vm454, %v3734
      %p3771 = scmp.lt.s32.totalorder %s14, 1
      %s3772 = scalar_select %p3771, %s14, 1
      %s3773 = smul.addr %s3772, 36
      %s3774 = smul.addr %s3773, 8
      %s3775 = scalar_lea.vmem %s3, %s3774
      // Predicated region
      $region33: #{double_conv_forward.3} parent=31 // pred_check
        %p3776 = pneg %p100
      $region34: #{double_conv_forward.3} parent=31 // pred_check_branch
        %3778 = sbr.rel (%p3776) target = $region36
      $region35: #{double_conv_forward.3} parent=31 // pred_region
        _
      $region36: #{double_conv_forward.3} parent=31 // pred_fallthru
        _
    $region32: #{double_conv_forward.3} parent=5 // pred_fallthru
      _
    %p3779 = scmp.le.s32.totalorder 2, %s9
    // Predicated region
    $region37: #{double_conv_forward.3} parent=5 // pred_check
      %p3780 = pneg %p3779
    $region38: #{double_conv_forward.3} parent=5 // pred_check_branch
      %3782 = sbr.rel (%p3780) target = $region40
    $region39: #{double_conv_forward.3} parent=5 // pred_region
      %s3783 = ssub.s32 %s9, 2
      // Predicated region
      $region41: #{double_conv_forward.3} parent=39 // pred_check
        %p3784 = pneg %p106
      $region42: #{double_conv_forward.3} parent=39 // pred_check_branch
        %3786 = sbr.rel (%p3784) target = $region44
      $region43: #{double_conv_forward.3} parent=39 // pred_region
        %p3787 = scmp.lt.s32.totalorder %s15, 1
        %s3788 = scalar_select %p3787, %s15, 1
        %s3789 = smul.addr %s3788, 36
        %s3790 = smul.addr %s3789, 8
        %s3791 = scalar_lea.vmem %s3, %s3790
      $region44: #{double_conv_forward.3} parent=39 // pred_fallthru
        _
    $region40: #{double_conv_forward.3} parent=5 // pred_fallthru
      _
  $region6: #{double_conv_forward.3} parent=0 // loop_footer
    %s13 = sadd.s32 1, %s9
  $region7: #{double_conv_forward.3} parent=0 // loop_footer_branch
    %8 = sbr.rel target = $region3
  $region8: #{double_conv_forward.3} parent=0 // loop_exit
    _

// kernel: double_conv_forward.5
$region0: #{double_conv_forward.5}
  #allocation0 [shape = 'u32[]', space=smem, size = 0x4, offset = 0x4, fixed_abs, tag = 'smem constant byte address 0x4 - core index']
  #allocation1 [shape = 'u32[144,128]{1,0:T(1,128)}', space=vmem, size = 0x12000, scoped, tag = 'internal scratch']
  %s0 = inlined_call_operand.vmem [shape: bf16[2,342,4], index: 0, kind: input, shape index: {}]
  %s1 = inlined_call_operand.vmem [shape: bf16[9,4,4], index: 1, kind: input, shape index: {}]
  %s2 = inlined_call_operand.vmem [shape: f32[1,4], index: 2, kind: input, shape index: {}]
  %s3 = inlined_call_operand.vmem [shape: f32[2,288,4], index: 3, kind: input, shape index: {}, may-alias: {3,4}]
  %s4 = inlined_call_operand.vmem [shape: f32[2,288,4], index: 4, kind: output, shape index: {}, may-alias: {3,4}]
  %s5 = sld [smem:[#allocation0]]
  $region49: #{double_conv_forward.5} parent=0
    _
  %s7 = ssub.s32 1, %s5
  %s8 = scalar_select 0, %s7, %s5
  loop: start=0, step=1, limit=4
  $region2: #{double_conv_forward.5} parent=0 // loop_pre_header
    _
  $region3: #{double_conv_forward.5} parent=0 // loop_header
    %s10 = sphi 0, %s14
    %p11 = scmp.ge.s32.totalorder %s10, 4
    %s20 = sphi 0, %s22
    %s23 = sphi 0, %s20
    %s24 = sphi 0, %s23
    %s40 = sphi 0, %s24
    %s44 = sphi 0, %s44
    %s46 = sphi 0, %s44
    %s47 = sphi 0, %s46
    %s61 = sphi 0, %s47
    %s65 = sphi 0, %s65
    %s67 = sphi 0, %s65
    %s68 = sphi 0, %s67
    %s82 = sphi 0, %s68
    %s88 = sphi 0, %s90
    %s91 = sphi 0, %s88
    %s92 = sphi 0, %s91
    %s108 = sphi 0, %s92
    %s114 = sphi 0, %s116
    %s117 = sphi 0, %s114
    %s118 = sphi 0, %s117
    %s134 = sphi 0, %s118
  $region4: #{double_conv_forward.5} parent=0 // loop_header_branch
    %13 = sbr.rel (%p11) target = $region8
  $region5: #{double_conv_forward.5} parent=0 // loop_body
    %s15 = ssub.s32 %s10, 1
    %s16 = ssub.s32 %s10, 2
    %s17 = sadd.s32 %s10, 1
    %s18 = ssub.s32 %s10, %s17
    %p19 = scmp.eq.s32.totalorder %s18, 0
    %s21 = sadd.s32 %s20, 1
    %s22 = scalar_select %p19, %s20, %s21
    %p25 = pneg %p19
    %p26 = scmp.eq.s32.totalorder %s10, 1
    %p27 = por %p25, %p26
    %p28 = scmp.ne.s32.totalorder %s20, %s23
    %p29 = scmp.eq.s32.totalorder %s10, 0
    %p30 = por %p28, %p29
    %p31 = scmp.ne.s32.totalorder %s20, %s23
    %p32 = scmp.eq.s32.totalorder %s15, 1
    %p33 = por %p31, %p32
    %p34 = scmp.ne.s32.totalorder %s23, %s24
    %p35 = scmp.eq.s32.totalorder %s15, 0
    %p36 = por %p34, %p35
    %p37 = scmp.ne.s32.totalorder %s23, %s24
    %p38 = scmp.eq.s32.totalorder %s16, 1
    %p39 = por %p37, %p38
    %p41 = scmp.ne.s32.totalorder %s24, %s40
    %p42 = scmp.eq.s32.totalorder %s16, 0
    %p43 = por %p41, %p42
    %s45 = sadd.s32 %s44, 1
    %p48 = scmp.eq.s32.totalorder %s10, 1
    %p49 = scmp.ne.s32.totalorder %s44, %s46
    %p50 = scmp.eq.s32.totalorder %s10, 0
    %p51 = por %p49, %p50
    %p52 = scmp.ne.s32.totalorder %s44, %s46
    %p53 = scmp.eq.s32.totalorder %s15, 1
    %p54 = por %p52, %p53
    %p55 = scmp.ne.s32.totalorder %s46, %s47
    %p56 = scmp.eq.s32.totalorder %s15, 0
    %p57 = por %p55, %p56
    %p58 = scmp.ne.s32.totalorder %s46, %s47
    %p59 = scmp.eq.s32.totalorder %s16, 1
    %p60 = por %p58, %p59
    %p62 = scmp.ne.s32.totalorder %s47, %s61
    %p63 = scmp.eq.s32.totalorder %s16, 0
    %p64 = por %p62, %p63
    %s66 = sadd.s32 %s65, 1
    %p69 = scmp.eq.s32.totalorder %s10, 1
    %p70 = scmp.ne.s32.totalorder %s65, %s67
    %p71 = scmp.eq.s32.totalorder %s10, 0
    %p72 = por %p70, %p71
    %p73 = scmp.ne.s32.totalorder %s65, %s67
    %p74 = scmp.eq.s32.totalorder %s15, 1
    %p75 = por %p73, %p74
    %p76 = scmp.ne.s32.totalorder %s67, %s68
    %p77 = scmp.eq.s32.totalorder %s15, 0
    %p78 = por %p76, %p77
    %p79 = scmp.ne.s32.totalorder %s67, %s68
    %p80 = scmp.eq.s32.totalorder %s16, 1
    %p81 = por %p79, %p80
    %p83 = scmp.ne.s32.totalorder %s68, %s82
    %p84 = scmp.eq.s32.totalorder %s16, 0
    %p85 = por %p83, %p84
    %s86 = ssub.s32 %s10, %s17
    %p87 = scmp.eq.s32.totalorder %s86, 0
    %s89 = sadd.s32 %s88, 1
    %s90 = scalar_select %p87, %s88, %s89
    %p93 = pneg %p87
    %p94 = scmp.eq.s32.totalorder %s10, 1
    %p95 = por %p93, %p94
    %p96 = scmp.ne.s32.totalorder %s88, %s91
    %p97 = scmp.eq.s32.totalorder %s10, 0
    %p98 = por %p96, %p97
    %p99 = scmp.ne.s32.totalorder %s88, %s91
    %p100 = scmp.eq.s32.totalorder %s15, 1
    %p101 = por %p99, %p100
    %p102 = scmp.ne.s32.totalorder %s91, %s92
    %p103 = scmp.eq.s32.totalorder %s15, 0
    %p104 = por %p102, %p103
    %p105 = scmp.ne.s32.totalorder %s91, %s92
    %p106 = scmp.eq.s32.totalorder %s16, 1
    %p107 = por %p105, %p106
    %p109 = scmp.ne.s32.totalorder %s92, %s108
    %p110 = scmp.eq.s32.totalorder %s16, 0
    %p111 = por %p109, %p110
    %s112 = ssub.s32 %s10, %s17
    %p113 = scmp.eq.s32.totalorder %s112, 0
    %s115 = sadd.s32 %s114, 1
    %s116 = scalar_select %p113, %s114, %s115
    %p119 = pneg %p113
    %p120 = scmp.eq.s32.totalorder %s10, 1
    %p121 = por %p119, %p120
    %p122 = scmp.ne.s32.totalorder %s114, %s117
    %p123 = scmp.eq.s32.totalorder %s10, 0
    %p124 = por %p122, %p123
    %p125 = scmp.ne.s32.totalorder %s114, %s117
    %p126 = scmp.eq.s32.totalorder %s15, 1
    %p127 = por %p125, %p126
    %p128 = scmp.ne.s32.totalorder %s117, %s118
    %p129 = scmp.eq.s32.totalorder %s15, 0
    %p130 = por %p128, %p129
    %p131 = scmp.ne.s32.totalorder %s117, %s118
    %p132 = scmp.eq.s32.totalorder %s16, 1
    %p133 = por %p131, %p132
    %p135 = scmp.ne.s32.totalorder %s118, %s134
    %p136 = scmp.eq.s32.totalorder %s16, 0
    %p137 = por %p135, %p136
    %p138 = scmp.le.s32.totalorder 1, %s10
    %p139 = scmp.lt.s32.totalorder %s10, 3
    %p140 = pnand %p138, %p139
    %p141 = pneg %p140
    // Predicated region
    $region9: #{double_conv_forward.5} parent=5 // pred_check
      _
    $region10: #{double_conv_forward.5} parent=5 // pred_check_branch
      %143 = sbr.rel (%p140) target = $region12
    $region11: #{double_conv_forward.5} parent=5 // pred_region
      %s144 = ssub.s32 %s10, 1
      // Predicated region
      $region13: #{double_conv_forward.5} parent=11 // pred_check
        %p145 = pneg %p57
      $region14: #{double_conv_forward.5} parent=11 // pred_check_branch
        %147 = sbr.rel (%p145) target = $region16
      $region15: #{double_conv_forward.5} parent=11 // pred_region
        _
      $region16: #{double_conv_forward.5} parent=11 // pred_fallthru
        _
      // Predicated region
      $region17: #{double_conv_forward.5} parent=11 // pred_check
        %p148 = pneg %p78
      $region18: #{double_conv_forward.5} parent=11 // pred_check_branch
        %150 = sbr.rel (%p148) target = $region20
      $region19: #{double_conv_forward.5} parent=11 // pred_region
        _
      $region20: #{double_conv_forward.5} parent=11 // pred_fallthru
        _
    $region12: #{double_conv_forward.5} parent=5 // pred_fallthru
      _
    %p151 = scmp.lt.s32.totalorder %s10, 2
    // Predicated region
    $region21: #{double_conv_forward.5} parent=5 // pred_check
      %p152 = pneg %p151
    $region22: #{double_conv_forward.5} parent=5 // pred_check_branch
      %154 = sbr.rel (%p152) target = $region24
    $region23: #{double_conv_forward.5} parent=5 // pred_region
      // Predicated region
      $region25: #{double_conv_forward.5} parent=23 // pred_check
        %p155 = pneg %p30
      $region26: #{double_conv_forward.5} parent=23 // pred_check_branch
        %157 = sbr.rel (%p155) target = $region28
      $region27: #{double_conv_forward.5} parent=23 // pred_region
        %p158 = scmp.lt.s32.totalorder %s10, 1
        %s159 = scalar_select %p158, %s10, 1
        %s160 = smul.addr %s159, 43
        %s161 = smul.addr %s160, 4
        %s162 = scalar_lea.vmem %s0, %s161
      $region28: #{double_conv_forward.5} parent=23 // pred_fallthru
        _
      // Predicated region
      $region29: #{double_conv_forward.5} parent=23 // pred_check
        %p163 = pneg %p98
      $region30: #{double_conv_forward.5} parent=23 // pred_check_branch
        %165 = sbr.rel (%p163) target = $region32
      $region31: #{double_conv_forward.5} parent=23 // pred_region
        %p166 = scmp.lt.s32.totalorder %s10, 1
        %s167 = scalar_select %p166, %s10, 1
        %s168 = smul.addr %s167, 36
        %s169 = smul.addr %s168, 8
        %s170 = scalar_lea.vmem %s3, %s169
      $region32: #{double_conv_forward.5} parent=23 // pred_fallthru
        _
    $region24: #{double_conv_forward.5} parent=5 // pred_fallthru
      _
    %p171 = scmp.le.s32.totalorder 1, %s10
    %p172 = scmp.lt.s32.totalorder %s10, 3
    %p173 = pnand %p171, %p172
    %p174 = pneg %p173
    // Predicated region
    $region33: #{double_conv_forward.5} parent=5 // pred_check
      _
    $region34: #{double_conv_forward.5} parent=5 // pred_check_branch
      %176 = sbr.rel (%p173) target = $region36
    $region35: #{double_conv_forward.5} parent=5 // pred_region
      %s177 = ssub.s32 %s10, 1
      %p178 = scmp.lt.s32.totalorder %s15, 1
      %s179 = scalar_select %p178, %s15, 1
      %s180 = smul.addr %s179, 43
      %s181 = smul.addr %s180, 4
      %s182 = scalar_lea.vmem %s0, %s181
      %p183 = pneg %p36
      %p184 = pneg %p33
      %p185 = pneg %p57
      %p186 = pneg %p54
      %p187 = pneg %p78
      %p188 = pneg %p75
      %p189 = scmp.lt.s32.totalorder %s15, 1
      %s190 = scalar_select %p189, %s15, 1
      %s191 = smul.addr %s190, 36
      %s192 = smul.addr %s191, 8
      %s193 = scalar_lea.vmem %s3, %s192
      %p194 = pneg %p104
      %p195 = pneg %p101
      %p196 = pneg %p130
      %p197 = pneg %p127
      %p198 = scmp.lt.s32.totalorder %s15, 1
      %s199 = scalar_select %p198, %s15, 1
      %s200 = smul.addr %s199, 36
      %s201 = smul.addr %s200, 8
      %s202 = scalar_lea.vmem %s4, %s201
      %p203 = scmp.lt.s32.totalorder %s15, 1
      %s204 = scalar_select %p203, %s15, 1
      %s205 = smul.addr %s204, 43
      %s206 = smul.addr %s205, 4
      %s207 = scalar_lea.vmem %s0, %s206
      %p208 = scmp.lt.s32.totalorder %s15, 1
      %s209 = scalar_select %p208, %s15, 1
      %s210 = smul.addr %s209, 36
      %s211 = smul.addr %s210, 8
      %s212 = scalar_lea.vmem %s3, %s211
      %p213 = scmp.lt.s32.totalorder %s15, 1
      %s214 = scalar_select %p213, %s15, 1
      %s215 = smul.addr %s214, 36
      %s216 = smul.addr %s215, 8
      %s217 = scalar_lea.vmem %s4, %s216
      %v219 = vld [vmem:[%s207] sm:$0xf]
      %v220 = vld [vmem:[%s207 + $0x4] sm:$0xf]
      %v221 = vld [vmem:[%s207 + $0x8] sm:$0xf]
      %v222 = vld [vmem:[%s207 + $0xc] sm:$0xf]
      %v223 = vld [vmem:[%s207 + $0x10] sm:$0xf]
      %v224 = vld [vmem:[%s207 + $0x14] sm:$0xf]
      %v225 = vld [vmem:[%s207 + $0x18] sm:$0xf]
      %v226 = vld [vmem:[%s207 + $0x1c] sm:$0xf]
      %v227 = vld [vmem:[%s207 + $0x20] sm:$0xf]
      %v228 = vld [vmem:[%s207 + $0x24] sm:$0xf]
      %v229 = vld [vmem:[%s207 + $0x28] sm:$0xf]
      %v230 = vld [vmem:[%s207 + $0x2c] sm:$0xf]
      %v231 = vld [vmem:[%s207 + $0x30] sm:$0xf]
      %v232 = vld [vmem:[%s207 + $0x34] sm:$0xf]
      %v233 = vld [vmem:[%s207 + $0x38] sm:$0xf]
      %v234 = vld [vmem:[%s207 + $0x3c] sm:$0xf]
      %v235 = vld [vmem:[%s207 + $0x40] sm:$0xf]
      %v236 = vld [vmem:[%s207 + $0x44] sm:$0xf]
      %v237 = vld [vmem:[%s207 + $0x48] sm:$0xf]
      %v238 = vld [vmem:[%s207 + $0x4c] sm:$0xf]
      %v239 = vld [vmem:[%s207 + $0x50] sm:$0xf]
      %v240 = vld [vmem:[%s207 + $0x54] sm:$0xf]
      %v241 = vld [vmem:[%s207 + $0x58] sm:$0xf]
      %v242 = vld [vmem:[%s207 + $0x5c] sm:$0xf]
      %v243 = vld [vmem:[%s207 + $0x60] sm:$0xf]
      %v244 = vld [vmem:[%s207 + $0x64] sm:$0xf]
      %v245 = vld [vmem:[%s207 + $0x68] sm:$0xf]
      %v246 = vld [vmem:[%s207 + $0x6c] sm:$0xf]
      %v247 = vld [vmem:[%s207 + $0x70] sm:$0xf]
      %v248 = vld [vmem:[%s207 + $0x74] sm:$0xf]
      %v249 = vld [vmem:[%s207 + $0x78] sm:$0xf]
      %v250 = vld [vmem:[%s207 + $0x7c] sm:$0xf]
      %v251 = vld [vmem:[%s207 + $0x80] sm:$0xf]
      %v252 = vld [vmem:[%s207 + $0x84] sm:$0xf]
      %v253 = vld [vmem:[%s207 + $0x88] sm:$0xf]
      %v254 = vld [vmem:[%s207 + $0x8c] sm:$0xf]
      %v255 = vld [vmem:[%s1] sm:$0x3]
      %v256 = vld [vmem:[%s207 + $0x90] sm:$0x1]
      %s257 = scalar_lea.vmem %s1, 2
      %v258 = vld [vmem:[%s257] sm:$0x3]
      %v296 = vunpack.c.l.b16 %v219
      %v297 = vunpack.c.l.b16 %v220
      %v298 = vunpack.c.l.b16 %v221
      %v299 = vunpack.c.l.b16 %v222
      %v300 = vunpack.c.l.b16 %v223
      %v301 = vunpack.c.l.b16 %v224
      %v302 = vunpack.c.l.b16 %v225
      %v303 = vunpack.c.l.b16 %v226
      %v304 = vunpack.c.l.b16 %v227
      %v305 = vunpack.c.l.b16 %v228
      %v306 = vunpack.c.l.b16 %v229
      %v307 = vunpack.c.l.b16 %v230
      %v308 = vunpack.c.l.b16 %v231
      %v309 = vunpack.c.l.b16 %v232
      %v310 = vunpack.c.l.b16 %v233
      %v311 = vunpack.c.l.b16 %v234
      %v312 = vunpack.c.l.b16 %v235
      %v313 = vunpack.c.l.b16 %v236
      %v314 = vunpack.c.l.b16 %v237
      %v315 = vunpack.c.l.b16 %v238
      %v316 = vunpack.c.l.b16 %v239
      %v317 = vunpack.c.l.b16 %v240
      %v318 = vunpack.c.l.b16 %v241
      %v319 = vunpack.c.l.b16 %v242
      %v320 = vunpack.c.l.b16 %v243
      %v321 = vunpack.c.l.b16 %v244
      %v322 = vunpack.c.l.b16 %v245
      %v323 = vunpack.c.l.b16 %v246
      %v324 = vunpack.c.l.b16 %v247
      %v325 = vunpack.c.l.b16 %v248
      %v326 = vunpack.c.l.b16 %v249
      %v327 = vunpack.c.l.b16 %v250
      %v328 = vunpack.c.l.b16 %v251
      %v329 = vunpack.c.l.b16 %v252
      %v330 = vunpack.c.l.b16 %v253
      %v331 = vunpack.c.l.b16 %v254
      %v332 = vunpack.c.l.b16 %v256
      %v333 = vpack.c.b16 %v297, %v296
      %v334 = vpack.c.b16 %v299, %v298
      %v335 = vpack.c.b16 %v301, %v300
      %v336 = vpack.c.b16 %v303, %v302
      %v337 = vpack.c.b16 %v305, %v304
      %v338 = vpack.c.b16 %v307, %v306
      %v339 = vpack.c.b16 %v309, %v308
      %v340 = vpack.c.b16 %v311, %v310
      %v341 = vpack.c.b16 %v313, %v312
      %v342 = vpack.c.b16 %v315, %v314
      %v343 = vpack.c.b16 %v317, %v316
      %v344 = vpack.c.b16 %v319, %v318
      %v345 = vpack.c.b16 %v321, %v320
      %v346 = vpack.c.b16 %v323, %v322
      %v347 = vpack.c.b16 %v325, %v324
      %v348 = vpack.c.b16 %v327, %v326
      %v349 = vpack.c.b16 %v329, %v328
      %v350 = vpack.c.b16 %v331, %v330
      %v351 = vpack.c.b16 %v332, %v332
      %vm352 = vsmask.f32 7424
      %v354 = vshrl.u32 %v333, 16
      %v356 = vshll.u32 %v333, 16
      %v358 = vrot.slane %v356, 1
      %v359 = vor.u32 %v354, %v358
      %v361 = vshll.u32 %v334, 16
      %v363 = vrot.slane %v361, 1
      %v364 = vsel %vm352, %v359, %v363
      %v365 = vshrl.u32 %v334, 16
      %v367 = vor.u32 %v365, %v363
      %v369 = vshll.u32 %v335, 16
      %v371 = vrot.slane %v369, 1
      %v372 = vsel %vm352, %v367, %v371
      %v373 = vshrl.u32 %v335, 16
      %v375 = vor.u32 %v373, %v371
      %v377 = vshll.u32 %v336, 16
      %v379 = vrot.slane %v377, 1
      %v380 = vsel %vm352, %v375, %v379
      %v381 = vshrl.u32 %v336, 16
      %v383 = vor.u32 %v381, %v379
      %v385 = vshll.u32 %v337, 16
      %v387 = vrot.slane %v385, 1
      %v388 = vsel %vm352, %v383, %v387
      %v389 = vshrl.u32 %v337, 16
      %v391 = vor.u32 %v389, %v387
      %v393 = vshll.u32 %v338, 16
      %v395 = vrot.slane %v393, 1
      %v396 = vsel %vm352, %v391, %v395
      %v397 = vshrl.u32 %v338, 16
      %v399 = vor.u32 %v397, %v395
      %v401 = vshll.u32 %v339, 16
      %v403 = vrot.slane %v401, 1
      %v404 = vsel %vm352, %v399, %v403
      %v405 = vshrl.u32 %v339, 16
      %v407 = vor.u32 %v405, %v403
      %v409 = vshll.u32 %v340, 16
      %v411 = vrot.slane %v409, 1
      %v412 = vsel %vm352, %v407, %v411
      %v413 = vshrl.u32 %v340, 16
      %v415 = vor.u32 %v413, %v411
      %v417 = vshll.u32 %v341, 16
      %v419 = vrot.slane %v417, 1
      %v420 = vsel %vm352, %v415, %v419
      %v421 = vshrl.u32 %v341, 16
      %v423 = vor.u32 %v421, %v419
      %v425 = vshll.u32 %v342, 16
      %v427 = vrot.slane %v425, 1
      %v428 = vsel %vm352, %v423, %v427
      %v429 = vshrl.u32 %v342, 16
      %v431 = vor.u32 %v429, %v427
      %v433 = vshll.u32 %v343, 16
      %v435 = vrot.slane %v433, 1
      %v436 = vsel %vm352, %v431, %v435
      %v437 = vshrl.u32 %v343, 16
      %v439 = vor.u32 %v437, %v435
      %v441 = vshll.u32 %v344, 16
      %v443 = vrot.slane %v441, 1
      %v444 = vsel %vm352, %v439, %v443
      %v445 = vshrl.u32 %v344, 16
      %v447 = vor.u32 %v445, %v443
      %v449 = vshll.u32 %v345, 16
      %v451 = vrot.slane %v449, 1
      %v452 = vsel %vm352, %v447, %v451
      %v453 = vshrl.u32 %v345, 16
      %v455 = vor.u32 %v453, %v451
      %v457 = vshll.u32 %v346, 16
      %v459 = vrot.slane %v457, 1
      %v460 = vsel %vm352, %v455, %v459
      %v461 = vshrl.u32 %v346, 16
      %v463 = vor.u32 %v461, %v459
      %v465 = vshll.u32 %v347, 16
      %v467 = vrot.slane %v465, 1
      %v468 = vsel %vm352, %v463, %v467
      %v469 = vshrl.u32 %v347, 16
      %v471 = vor.u32 %v469, %v467
      %v473 = vshll.u32 %v348, 16
      %v475 = vrot.slane %v473, 1
      %v476 = vsel %vm352, %v471, %v475
      %v477 = vshrl.u32 %v348, 16
      %v479 = vor.u32 %v477, %v475
      %v481 = vshll.u32 %v349, 16
      %v483 = vrot.slane %v481, 1
      %v484 = vsel %vm352, %v479, %v483
      %v485 = vshrl.u32 %v349, 16
      %v487 = vor.u32 %v485, %v483
      %v489 = vshll.u32 %v350, 16
      %v491 = vrot.slane %v489, 1
      %v492 = vsel %vm352, %v487, %v491
      %v493 = vshrl.u32 %v350, 16
      %v495 = vor.u32 %v493, %v491
      %v497 = vshll.u32 %v351, 16
      %v499 = vrot.slane %v497, 1
      %v500 = vsel %vm352, %v495, %v499
      %vm501 = vcmask 31744
      %v503 = vsel %vm501, %v364, 0
      %v506 = vsel %vm501, %v372, 0
      %v509 = vsel %vm501, %v380, 0
      %v512 = vsel %vm501, %v388, 0
      %v515 = vsel %vm501, %v396, 0
      %v518 = vsel %vm501, %v404, 0
      %v521 = vsel %vm501, %v412, 0
      %v524 = vsel %vm501, %v420, 0
      %v527 = vsel %vm501, %v428, 0
      %v530 = vsel %vm501, %v436, 0
      %v533 = vsel %vm501, %v444, 0
      %v536 = vsel %vm501, %v452, 0
      %v539 = vsel %vm501, %v460, 0
      %v542 = vsel %vm501, %v468, 0
      %v545 = vsel %vm501, %v476, 0
      %v548 = vsel %vm501, %v484, 0
      %v551 = vsel %vm501, %v492, 0
      %v554 = vsel %vm501, %v500, 0
      %vm556 = vcmask 1041408
      %v558 = vsel %vm556, %v258, 0
      %560 = vmatprep.subr.bf16.mxu0 0
      %561 = vmatpush1.bf16.msra.mxu0 0
      %562 = vmatprep.subr.bf16.mxu0 0
      %563 = vmatpush1.bf16.msra.mxu0 0
      %564 = vmatprep.subr.bf16.mxu0 0
      %565 = vmatpush1.bf16.msra.mxu0 0
      %566 = vmatprep.subr.bf16.mxu0 0
      %567 = vmatpush1.bf16.msra.mxu0 0
      %568 = vmatprep.subr.bf16.mxu0 0
      %569 = vmatpush1.bf16.msra.mxu0 0
      %570 = vmatprep.subr.bf16.mxu0 0
      %571 = vmatpush1.bf16.msra.mxu0 0
      %572 = vmatprep.subr.bf16.mxu0 0
      %573 = vmatpush1.bf16.msra.mxu0 0
      %574 = vmatprep.subr.bf16.mxu0 0
      %575 = vmatpush1.bf16.msra.mxu0 %v558
      %576 = vmatprep.subr.bf16.mxu0 0
      %577 = vmatpush2.bf16.msra.mxu0 0
      %578 = vmatprep.subr.bf16.mxu0 0
      %579 = vmatpush2.bf16.msra.mxu0 0
      %580 = vmatprep.subr.bf16.mxu0 0
      %581 = vmatpush2.bf16.msra.mxu0 0
      %582 = vmatprep.subr.bf16.mxu0 0
      %583 = vmatpush2.bf16.msra.mxu0 0
      %584 = vmatprep.subr.bf16.mxu0 0
      %585 = vmatpush2.bf16.msra.mxu0 0
      %586 = vmatprep.subr.bf16.mxu0 0
      %587 = vmatpush2.bf16.msra.mxu0 0
      %588 = vmatprep.subr.bf16.mxu0 0
      %589 = vmatpush2.bf16.msra.mxu0 0
      %590 = vmatprep.subr.bf16.mxu0 0
      %591 = vmatpush2.bf16.msra.mxu0 0
      %592 = vmatprep.mubr.bf16.mxu0 0
      %593 = vmatmul.mubr.bf16.gmra.mxu0 %v503
      %v594 = vpop.f32.mrf.mxu0
      %v595 = vadd.f32 0.0, %v594
      %v596 = vpop.f32.mrf.mxu0
      %v597 = vpop.f32.mrf.mxu0
      %v598 = vadd.f32 0.0, %v597
      %v599 = vpop.f32.mrf.mxu0
      %600 = vmatprep.mubr.bf16.mxu0 0
      %601 = vmatmul.mubr.bf16.gmra.mxu0 %v506
      %v602 = vpop.f32.mrf.mxu0
      %v603 = vadd.f32 0.0, %v602
      %v604 = vpop.f32.mrf.mxu0
      %v605 = vpop.f32.mrf.mxu0
      %v606 = vadd.f32 0.0, %v605
      %v607 = vpop.f32.mrf.mxu0
      %608 = vmatprep.mubr.bf16.mxu0 0
      %609 = vmatmul.mubr.bf16.gmra.mxu0 %v509
      %v610 = vpop.f32.mrf.mxu0
      %v611 = vadd.f32 0.0, %v610
      %v612 = vpop.f32.mrf.mxu0
      %v613 = vpop.f32.mrf.mxu0
      %v614 = vadd.f32 0.0, %v613
      %v615 = vpop.f32.mrf.mxu0
      %616 = vmatprep.mubr.bf16.mxu0 0
      %617 = vmatmul.mubr.bf16.gmra.mxu0 %v512
      %v618 = vpop.f32.mrf.mxu0
      %v619 = vadd.f32 0.0, %v618
      %v620 = vpop.f32.mrf.mxu0
      %v621 = vpop.f32.mrf.mxu0
      %v622 = vadd.f32 0.0, %v621
      %v623 = vpop.f32.mrf.mxu0
      %624 = vmatprep.mubr.bf16.mxu0 0
      %625 = vmatmul.mubr.bf16.gmra.mxu0 %v515
      %v626 = vpop.f32.mrf.mxu0
      %v627 = vadd.f32 0.0, %v626
      %v628 = vpop.f32.mrf.mxu0
      %v629 = vpop.f32.mrf.mxu0
      %v630 = vadd.f32 0.0, %v629
      %v631 = vpop.f32.mrf.mxu0
      %632 = vmatprep.mubr.bf16.mxu0 0
      %633 = vmatmul.mubr.bf16.gmra.mxu0 %v518
      %v634 = vpop.f32.mrf.mxu0
      %v635 = vadd.f32 0.0, %v634
      %v636 = vpop.f32.mrf.mxu0
      %v637 = vpop.f32.mrf.mxu0
      %v638 = vadd.f32 0.0, %v637
      %v639 = vpop.f32.mrf.mxu0
      %640 = vmatprep.mubr.bf16.mxu0 0
      %641 = vmatmul.mubr.bf16.gmra.mxu0 %v521
      %v642 = vpop.f32.mrf.mxu0
      %v643 = vadd.f32 0.0, %v642
      %v644 = vpop.f32.mrf.mxu0
      %v645 = vpop.f32.mrf.mxu0
      %v646 = vadd.f32 0.0, %v645
      %v647 = vpop.f32.mrf.mxu0
      %648 = vmatprep.mubr.bf16.mxu0 0
      %649 = vmatmul.mubr.bf16.gmra.mxu0 %v524
      %v650 = vpop.f32.mrf.mxu0
      %v651 = vadd.f32 0.0, %v650
      %v652 = vpop.f32.mrf.mxu0
      %v653 = vpop.f32.mrf.mxu0
      %v654 = vadd.f32 0.0, %v653
      %v655 = vpop.f32.mrf.mxu0
      %656 = vmatprep.mubr.bf16.mxu0 0
      %657 = vmatmul.mubr.bf16.gmra.mxu0 %v527
      %v658 = vpop.f32.mrf.mxu0
      %v659 = vadd.f32 0.0, %v658
      %v660 = vpop.f32.mrf.mxu0
      %v661 = vpop.f32.mrf.mxu0
      %v662 = vadd.f32 0.0, %v661
      %v663 = vpop.f32.mrf.mxu0
      %664 = vmatprep.mubr.bf16.mxu0 0
      %665 = vmatmul.mubr.bf16.gmra.mxu0 %v530
      %v666 = vpop.f32.mrf.mxu0
      %v667 = vadd.f32 0.0, %v666
      %v668 = vpop.f32.mrf.mxu0
      %v669 = vpop.f32.mrf.mxu0
      %v670 = vadd.f32 0.0, %v669
      %v671 = vpop.f32.mrf.mxu0
      %672 = vmatprep.mubr.bf16.mxu0 0
      %673 = vmatmul.mubr.bf16.gmra.mxu0 %v533
      %v674 = vpop.f32.mrf.mxu0
      %v675 = vadd.f32 0.0, %v674
      %v676 = vpop.f32.mrf.mxu0
      %v677 = vpop.f32.mrf.mxu0
      %v678 = vadd.f32 0.0, %v677
      %v679 = vpop.f32.mrf.mxu0
      %680 = vmatprep.mubr.bf16.mxu0 0
      %681 = vmatmul.mubr.bf16.gmra.mxu0 %v536
      %v682 = vpop.f32.mrf.mxu0
      %v683 = vadd.f32 0.0, %v682
      %v684 = vpop.f32.mrf.mxu0
      %v685 = vpop.f32.mrf.mxu0
      %v686 = vadd.f32 0.0, %v685
      %v687 = vpop.f32.mrf.mxu0
      %688 = vmatprep.mubr.bf16.mxu0 0
      %689 = vmatmul.mubr.bf16.gmra.mxu0 %v539
      %v690 = vpop.f32.mrf.mxu0
      %v691 = vadd.f32 0.0, %v690
      %v692 = vpop.f32.mrf.mxu0
      %v693 = vpop.f32.mrf.mxu0
      %v694 = vadd.f32 0.0, %v693
      %v695 = vpop.f32.mrf.mxu0
      %696 = vmatprep.mubr.bf16.mxu0 0
      %697 = vmatmul.mubr.bf16.gmra.mxu0 %v542
      %v698 = vpop.f32.mrf.mxu0
      %v699 = vadd.f32 0.0, %v698
      %v700 = vpop.f32.mrf.mxu0
      %v701 = vpop.f32.mrf.mxu0
      %v702 = vadd.f32 0.0, %v701
      %v703 = vpop.f32.mrf.mxu0
      %704 = vmatprep.mubr.bf16.mxu0 0
      %705 = vmatmul.mubr.bf16.gmra.mxu0 %v545
      %v706 = vpop.f32.mrf.mxu0
      %v707 = vadd.f32 0.0, %v706
      %v708 = vpop.f32.mrf.mxu0
      %v709 = vpop.f32.mrf.mxu0
      %v710 = vadd.f32 0.0, %v709
      %v711 = vpop.f32.mrf.mxu0
      %712 = vmatprep.mubr.bf16.mxu0 0
      %713 = vmatmul.mubr.bf16.gmra.mxu0 %v548
      %v714 = vpop.f32.mrf.mxu0
      %v715 = vadd.f32 0.0, %v714
      %v716 = vpop.f32.mrf.mxu0
      %v717 = vpop.f32.mrf.mxu0
      %v718 = vadd.f32 0.0, %v717
      %v719 = vpop.f32.mrf.mxu0
      %720 = vmatprep.mubr.bf16.mxu0 0
      %721 = vmatmul.mubr.bf16.gmra.mxu0 %v551
      %v722 = vpop.f32.mrf.mxu0
      %v723 = vadd.f32 0.0, %v722
      %v724 = vpop.f32.mrf.mxu0
      %v725 = vpop.f32.mrf.mxu0
      %v726 = vadd.f32 0.0, %v725
      %v727 = vpop.f32.mrf.mxu0
      %728 = vmatprep.mubr.bf16.mxu0 0
      %729 = vmatmul.mubr.bf16.gmra.mxu0 %v554
      %v730 = vpop.f32.mrf.mxu0
      %v731 = vadd.f32 0.0, %v730
      %v732 = vpop.f32.mrf.mxu0
      %v733 = vpop.f32.mrf.mxu0
      %v734 = vadd.f32 0.0, %v733
      %v735 = vpop.f32.mrf.mxu0
      %736 = vdwg.mxu0
      %v737 = vsel %vm501, %v333, 0
      %v739 = vsel %vm501, %v334, 0
      %v741 = vsel %vm501, %v335, 0
      %v743 = vsel %vm501, %v336, 0
      %v745 = vsel %vm501, %v337, 0
      %v747 = vsel %vm501, %v338, 0
      %v749 = vsel %vm501, %v339, 0
      %v751 = vsel %vm501, %v340, 0
      %v753 = vsel %vm501, %v341, 0
      %v755 = vsel %vm501, %v342, 0
      %v757 = vsel %vm501, %v343, 0
      %v759 = vsel %vm501, %v344, 0
      %v761 = vsel %vm501, %v345, 0
      %v763 = vsel %vm501, %v346, 0
      %v765 = vsel %vm501, %v347, 0
      %v767 = vsel %vm501, %v348, 0
      %v769 = vsel %vm501, %v349, 0
      %v771 = vsel %vm501, %v350, 0
      %v774 = vsel %vm556, %v255, 0
      %776 = vmatprep.subr.bf16.mxu0 0
      %777 = vmatpush1.bf16.msra.mxu0 0
      %778 = vmatprep.subr.bf16.mxu0 0
      %779 = vmatpush1.bf16.msra.mxu0 0
      %780 = vmatprep.subr.bf16.mxu0 0
      %781 = vmatpush1.bf16.msra.mxu0 0
      %782 = vmatprep.subr.bf16.mxu0 0
      %783 = vmatpush1.bf16.msra.mxu0 0
      %784 = vmatprep.subr.bf16.mxu0 0
      %785 = vmatpush1.bf16.msra.mxu0 0
      %786 = vmatprep.subr.bf16.mxu0 0
      %787 = vmatpush1.bf16.msra.mxu0 0
      %788 = vmatprep.subr.bf16.mxu0 0
      %789 = vmatpush1.bf16.msra.mxu0 0
      %790 = vmatprep.subr.bf16.mxu0 0
      %791 = vmatpush1.bf16.msra.mxu0 %v774
      %792 = vmatprep.subr.bf16.mxu0 0
      %793 = vmatpush2.bf16.msra.mxu0 0
      %794 = vmatprep.subr.bf16.mxu0 0
      %795 = vmatpush2.bf16.msra.mxu0 0
      %796 = vmatprep.subr.bf16.mxu0 0
      %797 = vmatpush2.bf16.msra.mxu0 0
      %798 = vmatprep.subr.bf16.mxu0 0
      %799 = vmatpush2.bf16.msra.mxu0 0
      %800 = vmatprep.subr.bf16.mxu0 0
      %801 = vmatpush2.bf16.msra.mxu0 0
      %802 = vmatprep.subr.bf16.mxu0 0
      %803 = vmatpush2.bf16.msra.mxu0 0
      %804 = vmatprep.subr.bf16.mxu0 0
      %805 = vmatpush2.bf16.msra.mxu0 0
      %806 = vmatprep.subr.bf16.mxu0 0
      %807 = vmatpush2.bf16.msra.mxu0 0
      %808 = vmatprep.mubr.bf16.mxu0 0
      %809 = vmatmul.mubr.bf16.gmra.mxu0 %v737
      %v810 = vpop.f32.mrf.mxu0
      %v811 = vadd.f32 %v595, %v810
      %v812 = vpop.f32.mrf.mxu0
      %v813 = vpop.f32.mrf.mxu0
      %v814 = vadd.f32 %v598, %v813
      %v815 = vpop.f32.mrf.mxu0
      %816 = vmatprep.mubr.bf16.mxu0 0
      %817 = vmatmul.mubr.bf16.gmra.mxu0 %v739
      %v818 = vpop.f32.mrf.mxu0
      %v819 = vadd.f32 %v603, %v818
      %v820 = vpop.f32.mrf.mxu0
      %v821 = vpop.f32.mrf.mxu0
      %v822 = vadd.f32 %v606, %v821
      %v823 = vpop.f32.mrf.mxu0
      %824 = vmatprep.mubr.bf16.mxu0 0
      %825 = vmatmul.mubr.bf16.gmra.mxu0 %v741
      %v826 = vpop.f32.mrf.mxu0
      %v827 = vadd.f32 %v611, %v826
      %v828 = vpop.f32.mrf.mxu0
      %v829 = vpop.f32.mrf.mxu0
      %v830 = vadd.f32 %v614, %v829
      %v831 = vpop.f32.mrf.mxu0
      %832 = vmatprep.mubr.bf16.mxu0 0
      %833 = vmatmul.mubr.bf16.gmra.mxu0 %v743
      %v834 = vpop.f32.mrf.mxu0
      %v835 = vadd.f32 %v619, %v834
      %v836 = vpop.f32.mrf.mxu0
      %v837 = vpop.f32.mrf.mxu0
      %v838 = vadd.f32 %v622, %v837
      %v839 = vpop.f32.mrf.mxu0
      %840 = vmatprep.mubr.bf16.mxu0 0
      %841 = vmatmul.mubr.bf16.gmra.mxu0 %v745
      %v842 = vpop.f32.mrf.mxu0
      %v843 = vadd.f32 %v627, %v842
      %v844 = vpop.f32.mrf.mxu0
      %v845 = vpop.f32.mrf.mxu0
      %v846 = vadd.f32 %v630, %v845
      %v847 = vpop.f32.mrf.mxu0
      %848 = vmatprep.mubr.bf16.mxu0 0
      %849 = vmatmul.mubr.bf16.gmra.mxu0 %v747
      %v850 = vpop.f32.mrf.mxu0
      %v851 = vadd.f32 %v635, %v850
      %v852 = vpop.f32.mrf.mxu0
      %v853 = vpop.f32.mrf.mxu0
      %v854 = vadd.f32 %v638, %v853
      %v855 = vpop.f32.mrf.mxu0
      %856 = vmatprep.mubr.bf16.mxu0 0
      %857 = vmatmul.mubr.bf16.gmra.mxu0 %v749
      %v858 = vpop.f32.mrf.mxu0
      %v859 = vadd.f32 %v643, %v858
      %v860 = vpop.f32.mrf.mxu0
      %v861 = vpop.f32.mrf.mxu0
      %v862 = vadd.f32 %v646, %v861
      %v863 = vpop.f32.mrf.mxu0
      %864 = vmatprep.mubr.bf16.mxu0 0
      %865 = vmatmul.mubr.bf16.gmra.mxu0 %v751
      %v866 = vpop.f32.mrf.mxu0
      %v867 = vadd.f32 %v651, %v866
      %v868 = vpop.f32.mrf.mxu0
      %v869 = vpop.f32.mrf.mxu0
      %v870 = vadd.f32 %v654, %v869
      %v871 = vpop.f32.mrf.mxu0
      %872 = vmatprep.mubr.bf16.mxu0 0
      %873 = vmatmul.mubr.bf16.gmra.mxu0 %v753
      %v874 = vpop.f32.mrf.mxu0
      %v875 = vadd.f32 %v659, %v874
      %v876 = vpop.f32.mrf.mxu0
      %v877 = vpop.f32.mrf.mxu0
      %v878 = vadd.f32 %v662, %v877
      %v879 = vpop.f32.mrf.mxu0
      %880 = vmatprep.mubr.bf16.mxu0 0
      %881 = vmatmul.mubr.bf16.gmra.mxu0 %v755
      %v882 = vpop.f32.mrf.mxu0
      %v883 = vadd.f32 %v667, %v882
      %v884 = vpop.f32.mrf.mxu0
      %v885 = vpop.f32.mrf.mxu0
      %v886 = vadd.f32 %v670, %v885
      %v887 = vpop.f32.mrf.mxu0
      %888 = vmatprep.mubr.bf16.mxu0 0
      %889 = vmatmul.mubr.bf16.gmra.mxu0 %v757
      %v890 = vpop.f32.mrf.mxu0
      %v891 = vadd.f32 %v675, %v890
      %v892 = vpop.f32.mrf.mxu0
      %v893 = vpop.f32.mrf.mxu0
      %v894 = vadd.f32 %v678, %v893
      %v895 = vpop.f32.mrf.mxu0
      %896 = vmatprep.mubr.bf16.mxu0 0
      %897 = vmatmul.mubr.bf16.gmra.mxu0 %v759
      %v898 = vpop.f32.mrf.mxu0
      %v899 = vadd.f32 %v683, %v898
      %v900 = vpop.f32.mrf.mxu0
      %v901 = vpop.f32.mrf.mxu0
      %v902 = vadd.f32 %v686, %v901
      %v903 = vpop.f32.mrf.mxu0
      %904 = vmatprep.mubr.bf16.mxu0 0
      %905 = vmatmul.mubr.bf16.gmra.mxu0 %v761
      %v906 = vpop.f32.mrf.mxu0
      %v907 = vadd.f32 %v691, %v906
      %v908 = vpop.f32.mrf.mxu0
      %v909 = vpop.f32.mrf.mxu0
      %v910 = vadd.f32 %v694, %v909
      %v911 = vpop.f32.mrf.mxu0
      %912 = vmatprep.mubr.bf16.mxu0 0
      %913 = vmatmul.mubr.bf16.gmra.mxu0 %v763
      %v914 = vpop.f32.mrf.mxu0
      %v915 = vadd.f32 %v699, %v914
      %v916 = vpop.f32.mrf.mxu0
      %v917 = vpop.f32.mrf.mxu0
      %v918 = vadd.f32 %v702, %v917
      %v919 = vpop.f32.mrf.mxu0
      %920 = vmatprep.mubr.bf16.mxu0 0
      %921 = vmatmul.mubr.bf16.gmra.mxu0 %v765
      %v922 = vpop.f32.mrf.mxu0
      %v923 = vadd.f32 %v707, %v922
      %v924 = vpop.f32.mrf.mxu0
      %v925 = vpop.f32.mrf.mxu0
      %v926 = vadd.f32 %v710, %v925
      %v927 = vpop.f32.mrf.mxu0
      %928 = vmatprep.mubr.bf16.mxu0 0
      %929 = vmatmul.mubr.bf16.gmra.mxu0 %v767
      %v930 = vpop.f32.mrf.mxu0
      %v931 = vadd.f32 %v715, %v930
      %v932 = vpop.f32.mrf.mxu0
      %v933 = vpop.f32.mrf.mxu0
      %v934 = vadd.f32 %v718, %v933
      %v935 = vpop.f32.mrf.mxu0
      %936 = vmatprep.mubr.bf16.mxu0 0
      %937 = vmatmul.mubr.bf16.gmra.mxu0 %v769
      %v938 = vpop.f32.mrf.mxu0
      %v939 = vadd.f32 %v723, %v938
      %v940 = vpop.f32.mrf.mxu0
      %v941 = vpop.f32.mrf.mxu0
      %v942 = vadd.f32 %v726, %v941
      %v943 = vpop.f32.mrf.mxu0
      %944 = vmatprep.mubr.bf16.mxu0 0
      %945 = vmatmul.mubr.bf16.gmra.mxu0 %v771
      %v946 = vpop.f32.mrf.mxu0
      %v947 = vadd.f32 %v731, %v946
      %v948 = vpop.f32.mrf.mxu0
      %v949 = vpop.f32.mrf.mxu0
      %v950 = vadd.f32 %v734, %v949
      %v951 = vpop.f32.mrf.mxu0
      %952 = vdwg.mxu0
      %v953 = vld [vmem:[%s207] sm:$0xe]
      %s954 = scalar_lea.vmem %s1, 4
      %v955 = vld [vmem:[%s954] sm:$0x3]
      %v957 = vunpack.c.l.b16 %v953
      %v958 = vpack.c.b16 %v297, %v957
      %vm959 = vcmask 1046528
      %v960 = vrot.slane %v958, 1
      %v961 = vrot.slane %v334, 1
      %v962 = vsel %vm959, %v960, %v961
      %v963 = vrot.slane %v335, 1
      %v964 = vsel %vm959, %v961, %v963
      %v965 = vrot.slane %v336, 1
      %v966 = vsel %vm959, %v963, %v965
      %v967 = vrot.slane %v337, 1
      %v968 = vsel %vm959, %v965, %v967
      %v969 = vrot.slane %v338, 1
      %v970 = vsel %vm959, %v967, %v969
      %v971 = vrot.slane %v339, 1
      %v972 = vsel %vm959, %v969, %v971
      %v973 = vrot.slane %v340, 1
      %v974 = vsel %vm959, %v971, %v973
      %v975 = vrot.slane %v341, 1
      %v976 = vsel %vm959, %v973, %v975
      %v977 = vrot.slane %v342, 1
      %v978 = vsel %vm959, %v975, %v977
      %v979 = vrot.slane %v343, 1
      %v980 = vsel %vm959, %v977, %v979
      %v981 = vrot.slane %v344, 1
      %v982 = vsel %vm959, %v979, %v981
      %v983 = vrot.slane %v345, 1
      %v984 = vsel %vm959, %v981, %v983
      %v985 = vrot.slane %v346, 1
      %v986 = vsel %vm959, %v983, %v985
      %v987 = vrot.slane %v347, 1
      %v988 = vsel %vm959, %v985, %v987
      %v989 = vrot.slane %v348, 1
      %v990 = vsel %vm959, %v987, %v989
      %v991 = vrot.slane %v349, 1
      %v992 = vsel %vm959, %v989, %v991
      %v993 = vrot.slane %v350, 1
      %v994 = vsel %vm959, %v991, %v993
      %v995 = vrot.slane %v351, 1
      %v996 = vsel %vm959, %v993, %v995
      %v998 = vsel %vm501, %v962, 0
      %v1001 = vsel %vm501, %v964, 0
      %v1004 = vsel %vm501, %v966, 0
      %v1007 = vsel %vm501, %v968, 0
      %v1010 = vsel %vm501, %v970, 0
      %v1013 = vsel %vm501, %v972, 0
      %v1016 = vsel %vm501, %v974, 0
      %v1019 = vsel %vm501, %v976, 0
      %v1022 = vsel %vm501, %v978, 0
      %v1025 = vsel %vm501, %v980, 0
      %v1028 = vsel %vm501, %v982, 0
      %v1031 = vsel %vm501, %v984, 0
      %v1034 = vsel %vm501, %v986, 0
      %v1037 = vsel %vm501, %v988, 0
      %v1040 = vsel %vm501, %v990, 0
      %v1043 = vsel %vm501, %v992, 0
      %v1046 = vsel %vm501, %v994, 0
      %v1049 = vsel %vm501, %v996, 0
      %v1052 = vsel %vm556, %v955, 0
      %1054 = vmatprep.subr.bf16.mxu0 0
      %1055 = vmatpush1.bf16.msra.mxu0 0
      %1056 = vmatprep.subr.bf16.mxu0 0
      %1057 = vmatpush1.bf16.msra.mxu0 0
      %1058 = vmatprep.subr.bf16.mxu0 0
      %1059 = vmatpush1.bf16.msra.mxu0 0
      %1060 = vmatprep.subr.bf16.mxu0 0
      %1061 = vmatpush1.bf16.msra.mxu0 0
      %1062 = vmatprep.subr.bf16.mxu0 0
      %1063 = vmatpush1.bf16.msra.mxu0 0
      %1064 = vmatprep.subr.bf16.mxu0 0
      %1065 = vmatpush1.bf16.msra.mxu0 0
      %1066 = vmatprep.subr.bf16.mxu0 0
      %1067 = vmatpush1.bf16.msra.mxu0 0
      %1068 = vmatprep.subr.bf16.mxu0 0
      %1069 = vmatpush1.bf16.msra.mxu0 %v1052
      %1070 = vmatprep.subr.bf16.mxu0 0
      %1071 = vmatpush2.bf16.msra.mxu0 0
      %1072 = vmatprep.subr.bf16.mxu0 0
      %1073 = vmatpush2.bf16.msra.mxu0 0
      %1074 = vmatprep.subr.bf16.mxu0 0
      %1075 = vmatpush2.bf16.msra.mxu0 0
      %1076 = vmatprep.subr.bf16.mxu0 0
      %1077 = vmatpush2.bf16.msra.mxu0 0
      %1078 = vmatprep.subr.bf16.mxu0 0
      %1079 = vmatpush2.bf16.msra.mxu0 0
      %1080 = vmatprep.subr.bf16.mxu0 0
      %1081 = vmatpush2.bf16.msra.mxu0 0
      %1082 = vmatprep.subr.bf16.mxu0 0
      %1083 = vmatpush2.bf16.msra.mxu0 0
      %1084 = vmatprep.subr.bf16.mxu0 0
      %1085 = vmatpush2.bf16.msra.mxu0 0
      %1086 = vmatprep.mubr.bf16.mxu0 0
      %1087 = vmatmul.mubr.bf16.gmra.mxu0 %v998
      %v1088 = vpop.f32.mrf.mxu0
      %v1089 = vadd.f32 0.0, %v1088
      %v1090 = vpop.f32.mrf.mxu0
      %v1091 = vpop.f32.mrf.mxu0
      %v1092 = vadd.f32 0.0, %v1091
      %v1093 = vpop.f32.mrf.mxu0
      %1094 = vmatprep.mubr.bf16.mxu0 0
      %1095 = vmatmul.mubr.bf16.gmra.mxu0 %v1001
      %v1096 = vpop.f32.mrf.mxu0
      %v1097 = vadd.f32 0.0, %v1096
      %v1098 = vpop.f32.mrf.mxu0
      %v1099 = vpop.f32.mrf.mxu0
      %v1100 = vadd.f32 0.0, %v1099
      %v1101 = vpop.f32.mrf.mxu0
      %1102 = vmatprep.mubr.bf16.mxu0 0
      %1103 = vmatmul.mubr.bf16.gmra.mxu0 %v1004
      %v1104 = vpop.f32.mrf.mxu0
      %v1105 = vadd.f32 0.0, %v1104
      %v1106 = vpop.f32.mrf.mxu0
      %v1107 = vpop.f32.mrf.mxu0
      %v1108 = vadd.f32 0.0, %v1107
      %v1109 = vpop.f32.mrf.mxu0
      %1110 = vmatprep.mubr.bf16.mxu0 0
      %1111 = vmatmul.mubr.bf16.gmra.mxu0 %v1007
      %v1112 = vpop.f32.mrf.mxu0
      %v1113 = vadd.f32 0.0, %v1112
      %v1114 = vpop.f32.mrf.mxu0
      %v1115 = vpop.f32.mrf.mxu0
      %v1116 = vadd.f32 0.0, %v1115
      %v1117 = vpop.f32.mrf.mxu0
      %1118 = vmatprep.mubr.bf16.mxu0 0
      %1119 = vmatmul.mubr.bf16.gmra.mxu0 %v1010
      %v1120 = vpop.f32.mrf.mxu0
      %v1121 = vadd.f32 0.0, %v1120
      %v1122 = vpop.f32.mrf.mxu0
      %v1123 = vpop.f32.mrf.mxu0
      %v1124 = vadd.f32 0.0, %v1123
      %v1125 = vpop.f32.mrf.mxu0
      %1126 = vmatprep.mubr.bf16.mxu0 0
      %1127 = vmatmul.mubr.bf16.gmra.mxu0 %v1013
      %v1128 = vpop.f32.mrf.mxu0
      %v1129 = vadd.f32 0.0, %v1128
      %v1130 = vpop.f32.mrf.mxu0
      %v1131 = vpop.f32.mrf.mxu0
      %v1132 = vadd.f32 0.0, %v1131
      %v1133 = vpop.f32.mrf.mxu0
      %1134 = vmatprep.mubr.bf16.mxu0 0
      %1135 = vmatmul.mubr.bf16.gmra.mxu0 %v1016
      %v1136 = vpop.f32.mrf.mxu0
      %v1137 = vadd.f32 0.0, %v1136
      %v1138 = vpop.f32.mrf.mxu0
      %v1139 = vpop.f32.mrf.mxu0
      %v1140 = vadd.f32 0.0, %v1139
      %v1141 = vpop.f32.mrf.mxu0
      %1142 = vmatprep.mubr.bf16.mxu0 0
      %1143 = vmatmul.mubr.bf16.gmra.mxu0 %v1019
      %v1144 = vpop.f32.mrf.mxu0
      %v1145 = vadd.f32 0.0, %v1144
      %v1146 = vpop.f32.mrf.mxu0
      %v1147 = vpop.f32.mrf.mxu0
      %v1148 = vadd.f32 0.0, %v1147
      %v1149 = vpop.f32.mrf.mxu0
      %1150 = vmatprep.mubr.bf16.mxu0 0
      %1151 = vmatmul.mubr.bf16.gmra.mxu0 %v1022
      %v1152 = vpop.f32.mrf.mxu0
      %v1153 = vadd.f32 0.0, %v1152
      %v1154 = vpop.f32.mrf.mxu0
      %v1155 = vpop.f32.mrf.mxu0
      %v1156 = vadd.f32 0.0, %v1155
      %v1157 = vpop.f32.mrf.mxu0
      %1158 = vmatprep.mubr.bf16.mxu0 0
      %1159 = vmatmul.mubr.bf16.gmra.mxu0 %v1025
      %v1160 = vpop.f32.mrf.mxu0
      %v1161 = vadd.f32 0.0, %v1160
      %v1162 = vpop.f32.mrf.mxu0
      %v1163 = vpop.f32.mrf.mxu0
      %v1164 = vadd.f32 0.0, %v1163
      %v1165 = vpop.f32.mrf.mxu0
      %1166 = vmatprep.mubr.bf16.mxu0 0
      %1167 = vmatmul.mubr.bf16.gmra.mxu0 %v1028
      %v1168 = vpop.f32.mrf.mxu0
      %v1169 = vadd.f32 0.0, %v1168
      %v1170 = vpop.f32.mrf.mxu0
      %v1171 = vpop.f32.mrf.mxu0
      %v1172 = vadd.f32 0.0, %v1171
      %v1173 = vpop.f32.mrf.mxu0
      %1174 = vmatprep.mubr.bf16.mxu0 0
      %1175 = vmatmul.mubr.bf16.gmra.mxu0 %v1031
      %v1176 = vpop.f32.mrf.mxu0
      %v1177 = vadd.f32 0.0, %v1176
      %v1178 = vpop.f32.mrf.mxu0
      %v1179 = vpop.f32.mrf.mxu0
      %v1180 = vadd.f32 0.0, %v1179
      %v1181 = vpop.f32.mrf.mxu0
      %1182 = vmatprep.mubr.bf16.mxu0 0
      %1183 = vmatmul.mubr.bf16.gmra.mxu0 %v1034
      %v1184 = vpop.f32.mrf.mxu0
      %v1185 = vadd.f32 0.0, %v1184
      %v1186 = vpop.f32.mrf.mxu0
      %v1187 = vpop.f32.mrf.mxu0
      %v1188 = vadd.f32 0.0, %v1187
      %v1189 = vpop.f32.mrf.mxu0
      %1190 = vmatprep.mubr.bf16.mxu0 0
      %1191 = vmatmul.mubr.bf16.gmra.mxu0 %v1037
      %v1192 = vpop.f32.mrf.mxu0
      %v1193 = vadd.f32 0.0, %v1192
      %v1194 = vpop.f32.mrf.mxu0
      %v1195 = vpop.f32.mrf.mxu0
      %v1196 = vadd.f32 0.0, %v1195
      %v1197 = vpop.f32.mrf.mxu0
      %1198 = vmatprep.mubr.bf16.mxu0 0
      %1199 = vmatmul.mubr.bf16.gmra.mxu0 %v1040
      %v1200 = vpop.f32.mrf.mxu0
      %v1201 = vadd.f32 0.0, %v1200
      %v1202 = vpop.f32.mrf.mxu0
      %v1203 = vpop.f32.mrf.mxu0
      %v1204 = vadd.f32 0.0, %v1203
      %v1205 = vpop.f32.mrf.mxu0
      %1206 = vmatprep.mubr.bf16.mxu0 0
      %1207 = vmatmul.mubr.bf16.gmra.mxu0 %v1043
      %v1208 = vpop.f32.mrf.mxu0
      %v1209 = vadd.f32 0.0, %v1208
      %v1210 = vpop.f32.mrf.mxu0
      %v1211 = vpop.f32.mrf.mxu0
      %v1212 = vadd.f32 0.0, %v1211
      %v1213 = vpop.f32.mrf.mxu0
      %1214 = vmatprep.mubr.bf16.mxu0 0
      %1215 = vmatmul.mubr.bf16.gmra.mxu0 %v1046
      %v1216 = vpop.f32.mrf.mxu0
      %v1217 = vadd.f32 0.0, %v1216
      %v1218 = vpop.f32.mrf.mxu0
      %v1219 = vpop.f32.mrf.mxu0
      %v1220 = vadd.f32 0.0, %v1219
      %v1221 = vpop.f32.mrf.mxu0
      %1222 = vmatprep.mubr.bf16.mxu0 0
      %1223 = vmatmul.mubr.bf16.gmra.mxu0 %v1049
      %v1224 = vpop.f32.mrf.mxu0
      %v1225 = vadd.f32 0.0, %v1224
      %v1226 = vpop.f32.mrf.mxu0
      %v1227 = vpop.f32.mrf.mxu0
      %v1228 = vadd.f32 0.0, %v1227
      %v1229 = vpop.f32.mrf.mxu0
      %1230 = vdwg.mxu0
      %v1231 = vadd.f32 %v811, %v1089
      %v1232 = vadd.f32 %v814, %v1092
      %v1233 = vadd.f32 %v819, %v1097
      %v1234 = vadd.f32 %v822, %v1100
      %v1235 = vadd.f32 %v827, %v1105
      %v1236 = vadd.f32 %v830, %v1108
      %v1237 = vadd.f32 %v835, %v1113
      %v1238 = vadd.f32 %v838, %v1116
      %v1239 = vadd.f32 %v843, %v1121
      %v1240 = vadd.f32 %v846, %v1124
      %v1241 = vadd.f32 %v851, %v1129
      %v1242 = vadd.f32 %v854, %v1132
      %v1243 = vadd.f32 %v859, %v1137
      %v1244 = vadd.f32 %v862, %v1140
      %v1245 = vadd.f32 %v867, %v1145
      %v1246 = vadd.f32 %v870, %v1148
      %v1247 = vadd.f32 %v875, %v1153
      %v1248 = vadd.f32 %v878, %v1156
      %v1249 = vadd.f32 %v883, %v1161
      %v1250 = vadd.f32 %v886, %v1164
      %v1251 = vadd.f32 %v891, %v1169
      %v1252 = vadd.f32 %v894, %v1172
      %v1253 = vadd.f32 %v899, %v1177
      %v1254 = vadd.f32 %v902, %v1180
      %v1255 = vadd.f32 %v907, %v1185
      %v1256 = vadd.f32 %v910, %v1188
      %v1257 = vadd.f32 %v915, %v1193
      %v1258 = vadd.f32 %v918, %v1196
      %v1259 = vadd.f32 %v923, %v1201
      %v1260 = vadd.f32 %v926, %v1204
      %v1261 = vadd.f32 %v931, %v1209
      %v1262 = vadd.f32 %v934, %v1212
      %v1263 = vadd.f32 %v939, %v1217
      %v1264 = vadd.f32 %v942, %v1220
      %v1265 = vadd.f32 %v947, %v1225
      %v1266 = vadd.f32 %v950, %v1228
      %v1267 = vld [vmem:[%s207 + $0x8] sm:$0xe]
      %v1268 = vld [vmem:[%s207 + $0xc] sm:$0xf]
      %v1269 = vld [vmem:[%s207 + $0x10] sm:$0xf]
      %v1270 = vld [vmem:[%s207 + $0x14] sm:$0xf]
      %v1271 = vld [vmem:[%s207 + $0x18] sm:$0xf]
      %v1272 = vld [vmem:[%s207 + $0x1c] sm:$0xf]
      %v1273 = vld [vmem:[%s207 + $0x20] sm:$0xf]
      %v1274 = vld [vmem:[%s207 + $0x24] sm:$0xf]
      %v1275 = vld [vmem:[%s207 + $0x28] sm:$0xf]
      %v1276 = vld [vmem:[%s207 + $0x2c] sm:$0xf]
      %v1277 = vld [vmem:[%s207 + $0x30] sm:$0xf]
      %v1278 = vld [vmem:[%s207 + $0x34] sm:$0xf]
      %v1279 = vld [vmem:[%s207 + $0x38] sm:$0xf]
      %v1280 = vld [vmem:[%s207 + $0x3c] sm:$0xf]
      %v1281 = vld [vmem:[%s207 + $0x40] sm:$0xf]
      %v1282 = vld [vmem:[%s207 + $0x44] sm:$0xf]
      %v1283 = vld [vmem:[%s207 + $0x48] sm:$0xf]
      %v1284 = vld [vmem:[%s207 + $0x4c] sm:$0xf]
      %v1285 = vld [vmem:[%s207 + $0x50] sm:$0xf]
      %v1286 = vld [vmem:[%s207 + $0x54] sm:$0xf]
      %v1287 = vld [vmem:[%s207 + $0x58] sm:$0xf]
      %v1288 = vld [vmem:[%s207 + $0x5c] sm:$0xf]
      %v1289 = vld [vmem:[%s207 + $0x60] sm:$0xf]
      %v1290 = vld [vmem:[%s207 + $0x64] sm:$0xf]
      %v1291 = vld [vmem:[%s207 + $0x68] sm:$0xf]
      %v1292 = vld [vmem:[%s207 + $0x6c] sm:$0xf]
      %v1293 = vld [vmem:[%s207 + $0x70] sm:$0xf]
      %v1294 = vld [vmem:[%s207 + $0x74] sm:$0xf]
      %v1295 = vld [vmem:[%s207 + $0x78] sm:$0xf]
      %v1296 = vld [vmem:[%s207 + $0x7c] sm:$0xf]
      %v1297 = vld [vmem:[%s207 + $0x80] sm:$0xf]
      %v1298 = vld [vmem:[%s207 + $0x84] sm:$0xf]
      %v1299 = vld [vmem:[%s207 + $0x88] sm:$0xf]
      %v1300 = vld [vmem:[%s207 + $0x8c] sm:$0xf]
      %v1301 = vld [vmem:[%s207 + $0x90] sm:$0xf]
      %v1302 = vld [vmem:[%s207 + $0x94] sm:$0xf]
      %v1303 = vld [vmem:[%s207 + $0x98] sm:$0x1]
      %s1304 = scalar_lea.vmem %s1, 6
      %v1305 = vld [vmem:[%s1304] sm:$0x3]
      %v1343 = vunpack.c.l.b16 %v1267
      %v1344 = vunpack.c.l.b16 %v1268
      %v1345 = vunpack.c.l.b16 %v1269
      %v1346 = vunpack.c.l.b16 %v1270
      %v1347 = vunpack.c.l.b16 %v1271
      %v1348 = vunpack.c.l.b16 %v1272
      %v1349 = vunpack.c.l.b16 %v1273
      %v1350 = vunpack.c.l.b16 %v1274
      %v1351 = vunpack.c.l.b16 %v1275
      %v1352 = vunpack.c.l.b16 %v1276
      %v1353 = vunpack.c.l.b16 %v1277
      %v1354 = vunpack.c.l.b16 %v1278
      %v1355 = vunpack.c.l.b16 %v1279
      %v1356 = vunpack.c.l.b16 %v1280
      %v1357 = vunpack.c.l.b16 %v1281
      %v1358 = vunpack.c.l.b16 %v1282
      %v1359 = vunpack.c.l.b16 %v1283
      %v1360 = vunpack.c.l.b16 %v1284
      %v1361 = vunpack.c.l.b16 %v1285
      %v1362 = vunpack.c.l.b16 %v1286
      %v1363 = vunpack.c.l.b16 %v1287
      %v1364 = vunpack.c.l.b16 %v1288
      %v1365 = vunpack.c.l.b16 %v1289
      %v1366 = vunpack.c.l.b16 %v1290
      %v1367 = vunpack.c.l.b16 %v1291
      %v1368 = vunpack.c.l.b16 %v1292
      %v1369 = vunpack.c.l.b16 %v1293
      %v1370 = vunpack.c.l.b16 %v1294
      %v1371 = vunpack.c.l.b16 %v1295
      %v1372 = vunpack.c.l.b16 %v1296
      %v1373 = vunpack.c.l.b16 %v1297
      %v1374 = vunpack.c.l.b16 %v1298
      %v1375 = vunpack.c.l.b16 %v1299
      %v1376 = vunpack.c.l.b16 %v1300
      %v1377 = vunpack.c.l.b16 %v1301
      %v1378 = vunpack.c.l.b16 %v1302
      %v1379 = vunpack.c.l.b16 %v1303
      %v1380 = vpack.c.b16 %v1344, %v1343
      %v1381 = vpack.c.b16 %v1346, %v1345
      %v1382 = vpack.c.b16 %v1348, %v1347
      %v1383 = vpack.c.b16 %v1350, %v1349
      %v1384 = vpack.c.b16 %v1352, %v1351
      %v1385 = vpack.c.b16 %v1354, %v1353
      %v1386 = vpack.c.b16 %v1356, %v1355
      %v1387 = vpack.c.b16 %v1358, %v1357
      %v1388 = vpack.c.b16 %v1360, %v1359
      %v1389 = vpack.c.b16 %v1362, %v1361
      %v1390 = vpack.c.b16 %v1364, %v1363
      %v1391 = vpack.c.b16 %v1366, %v1365
      %v1392 = vpack.c.b16 %v1368, %v1367
      %v1393 = vpack.c.b16 %v1370, %v1369
      %v1394 = vpack.c.b16 %v1372, %v1371
      %v1395 = vpack.c.b16 %v1374, %v1373
      %v1396 = vpack.c.b16 %v1376, %v1375
      %v1397 = vpack.c.b16 %v1378, %v1377
      %v1398 = vpack.c.b16 %v1379, %v1379
      %v1399 = vrot.slane %v1380, 1
      %v1400 = vrot.slane %v1381, 1
      %v1401 = vsel %vm959, %v1399, %v1400
      %v1402 = vrot.slane %v1382, 1
      %v1403 = vsel %vm959, %v1400, %v1402
      %v1404 = vrot.slane %v1383, 1
      %v1405 = vsel %vm959, %v1402, %v1404
      %v1406 = vrot.slane %v1384, 1
      %v1407 = vsel %vm959, %v1404, %v1406
      %v1408 = vrot.slane %v1385, 1
      %v1409 = vsel %vm959, %v1406, %v1408
      %v1410 = vrot.slane %v1386, 1
      %v1411 = vsel %vm959, %v1408, %v1410
      %v1412 = vrot.slane %v1387, 1
      %v1413 = vsel %vm959, %v1410, %v1412
      %v1414 = vrot.slane %v1388, 1
      %v1415 = vsel %vm959, %v1412, %v1414
      %v1416 = vrot.slane %v1389, 1
      %v1417 = vsel %vm959, %v1414, %v1416
      %v1418 = vrot.slane %v1390, 1
      %v1419 = vsel %vm959, %v1416, %v1418
      %v1420 = vrot.slane %v1391, 1
      %v1421 = vsel %vm959, %v1418, %v1420
      %v1422 = vrot.slane %v1392, 1
      %v1423 = vsel %vm959, %v1420, %v1422
      %v1424 = vrot.slane %v1393, 1
      %v1425 = vsel %vm959, %v1422, %v1424
      %v1426 = vrot.slane %v1394, 1
      %v1427 = vsel %vm959, %v1424, %v1426
      %v1428 = vrot.slane %v1395, 1
      %v1429 = vsel %vm959, %v1426, %v1428
      %v1430 = vrot.slane %v1396, 1
      %v1431 = vsel %vm959, %v1428, %v1430
      %v1432 = vrot.slane %v1397, 1
      %v1433 = vsel %vm959, %v1430, %v1432
      %v1434 = vrot.slane %v1398, 1
      %v1435 = vsel %vm959, %v1432, %v1434
      %v1437 = vsel %vm501, %v1401, 0
      %v1440 = vsel %vm501, %v1403, 0
      %v1443 = vsel %vm501, %v1405, 0
      %v1446 = vsel %vm501, %v1407, 0
      %v1449 = vsel %vm501, %v1409, 0
      %v1452 = vsel %vm501, %v1411, 0
      %v1455 = vsel %vm501, %v1413, 0
      %v1458 = vsel %vm501, %v1415, 0
      %v1461 = vsel %vm501, %v1417, 0
      %v1464 = vsel %vm501, %v1419, 0
      %v1467 = vsel %vm501, %v1421, 0
      %v1470 = vsel %vm501, %v1423, 0
      %v1473 = vsel %vm501, %v1425, 0
      %v1476 = vsel %vm501, %v1427, 0
      %v1479 = vsel %vm501, %v1429, 0
      %v1482 = vsel %vm501, %v1431, 0
      %v1485 = vsel %vm501, %v1433, 0
      %v1488 = vsel %vm501, %v1435, 0
      %v1491 = vsel %vm556, %v1305, 0
      %1493 = vmatprep.subr.bf16.mxu0 0
      %1494 = vmatpush1.bf16.msra.mxu0 0
      %1495 = vmatprep.subr.bf16.mxu0 0
      %1496 = vmatpush1.bf16.msra.mxu0 0
      %1497 = vmatprep.subr.bf16.mxu0 0
      %1498 = vmatpush1.bf16.msra.mxu0 0
      %1499 = vmatprep.subr.bf16.mxu0 0
      %1500 = vmatpush1.bf16.msra.mxu0 0
      %1501 = vmatprep.subr.bf16.mxu0 0
      %1502 = vmatpush1.bf16.msra.mxu0 0
      %1503 = vmatprep.subr.bf16.mxu0 0
      %1504 = vmatpush1.bf16.msra.mxu0 0
      %1505 = vmatprep.subr.bf16.mxu0 0
      %1506 = vmatpush1.bf16.msra.mxu0 0
      %1507 = vmatprep.subr.bf16.mxu0 0
      %1508 = vmatpush1.bf16.msra.mxu0 %v1491
      %1509 = vmatprep.subr.bf16.mxu0 0
      %1510 = vmatpush2.bf16.msra.mxu0 0
      %1511 = vmatprep.subr.bf16.mxu0 0
      %1512 = vmatpush2.bf16.msra.mxu0 0
      %1513 = vmatprep.subr.bf16.mxu0 0
      %1514 = vmatpush2.bf16.msra.mxu0 0
      %1515 = vmatprep.subr.bf16.mxu0 0
      %1516 = vmatpush2.bf16.msra.mxu0 0
      %1517 = vmatprep.subr.bf16.mxu0 0
      %1518 = vmatpush2.bf16.msra.mxu0 0
      %1519 = vmatprep.subr.bf16.mxu0 0
      %1520 = vmatpush2.bf16.msra.mxu0 0
      %1521 = vmatprep.subr.bf16.mxu0 0
      %1522 = vmatpush2.bf16.msra.mxu0 0
      %1523 = vmatprep.subr.bf16.mxu0 0
      %1524 = vmatpush2.bf16.msra.mxu0 0
      %1525 = vmatprep.mubr.bf16.mxu0 0
      %1526 = vmatmul.mubr.bf16.gmra.mxu0 %v1437
      %v1527 = vpop.f32.mrf.mxu0
      %v1528 = vadd.f32 0.0, %v1527
      %v1529 = vpop.f32.mrf.mxu0
      %v1530 = vpop.f32.mrf.mxu0
      %v1531 = vadd.f32 0.0, %v1530
      %v1532 = vpop.f32.mrf.mxu0
      %1533 = vmatprep.mubr.bf16.mxu0 0
      %1534 = vmatmul.mubr.bf16.gmra.mxu0 %v1440
      %v1535 = vpop.f32.mrf.mxu0
      %v1536 = vadd.f32 0.0, %v1535
      %v1537 = vpop.f32.mrf.mxu0
      %v1538 = vpop.f32.mrf.mxu0
      %v1539 = vadd.f32 0.0, %v1538
      %v1540 = vpop.f32.mrf.mxu0
      %1541 = vmatprep.mubr.bf16.mxu0 0
      %1542 = vmatmul.mubr.bf16.gmra.mxu0 %v1443
      %v1543 = vpop.f32.mrf.mxu0
      %v1544 = vadd.f32 0.0, %v1543
      %v1545 = vpop.f32.mrf.mxu0
      %v1546 = vpop.f32.mrf.mxu0
      %v1547 = vadd.f32 0.0, %v1546
      %v1548 = vpop.f32.mrf.mxu0
      %1549 = vmatprep.mubr.bf16.mxu0 0
      %1550 = vmatmul.mubr.bf16.gmra.mxu0 %v1446
      %v1551 = vpop.f32.mrf.mxu0
      %v1552 = vadd.f32 0.0, %v1551
      %v1553 = vpop.f32.mrf.mxu0
      %v1554 = vpop.f32.mrf.mxu0
      %v1555 = vadd.f32 0.0, %v1554
      %v1556 = vpop.f32.mrf.mxu0
      %1557 = vmatprep.mubr.bf16.mxu0 0
      %1558 = vmatmul.mubr.bf16.gmra.mxu0 %v1449
      %v1559 = vpop.f32.mrf.mxu0
      %v1560 = vadd.f32 0.0, %v1559
      %v1561 = vpop.f32.mrf.mxu0
      %v1562 = vpop.f32.mrf.mxu0
      %v1563 = vadd.f32 0.0, %v1562
      %v1564 = vpop.f32.mrf.mxu0
      %1565 = vmatprep.mubr.bf16.mxu0 0
      %1566 = vmatmul.mubr.bf16.gmra.mxu0 %v1452
      %v1567 = vpop.f32.mrf.mxu0
      %v1568 = vadd.f32 0.0, %v1567
      %v1569 = vpop.f32.mrf.mxu0
      %v1570 = vpop.f32.mrf.mxu0
      %v1571 = vadd.f32 0.0, %v1570
      %v1572 = vpop.f32.mrf.mxu0
      %1573 = vmatprep.mubr.bf16.mxu0 0
      %1574 = vmatmul.mubr.bf16.gmra.mxu0 %v1455
      %v1575 = vpop.f32.mrf.mxu0
      %v1576 = vadd.f32 0.0, %v1575
      %v1577 = vpop.f32.mrf.mxu0
      %v1578 = vpop.f32.mrf.mxu0
      %v1579 = vadd.f32 0.0, %v1578
      %v1580 = vpop.f32.mrf.mxu0
      %1581 = vmatprep.mubr.bf16.mxu0 0
      %1582 = vmatmul.mubr.bf16.gmra.mxu0 %v1458
      %v1583 = vpop.f32.mrf.mxu0
      %v1584 = vadd.f32 0.0, %v1583
      %v1585 = vpop.f32.mrf.mxu0
      %v1586 = vpop.f32.mrf.mxu0
      %v1587 = vadd.f32 0.0, %v1586
      %v1588 = vpop.f32.mrf.mxu0
      %1589 = vmatprep.mubr.bf16.mxu0 0
      %1590 = vmatmul.mubr.bf16.gmra.mxu0 %v1461
      %v1591 = vpop.f32.mrf.mxu0
      %v1592 = vadd.f32 0.0, %v1591
      %v1593 = vpop.f32.mrf.mxu0
      %v1594 = vpop.f32.mrf.mxu0
      %v1595 = vadd.f32 0.0, %v1594
      %v1596 = vpop.f32.mrf.mxu0
      %1597 = vmatprep.mubr.bf16.mxu0 0
      %1598 = vmatmul.mubr.bf16.gmra.mxu0 %v1464
      %v1599 = vpop.f32.mrf.mxu0
      %v1600 = vadd.f32 0.0, %v1599
      %v1601 = vpop.f32.mrf.mxu0
      %v1602 = vpop.f32.mrf.mxu0
      %v1603 = vadd.f32 0.0, %v1602
      %v1604 = vpop.f32.mrf.mxu0
      %1605 = vmatprep.mubr.bf16.mxu0 0
      %1606 = vmatmul.mubr.bf16.gmra.mxu0 %v1467
      %v1607 = vpop.f32.mrf.mxu0
      %v1608 = vadd.f32 0.0, %v1607
      %v1609 = vpop.f32.mrf.mxu0
      %v1610 = vpop.f32.mrf.mxu0
      %v1611 = vadd.f32 0.0, %v1610
      %v1612 = vpop.f32.mrf.mxu0
      %1613 = vmatprep.mubr.bf16.mxu0 0
      %1614 = vmatmul.mubr.bf16.gmra.mxu0 %v1470
      %v1615 = vpop.f32.mrf.mxu0
      %v1616 = vadd.f32 0.0, %v1615
      %v1617 = vpop.f32.mrf.mxu0
      %v1618 = vpop.f32.mrf.mxu0
      %v1619 = vadd.f32 0.0, %v1618
      %v1620 = vpop.f32.mrf.mxu0
      %1621 = vmatprep.mubr.bf16.mxu0 0
      %1622 = vmatmul.mubr.bf16.gmra.mxu0 %v1473
      %v1623 = vpop.f32.mrf.mxu0
      %v1624 = vadd.f32 0.0, %v1623
      %v1625 = vpop.f32.mrf.mxu0
      %v1626 = vpop.f32.mrf.mxu0
      %v1627 = vadd.f32 0.0, %v1626
      %v1628 = vpop.f32.mrf.mxu0
      %1629 = vmatprep.mubr.bf16.mxu0 0
      %1630 = vmatmul.mubr.bf16.gmra.mxu0 %v1476
      %v1631 = vpop.f32.mrf.mxu0
      %v1632 = vadd.f32 0.0, %v1631
      %v1633 = vpop.f32.mrf.mxu0
      %v1634 = vpop.f32.mrf.mxu0
      %v1635 = vadd.f32 0.0, %v1634
      %v1636 = vpop.f32.mrf.mxu0
      %1637 = vmatprep.mubr.bf16.mxu0 0
      %1638 = vmatmul.mubr.bf16.gmra.mxu0 %v1479
      %v1639 = vpop.f32.mrf.mxu0
      %v1640 = vadd.f32 0.0, %v1639
      %v1641 = vpop.f32.mrf.mxu0
      %v1642 = vpop.f32.mrf.mxu0
      %v1643 = vadd.f32 0.0, %v1642
      %v1644 = vpop.f32.mrf.mxu0
      %1645 = vmatprep.mubr.bf16.mxu0 0
      %1646 = vmatmul.mubr.bf16.gmra.mxu0 %v1482
      %v1647 = vpop.f32.mrf.mxu0
      %v1648 = vadd.f32 0.0, %v1647
      %v1649 = vpop.f32.mrf.mxu0
      %v1650 = vpop.f32.mrf.mxu0
      %v1651 = vadd.f32 0.0, %v1650
      %v1652 = vpop.f32.mrf.mxu0
      %1653 = vmatprep.mubr.bf16.mxu0 0
      %1654 = vmatmul.mubr.bf16.gmra.mxu0 %v1485
      %v1655 = vpop.f32.mrf.mxu0
      %v1656 = vadd.f32 0.0, %v1655
      %v1657 = vpop.f32.mrf.mxu0
      %v1658 = vpop.f32.mrf.mxu0
      %v1659 = vadd.f32 0.0, %v1658
      %v1660 = vpop.f32.mrf.mxu0
      %1661 = vmatprep.mubr.bf16.mxu0 0
      %1662 = vmatmul.mubr.bf16.gmra.mxu0 %v1488
      %v1663 = vpop.f32.mrf.mxu0
      %v1664 = vadd.f32 0.0, %v1663
      %v1665 = vpop.f32.mrf.mxu0
      %v1666 = vpop.f32.mrf.mxu0
      %v1667 = vadd.f32 0.0, %v1666
      %v1668 = vpop.f32.mrf.mxu0
      %1669 = vdwg.mxu0
      %v1670 = vadd.f32 %v1231, %v1528
      %v1671 = vadd.f32 %v1232, %v1531
      %v1672 = vadd.f32 %v1233, %v1536
      %v1673 = vadd.f32 %v1234, %v1539
      %v1674 = vadd.f32 %v1235, %v1544
      %v1675 = vadd.f32 %v1236, %v1547
      %v1676 = vadd.f32 %v1237, %v1552
      %v1677 = vadd.f32 %v1238, %v1555
      %v1678 = vadd.f32 %v1239, %v1560
      %v1679 = vadd.f32 %v1240, %v1563
      %v1680 = vadd.f32 %v1241, %v1568
      %v1681 = vadd.f32 %v1242, %v1571
      %v1682 = vadd.f32 %v1243, %v1576
      %v1683 = vadd.f32 %v1244, %v1579
      %v1684 = vadd.f32 %v1245, %v1584
      %v1685 = vadd.f32 %v1246, %v1587
      %v1686 = vadd.f32 %v1247, %v1592
      %v1687 = vadd.f32 %v1248, %v1595
      %v1688 = vadd.f32 %v1249, %v1600
      %v1689 = vadd.f32 %v1250, %v1603
      %v1690 = vadd.f32 %v1251, %v1608
      %v1691 = vadd.f32 %v1252, %v1611
      %v1692 = vadd.f32 %v1253, %v1616
      %v1693 = vadd.f32 %v1254, %v1619
      %v1694 = vadd.f32 %v1255, %v1624
      %v1695 = vadd.f32 %v1256, %v1627
      %v1696 = vadd.f32 %v1257, %v1632
      %v1697 = vadd.f32 %v1258, %v1635
      %v1698 = vadd.f32 %v1259, %v1640
      %v1699 = vadd.f32 %v1260, %v1643
      %v1700 = vadd.f32 %v1261, %v1648
      %v1701 = vadd.f32 %v1262, %v1651
      %v1702 = vadd.f32 %v1263, %v1656
      %v1703 = vadd.f32 %v1264, %v1659
      %v1704 = vadd.f32 %v1265, %v1664
      %v1705 = vadd.f32 %v1266, %v1667
      %v1706 = vld [vmem:[%s207 + $0x98] sm:$0x3]
      %s1707 = scalar_lea.vmem %s1, 8
      %v1708 = vld [vmem:[%s1707] sm:$0x3]
      %v1710 = vunpack.c.l.b16 %v1706
      %v1711 = vpack.c.b16 %v1710, %v1710
      %vm1712 = vsmask.f32 6400
      %v1714 = vshrl.u32 %v1380, 16
      %v1716 = vrot.slane %v1714, 1
      %v1717 = vshll.u32 %v1380, 16
      %v1719 = vrot.slane %v1717, 2
      %v1720 = vor.u32 %v1716, %v1719
      %v1722 = vshrl.u32 %v1381, 16
      %v1724 = vrot.slane %v1722, 1
      %v1725 = vshll.u32 %v1381, 16
      %v1727 = vrot.slane %v1725, 2
      %v1728 = vor.u32 %v1724, %v1727
      %v1729 = vsel %vm1712, %v1720, %v1728
      %v1731 = vshrl.u32 %v1382, 16
      %v1733 = vrot.slane %v1731, 1
      %v1734 = vshll.u32 %v1382, 16
      %v1736 = vrot.slane %v1734, 2
      %v1737 = vor.u32 %v1733, %v1736
      %v1738 = vsel %vm1712, %v1728, %v1737
      %v1740 = vshrl.u32 %v1383, 16
      %v1742 = vrot.slane %v1740, 1
      %v1743 = vshll.u32 %v1383, 16
      %v1745 = vrot.slane %v1743, 2
      %v1746 = vor.u32 %v1742, %v1745
      %v1747 = vsel %vm1712, %v1737, %v1746
      %v1749 = vshrl.u32 %v1384, 16
      %v1751 = vrot.slane %v1749, 1
      %v1752 = vshll.u32 %v1384, 16
      %v1754 = vrot.slane %v1752, 2
      %v1755 = vor.u32 %v1751, %v1754
      %v1756 = vsel %vm1712, %v1746, %v1755
      %v1758 = vshrl.u32 %v1385, 16
      %v1760 = vrot.slane %v1758, 1
      %v1761 = vshll.u32 %v1385, 16
      %v1763 = vrot.slane %v1761, 2
      %v1764 = vor.u32 %v1760, %v1763
      %v1765 = vsel %vm1712, %v1755, %v1764
      %v1767 = vshrl.u32 %v1386, 16
      %v1769 = vrot.slane %v1767, 1
      %v1770 = vshll.u32 %v1386, 16
      %v1772 = vrot.slane %v1770, 2
      %v1773 = vor.u32 %v1769, %v1772
      %v1774 = vsel %vm1712, %v1764, %v1773
      %v1776 = vshrl.u32 %v1387, 16
      %v1778 = vrot.slane %v1776, 1
      %v1779 = vshll.u32 %v1387, 16
      %v1781 = vrot.slane %v1779, 2
      %v1782 = vor.u32 %v1778, %v1781
      %v1783 = vsel %vm1712, %v1773, %v1782
      %v1785 = vshrl.u32 %v1388, 16
      %v1787 = vrot.slane %v1785, 1
      %v1788 = vshll.u32 %v1388, 16
      %v1790 = vrot.slane %v1788, 2
      %v1791 = vor.u32 %v1787, %v1790
      %v1792 = vsel %vm1712, %v1782, %v1791
      %v1794 = vshrl.u32 %v1389, 16
      %v1796 = vrot.slane %v1794, 1
      %v1797 = vshll.u32 %v1389, 16
      %v1799 = vrot.slane %v1797, 2
      %v1800 = vor.u32 %v1796, %v1799
      %v1801 = vsel %vm1712, %v1791, %v1800
      %v1803 = vshrl.u32 %v1390, 16
      %v1805 = vrot.slane %v1803, 1
      %v1806 = vshll.u32 %v1390, 16
      %v1808 = vrot.slane %v1806, 2
      %v1809 = vor.u32 %v1805, %v1808
      %v1810 = vsel %vm1712, %v1800, %v1809
      %v1812 = vshrl.u32 %v1391, 16
      %v1814 = vrot.slane %v1812, 1
      %v1815 = vshll.u32 %v1391, 16
      %v1817 = vrot.slane %v1815, 2
      %v1818 = vor.u32 %v1814, %v1817
      %v1819 = vsel %vm1712, %v1809, %v1818
      %v1821 = vshrl.u32 %v1392, 16
      %v1823 = vrot.slane %v1821, 1
      %v1824 = vshll.u32 %v1392, 16
      %v1826 = vrot.slane %v1824, 2
      %v1827 = vor.u32 %v1823, %v1826
      %v1828 = vsel %vm1712, %v1818, %v1827
      %v1830 = vshrl.u32 %v1393, 16
      %v1832 = vrot.slane %v1830, 1
      %v1833 = vshll.u32 %v1393, 16
      %v1835 = vrot.slane %v1833, 2
      %v1836 = vor.u32 %v1832, %v1835
      %v1837 = vsel %vm1712, %v1827, %v1836
      %v1839 = vshrl.u32 %v1394, 16
      %v1841 = vrot.slane %v1839, 1
      %v1842 = vshll.u32 %v1394, 16
      %v1844 = vrot.slane %v1842, 2
      %v1845 = vor.u32 %v1841, %v1844
      %v1846 = vsel %vm1712, %v1836, %v1845
      %v1848 = vshrl.u32 %v1395, 16
      %v1850 = vrot.slane %v1848, 1
      %v1851 = vshll.u32 %v1395, 16
      %v1853 = vrot.slane %v1851, 2
      %v1854 = vor.u32 %v1850, %v1853
      %v1855 = vsel %vm1712, %v1845, %v1854
      %v1857 = vshrl.u32 %v1396, 16
      %v1859 = vrot.slane %v1857, 1
      %v1860 = vshll.u32 %v1396, 16
      %v1862 = vrot.slane %v1860, 2
      %v1863 = vor.u32 %v1859, %v1862
      %v1864 = vsel %vm1712, %v1854, %v1863
      %v1866 = vshrl.u32 %v1397, 16
      %v1868 = vrot.slane %v1866, 1
      %v1869 = vshll.u32 %v1397, 16
      %v1871 = vrot.slane %v1869, 2
      %v1872 = vor.u32 %v1868, %v1871
      %v1873 = vsel %vm1712, %v1863, %v1872
      %v1875 = vshrl.u32 %v1711, 16
      %v1877 = vrot.slane %v1875, 1
      %v1878 = vshll.u32 %v1711, 16
      %v1880 = vrot.slane %v1878, 2
      %v1881 = vor.u32 %v1877, %v1880
      %v1882 = vsel %vm1712, %v1872, %v1881
      %v1884 = vsel %vm501, %v1729, 0
      %v1887 = vsel %vm501, %v1738, 0
      %v1890 = vsel %vm501, %v1747, 0
      %v1893 = vsel %vm501, %v1756, 0
      %v1896 = vsel %vm501, %v1765, 0
      %v1899 = vsel %vm501, %v1774, 0
      %v1902 = vsel %vm501, %v1783, 0
      %v1905 = vsel %vm501, %v1792, 0
      %v1908 = vsel %vm501, %v1801, 0
      %v1911 = vsel %vm501, %v1810, 0
      %v1914 = vsel %vm501, %v1819, 0
      %v1917 = vsel %vm501, %v1828, 0
      %v1920 = vsel %vm501, %v1837, 0
      %v1923 = vsel %vm501, %v1846, 0
      %v1926 = vsel %vm501, %v1855, 0
      %v1929 = vsel %vm501, %v1864, 0
      %v1932 = vsel %vm501, %v1873, 0
      %v1935 = vsel %vm501, %v1882, 0
      %v1938 = vsel %vm556, %v1708, 0
      %1940 = vmatprep.subr.bf16.mxu0 0
      %1941 = vmatpush1.bf16.msra.mxu0 0
      %1942 = vmatprep.subr.bf16.mxu0 0
      %1943 = vmatpush1.bf16.msra.mxu0 0
      %1944 = vmatprep.subr.bf16.mxu0 0
      %1945 = vmatpush1.bf16.msra.mxu0 0
      %1946 = vmatprep.subr.bf16.mxu0 0
      %1947 = vmatpush1.bf16.msra.mxu0 0
      %1948 = vmatprep.subr.bf16.mxu0 0
      %1949 = vmatpush1.bf16.msra.mxu0 0
      %1950 = vmatprep.subr.bf16.mxu0 0
      %1951 = vmatpush1.bf16.msra.mxu0 0
      %1952 = vmatprep.subr.bf16.mxu0 0
      %1953 = vmatpush1.bf16.msra.mxu0 0
      %1954 = vmatprep.subr.bf16.mxu0 0
      %1955 = vmatpush1.bf16.msra.mxu0 %v1938
      %1956 = vmatprep.subr.bf16.mxu0 0
      %1957 = vmatpush2.bf16.msra.mxu0 0
      %1958 = vmatprep.subr.bf16.mxu0 0
      %1959 = vmatpush2.bf16.msra.mxu0 0
      %1960 = vmatprep.subr.bf16.mxu0 0
      %1961 = vmatpush2.bf16.msra.mxu0 0
      %1962 = vmatprep.subr.bf16.mxu0 0
      %1963 = vmatpush2.bf16.msra.mxu0 0
      %1964 = vmatprep.subr.bf16.mxu0 0
      %1965 = vmatpush2.bf16.msra.mxu0 0
      %1966 = vmatprep.subr.bf16.mxu0 0
      %1967 = vmatpush2.bf16.msra.mxu0 0
      %1968 = vmatprep.subr.bf16.mxu0 0
      %1969 = vmatpush2.bf16.msra.mxu0 0
      %1970 = vmatprep.subr.bf16.mxu0 0
      %1971 = vmatpush2.bf16.msra.mxu0 0
      %1972 = vmatprep.mubr.bf16.mxu0 0
      %1973 = vmatmul.mubr.bf16.gmra.mxu0 %v1884
      %v1974 = vpop.f32.mrf.mxu0
      %v1975 = vadd.f32 0.0, %v1974
      %v1976 = vpop.f32.mrf.mxu0
      %v1977 = vpop.f32.mrf.mxu0
      %v1978 = vadd.f32 0.0, %v1977
      %v1979 = vpop.f32.mrf.mxu0
      %1980 = vmatprep.mubr.bf16.mxu0 0
      %1981 = vmatmul.mubr.bf16.gmra.mxu0 %v1887
      %v1982 = vpop.f32.mrf.mxu0
      %v1983 = vadd.f32 0.0, %v1982
      %v1984 = vpop.f32.mrf.mxu0
      %v1985 = vpop.f32.mrf.mxu0
      %v1986 = vadd.f32 0.0, %v1985
      %v1987 = vpop.f32.mrf.mxu0
      %1988 = vmatprep.mubr.bf16.mxu0 0
      %1989 = vmatmul.mubr.bf16.gmra.mxu0 %v1890
      %v1990 = vpop.f32.mrf.mxu0
      %v1991 = vadd.f32 0.0, %v1990
      %v1992 = vpop.f32.mrf.mxu0
      %v1993 = vpop.f32.mrf.mxu0
      %v1994 = vadd.f32 0.0, %v1993
      %v1995 = vpop.f32.mrf.mxu0
      %1996 = vmatprep.mubr.bf16.mxu0 0
      %1997 = vmatmul.mubr.bf16.gmra.mxu0 %v1893
      %v1998 = vpop.f32.mrf.mxu0
      %v1999 = vadd.f32 0.0, %v1998
      %v2000 = vpop.f32.mrf.mxu0
      %v2001 = vpop.f32.mrf.mxu0
      %v2002 = vadd.f32 0.0, %v2001
      %v2003 = vpop.f32.mrf.mxu0
      %2004 = vmatprep.mubr.bf16.mxu0 0
      %2005 = vmatmul.mubr.bf16.gmra.mxu0 %v1896
      %v2006 = vpop.f32.mrf.mxu0
      %v2007 = vadd.f32 0.0, %v2006
      %v2008 = vpop.f32.mrf.mxu0
      %v2009 = vpop.f32.mrf.mxu0
      %v2010 = vadd.f32 0.0, %v2009
      %v2011 = vpop.f32.mrf.mxu0
      %2012 = vmatprep.mubr.bf16.mxu0 0
      %2013 = vmatmul.mubr.bf16.gmra.mxu0 %v1899
      %v2014 = vpop.f32.mrf.mxu0
      %v2015 = vadd.f32 0.0, %v2014
      %v2016 = vpop.f32.mrf.mxu0
      %v2017 = vpop.f32.mrf.mxu0
      %v2018 = vadd.f32 0.0, %v2017
      %v2019 = vpop.f32.mrf.mxu0
      %2020 = vmatprep.mubr.bf16.mxu0 0
      %2021 = vmatmul.mubr.bf16.gmra.mxu0 %v1902
      %v2022 = vpop.f32.mrf.mxu0
      %v2023 = vadd.f32 0.0, %v2022
      %v2024 = vpop.f32.mrf.mxu0
      %v2025 = vpop.f32.mrf.mxu0
      %v2026 = vadd.f32 0.0, %v2025
      %v2027 = vpop.f32.mrf.mxu0
      %2028 = vmatprep.mubr.bf16.mxu0 0
      %2029 = vmatmul.mubr.bf16.gmra.mxu0 %v1905
      %v2030 = vpop.f32.mrf.mxu0
      %v2031 = vadd.f32 0.0, %v2030
      %v2032 = vpop.f32.mrf.mxu0
      %v2033 = vpop.f32.mrf.mxu0
      %v2034 = vadd.f32 0.0, %v2033
      %v2035 = vpop.f32.mrf.mxu0
      %2036 = vmatprep.mubr.bf16.mxu0 0
      %2037 = vmatmul.mubr.bf16.gmra.mxu0 %v1908
      %v2038 = vpop.f32.mrf.mxu0
      %v2039 = vadd.f32 0.0, %v2038
      %v2040 = vpop.f32.mrf.mxu0
      %v2041 = vpop.f32.mrf.mxu0
      %v2042 = vadd.f32 0.0, %v2041
      %v2043 = vpop.f32.mrf.mxu0
      %2044 = vmatprep.mubr.bf16.mxu0 0
      %2045 = vmatmul.mubr.bf16.gmra.mxu0 %v1911
      %v2046 = vpop.f32.mrf.mxu0
      %v2047 = vadd.f32 0.0, %v2046
      %v2048 = vpop.f32.mrf.mxu0
      %v2049 = vpop.f32.mrf.mxu0
      %v2050 = vadd.f32 0.0, %v2049
      %v2051 = vpop.f32.mrf.mxu0
      %2052 = vmatprep.mubr.bf16.mxu0 0
      %2053 = vmatmul.mubr.bf16.gmra.mxu0 %v1914
      %v2054 = vpop.f32.mrf.mxu0
      %v2055 = vadd.f32 0.0, %v2054
      %v2056 = vpop.f32.mrf.mxu0
      %v2057 = vpop.f32.mrf.mxu0
      %v2058 = vadd.f32 0.0, %v2057
      %v2059 = vpop.f32.mrf.mxu0
      %2060 = vmatprep.mubr.bf16.mxu0 0
      %2061 = vmatmul.mubr.bf16.gmra.mxu0 %v1917
      %v2062 = vpop.f32.mrf.mxu0
      %v2063 = vadd.f32 0.0, %v2062
      %v2064 = vpop.f32.mrf.mxu0
      %v2065 = vpop.f32.mrf.mxu0
      %v2066 = vadd.f32 0.0, %v2065
      %v2067 = vpop.f32.mrf.mxu0
      %2068 = vmatprep.mubr.bf16.mxu0 0
      %2069 = vmatmul.mubr.bf16.gmra.mxu0 %v1920
      %v2070 = vpop.f32.mrf.mxu0
      %v2071 = vadd.f32 0.0, %v2070
      %v2072 = vpop.f32.mrf.mxu0
      %v2073 = vpop.f32.mrf.mxu0
      %v2074 = vadd.f32 0.0, %v2073
      %v2075 = vpop.f32.mrf.mxu0
      %2076 = vmatprep.mubr.bf16.mxu0 0
      %2077 = vmatmul.mubr.bf16.gmra.mxu0 %v1923
      %v2078 = vpop.f32.mrf.mxu0
      %v2079 = vadd.f32 0.0, %v2078
      %v2080 = vpop.f32.mrf.mxu0
      %v2081 = vpop.f32.mrf.mxu0
      %v2082 = vadd.f32 0.0, %v2081
      %v2083 = vpop.f32.mrf.mxu0
      %2084 = vmatprep.mubr.bf16.mxu0 0
      %2085 = vmatmul.mubr.bf16.gmra.mxu0 %v1926
      %v2086 = vpop.f32.mrf.mxu0
      %v2087 = vadd.f32 0.0, %v2086
      %v2088 = vpop.f32.mrf.mxu0
      %v2089 = vpop.f32.mrf.mxu0
      %v2090 = vadd.f32 0.0, %v2089
      %v2091 = vpop.f32.mrf.mxu0
      %2092 = vmatprep.mubr.bf16.mxu0 0
      %2093 = vmatmul.mubr.bf16.gmra.mxu0 %v1929
      %v2094 = vpop.f32.mrf.mxu0
      %v2095 = vadd.f32 0.0, %v2094
      %v2096 = vpop.f32.mrf.mxu0
      %v2097 = vpop.f32.mrf.mxu0
      %v2098 = vadd.f32 0.0, %v2097
      %v2099 = vpop.f32.mrf.mxu0
      %2100 = vmatprep.mubr.bf16.mxu0 0
      %2101 = vmatmul.mubr.bf16.gmra.mxu0 %v1932
      %v2102 = vpop.f32.mrf.mxu0
      %v2103 = vadd.f32 0.0, %v2102
      %v2104 = vpop.f32.mrf.mxu0
      %v2105 = vpop.f32.mrf.mxu0
      %v2106 = vadd.f32 0.0, %v2105
      %v2107 = vpop.f32.mrf.mxu0
      %2108 = vmatprep.mubr.bf16.mxu0 0
      %2109 = vmatmul.mubr.bf16.gmra.mxu0 %v1935
      %v2110 = vpop.f32.mrf.mxu0
      %v2111 = vadd.f32 0.0, %v2110
      %v2112 = vpop.f32.mrf.mxu0
      %v2113 = vpop.f32.mrf.mxu0
      %v2114 = vadd.f32 0.0, %v2113
      %v2115 = vpop.f32.mrf.mxu0
      %2116 = vdwg.mxu0
      %v2117 = vadd.f32 %v1670, %v1975
      %v2118 = vadd.f32 %v1671, %v1978
      %v2119 = vadd.f32 %v1672, %v1983
      %v2120 = vadd.f32 %v1673, %v1986
      %v2121 = vadd.f32 %v1674, %v1991
      %v2122 = vadd.f32 %v1675, %v1994
      %v2123 = vadd.f32 %v1676, %v1999
      %v2124 = vadd.f32 %v1677, %v2002
      %v2125 = vadd.f32 %v1678, %v2007
      %v2126 = vadd.f32 %v1679, %v2010
      %v2127 = vadd.f32 %v1680, %v2015
      %v2128 = vadd.f32 %v1681, %v2018
      %v2129 = vadd.f32 %v1682, %v2023
      %v2130 = vadd.f32 %v1683, %v2026
      %v2131 = vadd.f32 %v1684, %v2031
      %v2132 = vadd.f32 %v1685, %v2034
      %v2133 = vadd.f32 %v1686, %v2039
      %v2134 = vadd.f32 %v1687, %v2042
      %v2135 = vadd.f32 %v1688, %v2047
      %v2136 = vadd.f32 %v1689, %v2050
      %v2137 = vadd.f32 %v1690, %v2055
      %v2138 = vadd.f32 %v1691, %v2058
      %v2139 = vadd.f32 %v1692, %v2063
      %v2140 = vadd.f32 %v1693, %v2066
      %v2141 = vadd.f32 %v1694, %v2071
      %v2142 = vadd.f32 %v1695, %v2074
      %v2143 = vadd.f32 %v1696, %v2079
      %v2144 = vadd.f32 %v1697, %v2082
      %v2145 = vadd.f32 %v1698, %v2087
      %v2146 = vadd.f32 %v1699, %v2090
      %v2147 = vadd.f32 %v1700, %v2095
      %v2148 = vadd.f32 %v1701, %v2098
      %v2149 = vadd.f32 %v1702, %v2103
      %v2150 = vadd.f32 %v1703, %v2106
      %v2151 = vadd.f32 %v1704, %v2111
      %v2152 = vadd.f32 %v1705, %v2114
      %v2153 = vld [vmem:[%s207 + $0x8] sm:$0xc]
      %s2154 = scalar_lea.vmem %s1, 10
      %v2155 = vld [vmem:[%s2154] sm:$0x3]
      %v2157 = vunpack.c.l.b16 %v2153
      %v2158 = vpack.c.b16 %v1344, %v2157
      %vm2159 = vcmask 1045504
      %v2160 = vrot.slane %v2158, 2
      %v2161 = vrot.slane %v1381, 2
      %v2162 = vsel %vm2159, %v2160, %v2161
      %v2163 = vrot.slane %v1382, 2
      %v2164 = vsel %vm2159, %v2161, %v2163
      %v2165 = vrot.slane %v1383, 2
      %v2166 = vsel %vm2159, %v2163, %v2165
      %v2167 = vrot.slane %v1384, 2
      %v2168 = vsel %vm2159, %v2165, %v2167
      %v2169 = vrot.slane %v1385, 2
      %v2170 = vsel %vm2159, %v2167, %v2169
      %v2171 = vrot.slane %v1386, 2
      %v2172 = vsel %vm2159, %v2169, %v2171
      %v2173 = vrot.slane %v1387, 2
      %v2174 = vsel %vm2159, %v2171, %v2173
      %v2175 = vrot.slane %v1388, 2
      %v2176 = vsel %vm2159, %v2173, %v2175
      %v2177 = vrot.slane %v1389, 2
      %v2178 = vsel %vm2159, %v2175, %v2177
      %v2179 = vrot.slane %v1390, 2
      %v2180 = vsel %vm2159, %v2177, %v2179
      %v2181 = vrot.slane %v1391, 2
      %v2182 = vsel %vm2159, %v2179, %v2181
      %v2183 = vrot.slane %v1392, 2
      %v2184 = vsel %vm2159, %v2181, %v2183
      %v2185 = vrot.slane %v1393, 2
      %v2186 = vsel %vm2159, %v2183, %v2185
      %v2187 = vrot.slane %v1394, 2
      %v2188 = vsel %vm2159, %v2185, %v2187
      %v2189 = vrot.slane %v1395, 2
      %v2190 = vsel %vm2159, %v2187, %v2189
      %v2191 = vrot.slane %v1396, 2
      %v2192 = vsel %vm2159, %v2189, %v2191
      %v2193 = vrot.slane %v1397, 2
      %v2194 = vsel %vm2159, %v2191, %v2193
      %v2195 = vrot.slane %v1711, 2
      %v2196 = vsel %vm2159, %v2193, %v2195
      %v2198 = vsel %vm501, %v2162, 0
      %v2201 = vsel %vm501, %v2164, 0
      %v2204 = vsel %vm501, %v2166, 0
      %v2207 = vsel %vm501, %v2168, 0
      %v2210 = vsel %vm501, %v2170, 0
      %v2213 = vsel %vm501, %v2172, 0
      %v2216 = vsel %vm501, %v2174, 0
      %v2219 = vsel %vm501, %v2176, 0
      %v2222 = vsel %vm501, %v2178, 0
      %v2225 = vsel %vm501, %v2180, 0
      %v2228 = vsel %vm501, %v2182, 0
      %v2231 = vsel %vm501, %v2184, 0
      %v2234 = vsel %vm501, %v2186, 0
      %v2237 = vsel %vm501, %v2188, 0
      %v2240 = vsel %vm501, %v2190, 0
      %v2243 = vsel %vm501, %v2192, 0
      %v2246 = vsel %vm501, %v2194, 0
      %v2249 = vsel %vm501, %v2196, 0
      %v2252 = vsel %vm556, %v2155, 0
      %2254 = vmatprep.subr.bf16.mxu0 0
      %2255 = vmatpush1.bf16.msra.mxu0 0
      %2256 = vmatprep.subr.bf16.mxu0 0
      %2257 = vmatpush1.bf16.msra.mxu0 0
      %2258 = vmatprep.subr.bf16.mxu0 0
      %2259 = vmatpush1.bf16.msra.mxu0 0
      %2260 = vmatprep.subr.bf16.mxu0 0
      %2261 = vmatpush1.bf16.msra.mxu0 0
      %2262 = vmatprep.subr.bf16.mxu0 0
      %2263 = vmatpush1.bf16.msra.mxu0 0
      %2264 = vmatprep.subr.bf16.mxu0 0
      %2265 = vmatpush1.bf16.msra.mxu0 0
      %2266 = vmatprep.subr.bf16.mxu0 0
      %2267 = vmatpush1.bf16.msra.mxu0 0
      %2268 = vmatprep.subr.bf16.mxu0 0
      %2269 = vmatpush1.bf16.msra.mxu0 %v2252
      %2270 = vmatprep.subr.bf16.mxu0 0
      %2271 = vmatpush2.bf16.msra.mxu0 0
      %2272 = vmatprep.subr.bf16.mxu0 0
      %2273 = vmatpush2.bf16.msra.mxu0 0
      %2274 = vmatprep.subr.bf16.mxu0 0
      %2275 = vmatpush2.bf16.msra.mxu0 0
      %2276 = vmatprep.subr.bf16.mxu0 0
      %2277 = vmatpush2.bf16.msra.mxu0 0
      %2278 = vmatprep.subr.bf16.mxu0 0
      %2279 = vmatpush2.bf16.msra.mxu0 0
      %2280 = vmatprep.subr.bf16.mxu0 0
      %2281 = vmatpush2.bf16.msra.mxu0 0
      %2282 = vmatprep.subr.bf16.mxu0 0
      %2283 = vmatpush2.bf16.msra.mxu0 0
      %2284 = vmatprep.subr.bf16.mxu0 0
      %2285 = vmatpush2.bf16.msra.mxu0 0
      %2286 = vmatprep.mubr.bf16.mxu0 0
      %2287 = vmatmul.mubr.bf16.gmra.mxu0 %v2198
      %v2288 = vpop.f32.mrf.mxu0
      %v2289 = vadd.f32 0.0, %v2288
      %v2290 = vpop.f32.mrf.mxu0
      %v2291 = vpop.f32.mrf.mxu0
      %v2292 = vadd.f32 0.0, %v2291
      %v2293 = vpop.f32.mrf.mxu0
      %2294 = vmatprep.mubr.bf16.mxu0 0
      %2295 = vmatmul.mubr.bf16.gmra.mxu0 %v2201
      %v2296 = vpop.f32.mrf.mxu0
      %v2297 = vadd.f32 0.0, %v2296
      %v2298 = vpop.f32.mrf.mxu0
      %v2299 = vpop.f32.mrf.mxu0
      %v2300 = vadd.f32 0.0, %v2299
      %v2301 = vpop.f32.mrf.mxu0
      %2302 = vmatprep.mubr.bf16.mxu0 0
      %2303 = vmatmul.mubr.bf16.gmra.mxu0 %v2204
      %v2304 = vpop.f32.mrf.mxu0
      %v2305 = vadd.f32 0.0, %v2304
      %v2306 = vpop.f32.mrf.mxu0
      %v2307 = vpop.f32.mrf.mxu0
      %v2308 = vadd.f32 0.0, %v2307
      %v2309 = vpop.f32.mrf.mxu0
      %2310 = vmatprep.mubr.bf16.mxu0 0
      %2311 = vmatmul.mubr.bf16.gmra.mxu0 %v2207
      %v2312 = vpop.f32.mrf.mxu0
      %v2313 = vadd.f32 0.0, %v2312
      %v2314 = vpop.f32.mrf.mxu0
      %v2315 = vpop.f32.mrf.mxu0
      %v2316 = vadd.f32 0.0, %v2315
      %v2317 = vpop.f32.mrf.mxu0
      %2318 = vmatprep.mubr.bf16.mxu0 0
      %2319 = vmatmul.mubr.bf16.gmra.mxu0 %v2210
      %v2320 = vpop.f32.mrf.mxu0
      %v2321 = vadd.f32 0.0, %v2320
      %v2322 = vpop.f32.mrf.mxu0
      %v2323 = vpop.f32.mrf.mxu0
      %v2324 = vadd.f32 0.0, %v2323
      %v2325 = vpop.f32.mrf.mxu0
      %2326 = vmatprep.mubr.bf16.mxu0 0
      %2327 = vmatmul.mubr.bf16.gmra.mxu0 %v2213
      %v2328 = vpop.f32.mrf.mxu0
      %v2329 = vadd.f32 0.0, %v2328
      %v2330 = vpop.f32.mrf.mxu0
      %v2331 = vpop.f32.mrf.mxu0
      %v2332 = vadd.f32 0.0, %v2331
      %v2333 = vpop.f32.mrf.mxu0
      %2334 = vmatprep.mubr.bf16.mxu0 0
      %2335 = vmatmul.mubr.bf16.gmra.mxu0 %v2216
      %v2336 = vpop.f32.mrf.mxu0
      %v2337 = vadd.f32 0.0, %v2336
      %v2338 = vpop.f32.mrf.mxu0
      %v2339 = vpop.f32.mrf.mxu0
      %v2340 = vadd.f32 0.0, %v2339
      %v2341 = vpop.f32.mrf.mxu0
      %2342 = vmatprep.mubr.bf16.mxu0 0
      %2343 = vmatmul.mubr.bf16.gmra.mxu0 %v2219
      %v2344 = vpop.f32.mrf.mxu0
      %v2345 = vadd.f32 0.0, %v2344
      %v2346 = vpop.f32.mrf.mxu0
      %v2347 = vpop.f32.mrf.mxu0
      %v2348 = vadd.f32 0.0, %v2347
      %v2349 = vpop.f32.mrf.mxu0
      %2350 = vmatprep.mubr.bf16.mxu0 0
      %2351 = vmatmul.mubr.bf16.gmra.mxu0 %v2222
      %v2352 = vpop.f32.mrf.mxu0
      %v2353 = vadd.f32 0.0, %v2352
      %v2354 = vpop.f32.mrf.mxu0
      %v2355 = vpop.f32.mrf.mxu0
      %v2356 = vadd.f32 0.0, %v2355
      %v2357 = vpop.f32.mrf.mxu0
      %2358 = vmatprep.mubr.bf16.mxu0 0
      %2359 = vmatmul.mubr.bf16.gmra.mxu0 %v2225
      %v2360 = vpop.f32.mrf.mxu0
      %v2361 = vadd.f32 0.0, %v2360
      %v2362 = vpop.f32.mrf.mxu0
      %v2363 = vpop.f32.mrf.mxu0
      %v2364 = vadd.f32 0.0, %v2363
      %v2365 = vpop.f32.mrf.mxu0
      %2366 = vmatprep.mubr.bf16.mxu0 0
      %2367 = vmatmul.mubr.bf16.gmra.mxu0 %v2228
      %v2368 = vpop.f32.mrf.mxu0
      %v2369 = vadd.f32 0.0, %v2368
      %v2370 = vpop.f32.mrf.mxu0
      %v2371 = vpop.f32.mrf.mxu0
      %v2372 = vadd.f32 0.0, %v2371
      %v2373 = vpop.f32.mrf.mxu0
      %2374 = vmatprep.mubr.bf16.mxu0 0
      %2375 = vmatmul.mubr.bf16.gmra.mxu0 %v2231
      %v2376 = vpop.f32.mrf.mxu0
      %v2377 = vadd.f32 0.0, %v2376
      %v2378 = vpop.f32.mrf.mxu0
      %v2379 = vpop.f32.mrf.mxu0
      %v2380 = vadd.f32 0.0, %v2379
      %v2381 = vpop.f32.mrf.mxu0
      %2382 = vmatprep.mubr.bf16.mxu0 0
      %2383 = vmatmul.mubr.bf16.gmra.mxu0 %v2234
      %v2384 = vpop.f32.mrf.mxu0
      %v2385 = vadd.f32 0.0, %v2384
      %v2386 = vpop.f32.mrf.mxu0
      %v2387 = vpop.f32.mrf.mxu0
      %v2388 = vadd.f32 0.0, %v2387
      %v2389 = vpop.f32.mrf.mxu0
      %2390 = vmatprep.mubr.bf16.mxu0 0
      %2391 = vmatmul.mubr.bf16.gmra.mxu0 %v2237
      %v2392 = vpop.f32.mrf.mxu0
      %v2393 = vadd.f32 0.0, %v2392
      %v2394 = vpop.f32.mrf.mxu0
      %v2395 = vpop.f32.mrf.mxu0
      %v2396 = vadd.f32 0.0, %v2395
      %v2397 = vpop.f32.mrf.mxu0
      %2398 = vmatprep.mubr.bf16.mxu0 0
      %2399 = vmatmul.mubr.bf16.gmra.mxu0 %v2240
      %v2400 = vpop.f32.mrf.mxu0
      %v2401 = vadd.f32 0.0, %v2400
      %v2402 = vpop.f32.mrf.mxu0
      %v2403 = vpop.f32.mrf.mxu0
      %v2404 = vadd.f32 0.0, %v2403
      %v2405 = vpop.f32.mrf.mxu0
      %2406 = vmatprep.mubr.bf16.mxu0 0
      %2407 = vmatmul.mubr.bf16.gmra.mxu0 %v2243
      %v2408 = vpop.f32.mrf.mxu0
      %v2409 = vadd.f32 0.0, %v2408
      %v2410 = vpop.f32.mrf.mxu0
      %v2411 = vpop.f32.mrf.mxu0
      %v2412 = vadd.f32 0.0, %v2411
      %v2413 = vpop.f32.mrf.mxu0
      %2414 = vmatprep.mubr.bf16.mxu0 0
      %2415 = vmatmul.mubr.bf16.gmra.mxu0 %v2246
      %v2416 = vpop.f32.mrf.mxu0
      %v2417 = vadd.f32 0.0, %v2416
      %v2418 = vpop.f32.mrf.mxu0
      %v2419 = vpop.f32.mrf.mxu0
      %v2420 = vadd.f32 0.0, %v2419
      %v2421 = vpop.f32.mrf.mxu0
      %2422 = vmatprep.mubr.bf16.mxu0 0
      %2423 = vmatmul.mubr.bf16.gmra.mxu0 %v2249
      %v2424 = vpop.f32.mrf.mxu0
      %v2425 = vadd.f32 0.0, %v2424
      %v2426 = vpop.f32.mrf.mxu0
      %v2427 = vpop.f32.mrf.mxu0
      %v2428 = vadd.f32 0.0, %v2427
      %v2429 = vpop.f32.mrf.mxu0
      %2430 = vdwg.mxu0
      %v2431 = vadd.f32 %v2117, %v2289
      %v2432 = vadd.f32 %v2118, %v2292
      %v2433 = vadd.f32 %v2119, %v2297
      %v2434 = vadd.f32 %v2120, %v2300
      %v2435 = vadd.f32 %v2121, %v2305
      %v2436 = vadd.f32 %v2122, %v2308
      %v2437 = vadd.f32 %v2123, %v2313
      %v2438 = vadd.f32 %v2124, %v2316
      %v2439 = vadd.f32 %v2125, %v2321
      %v2440 = vadd.f32 %v2126, %v2324
      %v2441 = vadd.f32 %v2127, %v2329
      %v2442 = vadd.f32 %v2128, %v2332
      %v2443 = vadd.f32 %v2129, %v2337
      %v2444 = vadd.f32 %v2130, %v2340
      %v2445 = vadd.f32 %v2131, %v2345
      %v2446 = vadd.f32 %v2132, %v2348
      %v2447 = vadd.f32 %v2133, %v2353
      %v2448 = vadd.f32 %v2134, %v2356
      %v2449 = vadd.f32 %v2135, %v2361
      %v2450 = vadd.f32 %v2136, %v2364
      %v2451 = vadd.f32 %v2137, %v2369
      %v2452 = vadd.f32 %v2138, %v2372
      %v2453 = vadd.f32 %v2139, %v2377
      %v2454 = vadd.f32 %v2140, %v2380
      %v2455 = vadd.f32 %v2141, %v2385
      %v2456 = vadd.f32 %v2142, %v2388
      %v2457 = vadd.f32 %v2143, %v2393
      %v2458 = vadd.f32 %v2144, %v2396
      %v2459 = vadd.f32 %v2145, %v2401
      %v2460 = vadd.f32 %v2146, %v2404
      %v2461 = vadd.f32 %v2147, %v2409
      %v2462 = vadd.f32 %v2148, %v2412
      %v2463 = vadd.f32 %v2149, %v2417
      %v2464 = vadd.f32 %v2150, %v2420
      %v2465 = vadd.f32 %v2151, %v2425
      %v2466 = vadd.f32 %v2152, %v2428
      %v2467 = vld [vmem:[%s207 + $0x10] sm:$0xc]
      %v2468 = vld [vmem:[%s207 + $0x14] sm:$0xf]
      %v2469 = vld [vmem:[%s207 + $0x18] sm:$0xf]
      %v2470 = vld [vmem:[%s207 + $0x1c] sm:$0xf]
      %v2471 = vld [vmem:[%s207 + $0x20] sm:$0xf]
      %v2472 = vld [vmem:[%s207 + $0x24] sm:$0xf]
      %v2473 = vld [vmem:[%s207 + $0x28] sm:$0xf]
      %v2474 = vld [vmem:[%s207 + $0x2c] sm:$0xf]
      %v2475 = vld [vmem:[%s207 + $0x30] sm:$0xf]
      %v2476 = vld [vmem:[%s207 + $0x34] sm:$0xf]
      %v2477 = vld [vmem:[%s207 + $0x38] sm:$0xf]
      %v2478 = vld [vmem:[%s207 + $0x3c] sm:$0xf]
      %v2479 = vld [vmem:[%s207 + $0x40] sm:$0xf]
      %v2480 = vld [vmem:[%s207 + $0x44] sm:$0xf]
      %v2481 = vld [vmem:[%s207 + $0x48] sm:$0xf]
      %v2482 = vld [vmem:[%s207 + $0x4c] sm:$0xf]
      %v2483 = vld [vmem:[%s207 + $0x50] sm:$0xf]
      %v2484 = vld [vmem:[%s207 + $0x54] sm:$0xf]
      %v2485 = vld [vmem:[%s207 + $0x58] sm:$0xf]
      %v2486 = vld [vmem:[%s207 + $0x5c] sm:$0xf]
      %v2487 = vld [vmem:[%s207 + $0x60] sm:$0xf]
      %v2488 = vld [vmem:[%s207 + $0x64] sm:$0xf]
      %v2489 = vld [vmem:[%s207 + $0x68] sm:$0xf]
      %v2490 = vld [vmem:[%s207 + $0x6c] sm:$0xf]
      %v2491 = vld [vmem:[%s207 + $0x70] sm:$0xf]
      %v2492 = vld [vmem:[%s207 + $0x74] sm:$0xf]
      %v2493 = vld [vmem:[%s207 + $0x78] sm:$0xf]
      %v2494 = vld [vmem:[%s207 + $0x7c] sm:$0xf]
      %v2495 = vld [vmem:[%s207 + $0x80] sm:$0xf]
      %v2496 = vld [vmem:[%s207 + $0x84] sm:$0xf]
      %v2497 = vld [vmem:[%s207 + $0x88] sm:$0xf]
      %v2498 = vld [vmem:[%s207 + $0x8c] sm:$0xf]
      %v2499 = vld [vmem:[%s207 + $0x90] sm:$0xf]
      %v2500 = vld [vmem:[%s207 + $0x94] sm:$0xf]
      %v2501 = vld [vmem:[%s207 + $0x98] sm:$0xf]
      %v2502 = vld [vmem:[%s207 + $0x9c] sm:$0xf]
      %v2503 = vld [vmem:[%s207 + $0xa0] sm:$0x3]
      %s2504 = scalar_lea.vmem %s1, 12
      %v2505 = vld [vmem:[%s2504] sm:$0x3]
      %v2543 = vunpack.c.l.b16 %v2467
      %v2544 = vunpack.c.l.b16 %v2468
      %v2545 = vunpack.c.l.b16 %v2469
      %v2546 = vunpack.c.l.b16 %v2470
      %v2547 = vunpack.c.l.b16 %v2471
      %v2548 = vunpack.c.l.b16 %v2472
      %v2549 = vunpack.c.l.b16 %v2473
      %v2550 = vunpack.c.l.b16 %v2474
      %v2551 = vunpack.c.l.b16 %v2475
      %v2552 = vunpack.c.l.b16 %v2476
      %v2553 = vunpack.c.l.b16 %v2477
      %v2554 = vunpack.c.l.b16 %v2478
      %v2555 = vunpack.c.l.b16 %v2479
      %v2556 = vunpack.c.l.b16 %v2480
      %v2557 = vunpack.c.l.b16 %v2481
      %v2558 = vunpack.c.l.b16 %v2482
      %v2559 = vunpack.c.l.b16 %v2483
      %v2560 = vunpack.c.l.b16 %v2484
      %v2561 = vunpack.c.l.b16 %v2485
      %v2562 = vunpack.c.l.b16 %v2486
      %v2563 = vunpack.c.l.b16 %v2487
      %v2564 = vunpack.c.l.b16 %v2488
      %v2565 = vunpack.c.l.b16 %v2489
      %v2566 = vunpack.c.l.b16 %v2490
      %v2567 = vunpack.c.l.b16 %v2491
      %v2568 = vunpack.c.l.b16 %v2492
      %v2569 = vunpack.c.l.b16 %v2493
      %v2570 = vunpack.c.l.b16 %v2494
      %v2571 = vunpack.c.l.b16 %v2495
      %v2572 = vunpack.c.l.b16 %v2496
      %v2573 = vunpack.c.l.b16 %v2497
      %v2574 = vunpack.c.l.b16 %v2498
      %v2575 = vunpack.c.l.b16 %v2499
      %v2576 = vunpack.c.l.b16 %v2500
      %v2577 = vunpack.c.l.b16 %v2501
      %v2578 = vunpack.c.l.b16 %v2502
      %v2579 = vunpack.c.l.b16 %v2503
      %v2580 = vpack.c.b16 %v2544, %v2543
      %v2581 = vpack.c.b16 %v2546, %v2545
      %v2582 = vpack.c.b16 %v2548, %v2547
      %v2583 = vpack.c.b16 %v2550, %v2549
      %v2584 = vpack.c.b16 %v2552, %v2551
      %v2585 = vpack.c.b16 %v2554, %v2553
      %v2586 = vpack.c.b16 %v2556, %v2555
      %v2587 = vpack.c.b16 %v2558, %v2557
      %v2588 = vpack.c.b16 %v2560, %v2559
      %v2589 = vpack.c.b16 %v2562, %v2561
      %v2590 = vpack.c.b16 %v2564, %v2563
      %v2591 = vpack.c.b16 %v2566, %v2565
      %v2592 = vpack.c.b16 %v2568, %v2567
      %v2593 = vpack.c.b16 %v2570, %v2569
      %v2594 = vpack.c.b16 %v2572, %v2571
      %v2595 = vpack.c.b16 %v2574, %v2573
      %v2596 = vpack.c.b16 %v2576, %v2575
      %v2597 = vpack.c.b16 %v2578, %v2577
      %v2598 = vpack.c.b16 %v2579, %v2579
      %v2599 = vrot.slane %v2580, 2
      %v2600 = vrot.slane %v2581, 2
      %v2601 = vsel %vm2159, %v2599, %v2600
      %v2602 = vrot.slane %v2582, 2
      %v2603 = vsel %vm2159, %v2600, %v2602
      %v2604 = vrot.slane %v2583, 2
      %v2605 = vsel %vm2159, %v2602, %v2604
      %v2606 = vrot.slane %v2584, 2
      %v2607 = vsel %vm2159, %v2604, %v2606
      %v2608 = vrot.slane %v2585, 2
      %v2609 = vsel %vm2159, %v2606, %v2608
      %v2610 = vrot.slane %v2586, 2
      %v2611 = vsel %vm2159, %v2608, %v2610
      %v2612 = vrot.slane %v2587, 2
      %v2613 = vsel %vm2159, %v2610, %v2612
      %v2614 = vrot.slane %v2588, 2
      %v2615 = vsel %vm2159, %v2612, %v2614
      %v2616 = vrot.slane %v2589, 2
      %v2617 = vsel %vm2159, %v2614, %v2616
      %v2618 = vrot.slane %v2590, 2
      %v2619 = vsel %vm2159, %v2616, %v2618
      %v2620 = vrot.slane %v2591, 2
      %v2621 = vsel %vm2159, %v2618, %v2620
      %v2622 = vrot.slane %v2592, 2
      %v2623 = vsel %vm2159, %v2620, %v2622
      %v2624 = vrot.slane %v2593, 2
      %v2625 = vsel %vm2159, %v2622, %v2624
      %v2626 = vrot.slane %v2594, 2
      %v2627 = vsel %vm2159, %v2624, %v2626
      %v2628 = vrot.slane %v2595, 2
      %v2629 = vsel %vm2159, %v2626, %v2628
      %v2630 = vrot.slane %v2596, 2
      %v2631 = vsel %vm2159, %v2628, %v2630
      %v2632 = vrot.slane %v2597, 2
      %v2633 = vsel %vm2159, %v2630, %v2632
      %v2634 = vrot.slane %v2598, 2
      %v2635 = vsel %vm2159, %v2632, %v2634
      %v2637 = vsel %vm501, %v2601, 0
      %v2640 = vsel %vm501, %v2603, 0
      %v2643 = vsel %vm501, %v2605, 0
      %v2646 = vsel %vm501, %v2607, 0
      %v2649 = vsel %vm501, %v2609, 0
      %v2652 = vsel %vm501, %v2611, 0
      %v2655 = vsel %vm501, %v2613, 0
      %v2658 = vsel %vm501, %v2615, 0
      %v2661 = vsel %vm501, %v2617, 0
      %v2664 = vsel %vm501, %v2619, 0
      %v2667 = vsel %vm501, %v2621, 0
      %v2670 = vsel %vm501, %v2623, 0
      %v2673 = vsel %vm501, %v2625, 0
      %v2676 = vsel %vm501, %v2627, 0
      %v2679 = vsel %vm501, %v2629, 0
      %v2682 = vsel %vm501, %v2631, 0
      %v2685 = vsel %vm501, %v2633, 0
      %v2688 = vsel %vm501, %v2635, 0
      %v2691 = vsel %vm556, %v2505, 0
      %2693 = vmatprep.subr.bf16.mxu0 0
      %2694 = vmatpush1.bf16.msra.mxu0 0
      %2695 = vmatprep.subr.bf16.mxu0 0
      %2696 = vmatpush1.bf16.msra.mxu0 0
      %2697 = vmatprep.subr.bf16.mxu0 0
      %2698 = vmatpush1.bf16.msra.mxu0 0
      %2699 = vmatprep.subr.bf16.mxu0 0
      %2700 = vmatpush1.bf16.msra.mxu0 0
      %2701 = vmatprep.subr.bf16.mxu0 0
      %2702 = vmatpush1.bf16.msra.mxu0 0
      %2703 = vmatprep.subr.bf16.mxu0 0
      %2704 = vmatpush1.bf16.msra.mxu0 0
      %2705 = vmatprep.subr.bf16.mxu0 0
      %2706 = vmatpush1.bf16.msra.mxu0 0
      %2707 = vmatprep.subr.bf16.mxu0 0
      %2708 = vmatpush1.bf16.msra.mxu0 %v2691
      %2709 = vmatprep.subr.bf16.mxu0 0
      %2710 = vmatpush2.bf16.msra.mxu0 0
      %2711 = vmatprep.subr.bf16.mxu0 0
      %2712 = vmatpush2.bf16.msra.mxu0 0
      %2713 = vmatprep.subr.bf16.mxu0 0
      %2714 = vmatpush2.bf16.msra.mxu0 0
      %2715 = vmatprep.subr.bf16.mxu0 0
      %2716 = vmatpush2.bf16.msra.mxu0 0
      %2717 = vmatprep.subr.bf16.mxu0 0
      %2718 = vmatpush2.bf16.msra.mxu0 0
      %2719 = vmatprep.subr.bf16.mxu0 0
      %2720 = vmatpush2.bf16.msra.mxu0 0
      %2721 = vmatprep.subr.bf16.mxu0 0
      %2722 = vmatpush2.bf16.msra.mxu0 0
      %2723 = vmatprep.subr.bf16.mxu0 0
      %2724 = vmatpush2.bf16.msra.mxu0 0
      %2725 = vmatprep.mubr.bf16.mxu0 0
      %2726 = vmatmul.mubr.bf16.gmra.mxu0 %v2637
      %v2727 = vpop.f32.mrf.mxu0
      %v2728 = vadd.f32 0.0, %v2727
      %v2729 = vpop.f32.mrf.mxu0
      %v2730 = vpop.f32.mrf.mxu0
      %v2731 = vadd.f32 0.0, %v2730
      %v2732 = vpop.f32.mrf.mxu0
      %2733 = vmatprep.mubr.bf16.mxu0 0
      %2734 = vmatmul.mubr.bf16.gmra.mxu0 %v2640
      %v2735 = vpop.f32.mrf.mxu0
      %v2736 = vadd.f32 0.0, %v2735
      %v2737 = vpop.f32.mrf.mxu0
      %v2738 = vpop.f32.mrf.mxu0
      %v2739 = vadd.f32 0.0, %v2738
      %v2740 = vpop.f32.mrf.mxu0
      %2741 = vmatprep.mubr.bf16.mxu0 0
      %2742 = vmatmul.mubr.bf16.gmra.mxu0 %v2643
      %v2743 = vpop.f32.mrf.mxu0
      %v2744 = vadd.f32 0.0, %v2743
      %v2745 = vpop.f32.mrf.mxu0
      %v2746 = vpop.f32.mrf.mxu0
      %v2747 = vadd.f32 0.0, %v2746
      %v2748 = vpop.f32.mrf.mxu0
      %2749 = vmatprep.mubr.bf16.mxu0 0
      %2750 = vmatmul.mubr.bf16.gmra.mxu0 %v2646
      %v2751 = vpop.f32.mrf.mxu0
      %v2752 = vadd.f32 0.0, %v2751
      %v2753 = vpop.f32.mrf.mxu0
      %v2754 = vpop.f32.mrf.mxu0
      %v2755 = vadd.f32 0.0, %v2754
      %v2756 = vpop.f32.mrf.mxu0
      %2757 = vmatprep.mubr.bf16.mxu0 0
      %2758 = vmatmul.mubr.bf16.gmra.mxu0 %v2649
      %v2759 = vpop.f32.mrf.mxu0
      %v2760 = vadd.f32 0.0, %v2759
      %v2761 = vpop.f32.mrf.mxu0
      %v2762 = vpop.f32.mrf.mxu0
      %v2763 = vadd.f32 0.0, %v2762
      %v2764 = vpop.f32.mrf.mxu0
      %2765 = vmatprep.mubr.bf16.mxu0 0
      %2766 = vmatmul.mubr.bf16.gmra.mxu0 %v2652
      %v2767 = vpop.f32.mrf.mxu0
      %v2768 = vadd.f32 0.0, %v2767
      %v2769 = vpop.f32.mrf.mxu0
      %v2770 = vpop.f32.mrf.mxu0
      %v2771 = vadd.f32 0.0, %v2770
      %v2772 = vpop.f32.mrf.mxu0
      %2773 = vmatprep.mubr.bf16.mxu0 0
      %2774 = vmatmul.mubr.bf16.gmra.mxu0 %v2655
      %v2775 = vpop.f32.mrf.mxu0
      %v2776 = vadd.f32 0.0, %v2775
      %v2777 = vpop.f32.mrf.mxu0
      %v2778 = vpop.f32.mrf.mxu0
      %v2779 = vadd.f32 0.0, %v2778
      %v2780 = vpop.f32.mrf.mxu0
      %2781 = vmatprep.mubr.bf16.mxu0 0
      %2782 = vmatmul.mubr.bf16.gmra.mxu0 %v2658
      %v2783 = vpop.f32.mrf.mxu0
      %v2784 = vadd.f32 0.0, %v2783
      %v2785 = vpop.f32.mrf.mxu0
      %v2786 = vpop.f32.mrf.mxu0
      %v2787 = vadd.f32 0.0, %v2786
      %v2788 = vpop.f32.mrf.mxu0
      %2789 = vmatprep.mubr.bf16.mxu0 0
      %2790 = vmatmul.mubr.bf16.gmra.mxu0 %v2661
      %v2791 = vpop.f32.mrf.mxu0
      %v2792 = vadd.f32 0.0, %v2791
      %v2793 = vpop.f32.mrf.mxu0
      %v2794 = vpop.f32.mrf.mxu0
      %v2795 = vadd.f32 0.0, %v2794
      %v2796 = vpop.f32.mrf.mxu0
      %2797 = vmatprep.mubr.bf16.mxu0 0
      %2798 = vmatmul.mubr.bf16.gmra.mxu0 %v2664
      %v2799 = vpop.f32.mrf.mxu0
      %v2800 = vadd.f32 0.0, %v2799
      %v2801 = vpop.f32.mrf.mxu0
      %v2802 = vpop.f32.mrf.mxu0
      %v2803 = vadd.f32 0.0, %v2802
      %v2804 = vpop.f32.mrf.mxu0
      %2805 = vmatprep.mubr.bf16.mxu0 0
      %2806 = vmatmul.mubr.bf16.gmra.mxu0 %v2667
      %v2807 = vpop.f32.mrf.mxu0
      %v2808 = vadd.f32 0.0, %v2807
      %v2809 = vpop.f32.mrf.mxu0
      %v2810 = vpop.f32.mrf.mxu0
      %v2811 = vadd.f32 0.0, %v2810
      %v2812 = vpop.f32.mrf.mxu0
      %2813 = vmatprep.mubr.bf16.mxu0 0
      %2814 = vmatmul.mubr.bf16.gmra.mxu0 %v2670
      %v2815 = vpop.f32.mrf.mxu0
      %v2816 = vadd.f32 0.0, %v2815
      %v2817 = vpop.f32.mrf.mxu0
      %v2818 = vpop.f32.mrf.mxu0
      %v2819 = vadd.f32 0.0, %v2818
      %v2820 = vpop.f32.mrf.mxu0
      %2821 = vmatprep.mubr.bf16.mxu0 0
      %2822 = vmatmul.mubr.bf16.gmra.mxu0 %v2673
      %v2823 = vpop.f32.mrf.mxu0
      %v2824 = vadd.f32 0.0, %v2823
      %v2825 = vpop.f32.mrf.mxu0
      %v2826 = vpop.f32.mrf.mxu0
      %v2827 = vadd.f32 0.0, %v2826
      %v2828 = vpop.f32.mrf.mxu0
      %2829 = vmatprep.mubr.bf16.mxu0 0
      %2830 = vmatmul.mubr.bf16.gmra.mxu0 %v2676
      %v2831 = vpop.f32.mrf.mxu0
      %v2832 = vadd.f32 0.0, %v2831
      %v2833 = vpop.f32.mrf.mxu0
      %v2834 = vpop.f32.mrf.mxu0
      %v2835 = vadd.f32 0.0, %v2834
      %v2836 = vpop.f32.mrf.mxu0
      %2837 = vmatprep.mubr.bf16.mxu0 0
      %2838 = vmatmul.mubr.bf16.gmra.mxu0 %v2679
      %v2839 = vpop.f32.mrf.mxu0
      %v2840 = vadd.f32 0.0, %v2839
      %v2841 = vpop.f32.mrf.mxu0
      %v2842 = vpop.f32.mrf.mxu0
      %v2843 = vadd.f32 0.0, %v2842
      %v2844 = vpop.f32.mrf.mxu0
      %2845 = vmatprep.mubr.bf16.mxu0 0
      %2846 = vmatmul.mubr.bf16.gmra.mxu0 %v2682
      %v2847 = vpop.f32.mrf.mxu0
      %v2848 = vadd.f32 0.0, %v2847
      %v2849 = vpop.f32.mrf.mxu0
      %v2850 = vpop.f32.mrf.mxu0
      %v2851 = vadd.f32 0.0, %v2850
      %v2852 = vpop.f32.mrf.mxu0
      %2853 = vmatprep.mubr.bf16.mxu0 0
      %2854 = vmatmul.mubr.bf16.gmra.mxu0 %v2685
      %v2855 = vpop.f32.mrf.mxu0
      %v2856 = vadd.f32 0.0, %v2855
      %v2857 = vpop.f32.mrf.mxu0
      %v2858 = vpop.f32.mrf.mxu0
      %v2859 = vadd.f32 0.0, %v2858
      %v2860 = vpop.f32.mrf.mxu0
      %2861 = vmatprep.mubr.bf16.mxu0 0
      %2862 = vmatmul.mubr.bf16.gmra.mxu0 %v2688
      %v2863 = vpop.f32.mrf.mxu0
      %v2864 = vadd.f32 0.0, %v2863
      %v2865 = vpop.f32.mrf.mxu0
      %v2866 = vpop.f32.mrf.mxu0
      %v2867 = vadd.f32 0.0, %v2866
      %v2868 = vpop.f32.mrf.mxu0
      %2869 = vdwg.mxu0
      %v2870 = vadd.f32 %v2431, %v2728
      %v2871 = vadd.f32 %v2432, %v2731
      %v2872 = vadd.f32 %v2433, %v2736
      %v2873 = vadd.f32 %v2434, %v2739
      %v2874 = vadd.f32 %v2435, %v2744
      %v2875 = vadd.f32 %v2436, %v2747
      %v2876 = vadd.f32 %v2437, %v2752
      %v2877 = vadd.f32 %v2438, %v2755
      %v2878 = vadd.f32 %v2439, %v2760
      %v2879 = vadd.f32 %v2440, %v2763
      %v2880 = vadd.f32 %v2441, %v2768
      %v2881 = vadd.f32 %v2442, %v2771
      %v2882 = vadd.f32 %v2443, %v2776
      %v2883 = vadd.f32 %v2444, %v2779
      %v2884 = vadd.f32 %v2445, %v2784
      %v2885 = vadd.f32 %v2446, %v2787
      %v2886 = vadd.f32 %v2447, %v2792
      %v2887 = vadd.f32 %v2448, %v2795
      %v2888 = vadd.f32 %v2449, %v2800
      %v2889 = vadd.f32 %v2450, %v2803
      %v2890 = vadd.f32 %v2451, %v2808
      %v2891 = vadd.f32 %v2452, %v2811
      %v2892 = vadd.f32 %v2453, %v2816
      %v2893 = vadd.f32 %v2454, %v2819
      %v2894 = vadd.f32 %v2455, %v2824
      %v2895 = vadd.f32 %v2456, %v2827
      %v2896 = vadd.f32 %v2457, %v2832
      %v2897 = vadd.f32 %v2458, %v2835
      %v2898 = vadd.f32 %v2459, %v2840
      %v2899 = vadd.f32 %v2460, %v2843
      %v2900 = vadd.f32 %v2461, %v2848
      %v2901 = vadd.f32 %v2462, %v2851
      %v2902 = vadd.f32 %v2463, %v2856
      %v2903 = vadd.f32 %v2464, %v2859
      %v2904 = vadd.f32 %v2465, %v2864
      %v2905 = vadd.f32 %v2466, %v2867
      %v2906 = vld [vmem:[%s207 + $0xa0] sm:$0x7]
      %s2907 = scalar_lea.vmem %s1, 14
      %v2908 = vld [vmem:[%s2907] sm:$0x3]
      %v2910 = vunpack.c.l.b16 %v2906
      %v2911 = vpack.c.b16 %v2910, %v2910
      %vm2912 = vsmask.f32 5376
      %v2914 = vshrl.u32 %v2580, 16
      %v2916 = vrot.slane %v2914, 2
      %v2917 = vshll.u32 %v2580, 16
      %v2919 = vrot.slane %v2917, 3
      %v2920 = vor.u32 %v2916, %v2919
      %v2922 = vshrl.u32 %v2581, 16
      %v2924 = vrot.slane %v2922, 2
      %v2925 = vshll.u32 %v2581, 16
      %v2927 = vrot.slane %v2925, 3
      %v2928 = vor.u32 %v2924, %v2927
      %v2929 = vsel %vm2912, %v2920, %v2928
      %v2931 = vshrl.u32 %v2582, 16
      %v2933 = vrot.slane %v2931, 2
      %v2934 = vshll.u32 %v2582, 16
      %v2936 = vrot.slane %v2934, 3
      %v2937 = vor.u32 %v2933, %v2936
      %v2938 = vsel %vm2912, %v2928, %v2937
      %v2940 = vshrl.u32 %v2583, 16
      %v2942 = vrot.slane %v2940, 2
      %v2943 = vshll.u32 %v2583, 16
      %v2945 = vrot.slane %v2943, 3
      %v2946 = vor.u32 %v2942, %v2945
      %v2947 = vsel %vm2912, %v2937, %v2946
      %v2949 = vshrl.u32 %v2584, 16
      %v2951 = vrot.slane %v2949, 2
      %v2952 = vshll.u32 %v2584, 16
      %v2954 = vrot.slane %v2952, 3
      %v2955 = vor.u32 %v2951, %v2954
      %v2956 = vsel %vm2912, %v2946, %v2955
      %v2958 = vshrl.u32 %v2585, 16
      %v2960 = vrot.slane %v2958, 2
      %v2961 = vshll.u32 %v2585, 16
      %v2963 = vrot.slane %v2961, 3
      %v2964 = vor.u32 %v2960, %v2963
      %v2965 = vsel %vm2912, %v2955, %v2964
      %v2967 = vshrl.u32 %v2586, 16
      %v2969 = vrot.slane %v2967, 2
      %v2970 = vshll.u32 %v2586, 16
      %v2972 = vrot.slane %v2970, 3
      %v2973 = vor.u32 %v2969, %v2972
      %v2974 = vsel %vm2912, %v2964, %v2973
      %v2976 = vshrl.u32 %v2587, 16
      %v2978 = vrot.slane %v2976, 2
      %v2979 = vshll.u32 %v2587, 16
      %v2981 = vrot.slane %v2979, 3
      %v2982 = vor.u32 %v2978, %v2981
      %v2983 = vsel %vm2912, %v2973, %v2982
      %v2985 = vshrl.u32 %v2588, 16
      %v2987 = vrot.slane %v2985, 2
      %v2988 = vshll.u32 %v2588, 16
      %v2990 = vrot.slane %v2988, 3
      %v2991 = vor.u32 %v2987, %v2990
      %v2992 = vsel %vm2912, %v2982, %v2991
      %v2994 = vshrl.u32 %v2589, 16
      %v2996 = vrot.slane %v2994, 2
      %v2997 = vshll.u32 %v2589, 16
      %v2999 = vrot.slane %v2997, 3
      %v3000 = vor.u32 %v2996, %v2999
      %v3001 = vsel %vm2912, %v2991, %v3000
      %v3003 = vshrl.u32 %v2590, 16
      %v3005 = vrot.slane %v3003, 2
      %v3006 = vshll.u32 %v2590, 16
      %v3008 = vrot.slane %v3006, 3
      %v3009 = vor.u32 %v3005, %v3008
      %v3010 = vsel %vm2912, %v3000, %v3009
      %v3012 = vshrl.u32 %v2591, 16
      %v3014 = vrot.slane %v3012, 2
      %v3015 = vshll.u32 %v2591, 16
      %v3017 = vrot.slane %v3015, 3
      %v3018 = vor.u32 %v3014, %v3017
      %v3019 = vsel %vm2912, %v3009, %v3018
      %v3021 = vshrl.u32 %v2592, 16
      %v3023 = vrot.slane %v3021, 2
      %v3024 = vshll.u32 %v2592, 16
      %v3026 = vrot.slane %v3024, 3
      %v3027 = vor.u32 %v3023, %v3026
      %v3028 = vsel %vm2912, %v3018, %v3027
      %v3030 = vshrl.u32 %v2593, 16
      %v3032 = vrot.slane %v3030, 2
      %v3033 = vshll.u32 %v2593, 16
      %v3035 = vrot.slane %v3033, 3
      %v3036 = vor.u32 %v3032, %v3035
      %v3037 = vsel %vm2912, %v3027, %v3036
      %v3039 = vshrl.u32 %v2594, 16
      %v3041 = vrot.slane %v3039, 2
      %v3042 = vshll.u32 %v2594, 16
      %v3044 = vrot.slane %v3042, 3
      %v3045 = vor.u32 %v3041, %v3044
      %v3046 = vsel %vm2912, %v3036, %v3045
      %v3048 = vshrl.u32 %v2595, 16
      %v3050 = vrot.slane %v3048, 2
      %v3051 = vshll.u32 %v2595, 16
      %v3053 = vrot.slane %v3051, 3
      %v3054 = vor.u32 %v3050, %v3053
      %v3055 = vsel %vm2912, %v3045, %v3054
      %v3057 = vshrl.u32 %v2596, 16
      %v3059 = vrot.slane %v3057, 2
      %v3060 = vshll.u32 %v2596, 16
      %v3062 = vrot.slane %v3060, 3
      %v3063 = vor.u32 %v3059, %v3062
      %v3064 = vsel %vm2912, %v3054, %v3063
      %v3066 = vshrl.u32 %v2597, 16
      %v3068 = vrot.slane %v3066, 2
      %v3069 = vshll.u32 %v2597, 16
      %v3071 = vrot.slane %v3069, 3
      %v3072 = vor.u32 %v3068, %v3071
      %v3073 = vsel %vm2912, %v3063, %v3072
      %v3075 = vshrl.u32 %v2911, 16
      %v3077 = vrot.slane %v3075, 2
      %v3078 = vshll.u32 %v2911, 16
      %v3080 = vrot.slane %v3078, 3
      %v3081 = vor.u32 %v3077, %v3080
      %v3082 = vsel %vm2912, %v3072, %v3081
      %v3084 = vsel %vm501, %v2929, 0
      %v3087 = vsel %vm501, %v2938, 0
      %v3090 = vsel %vm501, %v2947, 0
      %v3093 = vsel %vm501, %v2956, 0
      %v3096 = vsel %vm501, %v2965, 0
      %v3099 = vsel %vm501, %v2974, 0
      %v3102 = vsel %vm501, %v2983, 0
      %v3105 = vsel %vm501, %v2992, 0
      %v3108 = vsel %vm501, %v3001, 0
      %v3111 = vsel %vm501, %v3010, 0
      %v3114 = vsel %vm501, %v3019, 0
      %v3117 = vsel %vm501, %v3028, 0
      %v3120 = vsel %vm501, %v3037, 0
      %v3123 = vsel %vm501, %v3046, 0
      %v3126 = vsel %vm501, %v3055, 0
      %v3129 = vsel %vm501, %v3064, 0
      %v3132 = vsel %vm501, %v3073, 0
      %v3135 = vsel %vm501, %v3082, 0
      %v3138 = vsel %vm556, %v2908, 0
      %3140 = vmatprep.subr.bf16.mxu0 0
      %3141 = vmatpush1.bf16.msra.mxu0 0
      %3142 = vmatprep.subr.bf16.mxu0 0
      %3143 = vmatpush1.bf16.msra.mxu0 0
      %3144 = vmatprep.subr.bf16.mxu0 0
      %3145 = vmatpush1.bf16.msra.mxu0 0
      %3146 = vmatprep.subr.bf16.mxu0 0
      %3147 = vmatpush1.bf16.msra.mxu0 0
      %3148 = vmatprep.subr.bf16.mxu0 0
      %3149 = vmatpush1.bf16.msra.mxu0 0
      %3150 = vmatprep.subr.bf16.mxu0 0
      %3151 = vmatpush1.bf16.msra.mxu0 0
      %3152 = vmatprep.subr.bf16.mxu0 0
      %3153 = vmatpush1.bf16.msra.mxu0 0
      %3154 = vmatprep.subr.bf16.mxu0 0
      %3155 = vmatpush1.bf16.msra.mxu0 %v3138
      %3156 = vmatprep.subr.bf16.mxu0 0
      %3157 = vmatpush2.bf16.msra.mxu0 0
      %3158 = vmatprep.subr.bf16.mxu0 0
      %3159 = vmatpush2.bf16.msra.mxu0 0
      %3160 = vmatprep.subr.bf16.mxu0 0
      %3161 = vmatpush2.bf16.msra.mxu0 0
      %3162 = vmatprep.subr.bf16.mxu0 0
      %3163 = vmatpush2.bf16.msra.mxu0 0
      %3164 = vmatprep.subr.bf16.mxu0 0
      %3165 = vmatpush2.bf16.msra.mxu0 0
      %3166 = vmatprep.subr.bf16.mxu0 0
      %3167 = vmatpush2.bf16.msra.mxu0 0
      %3168 = vmatprep.subr.bf16.mxu0 0
      %3169 = vmatpush2.bf16.msra.mxu0 0
      %3170 = vmatprep.subr.bf16.mxu0 0
      %3171 = vmatpush2.bf16.msra.mxu0 0
      %3172 = vmatprep.mubr.bf16.mxu0 0
      %3173 = vmatmul.mubr.bf16.gmra.mxu0 %v3084
      %v3174 = vpop.f32.mrf.mxu0
      %v3175 = vadd.f32 0.0, %v3174
      %v3176 = vpop.f32.mrf.mxu0
      %v3177 = vpop.f32.mrf.mxu0
      %v3178 = vadd.f32 0.0, %v3177
      %v3179 = vpop.f32.mrf.mxu0
      %3180 = vmatprep.mubr.bf16.mxu0 0
      %3181 = vmatmul.mubr.bf16.gmra.mxu0 %v3087
      %v3182 = vpop.f32.mrf.mxu0
      %v3183 = vadd.f32 0.0, %v3182
      %v3184 = vpop.f32.mrf.mxu0
      %v3185 = vpop.f32.mrf.mxu0
      %v3186 = vadd.f32 0.0, %v3185
      %v3187 = vpop.f32.mrf.mxu0
      %3188 = vmatprep.mubr.bf16.mxu0 0
      %3189 = vmatmul.mubr.bf16.gmra.mxu0 %v3090
      %v3190 = vpop.f32.mrf.mxu0
      %v3191 = vadd.f32 0.0, %v3190
      %v3192 = vpop.f32.mrf.mxu0
      %v3193 = vpop.f32.mrf.mxu0
      %v3194 = vadd.f32 0.0, %v3193
      %v3195 = vpop.f32.mrf.mxu0
      %3196 = vmatprep.mubr.bf16.mxu0 0
      %3197 = vmatmul.mubr.bf16.gmra.mxu0 %v3093
      %v3198 = vpop.f32.mrf.mxu0
      %v3199 = vadd.f32 0.0, %v3198
      %v3200 = vpop.f32.mrf.mxu0
      %v3201 = vpop.f32.mrf.mxu0
      %v3202 = vadd.f32 0.0, %v3201
      %v3203 = vpop.f32.mrf.mxu0
      %3204 = vmatprep.mubr.bf16.mxu0 0
      %3205 = vmatmul.mubr.bf16.gmra.mxu0 %v3096
      %v3206 = vpop.f32.mrf.mxu0
      %v3207 = vadd.f32 0.0, %v3206
      %v3208 = vpop.f32.mrf.mxu0
      %v3209 = vpop.f32.mrf.mxu0
      %v3210 = vadd.f32 0.0, %v3209
      %v3211 = vpop.f32.mrf.mxu0
      %3212 = vmatprep.mubr.bf16.mxu0 0
      %3213 = vmatmul.mubr.bf16.gmra.mxu0 %v3099
      %v3214 = vpop.f32.mrf.mxu0
      %v3215 = vadd.f32 0.0, %v3214
      %v3216 = vpop.f32.mrf.mxu0
      %v3217 = vpop.f32.mrf.mxu0
      %v3218 = vadd.f32 0.0, %v3217
      %v3219 = vpop.f32.mrf.mxu0
      %3220 = vmatprep.mubr.bf16.mxu0 0
      %3221 = vmatmul.mubr.bf16.gmra.mxu0 %v3102
      %v3222 = vpop.f32.mrf.mxu0
      %v3223 = vadd.f32 0.0, %v3222
      %v3224 = vpop.f32.mrf.mxu0
      %v3225 = vpop.f32.mrf.mxu0
      %v3226 = vadd.f32 0.0, %v3225
      %v3227 = vpop.f32.mrf.mxu0
      %3228 = vmatprep.mubr.bf16.mxu0 0
      %3229 = vmatmul.mubr.bf16.gmra.mxu0 %v3105
      %v3230 = vpop.f32.mrf.mxu0
      %v3231 = vadd.f32 0.0, %v3230
      %v3232 = vpop.f32.mrf.mxu0
      %v3233 = vpop.f32.mrf.mxu0
      %v3234 = vadd.f32 0.0, %v3233
      %v3235 = vpop.f32.mrf.mxu0
      %3236 = vmatprep.mubr.bf16.mxu0 0
      %3237 = vmatmul.mubr.bf16.gmra.mxu0 %v3108
      %v3238 = vpop.f32.mrf.mxu0
      %v3239 = vadd.f32 0.0, %v3238
      %v3240 = vpop.f32.mrf.mxu0
      %v3241 = vpop.f32.mrf.mxu0
      %v3242 = vadd.f32 0.0, %v3241
      %v3243 = vpop.f32.mrf.mxu0
      %3244 = vmatprep.mubr.bf16.mxu0 0
      %3245 = vmatmul.mubr.bf16.gmra.mxu0 %v3111
      %v3246 = vpop.f32.mrf.mxu0
      %v3247 = vadd.f32 0.0, %v3246
      %v3248 = vpop.f32.mrf.mxu0
      %v3249 = vpop.f32.mrf.mxu0
      %v3250 = vadd.f32 0.0, %v3249
      %v3251 = vpop.f32.mrf.mxu0
      %3252 = vmatprep.mubr.bf16.mxu0 0
      %3253 = vmatmul.mubr.bf16.gmra.mxu0 %v3114
      %v3254 = vpop.f32.mrf.mxu0
      %v3255 = vadd.f32 0.0, %v3254
      %v3256 = vpop.f32.mrf.mxu0
      %v3257 = vpop.f32.mrf.mxu0
      %v3258 = vadd.f32 0.0, %v3257
      %v3259 = vpop.f32.mrf.mxu0
      %3260 = vmatprep.mubr.bf16.mxu0 0
      %3261 = vmatmul.mubr.bf16.gmra.mxu0 %v3117
      %v3262 = vpop.f32.mrf.mxu0
      %v3263 = vadd.f32 0.0, %v3262
      %v3264 = vpop.f32.mrf.mxu0
      %v3265 = vpop.f32.mrf.mxu0
      %v3266 = vadd.f32 0.0, %v3265
      %v3267 = vpop.f32.mrf.mxu0
      %3268 = vmatprep.mubr.bf16.mxu0 0
      %3269 = vmatmul.mubr.bf16.gmra.mxu0 %v3120
      %v3270 = vpop.f32.mrf.mxu0
      %v3271 = vadd.f32 0.0, %v3270
      %v3272 = vpop.f32.mrf.mxu0
      %v3273 = vpop.f32.mrf.mxu0
      %v3274 = vadd.f32 0.0, %v3273
      %v3275 = vpop.f32.mrf.mxu0
      %3276 = vmatprep.mubr.bf16.mxu0 0
      %3277 = vmatmul.mubr.bf16.gmra.mxu0 %v3123
      %v3278 = vpop.f32.mrf.mxu0
      %v3279 = vadd.f32 0.0, %v3278
      %v3280 = vpop.f32.mrf.mxu0
      %v3281 = vpop.f32.mrf.mxu0
      %v3282 = vadd.f32 0.0, %v3281
      %v3283 = vpop.f32.mrf.mxu0
      %3284 = vmatprep.mubr.bf16.mxu0 0
      %3285 = vmatmul.mubr.bf16.gmra.mxu0 %v3126
      %v3286 = vpop.f32.mrf.mxu0
      %v3287 = vadd.f32 0.0, %v3286
      %v3288 = vpop.f32.mrf.mxu0
      %v3289 = vpop.f32.mrf.mxu0
      %v3290 = vadd.f32 0.0, %v3289
      %v3291 = vpop.f32.mrf.mxu0
      %3292 = vmatprep.mubr.bf16.mxu0 0
      %3293 = vmatmul.mubr.bf16.gmra.mxu0 %v3129
      %v3294 = vpop.f32.mrf.mxu0
      %v3295 = vadd.f32 0.0, %v3294
      %v3296 = vpop.f32.mrf.mxu0
      %v3297 = vpop.f32.mrf.mxu0
      %v3298 = vadd.f32 0.0, %v3297
      %v3299 = vpop.f32.mrf.mxu0
      %3300 = vmatprep.mubr.bf16.mxu0 0
      %3301 = vmatmul.mubr.bf16.gmra.mxu0 %v3132
      %v3302 = vpop.f32.mrf.mxu0
      %v3303 = vadd.f32 0.0, %v3302
      %v3304 = vpop.f32.mrf.mxu0
      %v3305 = vpop.f32.mrf.mxu0
      %v3306 = vadd.f32 0.0, %v3305
      %v3307 = vpop.f32.mrf.mxu0
      %3308 = vmatprep.mubr.bf16.mxu0 0
      %3309 = vmatmul.mubr.bf16.gmra.mxu0 %v3135
      %v3310 = vpop.f32.mrf.mxu0
      %v3311 = vadd.f32 0.0, %v3310
      %v3312 = vpop.f32.mrf.mxu0
      %v3313 = vpop.f32.mrf.mxu0
      %v3314 = vadd.f32 0.0, %v3313
      %v3315 = vpop.f32.mrf.mxu0
      %3316 = vdwg.mxu0
      %v3317 = vadd.f32 %v2870, %v3175
      %v3318 = vadd.f32 %v2871, %v3178
      %v3319 = vadd.f32 %v2872, %v3183
      %v3320 = vadd.f32 %v2873, %v3186
      %v3321 = vadd.f32 %v2874, %v3191
      %v3322 = vadd.f32 %v2875, %v3194
      %v3323 = vadd.f32 %v2876, %v3199
      %v3324 = vadd.f32 %v2877, %v3202
      %v3325 = vadd.f32 %v2878, %v3207
      %v3326 = vadd.f32 %v2879, %v3210
      %v3327 = vadd.f32 %v2880, %v3215
      %v3328 = vadd.f32 %v2881, %v3218
      %v3329 = vadd.f32 %v2882, %v3223
      %v3330 = vadd.f32 %v2883, %v3226
      %v3331 = vadd.f32 %v2884, %v3231
      %v3332 = vadd.f32 %v2885, %v3234
      %v3333 = vadd.f32 %v2886, %v3239
      %v3334 = vadd.f32 %v2887, %v3242
      %v3335 = vadd.f32 %v2888, %v3247
      %v3336 = vadd.f32 %v2889, %v3250
      %v3337 = vadd.f32 %v2890, %v3255
      %v3338 = vadd.f32 %v2891, %v3258
      %v3339 = vadd.f32 %v2892, %v3263
      %v3340 = vadd.f32 %v2893, %v3266
      %v3341 = vadd.f32 %v2894, %v3271
      %v3342 = vadd.f32 %v2895, %v3274
      %v3343 = vadd.f32 %v2896, %v3279
      %v3344 = vadd.f32 %v2897, %v3282
      %v3345 = vadd.f32 %v2898, %v3287
      %v3346 = vadd.f32 %v2899, %v3290
      %v3347 = vadd.f32 %v2900, %v3295
      %v3348 = vadd.f32 %v2901, %v3298
      %v3349 = vadd.f32 %v2902, %v3303
      %v3350 = vadd.f32 %v2903, %v3306
      %v3351 = vadd.f32 %v2904, %v3311
      %v3352 = vadd.f32 %v2905, %v3314
      %v3353 = vld [vmem:[%s207 + $0x10] sm:$0x8]
      %s3354 = scalar_lea.vmem %s1, 16
      %v3355 = vld [vmem:[%s3354] sm:$0x3]
      %v3357 = vunpack.c.l.b16 %v3353
      %v3358 = vpack.c.b16 %v2544, %v3357
      %vm3359 = vcmask 1044480
      %v3360 = vrot.slane %v3358, 3
      %v3361 = vrot.slane %v2581, 3
      %v3362 = vsel %vm3359, %v3360, %v3361
      %v3363 = vrot.slane %v2582, 3
      %v3364 = vsel %vm3359, %v3361, %v3363
      %v3365 = vrot.slane %v2583, 3
      %v3366 = vsel %vm3359, %v3363, %v3365
      %v3367 = vrot.slane %v2584, 3
      %v3368 = vsel %vm3359, %v3365, %v3367
      %v3369 = vrot.slane %v2585, 3
      %v3370 = vsel %vm3359, %v3367, %v3369
      %v3371 = vrot.slane %v2586, 3
      %v3372 = vsel %vm3359, %v3369, %v3371
      %v3373 = vrot.slane %v2587, 3
      %v3374 = vsel %vm3359, %v3371, %v3373
      %v3375 = vrot.slane %v2588, 3
      %v3376 = vsel %vm3359, %v3373, %v3375
      %v3377 = vrot.slane %v2589, 3
      %v3378 = vsel %vm3359, %v3375, %v3377
      %v3379 = vrot.slane %v2590, 3
      %v3380 = vsel %vm3359, %v3377, %v3379
      %v3381 = vrot.slane %v2591, 3
      %v3382 = vsel %vm3359, %v3379, %v3381
      %v3383 = vrot.slane %v2592, 3
      %v3384 = vsel %vm3359, %v3381, %v3383
      %v3385 = vrot.slane %v2593, 3
      %v3386 = vsel %vm3359, %v3383, %v3385
      %v3387 = vrot.slane %v2594, 3
      %v3388 = vsel %vm3359, %v3385, %v3387
      %v3389 = vrot.slane %v2595, 3
      %v3390 = vsel %vm3359, %v3387, %v3389
      %v3391 = vrot.slane %v2596, 3
      %v3392 = vsel %vm3359, %v3389, %v3391
      %v3393 = vrot.slane %v2597, 3
      %v3394 = vsel %vm3359, %v3391, %v3393
      %v3395 = vrot.slane %v2911, 3
      %v3396 = vsel %vm3359, %v3393, %v3395
      %v3398 = vsel %vm501, %v3362, 0
      %v3401 = vsel %vm501, %v3364, 0
      %v3404 = vsel %vm501, %v3366, 0
      %v3407 = vsel %vm501, %v3368, 0
      %v3410 = vsel %vm501, %v3370, 0
      %v3413 = vsel %vm501, %v3372, 0
      %v3416 = vsel %vm501, %v3374, 0
      %v3419 = vsel %vm501, %v3376, 0
      %v3422 = vsel %vm501, %v3378, 0
      %v3425 = vsel %vm501, %v3380, 0
      %v3428 = vsel %vm501, %v3382, 0
      %v3431 = vsel %vm501, %v3384, 0
      %v3434 = vsel %vm501, %v3386, 0
      %v3437 = vsel %vm501, %v3388, 0
      %v3440 = vsel %vm501, %v3390, 0
      %v3443 = vsel %vm501, %v3392, 0
      %v3446 = vsel %vm501, %v3394, 0
      %v3449 = vsel %vm501, %v3396, 0
      %v3452 = vsel %vm556, %v3355, 0
      %3454 = vmatprep.subr.bf16.mxu0 0
      %3455 = vmatpush1.bf16.msra.mxu0 0
      %3456 = vmatprep.subr.bf16.mxu0 0
      %3457 = vmatpush1.bf16.msra.mxu0 0
      %3458 = vmatprep.subr.bf16.mxu0 0
      %3459 = vmatpush1.bf16.msra.mxu0 0
      %3460 = vmatprep.subr.bf16.mxu0 0
      %3461 = vmatpush1.bf16.msra.mxu0 0
      %3462 = vmatprep.subr.bf16.mxu0 0
      %3463 = vmatpush1.bf16.msra.mxu0 0
      %3464 = vmatprep.subr.bf16.mxu0 0
      %3465 = vmatpush1.bf16.msra.mxu0 0
      %3466 = vmatprep.subr.bf16.mxu0 0
      %3467 = vmatpush1.bf16.msra.mxu0 0
      %3468 = vmatprep.subr.bf16.mxu0 0
      %3469 = vmatpush1.bf16.msra.mxu0 %v3452
      %3470 = vmatprep.subr.bf16.mxu0 0
      %3471 = vmatpush2.bf16.msra.mxu0 0
      %3472 = vmatprep.subr.bf16.mxu0 0
      %3473 = vmatpush2.bf16.msra.mxu0 0
      %3474 = vmatprep.subr.bf16.mxu0 0
      %3475 = vmatpush2.bf16.msra.mxu0 0
      %3476 = vmatprep.subr.bf16.mxu0 0
      %3477 = vmatpush2.bf16.msra.mxu0 0
      %3478 = vmatprep.subr.bf16.mxu0 0
      %3479 = vmatpush2.bf16.msra.mxu0 0
      %3480 = vmatprep.subr.bf16.mxu0 0
      %3481 = vmatpush2.bf16.msra.mxu0 0
      %3482 = vmatprep.subr.bf16.mxu0 0
      %3483 = vmatpush2.bf16.msra.mxu0 0
      %3484 = vmatprep.subr.bf16.mxu0 0
      %3485 = vmatpush2.bf16.msra.mxu0 0
      %3486 = vmatprep.mubr.bf16.mxu0 0
      %3487 = vmatmul.mubr.bf16.gmra.mxu0 %v3398
      %v3488 = vpop.f32.mrf.mxu0
      %v3489 = vadd.f32 0.0, %v3488
      %v3490 = vpop.f32.mrf.mxu0
      %v3491 = vpop.f32.mrf.mxu0
      %v3492 = vadd.f32 0.0, %v3491
      %v3493 = vpop.f32.mrf.mxu0
      %3494 = vmatprep.mubr.bf16.mxu0 0
      %3495 = vmatmul.mubr.bf16.gmra.mxu0 %v3401
      %v3496 = vpop.f32.mrf.mxu0
      %v3497 = vadd.f32 0.0, %v3496
      %v3498 = vpop.f32.mrf.mxu0
      %v3499 = vpop.f32.mrf.mxu0
      %v3500 = vadd.f32 0.0, %v3499
      %v3501 = vpop.f32.mrf.mxu0
      %3502 = vmatprep.mubr.bf16.mxu0 0
      %3503 = vmatmul.mubr.bf16.gmra.mxu0 %v3404
      %v3504 = vpop.f32.mrf.mxu0
      %v3505 = vadd.f32 0.0, %v3504
      %v3506 = vpop.f32.mrf.mxu0
      %v3507 = vpop.f32.mrf.mxu0
      %v3508 = vadd.f32 0.0, %v3507
      %v3509 = vpop.f32.mrf.mxu0
      %3510 = vmatprep.mubr.bf16.mxu0 0
      %3511 = vmatmul.mubr.bf16.gmra.mxu0 %v3407
      %v3512 = vpop.f32.mrf.mxu0
      %v3513 = vadd.f32 0.0, %v3512
      %v3514 = vpop.f32.mrf.mxu0
      %v3515 = vpop.f32.mrf.mxu0
      %v3516 = vadd.f32 0.0, %v3515
      %v3517 = vpop.f32.mrf.mxu0
      %3518 = vmatprep.mubr.bf16.mxu0 0
      %3519 = vmatmul.mubr.bf16.gmra.mxu0 %v3410
      %v3520 = vpop.f32.mrf.mxu0
      %v3521 = vadd.f32 0.0, %v3520
      %v3522 = vpop.f32.mrf.mxu0
      %v3523 = vpop.f32.mrf.mxu0
      %v3524 = vadd.f32 0.0, %v3523
      %v3525 = vpop.f32.mrf.mxu0
      %3526 = vmatprep.mubr.bf16.mxu0 0
      %3527 = vmatmul.mubr.bf16.gmra.mxu0 %v3413
      %v3528 = vpop.f32.mrf.mxu0
      %v3529 = vadd.f32 0.0, %v3528
      %v3530 = vpop.f32.mrf.mxu0
      %v3531 = vpop.f32.mrf.mxu0
      %v3532 = vadd.f32 0.0, %v3531
      %v3533 = vpop.f32.mrf.mxu0
      %3534 = vmatprep.mubr.bf16.mxu0 0
      %3535 = vmatmul.mubr.bf16.gmra.mxu0 %v3416
      %v3536 = vpop.f32.mrf.mxu0
      %v3537 = vadd.f32 0.0, %v3536
      %v3538 = vpop.f32.mrf.mxu0
      %v3539 = vpop.f32.mrf.mxu0
      %v3540 = vadd.f32 0.0, %v3539
      %v3541 = vpop.f32.mrf.mxu0
      %3542 = vmatprep.mubr.bf16.mxu0 0
      %3543 = vmatmul.mubr.bf16.gmra.mxu0 %v3419
      %v3544 = vpop.f32.mrf.mxu0
      %v3545 = vadd.f32 0.0, %v3544
      %v3546 = vpop.f32.mrf.mxu0
      %v3547 = vpop.f32.mrf.mxu0
      %v3548 = vadd.f32 0.0, %v3547
      %v3549 = vpop.f32.mrf.mxu0
      %3550 = vmatprep.mubr.bf16.mxu0 0
      %3551 = vmatmul.mubr.bf16.gmra.mxu0 %v3422
      %v3552 = vpop.f32.mrf.mxu0
      %v3553 = vadd.f32 0.0, %v3552
      %v3554 = vpop.f32.mrf.mxu0
      %v3555 = vpop.f32.mrf.mxu0
      %v3556 = vadd.f32 0.0, %v3555
      %v3557 = vpop.f32.mrf.mxu0
      %3558 = vmatprep.mubr.bf16.mxu0 0
      %3559 = vmatmul.mubr.bf16.gmra.mxu0 %v3425
      %v3560 = vpop.f32.mrf.mxu0
      %v3561 = vadd.f32 0.0, %v3560
      %v3562 = vpop.f32.mrf.mxu0
      %v3563 = vpop.f32.mrf.mxu0
      %v3564 = vadd.f32 0.0, %v3563
      %v3565 = vpop.f32.mrf.mxu0
      %3566 = vmatprep.mubr.bf16.mxu0 0
      %3567 = vmatmul.mubr.bf16.gmra.mxu0 %v3428
      %v3568 = vpop.f32.mrf.mxu0
      %v3569 = vadd.f32 0.0, %v3568
      %v3570 = vpop.f32.mrf.mxu0
      %v3571 = vpop.f32.mrf.mxu0
      %v3572 = vadd.f32 0.0, %v3571
      %v3573 = vpop.f32.mrf.mxu0
      %3574 = vmatprep.mubr.bf16.mxu0 0
      %3575 = vmatmul.mubr.bf16.gmra.mxu0 %v3431
      %v3576 = vpop.f32.mrf.mxu0
      %v3577 = vadd.f32 0.0, %v3576
      %v3578 = vpop.f32.mrf.mxu0
      %v3579 = vpop.f32.mrf.mxu0
      %v3580 = vadd.f32 0.0, %v3579
      %v3581 = vpop.f32.mrf.mxu0
      %3582 = vmatprep.mubr.bf16.mxu0 0
      %3583 = vmatmul.mubr.bf16.gmra.mxu0 %v3434
      %v3584 = vpop.f32.mrf.mxu0
      %v3585 = vadd.f32 0.0, %v3584
      %v3586 = vpop.f32.mrf.mxu0
      %v3587 = vpop.f32.mrf.mxu0
      %v3588 = vadd.f32 0.0, %v3587
      %v3589 = vpop.f32.mrf.mxu0
      %3590 = vmatprep.mubr.bf16.mxu0 0
      %3591 = vmatmul.mubr.bf16.gmra.mxu0 %v3437
      %v3592 = vpop.f32.mrf.mxu0
      %v3593 = vadd.f32 0.0, %v3592
      %v3594 = vpop.f32.mrf.mxu0
      %v3595 = vpop.f32.mrf.mxu0
      %v3596 = vadd.f32 0.0, %v3595
      %v3597 = vpop.f32.mrf.mxu0
      %3598 = vmatprep.mubr.bf16.mxu0 0
      %3599 = vmatmul.mubr.bf16.gmra.mxu0 %v3440
      %v3600 = vpop.f32.mrf.mxu0
      %v3601 = vadd.f32 0.0, %v3600
      %v3602 = vpop.f32.mrf.mxu0
      %v3603 = vpop.f32.mrf.mxu0
      %v3604 = vadd.f32 0.0, %v3603
      %v3605 = vpop.f32.mrf.mxu0
      %3606 = vmatprep.mubr.bf16.mxu0 0
      %3607 = vmatmul.mubr.bf16.gmra.mxu0 %v3443
      %v3608 = vpop.f32.mrf.mxu0
      %v3609 = vadd.f32 0.0, %v3608
      %v3610 = vpop.f32.mrf.mxu0
      %v3611 = vpop.f32.mrf.mxu0
      %v3612 = vadd.f32 0.0, %v3611
      %v3613 = vpop.f32.mrf.mxu0
      %3614 = vmatprep.mubr.bf16.mxu0 0
      %3615 = vmatmul.mubr.bf16.gmra.mxu0 %v3446
      %v3616 = vpop.f32.mrf.mxu0
      %v3617 = vadd.f32 0.0, %v3616
      %v3618 = vpop.f32.mrf.mxu0
      %v3619 = vpop.f32.mrf.mxu0
      %v3620 = vadd.f32 0.0, %v3619
      %v3621 = vpop.f32.mrf.mxu0
      %3622 = vmatprep.mubr.bf16.mxu0 0
      %3623 = vmatmul.mubr.bf16.gmra.mxu0 %v3449
      %v3624 = vpop.f32.mrf.mxu0
      %v3625 = vadd.f32 0.0, %v3624
      %v3626 = vpop.f32.mrf.mxu0
      %v3627 = vpop.f32.mrf.mxu0
      %v3628 = vadd.f32 0.0, %v3627
      %v3629 = vpop.f32.mrf.mxu0
      %3630 = vdwg.mxu0
      %v3631 = vadd.f32 %v3317, %v3489
      %v3632 = vadd.f32 %v3318, %v3492
      %v3633 = vadd.f32 %v3319, %v3497
      %v3634 = vadd.f32 %v3320, %v3500
      %v3635 = vadd.f32 %v3321, %v3505
      %v3636 = vadd.f32 %v3322, %v3508
      %v3637 = vadd.f32 %v3323, %v3513
      %v3638 = vadd.f32 %v3324, %v3516
      %v3639 = vadd.f32 %v3325, %v3521
      %v3640 = vadd.f32 %v3326, %v3524
      %v3641 = vadd.f32 %v3327, %v3529
      %v3642 = vadd.f32 %v3328, %v3532
      %v3643 = vadd.f32 %v3329, %v3537
      %v3644 = vadd.f32 %v3330, %v3540
      %v3645 = vadd.f32 %v3331, %v3545
      %v3646 = vadd.f32 %v3332, %v3548
      %v3647 = vadd.f32 %v3333, %v3553
      %v3648 = vadd.f32 %v3334, %v3556
      %v3649 = vadd.f32 %v3335, %v3561
      %v3650 = vadd.f32 %v3336, %v3564
      %v3651 = vadd.f32 %v3337, %v3569
      %v3652 = vadd.f32 %v3338, %v3572
      %v3653 = vadd.f32 %v3339, %v3577
      %v3654 = vadd.f32 %v3340, %v3580
      %v3655 = vadd.f32 %v3341, %v3585
      %v3656 = vadd.f32 %v3342, %v3588
      %v3657 = vadd.f32 %v3343, %v3593
      %v3658 = vadd.f32 %v3344, %v3596
      %v3659 = vadd.f32 %v3345, %v3601
      %v3660 = vadd.f32 %v3346, %v3604
      %v3661 = vadd.f32 %v3347, %v3609
      %v3662 = vadd.f32 %v3348, %v3612
      %v3663 = vadd.f32 %v3349, %v3617
      %v3664 = vadd.f32 %v3350, %v3620
      %v3665 = vadd.f32 %v3351, %v3625
      %v3666 = vadd.f32 %v3352, %v3628
      %v3667 = vld [vmem:[%s2] sm:$0x1]
      %v3669 = vlaneseq
      %v3670 = vshrl.u32 %v3669, 7
      %v3671 = vsub.s32 0, %v3670
      %v3672 = vrot.slane %v3667, %v3671
      %v3674 = vadd.f32 %v3631, %v3672
      %v3675 = vadd.f32 %v3632, %v3672
      %v3676 = vadd.f32 %v3633, %v3672
      %v3677 = vadd.f32 %v3634, %v3672
      %v3678 = vadd.f32 %v3635, %v3672
      %v3679 = vadd.f32 %v3636, %v3672
      %v3680 = vadd.f32 %v3637, %v3672
      %v3681 = vadd.f32 %v3638, %v3672
      %v3682 = vadd.f32 %v3639, %v3672
      %v3683 = vadd.f32 %v3640, %v3672
      %v3684 = vadd.f32 %v3641, %v3672
      %v3685 = vadd.f32 %v3642, %v3672
      %v3686 = vadd.f32 %v3643, %v3672
      %v3687 = vadd.f32 %v3644, %v3672
      %v3688 = vadd.f32 %v3645, %v3672
      %v3689 = vadd.f32 %v3646, %v3672
      %v3690 = vadd.f32 %v3647, %v3672
      %v3691 = vadd.f32 %v3648, %v3672
      %v3692 = vadd.f32 %v3649, %v3672
      %v3693 = vadd.f32 %v3650, %v3672
      %v3694 = vadd.f32 %v3651, %v3672
      %v3695 = vadd.f32 %v3652, %v3672
      %v3696 = vadd.f32 %v3653, %v3672
      %v3697 = vadd.f32 %v3654, %v3672
      %v3698 = vadd.f32 %v3655, %v3672
      %v3699 = vadd.f32 %v3656, %v3672
      %v3700 = vadd.f32 %v3657, %v3672
      %v3701 = vadd.f32 %v3658, %v3672
      %v3702 = vadd.f32 %v3659, %v3672
      %v3703 = vadd.f32 %v3660, %v3672
      %v3704 = vadd.f32 %v3661, %v3672
      %v3705 = vadd.f32 %v3662, %v3672
      %v3706 = vadd.f32 %v3663, %v3672
      %v3707 = vadd.f32 %v3664, %v3672
      %v3708 = vadd.f32 %v3665, %v3672
      %v3709 = vadd.f32 %v3666, %v3672
      %v3710 = vmul.f32 %v3674, 0.01
      %v3711 = vmul.f32 %v3675, 0.01
      %v3712 = vmul.f32 %v3676, 0.01
      %v3713 = vmul.f32 %v3677, 0.01
      %v3714 = vmul.f32 %v3678, 0.01
      %v3715 = vmul.f32 %v3679, 0.01
      %v3716 = vmul.f32 %v3680, 0.01
      %v3717 = vmul.f32 %v3681, 0.01
      %v3718 = vmul.f32 %v3682, 0.01
      %v3719 = vmul.f32 %v3683, 0.01
      %v3720 = vmul.f32 %v3684, 0.01
      %v3721 = vmul.f32 %v3685, 0.01
      %v3722 = vmul.f32 %v3686, 0.01
      %v3723 = vmul.f32 %v3687, 0.01
      %v3724 = vmul.f32 %v3688, 0.01
      %v3725 = vmul.f32 %v3689, 0.01
      %v3726 = vmul.f32 %v3690, 0.01
      %v3727 = vmul.f32 %v3691, 0.01
      %v3728 = vmul.f32 %v3692, 0.01
      %v3729 = vmul.f32 %v3693, 0.01
      %v3730 = vmul.f32 %v3694, 0.01
      %v3731 = vmul.f32 %v3695, 0.01
      %v3732 = vmul.f32 %v3696, 0.01
      %v3733 = vmul.f32 %v3697, 0.01
      %v3734 = vmul.f32 %v3698, 0.01
      %v3735 = vmul.f32 %v3699, 0.01
      %v3736 = vmul.f32 %v3700, 0.01
      %v3737 = vmul.f32 %v3701, 0.01
      %v3738 = vmul.f32 %v3702, 0.01
      %v3739 = vmul.f32 %v3703, 0.01
      %v3740 = vmul.f32 %v3704, 0.01
      %v3741 = vmul.f32 %v3705, 0.01
      %v3742 = vmul.f32 %v3706, 0.01
      %v3743 = vmul.f32 %v3707, 0.01
      %v3744 = vmul.f32 %v3708, 0.01
      %v3745 = vmul.f32 %v3709, 0.01
      %v3746 = vmax.f32 %v3674, %v3710
      %v3747 = vmax.f32 %v3675, %v3711
      %v3748 = vmax.f32 %v3676, %v3712
      %v3749 = vmax.f32 %v3677, %v3713
      %v3750 = vmax.f32 %v3678, %v3714
      %v3751 = vmax.f32 %v3679, %v3715
      %v3752 = vmax.f32 %v3680, %v3716
      %v3753 = vmax.f32 %v3681, %v3717
      %v3754 = vmax.f32 %v3682, %v3718
      %v3755 = vmax.f32 %v3683, %v3719
      %v3756 = vmax.f32 %v3684, %v3720
      %v3757 = vmax.f32 %v3685, %v3721
      %v3758 = vmax.f32 %v3686, %v3722
      %v3759 = vmax.f32 %v3687, %v3723
      %v3760 = vmax.f32 %v3688, %v3724
      %v3761 = vmax.f32 %v3689, %v3725
      %v3762 = vmax.f32 %v3690, %v3726
      %v3763 = vmax.f32 %v3691, %v3727
      %v3764 = vmax.f32 %v3692, %v3728
      %v3765 = vmax.f32 %v3693, %v3729
      %v3766 = vmax.f32 %v3694, %v3730
      %v3767 = vmax.f32 %v3695, %v3731
      %v3768 = vmax.f32 %v3696, %v3732
      %v3769 = vmax.f32 %v3697, %v3733
      %v3770 = vmax.f32 %v3698, %v3734
      %v3771 = vmax.f32 %v3699, %v3735
      %v3772 = vmax.f32 %v3700, %v3736
      %v3773 = vmax.f32 %v3701, %v3737
      %v3774 = vmax.f32 %v3702, %v3738
      %v3775 = vmax.f32 %v3703, %v3739
      %v3776 = vmax.f32 %v3704, %v3740
      %v3777 = vmax.f32 %v3705, %v3741
      %v3778 = vmax.f32 %v3706, %v3742
      %v3779 = vmax.f32 %v3707, %v3743
      %v3780 = vmax.f32 %v3708, %v3744
      %v3781 = vmax.f32 %v3709, %v3745
      %v3782 = vld [vmem:[%s212] sm:$0xff]
      %v3783 = vld [vmem:[%s212 + $0x8] sm:$0xff]
      %v3784 = vld [vmem:[%s212 + $0x10] sm:$0xff]
      %v3785 = vld [vmem:[%s212 + $0x18] sm:$0xff]
      %v3786 = vld [vmem:[%s212 + $0x20] sm:$0xff]
      %v3787 = vld [vmem:[%s212 + $0x28] sm:$0xff]
      %v3788 = vld [vmem:[%s212 + $0x30] sm:$0xff]
      %v3789 = vld [vmem:[%s212 + $0x38] sm:$0xff]
      %v3790 = vld [vmem:[%s212 + $0x40] sm:$0xff]
      %v3791 = vld [vmem:[%s212 + $0x48] sm:$0xff]
      %v3792 = vld [vmem:[%s212 + $0x50] sm:$0xff]
      %v3793 = vld [vmem:[%s212 + $0x58] sm:$0xff]
      %v3794 = vld [vmem:[%s212 + $0x60] sm:$0xff]
      %v3795 = vld [vmem:[%s212 + $0x68] sm:$0xff]
      %v3796 = vld [vmem:[%s212 + $0x70] sm:$0xff]
      %v3797 = vld [vmem:[%s212 + $0x78] sm:$0xff]
      %v3798 = vld [vmem:[%s212 + $0x80] sm:$0xff]
      %v3799 = vld [vmem:[%s212 + $0x88] sm:$0xff]
      %v3800 = vld [vmem:[%s212 + $0x90] sm:$0xff]
      %v3801 = vld [vmem:[%s212 + $0x98] sm:$0xff]
      %v3802 = vld [vmem:[%s212 + $0xa0] sm:$0xff]
      %v3803 = vld [vmem:[%s212 + $0xa8] sm:$0xff]
      %v3804 = vld [vmem:[%s212 + $0xb0] sm:$0xff]
      %v3805 = vld [vmem:[%s212 + $0xb8] sm:$0xff]
      %v3806 = vld [vmem:[%s212 + $0xc0] sm:$0xff]
      %v3807 = vld [vmem:[%s212 + $0xc8] sm:$0xff]
      %v3808 = vld [vmem:[%s212 + $0xd0] sm:$0xff]
      %v3809 = vld [vmem:[%s212 + $0xd8] sm:$0xff]
      %v3810 = vld [vmem:[%s212 + $0xe0] sm:$0xff]
      %v3811 = vld [vmem:[%s212 + $0xe8] sm:$0xff]
      %v3812 = vld [vmem:[%s212 + $0xf0] sm:$0xff]
      %v3813 = vld [vmem:[%s212 + $0xf8] sm:$0xff]
      %v3814 = vld [vmem:[%s212 + $0x100] sm:$0xff]
      %v3815 = vld [vmem:[%s212 + $0x108] sm:$0xff]
      %v3816 = vld [vmem:[%s212 + $0x110] sm:$0xff]
      %v3817 = vld [vmem:[%s212 + $0x118] sm:$0xff]
      %v3818 = vadd.f32 %v3746, %v3782
      %v3819 = vadd.f32 %v3747, %v3783
      %v3820 = vadd.f32 %v3748, %v3784
      %v3821 = vadd.f32 %v3749, %v3785
      %v3822 = vadd.f32 %v3750, %v3786
      %v3823 = vadd.f32 %v3751, %v3787
      %v3824 = vadd.f32 %v3752, %v3788
      %v3825 = vadd.f32 %v3753, %v3789
      %v3826 = vadd.f32 %v3754, %v3790
      %v3827 = vadd.f32 %v3755, %v3791
      %v3828 = vadd.f32 %v3756, %v3792
      %v3829 = vadd.f32 %v3757, %v3793
      %v3830 = vadd.f32 %v3758, %v3794
      %v3831 = vadd.f32 %v3759, %v3795
      %v3832 = vadd.f32 %v3760, %v3796
      %v3833 = vadd.f32 %v3761, %v3797
      %v3834 = vadd.f32 %v3762, %v3798
      %v3835 = vadd.f32 %v3763, %v3799
      %v3836 = vadd.f32 %v3764, %v3800
      %v3837 = vadd.f32 %v3765, %v3801
      %v3838 = vadd.f32 %v3766, %v3802
      %v3839 = vadd.f32 %v3767, %v3803
      %v3840 = vadd.f32 %v3768, %v3804
      %v3841 = vadd.f32 %v3769, %v3805
      %v3842 = vadd.f32 %v3770, %v3806
      %v3843 = vadd.f32 %v3771, %v3807
      %v3844 = vadd.f32 %v3772, %v3808
      %v3845 = vadd.f32 %v3773, %v3809
      %v3846 = vadd.f32 %v3774, %v3810
      %v3847 = vadd.f32 %v3775, %v3811
      %v3848 = vadd.f32 %v3776, %v3812
      %v3849 = vadd.f32 %v3777, %v3813
      %v3850 = vadd.f32 %v3778, %v3814
      %v3851 = vadd.f32 %v3779, %v3815
      %v3852 = vadd.f32 %v3780, %v3816
      %v3853 = vadd.f32 %v3781, %v3817
      %3854 = vst.msk [vmem:[%s217] sm:$0xff] %vm501, %v3818
      %3855 = vst.msk [vmem:[%s217 + $0x8] sm:$0xff] %vm501, %v3819
      %3856 = vst.msk [vmem:[%s217 + $0x10] sm:$0xff] %vm501, %v3820
      %3857 = vst.msk [vmem:[%s217 + $0x18] sm:$0xff] %vm501, %v3821
      %3858 = vst.msk [vmem:[%s217 + $0x20] sm:$0xff] %vm501, %v3822
      %3859 = vst.msk [vmem:[%s217 + $0x28] sm:$0xff] %vm501, %v3823
      %3860 = vst.msk [vmem:[%s217 + $0x30] sm:$0xff] %vm501, %v3824
      %3861 = vst.msk [vmem:[%s217 + $0x38] sm:$0xff] %vm501, %v3825
      %3862 = vst.msk [vmem:[%s217 + $0x40] sm:$0xff] %vm501, %v3826
      %3863 = vst.msk [vmem:[%s217 + $0x48] sm:$0xff] %vm501, %v3827
      %3864 = vst.msk [vmem:[%s217 + $0x50] sm:$0xff] %vm501, %v3828
      %3865 = vst.msk [vmem:[%s217 + $0x58] sm:$0xff] %vm501, %v3829
      %3866 = vst.msk [vmem:[%s217 + $0x60] sm:$0xff] %vm501, %v3830
      %3867 = vst.msk [vmem:[%s217 + $0x68] sm:$0xff] %vm501, %v3831
      %3868 = vst.msk [vmem:[%s217 + $0x70] sm:$0xff] %vm501, %v3832
      %3869 = vst.msk [vmem:[%s217 + $0x78] sm:$0xff] %vm501, %v3833
      %3870 = vst.msk [vmem:[%s217 + $0x80] sm:$0xff] %vm501, %v3834
      %3871 = vst.msk [vmem:[%s217 + $0x88] sm:$0xff] %vm501, %v3835
      %3872 = vst.msk [vmem:[%s217 + $0x90] sm:$0xff] %vm501, %v3836
      %3873 = vst.msk [vmem:[%s217 + $0x98] sm:$0xff] %vm501, %v3837
      %3874 = vst.msk [vmem:[%s217 + $0xa0] sm:$0xff] %vm501, %v3838
      %3875 = vst.msk [vmem:[%s217 + $0xa8] sm:$0xff] %vm501, %v3839
      %3876 = vst.msk [vmem:[%s217 + $0xb0] sm:$0xff] %vm501, %v3840
      %3877 = vst.msk [vmem:[%s217 + $0xb8] sm:$0xff] %vm501, %v3841
      %3878 = vst.msk [vmem:[%s217 + $0xc0] sm:$0xff] %vm501, %v3842
      %3879 = vst.msk [vmem:[%s217 + $0xc8] sm:$0xff] %vm501, %v3843
      %3880 = vst.msk [vmem:[%s217 + $0xd0] sm:$0xff] %vm501, %v3844
      %3881 = vst.msk [vmem:[%s217 + $0xd8] sm:$0xff] %vm501, %v3845
      %3882 = vst.msk [vmem:[%s217 + $0xe0] sm:$0xff] %vm501, %v3846
      %3883 = vst.msk [vmem:[%s217 + $0xe8] sm:$0xff] %vm501, %v3847
      %3884 = vst.msk [vmem:[%s217 + $0xf0] sm:$0xff] %vm501, %v3848
      %3885 = vst.msk [vmem:[%s217 + $0xf8] sm:$0xff] %vm501, %v3849
      %3886 = vst.msk [vmem:[%s217 + $0x100] sm:$0xff] %vm501, %v3850
      %3887 = vst.msk [vmem:[%s217 + $0x108] sm:$0xff] %vm501, %v3851
      %3888 = vst.msk [vmem:[%s217 + $0x110] sm:$0xff] %vm501, %v3852
      %3889 = vst.msk [vmem:[%s217 + $0x118] sm:$0xff] %vm501, %v3853
      %p3890 = scmp.lt.s32.totalorder %s15, 1
      %s3891 = scalar_select %p3890, %s15, 1
      %s3892 = smul.addr %s3891, 36
      %s3893 = smul.addr %s3892, 8
      %s3894 = scalar_lea.vmem %s4, %s3893
      // Predicated region
      $region37: #{double_conv_forward.5} parent=35 // pred_check
        %p3895 = pneg %p127
      $region38: #{double_conv_forward.5} parent=35 // pred_check_branch
        %3897 = sbr.rel (%p3895) target = $region40
      $region39: #{double_conv_forward.5} parent=35 // pred_region
        _
      $region40: #{double_conv_forward.5} parent=35 // pred_fallthru
        _
    $region36: #{double_conv_forward.5} parent=5 // pred_fallthru
      _
    %p3898 = scmp.le.s32.totalorder 2, %s10
    // Predicated region
    $region41: #{double_conv_forward.5} parent=5 // pred_check
      %p3899 = pneg %p3898
    $region42: #{double_conv_forward.5} parent=5 // pred_check_branch
      %3901 = sbr.rel (%p3899) target = $region44
    $region43: #{double_conv_forward.5} parent=5 // pred_region
      %s3902 = ssub.s32 %s10, 2
      // Predicated region
      $region45: #{double_conv_forward.5} parent=43 // pred_check
        %p3903 = pneg %p133
      $region46: #{double_conv_forward.5} parent=43 // pred_check_branch
        %3905 = sbr.rel (%p3903) target = $region48
      $region47: #{double_conv_forward.5} parent=43 // pred_region
        %p3906 = scmp.lt.s32.totalorder %s16, 1
        %s3907 = scalar_select %p3906, %s16, 1
        %s3908 = smul.addr %s3907, 36
        %s3909 = smul.addr %s3908, 8
        %s3910 = scalar_lea.vmem %s4, %s3909
      $region48: #{double_conv_forward.5} parent=43 // pred_fallthru
        _
    $region44: #{double_conv_forward.5} parent=5 // pred_fallthru
      _
  $region6: #{double_conv_forward.5} parent=0 // loop_footer
    %s14 = sadd.s32 1, %s10
  $region7: #{double_conv_forward.5} parent=0 // loop_footer_branch
    %9 = sbr.rel target = $region3
  $region8: #{double_conv_forward.5} parent=0 // loop_exit
    _

</llo_original>
